<compile_context>
chip_gen: v5e
topology: v5e:2x2
jax: 0.10.0
libtpu: 0.0.40
codegen_flags: <defaults>
</compile_context>

<pallas_src>
import math
from functools import partial

import jax
import jax.numpy as jnp
from jax import lax
from jax.experimental import pallas as pl
from jax.experimental.pallas import tpu as pltpu


def _round_up(x, m):
    return ((x + m - 1) // m) * m


# ----------------------- tiled matmul (M, N, K tiled) ------------------------

def _mm_kernel(*refs, use_bias, use_rs, use_cs, relu, trans_b, out_scale,
               acc_scratch):
    if acc_scratch:
        *ins, o_ref, acc_ref = refs
    else:
        *ins, o_ref = refs
        acc_ref = o_ref                      # accumulate into the resident output
    it = iter(ins)
    a_ref = next(it)
    b_ref = next(it)
    bias_ref = next(it) if use_bias else None
    rs_ref = next(it) if use_rs else None
    cs_ref = next(it) if use_cs else None

    @pl.when(pl.program_id(2) == 0)
    def _():
        acc_ref[...] = jnp.zeros_like(acc_ref)

    a = a_ref[...]
    b = b_ref[...]
    if trans_b:
        acc_ref[...] += lax.dot_general(
            a, b, (((1,), (1,)), ((), ())), preferred_element_type=jnp.float32)
    else:
        acc_ref[...] += jnp.dot(a, b, preferred_element_type=jnp.float32)

    needs_final = (use_bias or use_rs or use_cs or relu
                   or (out_scale is not None) or acc_scratch)
    if needs_final:
        @pl.when(pl.program_id(2) == pl.num_programs(2) - 1)
        def _():
            r = acc_ref[...]
            if use_bias:
                r = r + bias_ref[...]
            if relu:
                r = jnp.maximum(r, 0.0)
            if use_rs:
                r = r * rs_ref[...]
            if use_cs:
                r = r * cs_ref[...]
            if out_scale is not None:
                r = r * out_scale
            o_ref[...] = r.astype(o_ref.dtype)


def pallas_matmul(a, b, bias=None, *, trans_b=False, relu=False,
                  row_scale=None, col_scale=None, out_scale=None,
                  out_dtype=jnp.float32, tm=256, tn=256, tk=512):
    """C = (A @ B  or  A @ B.T) [+ bias] [ReLU] [* row_scale * col_scale * out_scale].

    bf16 MXU inputs, f32 accumulation in the resident output block (or a VMEM
    scratch when out_dtype != f32), K-reduction grid axis "arbitrary", M/N
    axes "parallel".  Dims that fit inside one tile use full-dim blocks so no
    host-side padding pass is emitted; larger dims are padded to tile
    multiples and the result is sliced back.
    """
    M, K = a.shape
    if trans_b:
        N, Kb = b.shape
    else:
        Kb, N = b.shape
    assert K == Kb

    # Full-dim blocks when a dim fits in one tile (no padding); otherwise tile
    # + pad.  bf16 operands want 16-row sublane tiles when actually tiled.
    tm = M if M <= tm else tm
    tn = N if N <= tn else tn
    tk = K if K <= tk else tk
    Mp = M if tm == M else _round_up(M, tm)
    Np = N if tn == N else _round_up(N, tn)
    Kp = K if tk == K else _round_up(K, tk)

    def prep(x, shape_p):
        if x.dtype != jnp.bfloat16:
            x = x.astype(jnp.bfloat16)
        pads = tuple((0, p - s) for s, p in zip(x.shape, shape_p))
        if any(p[1] for p in pads):
            x = jnp.pad(x, pads)
        return x

    a_p = prep(a, (Mp, Kp))
    if trans_b:
        b_p = prep(b, (Np, Kp))
        b_spec = pl.BlockSpec((tn, tk), lambda i, j, k: (j, k))
    else:
        b_p = prep(b, (Kp, Np))
        b_spec = pl.BlockSpec((tk, tn), lambda i, j, k: (k, j))

    inputs = [a_p, b_p]
    in_specs = [pl.BlockSpec((tm, tk), lambda i, j, k: (i, k)), b_spec]

    if bias is not None:
        bias_p = bias.reshape(1, N).astype(jnp.float32)
        if Np != N:
            bias_p = jnp.pad(bias_p, ((0, 0), (0, Np - N)))
        inputs.append(bias_p)
        in_specs.append(pl.BlockSpec((1, tn), lambda i, j, k: (0, j)))
    if row_scale is not None:
        rs = row_scale.reshape(M, 1).astype(jnp.float32)
        if Mp != M:
            rs = jnp.pad(rs, ((0, Mp - M), (0, 0)))
        inputs.append(rs)
        in_specs.append(pl.BlockSpec((tm, 1), lambda i, j, k: (i, 0)))
    if col_scale is not None:
        cs = col_scale.reshape(1, N).astype(jnp.float32)
        if Np != N:
            cs = jnp.pad(cs, ((0, 0), (0, Np - N)))
        inputs.append(cs)
        in_specs.append(pl.BlockSpec((1, tn), lambda i, j, k: (0, j)))

    acc_scratch = jnp.dtype(out_dtype) != jnp.dtype(jnp.float32)
    scratch_shapes = [pltpu.VMEM((tm, tn), jnp.float32)] if acc_scratch else []

    out = pl.pallas_call(
        partial(_mm_kernel, use_bias=bias is not None,
                use_rs=row_scale is not None, use_cs=col_scale is not None,
                relu=relu, trans_b=trans_b, out_scale=out_scale,
                acc_scratch=acc_scratch),
        out_shape=jax.ShapeDtypeStruct((Mp, Np), out_dtype),
        grid=(Mp // tm, Np // tn, Kp // tk),
        in_specs=in_specs,
        out_specs=pl.BlockSpec((tm, tn), lambda i, j, k: (i, j)),
        scratch_shapes=scratch_shapes,
        compiler_params=pltpu.CompilerParams(
            dimension_semantics=("parallel", "parallel", "arbitrary")),
    )(*inputs)
    if (Mp, Np) != (M, N):
        out = out[:M, :N]
    return out


# --------------------------- MEAformer fusion layer --------------------------

def _fusion_kernel(g_ref, r_ref, att_ref, m_ref,
                   wqkv_ref, wo_ref,
                   ln1_w_ref, ln1_b_ref, w1_ref, b1_ref, w2_ref, b2_ref,
                   ln2_w_ref, ln2_b_ref,
                   joint_ref, hid_ref):
    """One single-head transformer-encoder layer over the 4 modality tokens,
    with the joint_emb / generate_hidden_emb epilogues fused in.

    The 4 modality tiles are stacked into one (4*tn, D) slab so QKV / wo / w1
    / w2 are each a single large MXU matmul; the per-entity 4x4 token
    attention is unrolled onto the VPU with bf16 q/k/v and EUP reciprocals."""
    xs = [g_ref[...], r_ref[...], att_ref[...], m_ref[...]]    # 4 x (tn, D) f32
    tn, D = xs[0].shape
    scale = 1.0 / math.sqrt(D)

    x_all = jnp.concatenate(xs, axis=0)                        # (4tn, D) f32
    xb = x_all.astype(jnp.bfloat16)

    # Single fused QKV matmul; keep q/k/v in bf16 to bound the live set.
    qkv = jnp.dot(xb, wqkv_ref[...],
                  preferred_element_type=jnp.float32).astype(jnp.bfloat16)
    qs = [qkv[t * tn:(t + 1) * tn, 0:D] for t in range(4)]
    ks = [qkv[t * tn:(t + 1) * tn, D:2 * D] for t in range(4)]
    vs = [qkv[t * tn:(t + 1) * tn, 2 * D:3 * D] for t in range(4)]

    # per-entity 4x4 softmax attention (elementwise mult + lane reductions)
    attn = []                                                   # attn[q][k]: (tn,1) f32
    for qt in range(4):
        s = [scale * jnp.sum(qs[qt].astype(jnp.float32) * ks[kt],
                             axis=-1, keepdims=True) for kt in range(4)]
        smax = jnp.maximum(jnp.maximum(s[0], s[1]), jnp.maximum(s[2], s[3]))
        p = [jnp.exp(si - smax) for si in s]
        inv = pl.reciprocal(p[0] + p[1] + p[2] + p[3], approx=True)
        attn.append([pi * inv for pi in p])

    # TODO(synk): modality weight here = softmax over mean attention mass each
    # key token receives — synthetic approximation of MEAformer's weight_norm.
    wsum = [(attn[0][kt] + attn[1][kt] + attn[2][kt] + attn[3][kt]) * 0.25
            for kt in range(4)]
    wmax = jnp.maximum(jnp.maximum(wsum[0], wsum[1]),
                       jnp.maximum(wsum[2], wsum[3]))
    wexp = [jnp.exp(wi - wmax) for wi in wsum]
    winv = pl.reciprocal(wexp[0] + wexp[1] + wexp[2] + wexp[3], approx=True)
    wn = [wi * winv for wi in wexp]                             # 4 x (tn, 1)

    # attention-weighted context, stacked back into the (4tn, D) slab
    ctx_parts = []
    for t in range(4):
        c = attn[t][0] * vs[0]
        c = c + attn[t][1] * vs[1]
        c = c + attn[t][2] * vs[2]
        c = c + attn[t][3] * vs[3]
        ctx_parts.append(c)
    ctx_all = jnp.concatenate(ctx_parts, axis=0).astype(jnp.bfloat16)
    ctx_all = jnp.dot(ctx_all, wo_ref[...], preferred_element_type=jnp.float32)

    # residual + LayerNorm 1 (row-wise, all 4 tokens at once)
    h = x_all + ctx_all
    mu = jnp.mean(h, axis=-1, keepdims=True)
    d = h - mu
    var = jnp.mean(d * d, axis=-1, keepdims=True)
    h = d * lax.rsqrt(var + 1e-5) * ln1_w_ref[...] + ln1_b_ref[...]

    # FFN (two large MXU matmuls over the stacked slab)
    ff = jnp.dot(h.astype(jnp.bfloat16), w1_ref[...],
                 preferred_element_type=jnp.float32) + b1_ref[...]
    ff = jnp.maximum(ff, 0.0)
    ff = jnp.dot(ff.astype(jnp.bfloat16), w2_ref[...],
                 preferred_element_type=jnp.float32) + b2_ref[...]

    # residual + LayerNorm 2
    h2 = h + ff
    mu2 = jnp.mean(h2, axis=-1, keepdims=True)
    d2 = h2 - mu2
    var2 = jnp.mean(d2 * d2, axis=-1, keepdims=True)
    h2 = d2 * lax.rsqrt(var2 + 1e-5) * ln2_w_ref[...] + ln2_b_ref[...]

    # fused epilogues:
    #   joint_emb = concat_m weight_norm[:,m] * F.normalize(emb_m)
    #   joint_hid = concat_m F.normalize(hidden[:, m, :])
    joint_parts, hid_parts = [], []
    for t in range(4):
        x_t = xs[t]
        x_inv = lax.rsqrt(jnp.maximum(jnp.sum(x_t * x_t, axis=-1, keepdims=True),
                                      1e-24))
        joint_parts.append(wn[t] * x_t * x_inv)
        h_t = h2[t * tn:(t + 1) * tn, :]
        h_inv = lax.rsqrt(jnp.maximum(jnp.sum(h_t * h_t, axis=-1, keepdims=True),
                                      1e-24))
        hid_parts.append(h_t * h_inv)

    # lane-dense stores (last dim 4*D), no narrow partial stores
    joint_ref[...] = jnp.concatenate(joint_parts, axis=-1)
    hid_ref[...] = jnp.concatenate(hid_parts, axis=-1)


def pallas_fusion(gph_emb, rel_emb, att_emb, img_emb, fp, tn=128):
    N, D = gph_emb.shape
    F_dim = fp['w1'].shape[1]
    # tn=128 keeps the per-step working set comfortable inside v7x's 32 MiB
    # scoped VMEM default even at real D; v5e/v6e have plenty of headroom.
    tn = N if N <= tn else tn
    Np = N if tn == N else _round_up(N, tn)

    def pad(x):
        x = x.astype(jnp.float32)
        if Np != N:
            x = jnp.pad(x, ((0, Np - N), (0, 0)))
        return x

    # concatenate wq|wk|wv once → a single (D, 3D) MXU weight
    wqkv = jnp.concatenate([fp['wq'], fp['wk'], fp['wv']],
                           axis=1).astype(jnp.bfloat16)

    def const(shape):
        # constant index_map -> block stays resident / re-fetch overlaps compute
        return pl.BlockSpec(shape, lambda i: (0, 0))

    ent_spec = pl.BlockSpec((tn, D), lambda i: (i, 0))
    out_spec = pl.BlockSpec((tn, 4 * D), lambda i: (i, 0))

    joint, hid = pl.pallas_call(
        _fusion_kernel,
        out_shape=(jax.ShapeDtypeStruct((Np, 4 * D), jnp.float32),
                   jax.ShapeDtypeStruct((Np, 4 * D), jnp.float32)),
        grid=(Np // tn,),
        in_specs=[ent_spec, ent_spec, ent_spec, ent_spec,
                  const((D, 3 * D)), const((D, D)),
                  const((1, D)), const((1, D)),
                  const((D, F_dim)), const((1, F_dim)),
                  const((F_dim, D)), const((1, D)),
                  const((1, D)), const((1, D))],
        out_specs=(out_spec, out_spec),
        compiler_params=pltpu.CompilerParams(dimension_semantics=("parallel",)),
    )(pad(gph_emb), pad(rel_emb), pad(att_emb), pad(img_emb),
      wqkv, fp['wo'].astype(jnp.bfloat16),
      fp['ln1_w'], fp['ln1_b'],
      fp['w1'].astype(jnp.bfloat16), fp['b1'],
      fp['w2'].astype(jnp.bfloat16), fp['b2'],
      fp['ln2_w'], fp['ln2_b'])
    if Np != N:
        joint, hid = joint[:N], hid[:N]
    return joint, hid


# ------------------------------- loss modules --------------------------------

def icl_loss(emb, batch, tau=0.1, alpha=0.5):
    """Bidirectional InfoNCE over aligned (left, right) entity pairs.
    F.normalize + /tau are fused into the similarity matmul's finalize."""
    z1 = jnp.take(emb, batch[:, 0], axis=0)
    z2 = jnp.take(emb, batch[:, 1], axis=0)
    inv1 = 1.0 / jnp.maximum(
        jnp.sqrt(jnp.sum(z1 * z1, axis=1, keepdims=True)), 1e-12)
    inv2 = 1.0 / jnp.maximum(
        jnp.sqrt(jnp.sum(z2 * z2, axis=1, keepdims=True)), 1e-12)
    sim = pallas_matmul(z1, z2, trans_b=True,
                        row_scale=inv1, col_scale=inv2.T, out_scale=1.0 / tau)
    lsm_a = jax.nn.log_softmax(sim, axis=-1)
    lsm_b = jax.nn.log_softmax(sim.T, axis=-1)
    loss_a = -jnp.mean(jnp.diagonal(lsm_a))
    loss_b = -jnp.mean(jnp.diagonal(lsm_b))
    return alpha * loss_a + (1.0 - alpha) * loss_b


def multi_loss_layer(losses, log_vars):
    """CustomMultiLossLayer: sum_i exp(-s_i)*L_i + s_i.
    Matches the reference: absent modalities contribute 0 loss but the
    log_vars[i] term is still added (precision_i * 0 + s_i)."""
    precision = jnp.exp(-log_vars)
    total = jnp.float32(0.0)
    for i, l in enumerate(losses):
        li = jnp.float32(0.0) if l is None else l
        total = total + precision[i] * li + log_vars[i]
    return total


# -------------------------------- parameters ---------------------------------

def init_params(key, N, D, img_dim, rel_dim, att_dim, ffn_dim):
    keys = jax.random.split(key, 12)

    def nrm(k, shape, scale=0.1):
        return scale * jax.random.normal(k, shape, jnp.float32)

    return dict(
        ent_emb=nrm(keys[0], (N, D)),
        w_gcn1=nrm(keys[1], (D, D)),
        w_gcn2=nrm(keys[2], (D, D)),
        w_img=nrm(keys[3], (img_dim, D)), b_img=jnp.zeros((D,), jnp.float32),
        w_rel=nrm(keys[4], (rel_dim, D)), b_rel=jnp.zeros((D,), jnp.float32),
        w_att=nrm(keys[5], (att_dim, D)), b_att=jnp.zeros((D,), jnp.float32),
        fusion=dict(
            wq=nrm(keys[6], (D, D)), wk=nrm(keys[7], (D, D)),
            wv=nrm(keys[8], (D, D)), wo=nrm(keys[9], (D, D)),
            ln1_w=jnp.ones((1, D), jnp.float32), ln1_b=jnp.zeros((1, D), jnp.float32),
            w1=nrm(keys[10], (D, ffn_dim)), b1=jnp.zeros((1, ffn_dim), jnp.float32),
            w2=nrm(keys[11], (ffn_dim, D)), b2=jnp.zeros((1, D), jnp.float32),
            ln2_w=jnp.ones((1, D), jnp.float32), ln2_b=jnp.zeros((1, D), jnp.float32),
        ),
        log_vars=jnp.zeros((6,), jnp.float32),       # CustomMultiLossLayer(loss_num=6)
    )


# -------------------------------- forward pass --------------------------------

def meaformer_forward(params, adj, img_feats, rel_feats, att_feats, batch,
                      tau=0.1, alpha=0.5):
    # ---- MultiModalEncoder: per-modality embeddings ----
    # 2-layer GCN over entity embeddings (adjacency kept dense here).
    # adj is used twice → cast to bf16 once; intermediates that only feed the
    # next matmul are produced directly in bf16 (no separate cast pass).
    # TODO(synk): the reference uses a sparse adjacency spmm; dense here.
    adj_bf = adj.astype(jnp.bfloat16)
    h = pallas_matmul(params['ent_emb'], params['w_gcn1'], out_dtype=jnp.bfloat16)
    h = pallas_matmul(adj_bf, h, relu=True, out_dtype=jnp.bfloat16)
    h = pallas_matmul(h, params['w_gcn2'], out_dtype=jnp.bfloat16)
    gph_emb = pallas_matmul(adj_bf, h)
    img_emb = pallas_matmul(img_feats, params['w_img'], params['b_img'])
    rel_emb = pallas_matmul(rel_feats, params['w_rel'], params['b_rel'])
    att_emb = pallas_matmul(att_feats, params['w_att'], params['b_att'])
    name_emb, char_emb = None, None    # kgs['name_features'] is None in this config

    # ---- MEAformer fusion (transformer over 4 modality tokens) with fused
    #      modality-weight softmax + F.normalize + scaling epilogues ----
    joint_emb, joint_emb_hid = pallas_fusion(
        gph_emb, rel_emb, att_emb, img_emb, params['fusion'])   # [N,4*D] each
    D = gph_emb.shape[1]
    hid_embs = [joint_emb_hid[:, i * D:(i + 1) * D] for i in range(4)]

    # ---- losses ----
    loss_joi = icl_loss(joint_emb, batch, tau, alpha)

    def inner_view_loss(e_list):
        losses = [icl_loss(e, batch, tau, alpha) if e is not None else None
                  for e in e_list]
        return multi_loss_layer(losses, params['log_vars'])

    in_loss = inner_view_loss([gph_emb, rel_emb, att_emb, img_emb,
                               name_emb, char_emb])
    out_loss = inner_view_loss(hid_embs + [None, None])

    # TODO(synk): rule / replay branches (SpecialLossRule, python set-difference
    # negative mining, replay_matrix index_put, host prints) not translated.
    loss_all = loss_joi + in_loss + out_loss
    return loss_all, joint_emb


# ------------------------------------ main ------------------------------------

if __name__ == "__main__":
    # 128-multiple feature dims keep every last dim lane-dense end to end.
    N, D = 64, 128                    # ent_num, hidden dim (300 in the paper)
    IMG_DIM, REL_DIM, ATT_DIM, FFN = 128, 128, 128, 256
    B = 8                             # train_ill batch of aligned pairs

    key = jax.random.PRNGKey(0)
    k_param, k_img, k_rel, k_att, k_adj = jax.random.split(key, 5)

    params = init_params(k_param, N, D, IMG_DIM, REL_DIM, ATT_DIM, FFN)

    img_raw = jax.random.normal(k_img, (N, IMG_DIM), jnp.float32)
    img_feats = img_raw / jnp.maximum(
        jnp.linalg.norm(img_raw, axis=1, keepdims=True), 1e-12)   # F.normalize(images_list)
    rel_feats = jax.random.normal(k_rel, (N, REL_DIM), jnp.float32)
    att_feats = jax.random.normal(k_att, (N, ATT_DIM), jnp.float32)

    a = (jax.random.uniform(k_adj, (N, N)) < 0.1).astype(jnp.float32)
    a = jnp.maximum(a, a.T) + jnp.eye(N, dtype=jnp.float32)
    adj = a / jnp.sum(a, axis=1, keepdims=True)       # row-normalized dense adjacency

    # batch of aligned entity pairs (left KG ids, right KG ids)
    batch = jnp.stack([jnp.arange(B, dtype=jnp.int32),
                       jnp.arange(N // 2, N // 2 + B, dtype=jnp.int32)], axis=1)

    loss_all, joint_emb = jax.jit(meaformer_forward)(
        params, adj, img_feats, rel_feats, att_feats, batch)
    jax.block_until_ready((loss_all, joint_emb))

    assert joint_emb.shape == (N, 4 * D)
    assert bool(jnp.isfinite(loss_all))
    print("KERNEL_OK")
</pallas_src>

<mosaic_0001>
module attributes {stable_mosaic.version = 11 : i64} {
  func.func @_mm_kernel(%arg0: i32, %arg1: i32, %arg2: i32, %arg3: memref<64x128xbf16, #tpu.memory_space<vmem>>, %arg4: memref<128x128xbf16, #tpu.memory_space<vmem>>, %arg5: memref<64x128xbf16, #tpu.memory_space<vmem>>, %arg6: memref<64x128xf32, #tpu.memory_space<vmem>>) attributes {dimension_semantics = [#tpu.dimension_semantics<parallel>, #tpu.dimension_semantics<parallel>, #tpu.dimension_semantics<arbitrary>], iteration_bounds = array<i64: 1, 1, 1>, scalar_prefetch = 0 : i64, scratch_operands = 1 : i64, tpu.core_type = #tpu.core_type<tc>, window_params = [{transform_indices = @transform_0, window_bounds = array<i64: 64, 128>}, {transform_indices = @transform_1, window_bounds = array<i64: 128, 128>}, {transform_indices = @transform_2, window_bounds = array<i64: 64, 128>}]} {
    %c0_i32 = arith.constant 0 : i32
    %0 = arith.cmpi eq, %arg2, %c0_i32 : i32
    %1 = arith.extui %0 : i1 to i32
    %c0_i32_0 = arith.constant 0 : i32
    %2 = arith.cmpi ne, %1, %c0_i32_0 : i32
    scf.if %2 {
      %cst_10 = arith.constant 0.000000e+00 : f32
      %12 = vector.broadcast %cst_10 : f32 to vector<64x128xf32>
      %c0_11 = arith.constant 0 : index
      %c0_12 = arith.constant 0 : index
      %13 = vector.load %arg6[%c0_11, %c0_12] : memref<64x128xf32, #tpu.memory_space<vmem>>, vector<64x128xf32>
      tpu.vector_store %arg6[%c0_11, %c0_12], %12 {strides = array<i32>} : memref<64x128xf32, #tpu.memory_space<vmem>>, vector<64x128xf32>,
    } else {
    }
    %c0 = arith.constant 0 : index
    %c0_1 = arith.constant 0 : index
    %3 = vector.load %arg3[%c0, %c0_1] : memref<64x128xbf16, #tpu.memory_space<vmem>>, vector<64x128xbf16>
    %c0_2 = arith.constant 0 : index
    %c0_3 = arith.constant 0 : index
    %4 = vector.load %arg4[%c0_2, %c0_3] : memref<128x128xbf16, #tpu.memory_space<vmem>>, vector<128x128xbf16>
    %c0_4 = arith.constant 0 : index
    %c0_5 = arith.constant 0 : index
    %5 = vector.load %arg6[%c0_4, %c0_5] : memref<64x128xf32, #tpu.memory_space<vmem>>, vector<64x128xf32>
    %cst = arith.constant dense<0.000000e+00> : vector<64x128xf32>
    %6 = tpu.matmul %3, %4, %cst {dimension_numbers = #tpu.dot_dimension_numbers<[1], [0], [0], [1], [0, 0, 1, 1], [], []>} : vector<64x128xbf16>, vector<128x128xbf16>, vector<64x128xf32> -> vector<64x128xf32>
    %7 = arith.addf %5, %6 : vector<64x128xf32>
    %c0_6 = arith.constant 0 : index
    %c0_7 = arith.constant 0 : index
    %8 = vector.load %arg6[%c0_6, %c0_7] : memref<64x128xf32, #tpu.memory_space<vmem>>, vector<64x128xf32>
    tpu.vector_store %arg6[%c0_6, %c0_7], %7 {strides = array<i32>} : memref<64x128xf32, #tpu.memory_space<vmem>>, vector<64x128xf32>,
    %c0_i32_8 = arith.constant 0 : i32
    %9 = arith.cmpi eq, %arg2, %c0_i32_8 : i32
    %10 = arith.extui %9 : i1 to i32
    %c0_i32_9 = arith.constant 0 : i32
    %11 = arith.cmpi ne, %10, %c0_i32_9 : i32
    scf.if %11 {
      %c0_10 = arith.constant 0 : index
      %c0_11 = arith.constant 0 : index
      %12 = vector.load %arg6[%c0_10, %c0_11] : memref<64x128xf32, #tpu.memory_space<vmem>>, vector<64x128xf32>
      %13 = arith.truncf %12 : vector<64x128xf32> to vector<64x128xbf16>
      %c0_12 = arith.constant 0 : index
      %c0_13 = arith.constant 0 : index
      %14 = vector.load %arg5[%c0_12, %c0_13] : memref<64x128xbf16, #tpu.memory_space<vmem>>, vector<64x128xbf16>
      tpu.vector_store %arg5[%c0_12, %c0_13], %13 {strides = array<i32>} : memref<64x128xbf16, #tpu.memory_space<vmem>>, vector<64x128xbf16>,
    } else {
    }
    return
  }
  func.func @transform_0(%arg0: i32, %arg1: i32, %arg2: i32) -> (i32, i32) {
    %c0_i32 = arith.constant 0 : i32
    return %arg0, %arg2 : i32, i32
  }
  func.func @transform_1(%arg0: i32, %arg1: i32, %arg2: i32) -> (i32, i32) {
    %c0_i32 = arith.constant 0 : i32
    return %arg2, %arg1 : i32, i32
  }
  func.func @transform_2(%arg0: i32, %arg1: i32, %arg2: i32) -> (i32, i32) {
    %c0_i32 = arith.constant 0 : i32
    return %arg0, %arg1 : i32, i32
  }
}

module attributes {stable_mosaic.version = 11 : i64} {
  func.func @_mm_kernel(%arg0: i32, %arg1: i32, %arg2: i32, %arg3: memref<64x64xbf16, #tpu.memory_space<vmem>>, %arg4: memref<64x128xbf16, #tpu.memory_space<vmem>>, %arg5: memref<64x128xbf16, #tpu.memory_space<vmem>>, %arg6: memref<64x128xf32, #tpu.memory_space<vmem>>) attributes {dimension_semantics = [#tpu.dimension_semantics<parallel>, #tpu.dimension_semantics<parallel>, #tpu.dimension_semantics<arbitrary>], iteration_bounds = array<i64: 1, 1, 1>, scalar_prefetch = 0 : i64, scratch_operands = 1 : i64, tpu.core_type = #tpu.core_type<tc>, window_params = [{transform_indices = @transform_0, window_bounds = array<i64: 64, 64>}, {transform_indices = @transform_1, window_bounds = array<i64: 64, 128>}, {transform_indices = @transform_2, window_bounds = array<i64: 64, 128>}]} {
    %c0_i32 = arith.constant 0 : i32
    %0 = arith.cmpi eq, %arg2, %c0_i32 : i32
    %1 = arith.extui %0 : i1 to i32
    %c0_i32_0 = arith.constant 0 : i32
    %2 = arith.cmpi ne, %1, %c0_i32_0 : i32
    scf.if %2 {
      %cst_10 = arith.constant 0.000000e+00 : f32
      %12 = vector.broadcast %cst_10 : f32 to vector<64x128xf32>
      %c0_11 = arith.constant 0 : index
      %c0_12 = arith.constant 0 : index
      %13 = vector.load %arg6[%c0_11, %c0_12] : memref<64x128xf32, #tpu.memory_space<vmem>>, vector<64x128xf32>
      tpu.vector_store %arg6[%c0_11, %c0_12], %12 {strides = array<i32>} : memref<64x128xf32, #tpu.memory_space<vmem>>, vector<64x128xf32>,
    } else {
    }
    %c0 = arith.constant 0 : index
    %c0_1 = arith.constant 0 : index
    %3 = vector.load %arg3[%c0, %c0_1] : memref<64x64xbf16, #tpu.memory_space<vmem>>, vector<64x64xbf16>
    %c0_2 = arith.constant 0 : index
    %c0_3 = arith.constant 0 : index
    %4 = vector.load %arg4[%c0_2, %c0_3] : memref<64x128xbf16, #tpu.memory_space<vmem>>, vector<64x128xbf16>
    %c0_4 = arith.constant 0 : index
    %c0_5 = arith.constant 0 : index
    %5 = vector.load %arg6[%c0_4, %c0_5] : memref<64x128xf32, #tpu.memory_space<vmem>>, vector<64x128xf32>
    %cst = arith.constant dense<0.000000e+00> : vector<64x128xf32>
    %6 = tpu.matmul %3, %4, %cst {dimension_numbers = #tpu.dot_dimension_numbers<[1], [0], [0], [1], [0, 0, 1, 1], [], []>} : vector<64x64xbf16>, vector<64x128xbf16>, vector<64x128xf32> -> vector<64x128xf32>
    %7 = arith.addf %5, %6 : vector<64x128xf32>
    %c0_6 = arith.constant 0 : index
    %c0_7 = arith.constant 0 : index
    %8 = vector.load %arg6[%c0_6, %c0_7] : memref<64x128xf32, #tpu.memory_space<vmem>>, vector<64x128xf32>
    tpu.vector_store %arg6[%c0_6, %c0_7], %7 {strides = array<i32>} : memref<64x128xf32, #tpu.memory_space<vmem>>, vector<64x128xf32>,
    %c0_i32_8 = arith.constant 0 : i32
    %9 = arith.cmpi eq, %arg2, %c0_i32_8 : i32
    %10 = arith.extui %9 : i1 to i32
    %c0_i32_9 = arith.constant 0 : i32
    %11 = arith.cmpi ne, %10, %c0_i32_9 : i32
    scf.if %11 {
      %c0_10 = arith.constant 0 : index
      %c0_11 = arith.constant 0 : index
      %12 = vector.load %arg6[%c0_10, %c0_11] : memref<64x128xf32, #tpu.memory_space<vmem>>, vector<64x128xf32>
      %cst_12 = arith.constant 0.000000e+00 : f32
      %13 = vector.broadcast %cst_12 : f32 to vector<64x128xf32>
      %14 = arith.maximumf %12, %13 : vector<64x128xf32>
      %15 = arith.truncf %14 : vector<64x128xf32> to vector<64x128xbf16>
      %c0_13 = arith.constant 0 : index
      %c0_14 = arith.constant 0 : index
      %16 = vector.load %arg5[%c0_13, %c0_14] : memref<64x128xbf16, #tpu.memory_space<vmem>>, vector<64x128xbf16>
      tpu.vector_store %arg5[%c0_13, %c0_14], %15 {strides = array<i32>} : memref<64x128xbf16, #tpu.memory_space<vmem>>, vector<64x128xbf16>,
    } else {
    }
    return
  }
  func.func @transform_0(%arg0: i32, %arg1: i32, %arg2: i32) -> (i32, i32) {
    %c0_i32 = arith.constant 0 : i32
    return %arg0, %arg2 : i32, i32
  }
  func.func @transform_1(%arg0: i32, %arg1: i32, %arg2: i32) -> (i32, i32) {
    %c0_i32 = arith.constant 0 : i32
    return %arg2, %arg1 : i32, i32
  }
  func.func @transform_2(%arg0: i32, %arg1: i32, %arg2: i32) -> (i32, i32) {
    %c0_i32 = arith.constant 0 : i32
    return %arg0, %arg1 : i32, i32
  }
}

module attributes {stable_mosaic.version = 11 : i64} {
  func.func @_mm_kernel(%arg0: i32, %arg1: i32, %arg2: i32, %arg3: memref<64x64xbf16, #tpu.memory_space<vmem>>, %arg4: memref<64x128xbf16, #tpu.memory_space<vmem>>, %arg5: memref<64x128xf32, #tpu.memory_space<vmem>>) attributes {dimension_semantics = [#tpu.dimension_semantics<parallel>, #tpu.dimension_semantics<parallel>, #tpu.dimension_semantics<arbitrary>], iteration_bounds = array<i64: 1, 1, 1>, scalar_prefetch = 0 : i64, scratch_operands = 0 : i64, tpu.core_type = #tpu.core_type<tc>, window_params = [{transform_indices = @transform_0, window_bounds = array<i64: 64, 64>}, {transform_indices = @transform_1, window_bounds = array<i64: 64, 128>}, {transform_indices = @transform_2, window_bounds = array<i64: 64, 128>}]} {
    %c0_i32 = arith.constant 0 : i32
    %0 = arith.cmpi eq, %arg2, %c0_i32 : i32
    %1 = arith.extui %0 : i1 to i32
    %c0_i32_0 = arith.constant 0 : i32
    %2 = arith.cmpi ne, %1, %c0_i32_0 : i32
    scf.if %2 {
      %cst_8 = arith.constant 0.000000e+00 : f32
      %9 = vector.broadcast %cst_8 : f32 to vector<64x128xf32>
      %c0_9 = arith.constant 0 : index
      %c0_10 = arith.constant 0 : index
      %10 = vector.load %arg5[%c0_9, %c0_10] : memref<64x128xf32, #tpu.memory_space<vmem>>, vector<64x128xf32>
      tpu.vector_store %arg5[%c0_9, %c0_10], %9 {strides = array<i32>} : memref<64x128xf32, #tpu.memory_space<vmem>>, vector<64x128xf32>,
    } else {
    }
    %c0 = arith.constant 0 : index
    %c0_1 = arith.constant 0 : index
    %3 = vector.load %arg3[%c0, %c0_1] : memref<64x64xbf16, #tpu.memory_space<vmem>>, vector<64x64xbf16>
    %c0_2 = arith.constant 0 : index
    %c0_3 = arith.constant 0 : index
    %4 = vector.load %arg4[%c0_2, %c0_3] : memref<64x128xbf16, #tpu.memory_space<vmem>>, vector<64x128xbf16>
    %c0_4 = arith.constant 0 : index
    %c0_5 = arith.constant 0 : index
    %5 = vector.load %arg5[%c0_4, %c0_5] : memref<64x128xf32, #tpu.memory_space<vmem>>, vector<64x128xf32>
    %cst = arith.constant dense<0.000000e+00> : vector<64x128xf32>
    %6 = tpu.matmul %3, %4, %cst {dimension_numbers = #tpu.dot_dimension_numbers<[1], [0], [0], [1], [0, 0, 1, 1], [], []>} : vector<64x64xbf16>, vector<64x128xbf16>, vector<64x128xf32> -> vector<64x128xf32>
    %7 = arith.addf %5, %6 : vector<64x128xf32>
    %c0_6 = arith.constant 0 : index
    %c0_7 = arith.constant 0 : index
    %8 = vector.load %arg5[%c0_6, %c0_7] : memref<64x128xf32, #tpu.memory_space<vmem>>, vector<64x128xf32>
    tpu.vector_store %arg5[%c0_6, %c0_7], %7 {strides = array<i32>} : memref<64x128xf32, #tpu.memory_space<vmem>>, vector<64x128xf32>,
    return
  }
  func.func @transform_0(%arg0: i32, %arg1: i32, %arg2: i32) -> (i32, i32) {
    %c0_i32 = arith.constant 0 : i32
    return %arg0, %arg2 : i32, i32
  }
  func.func @transform_1(%arg0: i32, %arg1: i32, %arg2: i32) -> (i32, i32) {
    %c0_i32 = arith.constant 0 : i32
    return %arg2, %arg1 : i32, i32
  }
  func.func @transform_2(%arg0: i32, %arg1: i32, %arg2: i32) -> (i32, i32) {
    %c0_i32 = arith.constant 0 : i32
    return %arg0, %arg1 : i32, i32
  }
}

module attributes {stable_mosaic.version = 11 : i64} {
  func.func @_mm_kernel(%arg0: i32, %arg1: i32, %arg2: i32, %arg3: memref<64x128xbf16, #tpu.memory_space<vmem>>, %arg4: memref<128x128xbf16, #tpu.memory_space<vmem>>, %arg5: memref<1x128xf32, #tpu.memory_space<vmem>>, %arg6: memref<64x128xf32, #tpu.memory_space<vmem>>) attributes {dimension_semantics = [#tpu.dimension_semantics<parallel>, #tpu.dimension_semantics<parallel>, #tpu.dimension_semantics<arbitrary>], iteration_bounds = array<i64: 1, 1, 1>, scalar_prefetch = 0 : i64, scratch_operands = 0 : i64, tpu.core_type = #tpu.core_type<tc>, window_params = [{transform_indices = @transform_0, window_bounds = array<i64: 64, 128>}, {transform_indices = @transform_1, window_bounds = array<i64: 128, 128>}, {transform_indices = @transform_2, window_bounds = array<i64: 1, 128>}, {transform_indices = @transform_3, window_bounds = array<i64: 64, 128>}]} {
    %c0_i32 = arith.constant 0 : i32
    %0 = arith.cmpi eq, %arg2, %c0_i32 : i32
    %1 = arith.extui %0 : i1 to i32
    %c0_i32_0 = arith.constant 0 : i32
    %2 = arith.cmpi ne, %1, %c0_i32_0 : i32
    scf.if %2 {
      %cst_10 = arith.constant 0.000000e+00 : f32
      %12 = vector.broadcast %cst_10 : f32 to vector<64x128xf32>
      %c0_11 = arith.constant 0 : index
      %c0_12 = arith.constant 0 : index
      %13 = vector.load %arg6[%c0_11, %c0_12] : memref<64x128xf32, #tpu.memory_space<vmem>>, vector<64x128xf32>
      tpu.vector_store %arg6[%c0_11, %c0_12], %12 {strides = array<i32>} : memref<64x128xf32, #tpu.memory_space<vmem>>, vector<64x128xf32>,
    } else {
    }
    %c0 = arith.constant 0 : index
    %c0_1 = arith.constant 0 : index
    %3 = vector.load %arg3[%c0, %c0_1] : memref<64x128xbf16, #tpu.memory_space<vmem>>, vector<64x128xbf16>
    %c0_2 = arith.constant 0 : index
    %c0_3 = arith.constant 0 : index
    %4 = vector.load %arg4[%c0_2, %c0_3] : memref<128x128xbf16, #tpu.memory_space<vmem>>, vector<128x128xbf16>
    %c0_4 = arith.constant 0 : index
    %c0_5 = arith.constant 0 : index
    %5 = vector.load %arg6[%c0_4, %c0_5] : memref<64x128xf32, #tpu.memory_space<vmem>>, vector<64x128xf32>
    %cst = arith.constant dense<0.000000e+00> : vector<64x128xf32>
    %6 = tpu.matmul %3, %4, %cst {dimension_numbers = #tpu.dot_dimension_numbers<[1], [0], [0], [1], [0, 0, 1, 1], [], []>} : vector<64x128xbf16>, vector<128x128xbf16>, vector<64x128xf32> -> vector<64x128xf32>
    %7 = arith.addf %5, %6 : vector<64x128xf32>
    %c0_6 = arith.constant 0 : index
    %c0_7 = arith.constant 0 : index
    %8 = vector.load %arg6[%c0_6, %c0_7] : memref<64x128xf32, #tpu.memory_space<vmem>>, vector<64x128xf32>
    tpu.vector_store %arg6[%c0_6, %c0_7], %7 {strides = array<i32>} : memref<64x128xf32, #tpu.memory_space<vmem>>, vector<64x128xf32>,
    %c0_i32_8 = arith.constant 0 : i32
    %9 = arith.cmpi eq, %arg2, %c0_i32_8 : i32
    %10 = arith.extui %9 : i1 to i32
    %c0_i32_9 = arith.constant 0 : i32
    %11 = arith.cmpi ne, %10, %c0_i32_9 : i32
    scf.if %11 {
      %c0_10 = arith.constant 0 : index
      %c0_11 = arith.constant 0 : index
      %12 = vector.load %arg6[%c0_10, %c0_11] : memref<64x128xf32, #tpu.memory_space<vmem>>, vector<64x128xf32>
      %c0_12 = arith.constant 0 : index
      %c0_13 = arith.constant 0 : index
      %13 = vector.load %arg5[%c0_12, %c0_13] : memref<1x128xf32, #tpu.memory_space<vmem>>, vector<1x128xf32>
      %14 = vector.broadcast %13 : vector<1x128xf32> to vector<64x128xf32>
      %15 = arith.addf %12, %14 : vector<64x128xf32>
      %c0_14 = arith.constant 0 : index
      %c0_15 = arith.constant 0 : index
      %16 = vector.load %arg6[%c0_14, %c0_15] : memref<64x128xf32, #tpu.memory_space<vmem>>, vector<64x128xf32>
      tpu.vector_store %arg6[%c0_14, %c0_15], %15 {strides = array<i32>} : memref<64x128xf32, #tpu.memory_space<vmem>>, vector<64x128xf32>,
    } else {
    }
    return
  }
  func.func @transform_0(%arg0: i32, %arg1: i32, %arg2: i32) -> (i32, i32) {
    %c0_i32 = arith.constant 0 : i32
    return %arg0, %arg2 : i32, i32
  }
  func.func @transform_1(%arg0: i32, %arg1: i32, %arg2: i32) -> (i32, i32) {
    %c0_i32 = arith.constant 0 : i32
    return %arg2, %arg1 : i32, i32
  }
  func.func @transform_2(%arg0: i32, %arg1: i32, %arg2: i32) -> (i32, i32) {
    %c0_i32 = arith.constant 0 : i32
    %c0_i32_0 = arith.constant 0 : i32
    return %c0_i32, %arg1 : i32, i32
  }
  func.func @transform_3(%arg0: i32, %arg1: i32, %arg2: i32) -> (i32, i32) {
    %c0_i32 = arith.constant 0 : i32
    return %arg0, %arg1 : i32, i32
  }
}

module attributes {stable_mosaic.version = 11 : i64} {
  func.func @_fusion_kernel(%arg0: i32, %arg1: memref<64x128xf32, #tpu.memory_space<vmem>>, %arg2: memref<64x128xf32, #tpu.memory_space<vmem>>, %arg3: memref<64x128xf32, #tpu.memory_space<vmem>>, %arg4: memref<64x128xf32, #tpu.memory_space<vmem>>, %arg5: memref<128x384xbf16, #tpu.memory_space<vmem>>, %arg6: memref<128x128xbf16, #tpu.memory_space<vmem>>, %arg7: memref<1x128xf32, #tpu.memory_space<vmem>>, %arg8: memref<1x128xf32, #tpu.memory_space<vmem>>, %arg9: memref<128x256xbf16, #tpu.memory_space<vmem>>, %arg10: memref<1x256xf32, #tpu.memory_space<vmem>>, %arg11: memref<256x128xbf16, #tpu.memory_space<vmem>>, %arg12: memref<1x128xf32, #tpu.memory_space<vmem>>, %arg13: memref<1x128xf32, #tpu.memory_space<vmem>>, %arg14: memref<1x128xf32, #tpu.memory_space<vmem>>, %arg15: memref<64x512xf32, #tpu.memory_space<vmem>>, %arg16: memref<64x512xf32, #tpu.memory_space<vmem>>) attributes {dimension_semantics = [#tpu.dimension_semantics<parallel>], iteration_bounds = array<i64: 1>, scalar_prefetch = 0 : i64, scratch_operands = 0 : i64, tpu.core_type = #tpu.core_type<tc>, window_params = [{transform_indices = @transform_0, window_bounds = array<i64: 64, 128>}, {transform_indices = @transform_1, window_bounds = array<i64: 64, 128>}, {transform_indices = @transform_2, window_bounds = array<i64: 64, 128>}, {transform_indices = @transform_3, window_bounds = array<i64: 64, 128>}, {pipeline_mode = #tpu.pipeline_mode<synchronous>, transform_indices = @transform_4, window_bounds = array<i64: 128, 384>}, {pipeline_mode = #tpu.pipeline_mode<synchronous>, transform_indices = @transform_5, window_bounds = array<i64: 128, 128>}, {pipeline_mode = #tpu.pipeline_mode<synchronous>, transform_indices = @transform_6, window_bounds = array<i64: 1, 128>}, {pipeline_mode = #tpu.pipeline_mode<synchronous>, transform_indices = @transform_7, window_bounds = array<i64: 1, 128>}, {pipeline_mode = #tpu.pipeline_mode<synchronous>, transform_indices = @transform_8, window_bounds = array<i64: 128, 256>}, {pipeline_mode = #tpu.pipeline_mode<synchronous>, transform_indices = @transform_9, window_bounds = array<i64: 1, 256>}, {pipeline_mode = #tpu.pipeline_mode<synchronous>, transform_indices = @transform_10, window_bounds = array<i64: 256, 128>}, {pipeline_mode = #tpu.pipeline_mode<synchronous>, transform_indices = @transform_11, window_bounds = array<i64: 1, 128>}, {pipeline_mode = #tpu.pipeline_mode<synchronous>, transform_indices = @transform_12, window_bounds = array<i64: 1, 128>}, {pipeline_mode = #tpu.pipeline_mode<synchronous>, transform_indices = @transform_13, window_bounds = array<i64: 1, 128>}, {transform_indices = @transform_14, window_bounds = array<i64: 64, 512>}, {transform_indices = @transform_15, window_bounds = array<i64: 64, 512>}]} {
    %c0 = arith.constant 0 : index
    %c0_0 = arith.constant 0 : index
    %0 = vector.load %arg1[%c0, %c0_0] : memref<64x128xf32, #tpu.memory_space<vmem>>, vector<64x128xf32>
    %c0_1 = arith.constant 0 : index
    %c0_2 = arith.constant 0 : index
    %1 = vector.load %arg2[%c0_1, %c0_2] : memref<64x128xf32, #tpu.memory_space<vmem>>, vector<64x128xf32>
    %c0_3 = arith.constant 0 : index
    %c0_4 = arith.constant 0 : index
    %2 = vector.load %arg3[%c0_3, %c0_4] : memref<64x128xf32, #tpu.memory_space<vmem>>, vector<64x128xf32>
    %c0_5 = arith.constant 0 : index
    %c0_6 = arith.constant 0 : index
    %3 = vector.load %arg4[%c0_5, %c0_6] : memref<64x128xf32, #tpu.memory_space<vmem>>, vector<64x128xf32>
    %4 = tpu.concatenate %0, %1, %2, %3 in 0 : vector<64x128xf32>, vector<64x128xf32>, vector<64x128xf32>, vector<64x128xf32> -> vector<256x128xf32>
    %5 = arith.truncf %4 : vector<256x128xf32> to vector<256x128xbf16>
    %c0_7 = arith.constant 0 : index
    %c0_8 = arith.constant 0 : index
    %6 = vector.load %arg5[%c0_7, %c0_8] : memref<128x384xbf16, #tpu.memory_space<vmem>>, vector<128x384xbf16>
    %cst = arith.constant dense<0.000000e+00> : vector<256x384xf32>
    %7 = tpu.matmul %5, %6, %cst {dimension_numbers = #tpu.dot_dimension_numbers<[1], [0], [0], [1], [0, 0, 1, 1], [], []>} : vector<256x128xbf16>, vector<128x384xbf16>, vector<256x384xf32> -> vector<256x384xf32>
    %8 = arith.truncf %7 : vector<256x384xf32> to vector<256x384xbf16>
    %9 = vector.extract_strided_slice %8 {offsets = [0, 0], sizes = [64, 128], strides = [1, 1]} : vector<256x384xbf16> to vector<64x128xbf16>
    %10 = vector.extract_strided_slice %8 {offsets = [64, 0], sizes = [64, 128], strides = [1, 1]} : vector<256x384xbf16> to vector<64x128xbf16>
    %11 = vector.extract_strided_slice %8 {offsets = [128, 0], sizes = [64, 128], strides = [1, 1]} : vector<256x384xbf16> to vector<64x128xbf16>
    %12 = vector.extract_strided_slice %8 {offsets = [192, 0], sizes = [64, 128], strides = [1, 1]} : vector<256x384xbf16> to vector<64x128xbf16>
    %13 = vector.extract_strided_slice %8 {offsets = [0, 128], sizes = [64, 128], strides = [1, 1]} : vector<256x384xbf16> to vector<64x128xbf16>
    %14 = vector.extract_strided_slice %8 {offsets = [64, 128], sizes = [64, 128], strides = [1, 1]} : vector<256x384xbf16> to vector<64x128xbf16>
    %15 = vector.extract_strided_slice %8 {offsets = [128, 128], sizes = [64, 128], strides = [1, 1]} : vector<256x384xbf16> to vector<64x128xbf16>
    %16 = vector.extract_strided_slice %8 {offsets = [192, 128], sizes = [64, 128], strides = [1, 1]} : vector<256x384xbf16> to vector<64x128xbf16>
    %17 = vector.extract_strided_slice %8 {offsets = [0, 256], sizes = [64, 128], strides = [1, 1]} : vector<256x384xbf16> to vector<64x128xbf16>
    %18 = vector.extract_strided_slice %8 {offsets = [64, 256], sizes = [64, 128], strides = [1, 1]} : vector<256x384xbf16> to vector<64x128xbf16>
    %19 = vector.extract_strided_slice %8 {offsets = [128, 256], sizes = [64, 128], strides = [1, 1]} : vector<256x384xbf16> to vector<64x128xbf16>
    %20 = vector.extract_strided_slice %8 {offsets = [192, 256], sizes = [64, 128], strides = [1, 1]} : vector<256x384xbf16> to vector<64x128xbf16>
    %21 = arith.extf %9 : vector<64x128xbf16> to vector<64x128xf32>
    %22 = arith.extf %13 : vector<64x128xbf16> to vector<64x128xf32>
    %23 = arith.mulf %21, %22 : vector<64x128xf32>
    %cst_9 = arith.constant dense<0.000000e+00> : vector<64xf32>
    %24 = vector.multi_reduction <add>, %23, %cst_9 [1] : vector<64x128xf32> to vector<64xf32>
    %25 = vector.shape_cast %24 : vector<64xf32> to vector<64x1xf32>
    %cst_10 = arith.constant 0.0883883461 : f32
    %26 = vector.broadcast %cst_10 : f32 to vector<64x1xf32>
    %27 = arith.mulf %26, %25 : vector<64x1xf32>
    %28 = arith.extf %9 : vector<64x128xbf16> to vector<64x128xf32>
    %29 = arith.extf %14 : vector<64x128xbf16> to vector<64x128xf32>
    %30 = arith.mulf %28, %29 : vector<64x128xf32>
    %cst_11 = arith.constant dense<0.000000e+00> : vector<64xf32>
    %31 = vector.multi_reduction <add>, %30, %cst_11 [1] : vector<64x128xf32> to vector<64xf32>
    %32 = vector.shape_cast %31 : vector<64xf32> to vector<64x1xf32>
    %cst_12 = arith.constant 0.0883883461 : f32
    %33 = vector.broadcast %cst_12 : f32 to vector<64x1xf32>
    %34 = arith.mulf %33, %32 : vector<64x1xf32>
    %35 = arith.extf %9 : vector<64x128xbf16> to vector<64x128xf32>
    %36 = arith.extf %15 : vector<64x128xbf16> to vector<64x128xf32>
    %37 = arith.mulf %35, %36 : vector<64x128xf32>
    %cst_13 = arith.constant dense<0.000000e+00> : vector<64xf32>
    %38 = vector.multi_reduction <add>, %37, %cst_13 [1] : vector<64x128xf32> to vector<64xf32>
    %39 = vector.shape_cast %38 : vector<64xf32> to vector<64x1xf32>
    %cst_14 = arith.constant 0.0883883461 : f32
    %40 = vector.broadcast %cst_14 : f32 to vector<64x1xf32>
    %41 = arith.mulf %40, %39 : vector<64x1xf32>
    %42 = arith.extf %9 : vector<64x128xbf16> to vector<64x128xf32>
    %43 = arith.extf %16 : vector<64x128xbf16> to vector<64x128xf32>
    %44 = arith.mulf %42, %43 : vector<64x128xf32>
    %cst_15 = arith.constant dense<0.000000e+00> : vector<64xf32>
    %45 = vector.multi_reduction <add>, %44, %cst_15 [1] : vector<64x128xf32> to vector<64xf32>
    %46 = vector.shape_cast %45 : vector<64xf32> to vector<64x1xf32>
    %cst_16 = arith.constant 0.0883883461 : f32
    %47 = vector.broadcast %cst_16 : f32 to vector<64x1xf32>
    %48 = arith.mulf %47, %46 : vector<64x1xf32>
    %49 = arith.maximumf %27, %34 : vector<64x1xf32>
    %50 = arith.maximumf %41, %48 : vector<64x1xf32>
    %51 = arith.maximumf %49, %50 : vector<64x1xf32>
    %52 = arith.subf %27, %51 : vector<64x1xf32>
    %53 = math.exp %52 : vector<64x1xf32>
    %54 = arith.subf %34, %51 : vector<64x1xf32>
    %55 = math.exp %54 : vector<64x1xf32>
    %56 = arith.subf %41, %51 : vector<64x1xf32>
    %57 = math.exp %56 : vector<64x1xf32>
    %58 = arith.subf %48, %51 : vector<64x1xf32>
    %59 = math.exp %58 : vector<64x1xf32>
    %60 = arith.addf %53, %55 : vector<64x1xf32>
    %61 = arith.addf %60, %57 : vector<64x1xf32>
    %62 = arith.addf %61, %59 : vector<64x1xf32>
    %63 = tpu.reciprocal %62 {approx = true} : vector<64x1xf32> -> vector<64x1xf32>
    %64 = arith.mulf %53, %63 : vector<64x1xf32>
    %65 = arith.mulf %55, %63 : vector<64x1xf32>
    %66 = arith.mulf %57, %63 : vector<64x1xf32>
    %67 = arith.mulf %59, %63 : vector<64x1xf32>
    %68 = arith.extf %10 : vector<64x128xbf16> to vector<64x128xf32>
    %69 = arith.extf %13 : vector<64x128xbf16> to vector<64x128xf32>
    %70 = arith.mulf %68, %69 : vector<64x128xf32>
    %cst_17 = arith.constant dense<0.000000e+00> : vector<64xf32>
    %71 = vector.multi_reduction <add>, %70, %cst_17 [1] : vector<64x128xf32> to vector<64xf32>
    %72 = vector.shape_cast %71 : vector<64xf32> to vector<64x1xf32>
    %cst_18 = arith.constant 0.0883883461 : f32
    %73 = vector.broadcast %cst_18 : f32 to vector<64x1xf32>
    %74 = arith.mulf %73, %72 : vector<64x1xf32>
    %75 = arith.extf %10 : vector<64x128xbf16> to vector<64x128xf32>
    %76 = arith.extf %14 : vector<64x128xbf16> to vector<64x128xf32>
    %77 = arith.mulf %75, %76 : vector<64x128xf32>
    %cst_19 = arith.constant dense<0.000000e+00> : vector<64xf32>
    %78 = vector.multi_reduction <add>, %77, %cst_19 [1] : vector<64x128xf32> to vector<64xf32>
    %79 = vector.shape_cast %78 : vector<64xf32> to vector<64x1xf32>
    %cst_20 = arith.constant 0.0883883461 : f32
    %80 = vector.broadcast %cst_20 : f32 to vector<64x1xf32>
    %81 = arith.mulf %80, %79 : vector<64x1xf32>
    %82 = arith.extf %10 : vector<64x128xbf16> to vector<64x128xf32>
    %83 = arith.extf %15 : vector<64x128xbf16> to vector<64x128xf32>
    %84 = arith.mulf %82, %83 : vector<64x128xf32>
    %cst_21 = arith.constant dense<0.000000e+00> : vector<64xf32>
    %85 = vector.multi_reduction <add>, %84, %cst_21 [1] : vector<64x128xf32> to vector<64xf32>
    %86 = vector.shape_cast %85 : vector<64xf32> to vector<64x1xf32>
    %cst_22 = arith.constant 0.0883883461 : f32
    %87 = vector.broadcast %cst_22 : f32 to vector<64x1xf32>
    %88 = arith.mulf %87, %86 : vector<64x1xf32>
    %89 = arith.extf %10 : vector<64x128xbf16> to vector<64x128xf32>
    %90 = arith.extf %16 : vector<64x128xbf16> to vector<64x128xf32>
    %91 = arith.mulf %89, %90 : vector<64x128xf32>
    %cst_23 = arith.constant dense<0.000000e+00> : vector<64xf32>
    %92 = vector.multi_reduction <add>, %91, %cst_23 [1] : vector<64x128xf32> to vector<64xf32>
    %93 = vector.shape_cast %92 : vector<64xf32> to vector<64x1xf32>
    %cst_24 = arith.constant 0.0883883461 : f32
    %94 = vector.broadcast %cst_24 : f32 to vector<64x1xf32>
    %95 = arith.mulf %94, %93 : vector<64x1xf32>
    %96 = arith.maximumf %74, %81 : vector<64x1xf32>
    %97 = arith.maximumf %88, %95 : vector<64x1xf32>
    %98 = arith.maximumf %96, %97 : vector<64x1xf32>
    %99 = arith.subf %74, %98 : vector<64x1xf32>
    %100 = math.exp %99 : vector<64x1xf32>
    %101 = arith.subf %81, %98 : vector<64x1xf32>
    %102 = math.exp %101 : vector<64x1xf32>
    %103 = arith.subf %88, %98 : vector<64x1xf32>
    %104 = math.exp %103 : vector<64x1xf32>
    %105 = arith.subf %95, %98 : vector<64x1xf32>
    %106 = math.exp %105 : vector<64x1xf32>
    %107 = arith.addf %100, %102 : vector<64x1xf32>
    %108 = arith.addf %107, %104 : vector<64x1xf32>
    %109 = arith.addf %108, %106 : vector<64x1xf32>
    %110 = tpu.reciprocal %109 {approx = true} : vector<64x1xf32> -> vector<64x1xf32>
    %111 = arith.mulf %100, %110 : vector<64x1xf32>
    %112 = arith.mulf %102, %110 : vector<64x1xf32>
    %113 = arith.mulf %104, %110 : vector<64x1xf32>
    %114 = arith.mulf %106, %110 : vector<64x1xf32>
    %115 = arith.extf %11 : vector<64x128xbf16> to vector<64x128xf32>
    %116 = arith.extf %13 : vector<64x128xbf16> to vector<64x128xf32>
    %117 = arith.mulf %115, %116 : vector<64x128xf32>
    %cst_25 = arith.constant dense<0.000000e+00> : vector<64xf32>
    %118 = vector.multi_reduction <add>, %117, %cst_25 [1] : vector<64x128xf32> to vector<64xf32>
    %119 = vector.shape_cast %118 : vector<64xf32> to vector<64x1xf32>
    %cst_26 = arith.constant 0.0883883461 : f32
    %120 = vector.broadcast %cst_26 : f32 to vector<64x1xf32>
    %121 = arith.mulf %120, %119 : vector<64x1xf32>
    %122 = arith.extf %11 : vector<64x128xbf16> to vector<64x128xf32>
    %123 = arith.extf %14 : vector<64x128xbf16> to vector<64x128xf32>
    %124 = arith.mulf %122, %123 : vector<64x128xf32>
    %cst_27 = arith.constant dense<0.000000e+00> : vector<64xf32>
    %125 = vector.multi_reduction <add>, %124, %cst_27 [1] : vector<64x128xf32> to vector<64xf32>
    %126 = vector.shape_cast %125 : vector<64xf32> to vector<64x1xf32>
    %cst_28 = arith.constant 0.0883883461 : f32
    %127 = vector.broadcast %cst_28 : f32 to vector<64x1xf32>
    %128 = arith.mulf %127, %126 : vector<64x1xf32>
    %129 = arith.extf %11 : vector<64x128xbf16> to vector<64x128xf32>
    %130 = arith.extf %15 : vector<64x128xbf16> to vector<64x128xf32>
    %131 = arith.mulf %129, %130 : vector<64x128xf32>
    %cst_29 = arith.constant dense<0.000000e+00> : vector<64xf32>
    %132 = vector.multi_reduction <add>, %131, %cst_29 [1] : vector<64x128xf32> to vector<64xf32>
    %133 = vector.shape_cast %132 : vector<64xf32> to vector<64x1xf32>
    %cst_30 = arith.constant 0.0883883461 : f32
    %134 = vector.broadcast %cst_30 : f32 to vector<64x1xf32>
    %135 = arith.mulf %134, %133 : vector<64x1xf32>
    %136 = arith.extf %11 : vector<64x128xbf16> to vector<64x128xf32>
    %137 = arith.extf %16 : vector<64x128xbf16> to vector<64x128xf32>
    %138 = arith.mulf %136, %137 : vector<64x128xf32>
    %cst_31 = arith.constant dense<0.000000e+00> : vector<64xf32>
    %139 = vector.multi_reduction <add>, %138, %cst_31 [1] : vector<64x128xf32> to vector<64xf32>
    %140 = vector.shape_cast %139 : vector<64xf32> to vector<64x1xf32>
    %cst_32 = arith.constant 0.0883883461 : f32
    %141 = vector.broadcast %cst_32 : f32 to vector<64x1xf32>
    %142 = arith.mulf %141, %140 : vector<64x1xf32>
    %143 = arith.maximumf %121, %128 : vector<64x1xf32>
    %144 = arith.maximumf %135, %142 : vector<64x1xf32>
    %145 = arith.maximumf %143, %144 : vector<64x1xf32>
    %146 = arith.subf %121, %145 : vector<64x1xf32>
    %147 = math.exp %146 : vector<64x1xf32>
    %148 = arith.subf %128, %145 : vector<64x1xf32>
    %149 = math.exp %148 : vector<64x1xf32>
    %150 = arith.subf %135, %145 : vector<64x1xf32>
    %151 = math.exp %150 : vector<64x1xf32>
    %152 = arith.subf %142, %145 : vector<64x1xf32>
    %153 = math.exp %152 : vector<64x1xf32>
    %154 = arith.addf %147, %149 : vector<64x1xf32>
    %155 = arith.addf %154, %151 : vector<64x1xf32>
    %156 = arith.addf %155, %153 : vector<64x1xf32>
    %157 = tpu.reciprocal %156 {approx = true} : vector<64x1xf32> -> vector<64x1xf32>
    %158 = arith.mulf %147, %157 : vector<64x1xf32>
    %159 = arith.mulf %149, %157 : vector<64x1xf32>
    %160 = arith.mulf %151, %157 : vector<64x1xf32>
    %161 = arith.mulf %153, %157 : vector<64x1xf32>
    %162 = arith.extf %12 : vector<64x128xbf16> to vector<64x128xf32>
    %163 = arith.extf %13 : vector<64x128xbf16> to vector<64x128xf32>
    %164 = arith.mulf %162, %163 : vector<64x128xf32>
    %cst_33 = arith.constant dense<0.000000e+00> : vector<64xf32>
    %165 = vector.multi_reduction <add>, %164, %cst_33 [1] : vector<64x128xf32> to vector<64xf32>
    %166 = vector.shape_cast %165 : vector<64xf32> to vector<64x1xf32>
    %cst_34 = arith.constant 0.0883883461 : f32
    %167 = vector.broadcast %cst_34 : f32 to vector<64x1xf32>
    %168 = arith.mulf %167, %166 : vector<64x1xf32>
    %169 = arith.extf %12 : vector<64x128xbf16> to vector<64x128xf32>
    %170 = arith.extf %14 : vector<64x128xbf16> to vector<64x128xf32>
    %171 = arith.mulf %169, %170 : vector<64x128xf32>
    %cst_35 = arith.constant dense<0.000000e+00> : vector<64xf32>
    %172 = vector.multi_reduction <add>, %171, %cst_35 [1] : vector<64x128xf32> to vector<64xf32>
    %173 = vector.shape_cast %172 : vector<64xf32> to vector<64x1xf32>
    %cst_36 = arith.constant 0.0883883461 : f32
    %174 = vector.broadcast %cst_36 : f32 to vector<64x1xf32>
    %175 = arith.mulf %174, %173 : vector<64x1xf32>
    %176 = arith.extf %12 : vector<64x128xbf16> to vector<64x128xf32>
    %177 = arith.extf %15 : vector<64x128xbf16> to vector<64x128xf32>
    %178 = arith.mulf %176, %177 : vector<64x128xf32>
    %cst_37 = arith.constant dense<0.000000e+00> : vector<64xf32>
    %179 = vector.multi_reduction <add>, %178, %cst_37 [1] : vector<64x128xf32> to vector<64xf32>
    %180 = vector.shape_cast %179 : vector<64xf32> to vector<64x1xf32>
    %cst_38 = arith.constant 0.0883883461 : f32
    %181 = vector.broadcast %cst_38 : f32 to vector<64x1xf32>
    %182 = arith.mulf %181, %180 : vector<64x1xf32>
    %183 = arith.extf %12 : vector<64x128xbf16> to vector<64x128xf32>
    %184 = arith.extf %16 : vector<64x128xbf16> to vector<64x128xf32>
    %185 = arith.mulf %183, %184 : vector<64x128xf32>
    %cst_39 = arith.constant dense<0.000000e+00> : vector<64xf32>
    %186 = vector.multi_reduction <add>, %185, %cst_39 [1] : vector<64x128xf32> to vector<64xf32>
    %187 = vector.shape_cast %186 : vector<64xf32> to vector<64x1xf32>
    %cst_40 = arith.constant 0.0883883461 : f32
    %188 = vector.broadcast %cst_40 : f32 to vector<64x1xf32>
    %189 = arith.mulf %188, %187 : vector<64x1xf32>
    %190 = arith.maximumf %168, %175 : vector<64x1xf32>
    %191 = arith.maximumf %182, %189 : vector<64x1xf32>
    %192 = arith.maximumf %190, %191 : vector<64x1xf32>
    %193 = arith.subf %168, %192 : vector<64x1xf32>
    %194 = math.exp %193 : vector<64x1xf32>
    %195 = arith.subf %175, %192 : vector<64x1xf32>
    %196 = math.exp %195 : vector<64x1xf32>
    %197 = arith.subf %182, %192 : vector<64x1xf32>
    %198 = math.exp %197 : vector<64x1xf32>
    %199 = arith.subf %189, %192 : vector<64x1xf32>
    %200 = math.exp %199 : vector<64x1xf32>
    %201 = arith.addf %194, %196 : vector<64x1xf32>
    %202 = arith.addf %201, %198 : vector<64x1xf32>
    %203 = arith.addf %202, %200 : vector<64x1xf32>
    %204 = tpu.reciprocal %203 {approx = true} : vector<64x1xf32> -> vector<64x1xf32>
    %205 = arith.mulf %194, %204 : vector<64x1xf32>
    %206 = arith.mulf %196, %204 : vector<64x1xf32>
    %207 = arith.mulf %198, %204 : vector<64x1xf32>
    %208 = arith.mulf %200, %204 : vector<64x1xf32>
    %209 = arith.addf %64, %111 : vector<64x1xf32>
    %210 = arith.addf %209, %158 : vector<64x1xf32>
    %211 = arith.addf %210, %205 : vector<64x1xf32>
    %cst_41 = arith.constant 2.500000e-01 : f32
    %212 = vector.broadcast %cst_41 : f32 to vector<64x1xf32>
    %213 = arith.mulf %211, %212 : vector<64x1xf32>
    %214 = arith.addf %65, %112 : vector<64x1xf32>
    %215 = arith.addf %214, %159 : vector<64x1xf32>
    %216 = arith.addf %215, %206 : vector<64x1xf32>
    %cst_42 = arith.constant 2.500000e-01 : f32
    %217 = vector.broadcast %cst_42 : f32 to vector<64x1xf32>
    %218 = arith.mulf %216, %217 : vector<64x1xf32>
    %219 = arith.addf %66, %113 : vector<64x1xf32>
    %220 = arith.addf %219, %160 : vector<64x1xf32>
    %221 = arith.addf %220, %207 : vector<64x1xf32>
    %cst_43 = arith.constant 2.500000e-01 : f32
    %222 = vector.broadcast %cst_43 : f32 to vector<64x1xf32>
    %223 = arith.mulf %221, %222 : vector<64x1xf32>
    %224 = arith.addf %67, %114 : vector<64x1xf32>
    %225 = arith.addf %224, %161 : vector<64x1xf32>
    %226 = arith.addf %225, %208 : vector<64x1xf32>
    %cst_44 = arith.constant 2.500000e-01 : f32
    %227 = vector.broadcast %cst_44 : f32 to vector<64x1xf32>
    %228 = arith.mulf %226, %227 : vector<64x1xf32>
    %229 = arith.maximumf %213, %218 : vector<64x1xf32>
    %230 = arith.maximumf %223, %228 : vector<64x1xf32>
    %231 = arith.maximumf %229, %230 : vector<64x1xf32>
    %232 = arith.subf %213, %231 : vector<64x1xf32>
    %233 = math.exp %232 : vector<64x1xf32>
    %234 = arith.subf %218, %231 : vector<64x1xf32>
    %235 = math.exp %234 : vector<64x1xf32>
    %236 = arith.subf %223, %231 : vector<64x1xf32>
    %237 = math.exp %236 : vector<64x1xf32>
    %238 = arith.subf %228, %231 : vector<64x1xf32>
    %239 = math.exp %238 : vector<64x1xf32>
    %240 = arith.addf %233, %235 : vector<64x1xf32>
    %241 = arith.addf %240, %237 : vector<64x1xf32>
    %242 = arith.addf %241, %239 : vector<64x1xf32>
    %243 = tpu.reciprocal %242 {approx = true} : vector<64x1xf32> -> vector<64x1xf32>
    %244 = arith.mulf %233, %243 : vector<64x1xf32>
    %245 = arith.mulf %235, %243 : vector<64x1xf32>
    %246 = arith.mulf %237, %243 : vector<64x1xf32>
    %247 = arith.mulf %239, %243 : vector<64x1xf32>
    %248 = arith.extf %17 : vector<64x128xbf16> to vector<64x128xf32>
    %249 = vector.broadcast %64 : vector<64x1xf32> to vector<64x128xf32>
    %250 = arith.mulf %249, %248 : vector<64x128xf32>
    %251 = arith.extf %18 : vector<64x128xbf16> to vector<64x128xf32>
    %252 = vector.broadcast %65 : vector<64x1xf32> to vector<64x128xf32>
    %253 = arith.mulf %252, %251 : vector<64x128xf32>
    %254 = arith.addf %250, %253 : vector<64x128xf32>
    %255 = arith.extf %19 : vector<64x128xbf16> to vector<64x128xf32>
    %256 = vector.broadcast %66 : vector<64x1xf32> to vector<64x128xf32>
    %257 = arith.mulf %256, %255 : vector<64x128xf32>
    %258 = arith.addf %254, %257 : vector<64x128xf32>
    %259 = arith.extf %20 : vector<64x128xbf16> to vector<64x128xf32>
    %260 = vector.broadcast %67 : vector<64x1xf32> to vector<64x128xf32>
    %261 = arith.mulf %260, %259 : vector<64x128xf32>
    %262 = arith.addf %258, %261 : vector<64x128xf32>
    %263 = arith.extf %17 : vector<64x128xbf16> to vector<64x128xf32>
    %264 = vector.broadcast %111 : vector<64x1xf32> to vector<64x128xf32>
    %265 = arith.mulf %264, %263 : vector<64x128xf32>
    %266 = arith.extf %18 : vector<64x128xbf16> to vector<64x128xf32>
    %267 = vector.broadcast %112 : vector<64x1xf32> to vector<64x128xf32>
    %268 = arith.mulf %267, %266 : vector<64x128xf32>
    %269 = arith.addf %265, %268 : vector<64x128xf32>
    %270 = arith.extf %19 : vector<64x128xbf16> to vector<64x128xf32>
    %271 = vector.broadcast %113 : vector<64x1xf32> to vector<64x128xf32>
    %272 = arith.mulf %271, %270 : vector<64x128xf32>
    %273 = arith.addf %269, %272 : vector<64x128xf32>
    %274 = arith.extf %20 : vector<64x128xbf16> to vector<64x128xf32>
    %275 = vector.broadcast %114 : vector<64x1xf32> to vector<64x128xf32>
    %276 = arith.mulf %275, %274 : vector<64x128xf32>
    %277 = arith.addf %273, %276 : vector<64x128xf32>
    %278 = arith.extf %17 : vector<64x128xbf16> to vector<64x128xf32>
    %279 = vector.broadcast %158 : vector<64x1xf32> to vector<64x128xf32>
    %280 = arith.mulf %279, %278 : vector<64x128xf32>
    %281 = arith.extf %18 : vector<64x128xbf16> to vector<64x128xf32>
    %282 = vector.broadcast %159 : vector<64x1xf32> to vector<64x128xf32>
    %283 = arith.mulf %282, %281 : vector<64x128xf32>
    %284 = arith.addf %280, %283 : vector<64x128xf32>
    %285 = arith.extf %19 : vector<64x128xbf16> to vector<64x128xf32>
    %286 = vector.broadcast %160 : vector<64x1xf32> to vector<64x128xf32>
    %287 = arith.mulf %286, %285 : vector<64x128xf32>
    %288 = arith.addf %284, %287 : vector<64x128xf32>
    %289 = arith.extf %20 : vector<64x128xbf16> to vector<64x128xf32>
    %290 = vector.broadcast %161 : vector<64x1xf32> to vector<64x128xf32>
    %291 = arith.mulf %290, %289 : vector<64x128xf32>
    %292 = arith.addf %288, %291 : vector<64x128xf32>
    %293 = arith.extf %17 : vector<64x128xbf16> to vector<64x128xf32>
    %294 = vector.broadcast %205 : vector<64x1xf32> to vector<64x128xf32>
    %295 = arith.mulf %294, %293 : vector<64x128xf32>
    %296 = arith.extf %18 : vector<64x128xbf16> to vector<64x128xf32>
    %297 = vector.broadcast %206 : vector<64x1xf32> to vector<64x128xf32>
    %298 = arith.mulf %297, %296 : vector<64x128xf32>
    %299 = arith.addf %295, %298 : vector<64x128xf32>
    %300 = arith.extf %19 : vector<64x128xbf16> to vector<64x128xf32>
    %301 = vector.broadcast %207 : vector<64x1xf32> to vector<64x128xf32>
    %302 = arith.mulf %301, %300 : vector<64x128xf32>
    %303 = arith.addf %299, %302 : vector<64x128xf32>
    %304 = arith.extf %20 : vector<64x128xbf16> to vector<64x128xf32>
    %305 = vector.broadcast %208 : vector<64x1xf32> to vector<64x128xf32>
    %306 = arith.mulf %305, %304 : vector<64x128xf32>
    %307 = arith.addf %303, %306 : vector<64x128xf32>
    %308 = tpu.concatenate %262, %277, %292, %307 in 0 : vector<64x128xf32>, vector<64x128xf32>, vector<64x128xf32>, vector<64x128xf32> -> vector<256x128xf32>
    %309 = arith.truncf %308 : vector<256x128xf32> to vector<256x128xbf16>
    %c0_45 = arith.constant 0 : index
    %c0_46 = arith.constant 0 : index
    %310 = vector.load %arg6[%c0_45, %c0_46] : memref<128x128xbf16, #tpu.memory_space<vmem>>, vector<128x128xbf16>
    %cst_47 = arith.constant dense<0.000000e+00> : vector<256x128xf32>
    %311 = tpu.matmul %309, %310, %cst_47 {dimension_numbers = #tpu.dot_dimension_numbers<[1], [0], [0], [1], [0, 0, 1, 1], [], []>} : vector<256x128xbf16>, vector<128x128xbf16>, vector<256x128xf32> -> vector<256x128xf32>
    %312 = arith.addf %4, %311 : vector<256x128xf32>
    %cst_48 = arith.constant dense<0.000000e+00> : vector<256xf32>
    %313 = vector.multi_reduction <add>, %312, %cst_48 [1] : vector<256x128xf32> to vector<256xf32>
    %314 = vector.shape_cast %313 : vector<256xf32> to vector<256x1xf32>
    %cst_49 = arith.constant 1.280000e+02 : f32
    %315 = vector.broadcast %cst_49 : f32 to vector<256x1xf32>
    %316 = arith.divf %314, %315 : vector<256x1xf32>
    %317 = vector.broadcast %316 : vector<256x1xf32> to vector<256x128xf32>
    %318 = arith.subf %312, %317 : vector<256x128xf32>
    %319 = arith.mulf %318, %318 : vector<256x128xf32>
    %cst_50 = arith.constant dense<0.000000e+00> : vector<256xf32>
    %320 = vector.multi_reduction <add>, %319, %cst_50 [1] : vector<256x128xf32> to vector<256xf32>
    %321 = vector.shape_cast %320 : vector<256xf32> to vector<256x1xf32>
    %cst_51 = arith.constant 1.280000e+02 : f32
    %322 = vector.broadcast %cst_51 : f32 to vector<256x1xf32>
    %323 = arith.divf %321, %322 : vector<256x1xf32>
    %cst_52 = arith.constant 9.99999974E-6 : f32
    %324 = vector.broadcast %cst_52 : f32 to vector<256x1xf32>
    %325 = arith.addf %323, %324 : vector<256x1xf32>
    %326 = math.rsqrt %325 : vector<256x1xf32>
    %327 = vector.broadcast %326 : vector<256x1xf32> to vector<256x128xf32>
    %328 = arith.mulf %318, %327 : vector<256x128xf32>
    %c0_53 = arith.constant 0 : index
    %c0_54 = arith.constant 0 : index
    %329 = vector.load %arg7[%c0_53, %c0_54] : memref<1x128xf32, #tpu.memory_space<vmem>>, vector<1x128xf32>
    %330 = vector.broadcast %329 : vector<1x128xf32> to vector<256x128xf32>
    %331 = arith.mulf %328, %330 : vector<256x128xf32>
    %c0_55 = arith.constant 0 : index
    %c0_56 = arith.constant 0 : index
    %332 = vector.load %arg8[%c0_55, %c0_56] : memref<1x128xf32, #tpu.memory_space<vmem>>, vector<1x128xf32>
    %333 = vector.broadcast %332 : vector<1x128xf32> to vector<256x128xf32>
    %334 = arith.addf %331, %333 : vector<256x128xf32>
    %335 = arith.truncf %334 : vector<256x128xf32> to vector<256x128xbf16>
    %c0_57 = arith.constant 0 : index
    %c0_58 = arith.constant 0 : index
    %336 = vector.load %arg9[%c0_57, %c0_58] : memref<128x256xbf16, #tpu.memory_space<vmem>>, vector<128x256xbf16>
    %cst_59 = arith.constant dense<0.000000e+00> : vector<256x256xf32>
    %337 = tpu.matmul %335, %336, %cst_59 {dimension_numbers = #tpu.dot_dimension_numbers<[1], [0], [0], [1], [0, 0, 1, 1], [], []>} : vector<256x128xbf16>, vector<128x256xbf16>, vector<256x256xf32> -> vector<256x256xf32>
    %c0_60 = arith.constant 0 : index
    %c0_61 = arith.constant 0 : index
    %338 = vector.load %arg10[%c0_60, %c0_61] : memref<1x256xf32, #tpu.memory_space<vmem>>, vector<1x256xf32>
    %339 = vector.broadcast %338 : vector<1x256xf32> to vector<256x256xf32>
    %340 = arith.addf %337, %339 : vector<256x256xf32>
    %cst_62 = arith.constant 0.000000e+00 : f32
    %341 = vector.broadcast %cst_62 : f32 to vector<256x256xf32>
    %342 = arith.maximumf %340, %341 : vector<256x256xf32>
    %343 = arith.truncf %342 : vector<256x256xf32> to vector<256x256xbf16>
    %c0_63 = arith.constant 0 : index
    %c0_64 = arith.constant 0 : index
    %344 = vector.load %arg11[%c0_63, %c0_64] : memref<256x128xbf16, #tpu.memory_space<vmem>>, vector<256x128xbf16>
    %cst_65 = arith.constant dense<0.000000e+00> : vector<256x128xf32>
    %345 = tpu.matmul %343, %344, %cst_65 {dimension_numbers = #tpu.dot_dimension_numbers<[1], [0], [0], [1], [0, 0, 1, 1], [], []>} : vector<256x256xbf16>, vector<256x128xbf16>, vector<256x128xf32> -> vector<256x128xf32>
    %c0_66 = arith.constant 0 : index
    %c0_67 = arith.constant 0 : index
    %346 = vector.load %arg12[%c0_66, %c0_67] : memref<1x128xf32, #tpu.memory_space<vmem>>, vector<1x128xf32>
    %347 = vector.broadcast %346 : vector<1x128xf32> to vector<256x128xf32>
    %348 = arith.addf %345, %347 : vector<256x128xf32>
    %349 = arith.addf %334, %348 : vector<256x128xf32>
    %cst_68 = arith.constant dense<0.000000e+00> : vector<256xf32>
    %350 = vector.multi_reduction <add>, %349, %cst_68 [1] : vector<256x128xf32> to vector<256xf32>
    %351 = vector.shape_cast %350 : vector<256xf32> to vector<256x1xf32>
    %cst_69 = arith.constant 1.280000e+02 : f32
    %352 = vector.broadcast %cst_69 : f32 to vector<256x1xf32>
    %353 = arith.divf %351, %352 : vector<256x1xf32>
    %354 = vector.broadcast %353 : vector<256x1xf32> to vector<256x128xf32>
    %355 = arith.subf %349, %354 : vector<256x128xf32>
    %356 = arith.mulf %355, %355 : vector<256x128xf32>
    %cst_70 = arith.constant dense<0.000000e+00> : vector<256xf32>
    %357 = vector.multi_reduction <add>, %356, %cst_70 [1] : vector<256x128xf32> to vector<256xf32>
    %358 = vector.shape_cast %357 : vector<256xf32> to vector<256x1xf32>
    %cst_71 = arith.constant 1.280000e+02 : f32
    %359 = vector.broadcast %cst_71 : f32 to vector<256x1xf32>
    %360 = arith.divf %358, %359 : vector<256x1xf32>
    %cst_72 = arith.constant 9.99999974E-6 : f32
    %361 = vector.broadcast %cst_72 : f32 to vector<256x1xf32>
    %362 = arith.addf %360, %361 : vector<256x1xf32>
    %363 = math.rsqrt %362 : vector<256x1xf32>
    %364 = vector.broadcast %363 : vector<256x1xf32> to vector<256x128xf32>
    %365 = arith.mulf %355, %364 : vector<256x128xf32>
    %c0_73 = arith.constant 0 : index
    %c0_74 = arith.constant 0 : index
    %366 = vector.load %arg13[%c0_73, %c0_74] : memref<1x128xf32, #tpu.memory_space<vmem>>, vector<1x128xf32>
    %367 = vector.broadcast %366 : vector<1x128xf32> to vector<256x128xf32>
    %368 = arith.mulf %365, %367 : vector<256x128xf32>
    %c0_75 = arith.constant 0 : index
    %c0_76 = arith.constant 0 : index
    %369 = vector.load %arg14[%c0_75, %c0_76] : memref<1x128xf32, #tpu.memory_space<vmem>>, vector<1x128xf32>
    %370 = vector.broadcast %369 : vector<1x128xf32> to vector<256x128xf32>
    %371 = arith.addf %368, %370 : vector<256x128xf32>
    %372 = arith.mulf %0, %0 : vector<64x128xf32>
    %cst_77 = arith.constant dense<0.000000e+00> : vector<64xf32>
    %373 = vector.multi_reduction <add>, %372, %cst_77 [1] : vector<64x128xf32> to vector<64xf32>
    %374 = vector.shape_cast %373 : vector<64xf32> to vector<64x1xf32>
    %cst_78 = arith.constant 1.000000e-24 : f32
    %375 = vector.broadcast %cst_78 : f32 to vector<64x1xf32>
    %376 = arith.maximumf %374, %375 : vector<64x1xf32>
    %377 = math.rsqrt %376 : vector<64x1xf32>
    %378 = vector.broadcast %244 : vector<64x1xf32> to vector<64x128xf32>
    %379 = arith.mulf %378, %0 : vector<64x128xf32>
    %380 = vector.broadcast %377 : vector<64x1xf32> to vector<64x128xf32>
    %381 = arith.mulf %379, %380 : vector<64x128xf32>
    %382 = vector.extract_strided_slice %371 {offsets = [0, 0], sizes = [64, 128], strides = [1, 1]} : vector<256x128xf32> to vector<64x128xf32>
    %383 = arith.mulf %382, %382 : vector<64x128xf32>
    %cst_79 = arith.constant dense<0.000000e+00> : vector<64xf32>
    %384 = vector.multi_reduction <add>, %383, %cst_79 [1] : vector<64x128xf32> to vector<64xf32>
    %385 = vector.shape_cast %384 : vector<64xf32> to vector<64x1xf32>
    %cst_80 = arith.constant 1.000000e-24 : f32
    %386 = vector.broadcast %cst_80 : f32 to vector<64x1xf32>
    %387 = arith.maximumf %385, %386 : vector<64x1xf32>
    %388 = math.rsqrt %387 : vector<64x1xf32>
    %389 = vector.broadcast %388 : vector<64x1xf32> to vector<64x128xf32>
    %390 = arith.mulf %382, %389 : vector<64x128xf32>
    %391 = arith.mulf %1, %1 : vector<64x128xf32>
    %cst_81 = arith.constant dense<0.000000e+00> : vector<64xf32>
    %392 = vector.multi_reduction <add>, %391, %cst_81 [1] : vector<64x128xf32> to vector<64xf32>
    %393 = vector.shape_cast %392 : vector<64xf32> to vector<64x1xf32>
    %cst_82 = arith.constant 1.000000e-24 : f32
    %394 = vector.broadcast %cst_82 : f32 to vector<64x1xf32>
    %395 = arith.maximumf %393, %394 : vector<64x1xf32>
    %396 = math.rsqrt %395 : vector<64x1xf32>
    %397 = vector.broadcast %245 : vector<64x1xf32> to vector<64x128xf32>
    %398 = arith.mulf %397, %1 : vector<64x128xf32>
    %399 = vector.broadcast %396 : vector<64x1xf32> to vector<64x128xf32>
    %400 = arith.mulf %398, %399 : vector<64x128xf32>
    %401 = vector.extract_strided_slice %371 {offsets = [64, 0], sizes = [64, 128], strides = [1, 1]} : vector<256x128xf32> to vector<64x128xf32>
    %402 = arith.mulf %401, %401 : vector<64x128xf32>
    %cst_83 = arith.constant dense<0.000000e+00> : vector<64xf32>
    %403 = vector.multi_reduction <add>, %402, %cst_83 [1] : vector<64x128xf32> to vector<64xf32>
    %404 = vector.shape_cast %403 : vector<64xf32> to vector<64x1xf32>
    %cst_84 = arith.constant 1.000000e-24 : f32
    %405 = vector.broadcast %cst_84 : f32 to vector<64x1xf32>
    %406 = arith.maximumf %404, %405 : vector<64x1xf32>
    %407 = math.rsqrt %406 : vector<64x1xf32>
    %408 = vector.broadcast %407 : vector<64x1xf32> to vector<64x128xf32>
    %409 = arith.mulf %401, %408 : vector<64x128xf32>
    %410 = arith.mulf %2, %2 : vector<64x128xf32>
    %cst_85 = arith.constant dense<0.000000e+00> : vector<64xf32>
    %411 = vector.multi_reduction <add>, %410, %cst_85 [1] : vector<64x128xf32> to vector<64xf32>
    %412 = vector.shape_cast %411 : vector<64xf32> to vector<64x1xf32>
    %cst_86 = arith.constant 1.000000e-24 : f32
    %413 = vector.broadcast %cst_86 : f32 to vector<64x1xf32>
    %414 = arith.maximumf %412, %413 : vector<64x1xf32>
    %415 = math.rsqrt %414 : vector<64x1xf32>
    %416 = vector.broadcast %246 : vector<64x1xf32> to vector<64x128xf32>
    %417 = arith.mulf %416, %2 : vector<64x128xf32>
    %418 = vector.broadcast %415 : vector<64x1xf32> to vector<64x128xf32>
    %419 = arith.mulf %417, %418 : vector<64x128xf32>
    %420 = vector.extract_strided_slice %371 {offsets = [128, 0], sizes = [64, 128], strides = [1, 1]} : vector<256x128xf32> to vector<64x128xf32>
    %421 = arith.mulf %420, %420 : vector<64x128xf32>
    %cst_87 = arith.constant dense<0.000000e+00> : vector<64xf32>
    %422 = vector.multi_reduction <add>, %421, %cst_87 [1] : vector<64x128xf32> to vector<64xf32>
    %423 = vector.shape_cast %422 : vector<64xf32> to vector<64x1xf32>
    %cst_88 = arith.constant 1.000000e-24 : f32
    %424 = vector.broadcast %cst_88 : f32 to vector<64x1xf32>
    %425 = arith.maximumf %423, %424 : vector<64x1xf32>
    %426 = math.rsqrt %425 : vector<64x1xf32>
    %427 = vector.broadcast %426 : vector<64x1xf32> to vector<64x128xf32>
    %428 = arith.mulf %420, %427 : vector<64x128xf32>
    %429 = arith.mulf %3, %3 : vector<64x128xf32>
    %cst_89 = arith.constant dense<0.000000e+00> : vector<64xf32>
    %430 = vector.multi_reduction <add>, %429, %cst_89 [1] : vector<64x128xf32> to vector<64xf32>
    %431 = vector.shape_cast %430 : vector<64xf32> to vector<64x1xf32>
    %cst_90 = arith.constant 1.000000e-24 : f32
    %432 = vector.broadcast %cst_90 : f32 to vector<64x1xf32>
    %433 = arith.maximumf %431, %432 : vector<64x1xf32>
    %434 = math.rsqrt %433 : vector<64x1xf32>
    %435 = vector.broadcast %247 : vector<64x1xf32> to vector<64x128xf32>
    %436 = arith.mulf %435, %3 : vector<64x128xf32>
    %437 = vector.broadcast %434 : vector<64x1xf32> to vector<64x128xf32>
    %438 = arith.mulf %436, %437 : vector<64x128xf32>
    %439 = vector.extract_strided_slice %371 {offsets = [192, 0], sizes = [64, 128], strides = [1, 1]} : vector<256x128xf32> to vector<64x128xf32>
    %440 = arith.mulf %439, %439 : vector<64x128xf32>
    %cst_91 = arith.constant dense<0.000000e+00> : vector<64xf32>
    %441 = vector.multi_reduction <add>, %440, %cst_91 [1] : vector<64x128xf32> to vector<64xf32>
    %442 = vector.shape_cast %441 : vector<64xf32> to vector<64x1xf32>
    %cst_92 = arith.constant 1.000000e-24 : f32
    %443 = vector.broadcast %cst_92 : f32 to vector<64x1xf32>
    %444 = arith.maximumf %442, %443 : vector<64x1xf32>
    %445 = math.rsqrt %444 : vector<64x1xf32>
    %446 = vector.broadcast %445 : vector<64x1xf32> to vector<64x128xf32>
    %447 = arith.mulf %439, %446 : vector<64x128xf32>
    %448 = tpu.concatenate %381, %400, %419, %438 in 1 : vector<64x128xf32>, vector<64x128xf32>, vector<64x128xf32>, vector<64x128xf32> -> vector<64x512xf32>
    %c0_93 = arith.constant 0 : index
    %c0_94 = arith.constant 0 : index
    %449 = vector.load %arg15[%c0_93, %c0_94] : memref<64x512xf32, #tpu.memory_space<vmem>>, vector<64x512xf32>
    tpu.vector_store %arg15[%c0_93, %c0_94], %448 {strides = array<i32>} : memref<64x512xf32, #tpu.memory_space<vmem>>, vector<64x512xf32>,
    %450 = tpu.concatenate %390, %409, %428, %447 in 1 : vector<64x128xf32>, vector<64x128xf32>, vector<64x128xf32>, vector<64x128xf32> -> vector<64x512xf32>
    %c0_95 = arith.constant 0 : index
    %c0_96 = arith.constant 0 : index
    %451 = vector.load %arg16[%c0_95, %c0_96] : memref<64x512xf32, #tpu.memory_space<vmem>>, vector<64x512xf32>
    tpu.vector_store %arg16[%c0_95, %c0_96], %450 {strides = array<i32>} : memref<64x512xf32, #tpu.memory_space<vmem>>, vector<64x512xf32>,
    return
  }
  func.func @transform_0(%arg0: i32) -> (i32, i32) {
    %c0_i32 = arith.constant 0 : i32
    %c0_i32_0 = arith.constant 0 : i32
    return %arg0, %c0_i32 : i32, i32
  }
  func.func @transform_1(%arg0: i32) -> (i32, i32) {
    %c0_i32 = arith.constant 0 : i32
    %c0_i32_0 = arith.constant 0 : i32
    return %arg0, %c0_i32 : i32, i32
  }
  func.func @transform_2(%arg0: i32) -> (i32, i32) {
    %c0_i32 = arith.constant 0 : i32
    %c0_i32_0 = arith.constant 0 : i32
    return %arg0, %c0_i32 : i32, i32
  }
  func.func @transform_3(%arg0: i32) -> (i32, i32) {
    %c0_i32 = arith.constant 0 : i32
    %c0_i32_0 = arith.constant 0 : i32
    return %arg0, %c0_i32 : i32, i32
  }
  func.func @transform_4(%arg0: i32) -> (i32, i32) {
    %c0_i32 = arith.constant 0 : i32
    %c0_i32_0 = arith.constant 0 : i32
    %c0_i32_1 = arith.constant 0 : i32
    return %c0_i32, %c0_i32_0 : i32, i32
  }
  func.func @transform_5(%arg0: i32) -> (i32, i32) {
    %c0_i32 = arith.constant 0 : i32
    %c0_i32_0 = arith.constant 0 : i32
    %c0_i32_1 = arith.constant 0 : i32
    return %c0_i32, %c0_i32_0 : i32, i32
  }
  func.func @transform_6(%arg0: i32) -> (i32, i32) {
    %c0_i32 = arith.constant 0 : i32
    %c0_i32_0 = arith.constant 0 : i32
    %c0_i32_1 = arith.constant 0 : i32
    return %c0_i32, %c0_i32_0 : i32, i32
  }
  func.func @transform_7(%arg0: i32) -> (i32, i32) {
    %c0_i32 = arith.constant 0 : i32
    %c0_i32_0 = arith.constant 0 : i32
    %c0_i32_1 = arith.constant 0 : i32
    return %c0_i32, %c0_i32_0 : i32, i32
  }
  func.func @transform_8(%arg0: i32) -> (i32, i32) {
    %c0_i32 = arith.constant 0 : i32
    %c0_i32_0 = arith.constant 0 : i32
    %c0_i32_1 = arith.constant 0 : i32
    return %c0_i32, %c0_i32_0 : i32, i32
  }
  func.func @transform_9(%arg0: i32) -> (i32, i32) {
    %c0_i32 = arith.constant 0 : i32
    %c0_i32_0 = arith.constant 0 : i32
    %c0_i32_1 = arith.constant 0 : i32
    return %c0_i32, %c0_i32_0 : i32, i32
  }
  func.func @transform_10(%arg0: i32) -> (i32, i32) {
    %c0_i32 = arith.constant 0 : i32
    %c0_i32_0 = arith.constant 0 : i32
    %c0_i32_1 = arith.constant 0 : i32
    return %c0_i32, %c0_i32_0 : i32, i32
  }
  func.func @transform_11(%arg0: i32) -> (i32, i32) {
    %c0_i32 = arith.constant 0 : i32
    %c0_i32_0 = arith.constant 0 : i32
    %c0_i32_1 = arith.constant 0 : i32
    return %c0_i32, %c0_i32_0 : i32, i32
  }
  func.func @transform_12(%arg0: i32) -> (i32, i32) {
    %c0_i32 = arith.constant 0 : i32
    %c0_i32_0 = arith.constant 0 : i32
    %c0_i32_1 = arith.constant 0 : i32
    return %c0_i32, %c0_i32_0 : i32, i32
  }
  func.func @transform_13(%arg0: i32) -> (i32, i32) {
    %c0_i32 = arith.constant 0 : i32
    %c0_i32_0 = arith.constant 0 : i32
    %c0_i32_1 = arith.constant 0 : i32
    return %c0_i32, %c0_i32_0 : i32, i32
  }
  func.func @transform_14(%arg0: i32) -> (i32, i32) {
    %c0_i32 = arith.constant 0 : i32
    %c0_i32_0 = arith.constant 0 : i32
    return %arg0, %c0_i32 : i32, i32
  }
  func.func @transform_15(%arg0: i32) -> (i32, i32) {
    %c0_i32 = arith.constant 0 : i32
    %c0_i32_0 = arith.constant 0 : i32
    return %arg0, %c0_i32 : i32, i32
  }
}

module attributes {stable_mosaic.version = 11 : i64} {
  func.func @_mm_kernel(%arg0: i32, %arg1: i32, %arg2: i32, %arg3: memref<8x128xbf16, #tpu.memory_space<vmem>>, %arg4: memref<8x128xbf16, #tpu.memory_space<vmem>>, %arg5: memref<8x1xf32, #tpu.memory_space<vmem>>, %arg6: memref<1x8xf32, #tpu.memory_space<vmem>>, %arg7: memref<8x8xf32, #tpu.memory_space<vmem>>) attributes {dimension_semantics = [#tpu.dimension_semantics<parallel>, #tpu.dimension_semantics<parallel>, #tpu.dimension_semantics<arbitrary>], iteration_bounds = array<i64: 1, 1, 1>, scalar_prefetch = 0 : i64, scratch_operands = 0 : i64, tpu.core_type = #tpu.core_type<tc>, window_params = [{transform_indices = @transform_0, window_bounds = array<i64: 8, 128>}, {transform_indices = @transform_1, window_bounds = array<i64: 8, 128>}, {transform_indices = @transform_2, window_bounds = array<i64: 8, 1>}, {transform_indices = @transform_3, window_bounds = array<i64: 1, 8>}, {transform_indices = @transform_4, window_bounds = array<i64: 8, 8>}]} {
    %c0_i32 = arith.constant 0 : i32
    %0 = arith.cmpi eq, %arg2, %c0_i32 : i32
    %1 = arith.extui %0 : i1 to i32
    %c0_i32_0 = arith.constant 0 : i32
    %2 = arith.cmpi ne, %1, %c0_i32_0 : i32
    scf.if %2 {
      %cst_10 = arith.constant 0.000000e+00 : f32
      %12 = vector.broadcast %cst_10 : f32 to vector<8x8xf32>
      %c0_11 = arith.constant 0 : index
      %c0_12 = arith.constant 0 : index
      %13 = vector.load %arg7[%c0_11, %c0_12] : memref<8x8xf32, #tpu.memory_space<vmem>>, vector<8x8xf32>
      tpu.vector_store %arg7[%c0_11, %c0_12], %12 {strides = array<i32>} : memref<8x8xf32, #tpu.memory_space<vmem>>, vector<8x8xf32>,
    } else {
    }
    %c0 = arith.constant 0 : index
    %c0_1 = arith.constant 0 : index
    %3 = vector.load %arg3[%c0, %c0_1] : memref<8x128xbf16, #tpu.memory_space<vmem>>, vector<8x128xbf16>
    %c0_2 = arith.constant 0 : index
    %c0_3 = arith.constant 0 : index
    %4 = vector.load %arg4[%c0_2, %c0_3] : memref<8x128xbf16, #tpu.memory_space<vmem>>, vector<8x128xbf16>
    %c0_4 = arith.constant 0 : index
    %c0_5 = arith.constant 0 : index
    %5 = vector.load %arg7[%c0_4, %c0_5] : memref<8x8xf32, #tpu.memory_space<vmem>>, vector<8x8xf32>
    %cst = arith.constant dense<0.000000e+00> : vector<8x8xf32>
    %6 = tpu.matmul %3, %4, %cst {dimension_numbers = #tpu.dot_dimension_numbers<[1], [1], [0], [0], [0, 0, 1, 0], [], []>} : vector<8x128xbf16>, vector<8x128xbf16>, vector<8x8xf32> -> vector<8x8xf32>
    %7 = arith.addf %5, %6 : vector<8x8xf32>
    %c0_6 = arith.constant 0 : index
    %c0_7 = arith.constant 0 : index
    %8 = vector.load %arg7[%c0_6, %c0_7] : memref<8x8xf32, #tpu.memory_space<vmem>>, vector<8x8xf32>
    tpu.vector_store %arg7[%c0_6, %c0_7], %7 {strides = array<i32>} : memref<8x8xf32, #tpu.memory_space<vmem>>, vector<8x8xf32>,
    %c0_i32_8 = arith.constant 0 : i32
    %9 = arith.cmpi eq, %arg2, %c0_i32_8 : i32
    %10 = arith.extui %9 : i1 to i32
    %c0_i32_9 = arith.constant 0 : i32
    %11 = arith.cmpi ne, %10, %c0_i32_9 : i32
    scf.if %11 {
      %c0_10 = arith.constant 0 : index
      %c0_11 = arith.constant 0 : index
      %12 = vector.load %arg7[%c0_10, %c0_11] : memref<8x8xf32, #tpu.memory_space<vmem>>, vector<8x8xf32>
      %c0_12 = arith.constant 0 : index
      %c0_13 = arith.constant 0 : index
      %13 = vector.load %arg5[%c0_12, %c0_13] : memref<8x1xf32, #tpu.memory_space<vmem>>, vector<8x1xf32>
      %14 = vector.broadcast %13 : vector<8x1xf32> to vector<8x8xf32>
      %15 = arith.mulf %12, %14 : vector<8x8xf32>
      %c0_14 = arith.constant 0 : index
      %c0_15 = arith.constant 0 : index
      %16 = vector.load %arg6[%c0_14, %c0_15] : memref<1x8xf32, #tpu.memory_space<vmem>>, vector<1x8xf32>
      %17 = vector.broadcast %16 : vector<1x8xf32> to vector<8x8xf32>
      %18 = arith.mulf %15, %17 : vector<8x8xf32>
      %cst_16 = arith.constant 1.000000e+01 : f32
      %19 = vector.broadcast %cst_16 : f32 to vector<8x8xf32>
      %20 = arith.mulf %18, %19 : vector<8x8xf32>
      %c0_17 = arith.constant 0 : index
      %c0_18 = arith.constant 0 : index
      %21 = vector.load %arg7[%c0_17, %c0_18] : memref<8x8xf32, #tpu.memory_space<vmem>>, vector<8x8xf32>
      tpu.vector_store %arg7[%c0_17, %c0_18], %20 {strides = array<i32>} : memref<8x8xf32, #tpu.memory_space<vmem>>, vector<8x8xf32>,
    } else {
    }
    return
  }
  func.func @transform_0(%arg0: i32, %arg1: i32, %arg2: i32) -> (i32, i32) {
    %c0_i32 = arith.constant 0 : i32
    return %arg0, %arg2 : i32, i32
  }
  func.func @transform_1(%arg0: i32, %arg1: i32, %arg2: i32) -> (i32, i32) {
    %c0_i32 = arith.constant 0 : i32
    return %arg1, %arg2 : i32, i32
  }
  func.func @transform_2(%arg0: i32, %arg1: i32, %arg2: i32) -> (i32, i32) {
    %c0_i32 = arith.constant 0 : i32
    %c0_i32_0 = arith.constant 0 : i32
    return %arg0, %c0_i32 : i32, i32
  }
  func.func @transform_3(%arg0: i32, %arg1: i32, %arg2: i32) -> (i32, i32) {
    %c0_i32 = arith.constant 0 : i32
    %c0_i32_0 = arith.constant 0 : i32
    return %c0_i32, %arg1 : i32, i32
  }
  func.func @transform_4(%arg0: i32, %arg1: i32, %arg2: i32) -> (i32, i32) {
    %c0_i32 = arith.constant 0 : i32
    return %arg0, %arg1 : i32, i32
  }
}

module attributes {stable_mosaic.version = 11 : i64} {
  func.func @_mm_kernel(%arg0: i32, %arg1: i32, %arg2: i32, %arg3: memref<8x512xbf16, #tpu.memory_space<vmem>>, %arg4: memref<8x512xbf16, #tpu.memory_space<vmem>>, %arg5: memref<8x1xf32, #tpu.memory_space<vmem>>, %arg6: memref<1x8xf32, #tpu.memory_space<vmem>>, %arg7: memref<8x8xf32, #tpu.memory_space<vmem>>) attributes {dimension_semantics = [#tpu.dimension_semantics<parallel>, #tpu.dimension_semantics<parallel>, #tpu.dimension_semantics<arbitrary>], iteration_bounds = array<i64: 1, 1, 1>, scalar_prefetch = 0 : i64, scratch_operands = 0 : i64, tpu.core_type = #tpu.core_type<tc>, window_params = [{transform_indices = @transform_0, window_bounds = array<i64: 8, 512>}, {transform_indices = @transform_1, window_bounds = array<i64: 8, 512>}, {transform_indices = @transform_2, window_bounds = array<i64: 8, 1>}, {transform_indices = @transform_3, window_bounds = array<i64: 1, 8>}, {transform_indices = @transform_4, window_bounds = array<i64: 8, 8>}]} {
    %c0_i32 = arith.constant 0 : i32
    %0 = arith.cmpi eq, %arg2, %c0_i32 : i32
    %1 = arith.extui %0 : i1 to i32
    %c0_i32_0 = arith.constant 0 : i32
    %2 = arith.cmpi ne, %1, %c0_i32_0 : i32
    scf.if %2 {
      %cst_10 = arith.constant 0.000000e+00 : f32
      %12 = vector.broadcast %cst_10 : f32 to vector<8x8xf32>
      %c0_11 = arith.constant 0 : index
      %c0_12 = arith.constant 0 : index
      %13 = vector.load %arg7[%c0_11, %c0_12] : memref<8x8xf32, #tpu.memory_space<vmem>>, vector<8x8xf32>
      tpu.vector_store %arg7[%c0_11, %c0_12], %12 {strides = array<i32>} : memref<8x8xf32, #tpu.memory_space<vmem>>, vector<8x8xf32>,
    } else {
    }
    %c0 = arith.constant 0 : index
    %c0_1 = arith.constant 0 : index
    %3 = vector.load %arg3[%c0, %c0_1] : memref<8x512xbf16, #tpu.memory_space<vmem>>, vector<8x512xbf16>
    %c0_2 = arith.constant 0 : index
    %c0_3 = arith.constant 0 : index
    %4 = vector.load %arg4[%c0_2, %c0_3] : memref<8x512xbf16, #tpu.memory_space<vmem>>, vector<8x512xbf16>
    %c0_4 = arith.constant 0 : index
    %c0_5 = arith.constant 0 : index
    %5 = vector.load %arg7[%c0_4, %c0_5] : memref<8x8xf32, #tpu.memory_space<vmem>>, vector<8x8xf32>
    %cst = arith.constant dense<0.000000e+00> : vector<8x8xf32>
    %6 = tpu.matmul %3, %4, %cst {dimension_numbers = #tpu.dot_dimension_numbers<[1], [1], [0], [0], [0, 0, 1, 0], [], []>} : vector<8x512xbf16>, vector<8x512xbf16>, vector<8x8xf32> -> vector<8x8xf32>
    %7 = arith.addf %5, %6 : vector<8x8xf32>
    %c0_6 = arith.constant 0 : index
    %c0_7 = arith.constant 0 : index
    %8 = vector.load %arg7[%c0_6, %c0_7] : memref<8x8xf32, #tpu.memory_space<vmem>>, vector<8x8xf32>
    tpu.vector_store %arg7[%c0_6, %c0_7], %7 {strides = array<i32>} : memref<8x8xf32, #tpu.memory_space<vmem>>, vector<8x8xf32>,
    %c0_i32_8 = arith.constant 0 : i32
    %9 = arith.cmpi eq, %arg2, %c0_i32_8 : i32
    %10 = arith.extui %9 : i1 to i32
    %c0_i32_9 = arith.constant 0 : i32
    %11 = arith.cmpi ne, %10, %c0_i32_9 : i32
    scf.if %11 {
      %c0_10 = arith.constant 0 : index
      %c0_11 = arith.constant 0 : index
      %12 = vector.load %arg7[%c0_10, %c0_11] : memref<8x8xf32, #tpu.memory_space<vmem>>, vector<8x8xf32>
      %c0_12 = arith.constant 0 : index
      %c0_13 = arith.constant 0 : index
      %13 = vector.load %arg5[%c0_12, %c0_13] : memref<8x1xf32, #tpu.memory_space<vmem>>, vector<8x1xf32>
      %14 = vector.broadcast %13 : vector<8x1xf32> to vector<8x8xf32>
      %15 = arith.mulf %12, %14 : vector<8x8xf32>
      %c0_14 = arith.constant 0 : index
      %c0_15 = arith.constant 0 : index
      %16 = vector.load %arg6[%c0_14, %c0_15] : memref<1x8xf32, #tpu.memory_space<vmem>>, vector<1x8xf32>
      %17 = vector.broadcast %16 : vector<1x8xf32> to vector<8x8xf32>
      %18 = arith.mulf %15, %17 : vector<8x8xf32>
      %cst_16 = arith.constant 1.000000e+01 : f32
      %19 = vector.broadcast %cst_16 : f32 to vector<8x8xf32>
      %20 = arith.mulf %18, %19 : vector<8x8xf32>
      %c0_17 = arith.constant 0 : index
      %c0_18 = arith.constant 0 : index
      %21 = vector.load %arg7[%c0_17, %c0_18] : memref<8x8xf32, #tpu.memory_space<vmem>>, vector<8x8xf32>
      tpu.vector_store %arg7[%c0_17, %c0_18], %20 {strides = array<i32>} : memref<8x8xf32, #tpu.memory_space<vmem>>, vector<8x8xf32>,
    } else {
    }
    return
  }
  func.func @transform_0(%arg0: i32, %arg1: i32, %arg2: i32) -> (i32, i32) {
    %c0_i32 = arith.constant 0 : i32
    return %arg0, %arg2 : i32, i32
  }
  func.func @transform_1(%arg0: i32, %arg1: i32, %arg2: i32) -> (i32, i32) {
    %c0_i32 = arith.constant 0 : i32
    return %arg1, %arg2 : i32, i32
  }
  func.func @transform_2(%arg0: i32, %arg1: i32, %arg2: i32) -> (i32, i32) {
    %c0_i32 = arith.constant 0 : i32
    %c0_i32_0 = arith.constant 0 : i32
    return %arg0, %c0_i32 : i32, i32
  }
  func.func @transform_3(%arg0: i32, %arg1: i32, %arg2: i32) -> (i32, i32) {
    %c0_i32 = arith.constant 0 : i32
    %c0_i32_0 = arith.constant 0 : i32
    return %c0_i32, %arg1 : i32, i32
  }
  func.func @transform_4(%arg0: i32, %arg1: i32, %arg2: i32) -> (i32, i32) {
    %c0_i32 = arith.constant 0 : i32
    return %arg0, %arg1 : i32, i32
  }
}

</mosaic_0001>

<llo_original>
// kernel: meaformer_forward.20
$region0: #{meaformer_forward.20}
  #allocation0 [shape = 'u32[]', space=smem, size = 0x4, offset = 0x4, fixed_abs, tag = 'smem constant byte address 0x4 - core index']
  #allocation1 [shape = 'u32[72,128]{1,0:T(1,128)}', space=vmem, size = 0x9000, scoped, tag = 'internal scratch']
  %s0 = inlined_call_operand.vmem [shape: bf16[64,64], index: 0, kind: input, shape index: {}]
  %s1 = inlined_call_operand.vmem [shape: bf16[64,128], index: 1, kind: input, shape index: {}]
  %s2 = inlined_call_operand.vmem [shape: f32[64,128], index: 2, kind: output, shape index: {}]
  %s3 = sld [smem:[#allocation0]]
  $region22: #{meaformer_forward.20} parent=0
    _
  %s5 = ssub.s32 1, %s3
  %s6 = scalar_select 0, %s5, %s3
  // Predicated region
  $region2: #{meaformer_forward.20} parent=0 // pred_check
    _
  $region3: #{meaformer_forward.20} parent=0 // pred_check_branch
    %8 = sbr.rel (0) target = $region5
  $region4: #{meaformer_forward.20} parent=0 // pred_region
    _
  $region5: #{meaformer_forward.20} parent=0 // pred_fallthru
    _
  // Predicated region
  $region6: #{meaformer_forward.20} parent=0 // pred_check
    _
  $region7: #{meaformer_forward.20} parent=0 // pred_check_branch
    %10 = sbr.rel (0) target = $region9
  $region8: #{meaformer_forward.20} parent=0 // pred_region
    _
  $region9: #{meaformer_forward.20} parent=0 // pred_fallthru
    _
  %p12 = scmp.eq.s32.totalorder 0, 0
  // Predicated region
  $region10: #{meaformer_forward.20} parent=0 // pred_check
    %p13 = pneg %p12
  $region11: #{meaformer_forward.20} parent=0 // pred_check_branch
    %15 = sbr.rel (%p13) target = $region13
  $region12: #{meaformer_forward.20} parent=0 // pred_region
    %16 = vst [vmem:[%s2] sm:$0xff] 0.0
    %17 = vst [vmem:[%s2 + $0x8] sm:$0xff] 0.0
    %18 = vst [vmem:[%s2 + $0x10] sm:$0xff] 0.0
    %19 = vst [vmem:[%s2 + $0x18] sm:$0xff] 0.0
    %20 = vst [vmem:[%s2 + $0x20] sm:$0xff] 0.0
    %21 = vst [vmem:[%s2 + $0x28] sm:$0xff] 0.0
    %22 = vst [vmem:[%s2 + $0x30] sm:$0xff] 0.0
    %23 = vst [vmem:[%s2 + $0x38] sm:$0xff] 0.0
  $region13: #{meaformer_forward.20} parent=0 // pred_fallthru
    _
  %v24 = vld [vmem:[%s0] sm:$0xf]
  %v25 = vld [vmem:[%s0 + $0x4] sm:$0xf]
  %v26 = vld [vmem:[%s0 + $0x8] sm:$0xf]
  %v27 = vld [vmem:[%s0 + $0xc] sm:$0xf]
  %v28 = vld [vmem:[%s0 + $0x10] sm:$0xf]
  %v29 = vld [vmem:[%s0 + $0x14] sm:$0xf]
  %v30 = vld [vmem:[%s0 + $0x18] sm:$0xf]
  %v31 = vld [vmem:[%s0 + $0x1c] sm:$0xf]
  %v32 = vld [vmem:[%s1] sm:$0xf]
  %v33 = vld [vmem:[%s1 + $0x4] sm:$0xf]
  %v34 = vld [vmem:[%s1 + $0x8] sm:$0xf]
  %v35 = vld [vmem:[%s1 + $0xc] sm:$0xf]
  %v36 = vld [vmem:[%s1 + $0x10] sm:$0xf]
  %v37 = vld [vmem:[%s1 + $0x14] sm:$0xf]
  %v38 = vld [vmem:[%s1 + $0x18] sm:$0xf]
  %v39 = vld [vmem:[%s1 + $0x1c] sm:$0xf]
  %v40 = vld [vmem:[%s2] sm:$0xff]
  %v41 = vld [vmem:[%s2 + $0x8] sm:$0xff]
  %v42 = vld [vmem:[%s2 + $0x10] sm:$0xff]
  %v43 = vld [vmem:[%s2 + $0x18] sm:$0xff]
  %v44 = vld [vmem:[%s2 + $0x20] sm:$0xff]
  %v45 = vld [vmem:[%s2 + $0x28] sm:$0xff]
  %v46 = vld [vmem:[%s2 + $0x30] sm:$0xff]
  %v47 = vld [vmem:[%s2 + $0x38] sm:$0xff]
  %v56 = vunpack.c.l.b16 %v24
  %v57 = vunpack.c.l.b16 %v25
  %v58 = vunpack.c.l.b16 %v26
  %v59 = vunpack.c.l.b16 %v27
  %v60 = vunpack.c.l.b16 %v28
  %v61 = vunpack.c.l.b16 %v29
  %v62 = vunpack.c.l.b16 %v30
  %v63 = vunpack.c.l.b16 %v31
  %v64 = vpack.c.b16 %v57, %v56
  %v65 = vpack.c.b16 %v59, %v58
  %v66 = vpack.c.b16 %v61, %v60
  %v67 = vpack.c.b16 %v63, %v62
  %v76 = vunpack.c.l.b16 %v32
  %v77 = vunpack.c.l.b16 %v33
  %v78 = vunpack.c.l.b16 %v34
  %v79 = vunpack.c.l.b16 %v35
  %v80 = vunpack.c.l.b16 %v36
  %v81 = vunpack.c.l.b16 %v37
  %v82 = vunpack.c.l.b16 %v38
  %v83 = vunpack.c.l.b16 %v39
  %v84 = vpack.c.b16 %v77, %v76
  %v85 = vpack.c.b16 %v79, %v78
  %v86 = vpack.c.b16 %v81, %v80
  %v87 = vpack.c.b16 %v83, %v82
  %vm92 = vcmask 523264
  %v94 = vsel %vm92, %v64, 0
  %v97 = vsel %vm92, %v65, 0
  %v100 = vsel %vm92, %v66, 0
  %v103 = vsel %vm92, %v67, 0
  %105 = vmatpush.bf16.msra.mxu0 0
  %106 = vmatpush.bf16.msra.mxu0 0
  %107 = vmatpush.bf16.msra.mxu0 0
  %108 = vmatpush.bf16.msra.mxu0 0
  %109 = vmatpush.bf16.msra.mxu0 %v87
  %110 = vmatpush.bf16.msra.mxu0 %v86
  %111 = vmatpush.bf16.msra.mxu0 %v85
  %112 = vmatpush.bf16.msra.mxu0 %v84
  %113 = vmatmul.bf16.gmra.mxu0 %v94
  %v114 = vpop.f32.mrf.mxu0
  %v115 = vadd.f32 0.0, %v114
  %v116 = vpop.f32.mrf.mxu0
  %v117 = vadd.f32 0.0, %v116
  %118 = vmatmul.bf16.gmra.mxu0 %v97
  %v119 = vpop.f32.mrf.mxu0
  %v120 = vadd.f32 0.0, %v119
  %v121 = vpop.f32.mrf.mxu0
  %v122 = vadd.f32 0.0, %v121
  %123 = vmatmul.bf16.gmra.mxu0 %v100
  %v124 = vpop.f32.mrf.mxu0
  %v125 = vadd.f32 0.0, %v124
  %v126 = vpop.f32.mrf.mxu0
  %v127 = vadd.f32 0.0, %v126
  %128 = vmatmul.bf16.gmra.mxu0 %v103
  %v129 = vpop.f32.mrf.mxu0
  %v130 = vadd.f32 0.0, %v129
  %v131 = vpop.f32.mrf.mxu0
  %v132 = vadd.f32 0.0, %v131
  %133 = vdwg.mxu0
  %v134 = vadd.f32 %v40, %v115
  %v135 = vadd.f32 %v41, %v117
  %v136 = vadd.f32 %v42, %v120
  %v137 = vadd.f32 %v43, %v122
  %v138 = vadd.f32 %v44, %v125
  %v139 = vadd.f32 %v45, %v127
  %v140 = vadd.f32 %v46, %v130
  %v141 = vadd.f32 %v47, %v132
  %142 = vst [vmem:[%s2] sm:$0xff] %v134
  %143 = vst [vmem:[%s2 + $0x8] sm:$0xff] %v135
  %144 = vst [vmem:[%s2 + $0x10] sm:$0xff] %v136
  %145 = vst [vmem:[%s2 + $0x18] sm:$0xff] %v137
  %146 = vst [vmem:[%s2 + $0x20] sm:$0xff] %v138
  %147 = vst [vmem:[%s2 + $0x28] sm:$0xff] %v139
  %148 = vst [vmem:[%s2 + $0x30] sm:$0xff] %v140
  %149 = vst [vmem:[%s2 + $0x38] sm:$0xff] %v141
  // Predicated region
  $region14: #{meaformer_forward.20} parent=0 // pred_check
    _
  $region15: #{meaformer_forward.20} parent=0 // pred_check_branch
    %151 = sbr.rel (0) target = $region17
  $region16: #{meaformer_forward.20} parent=0 // pred_region
    _
  $region17: #{meaformer_forward.20} parent=0 // pred_fallthru
    _
  // Predicated region
  $region18: #{meaformer_forward.20} parent=0 // pred_check
    _
  $region19: #{meaformer_forward.20} parent=0 // pred_check_branch
    %153 = sbr.rel (0) target = $region21
  $region20: #{meaformer_forward.20} parent=0 // pred_region
    _
  $region21: #{meaformer_forward.20} parent=0 // pred_fallthru
    _

// kernel: meaformer_forward.17
$region0: #{meaformer_forward.17}
  #allocation0 [shape = 'u32[]', space=smem, size = 0x4, offset = 0x4, fixed_abs, tag = 'smem constant byte address 0x4 - core index']
  #allocation1 [shape = 'u32[72,128]{1,0:T(1,128)}', space=vmem, size = 0x9000, scoped, tag = 'internal scratch']
  #allocation2 [shape = 'f32[64,128]{1,0:T(8,128)}', space=vmem, size = 0x8000, scoped, tag = 'scratch operand']
  %s0 = inlined_call_operand.vmem [shape: bf16[64,128], index: 0, kind: input, shape index: {}]
  %s1 = inlined_call_operand.vmem [shape: bf16[128,128], index: 1, kind: input, shape index: {}]
  %s2 = inlined_call_operand.vmem [shape: bf16[64,128], index: 2, kind: output, shape index: {}]
  %s3 = sld [smem:[#allocation0]]
  $region26: #{meaformer_forward.17} parent=0
    _
  %s5 = ssub.s32 1, %s3
  %s6 = scalar_select 0, %s5, %s3
  // Predicated region
  $region2: #{meaformer_forward.17} parent=0 // pred_check
    _
  $region3: #{meaformer_forward.17} parent=0 // pred_check_branch
    %8 = sbr.rel (0) target = $region5
  $region4: #{meaformer_forward.17} parent=0 // pred_region
    _
  $region5: #{meaformer_forward.17} parent=0 // pred_fallthru
    _
  // Predicated region
  $region6: #{meaformer_forward.17} parent=0 // pred_check
    _
  $region7: #{meaformer_forward.17} parent=0 // pred_check_branch
    %10 = sbr.rel (0) target = $region9
  $region8: #{meaformer_forward.17} parent=0 // pred_region
    _
  $region9: #{meaformer_forward.17} parent=0 // pred_fallthru
    _
  %p11 = scmp.eq.s32.totalorder 0, 0
  // Predicated region
  $region10: #{meaformer_forward.17} parent=0 // pred_check
    %p12 = pneg %p11
  $region11: #{meaformer_forward.17} parent=0 // pred_check_branch
    %14 = sbr.rel (%p12) target = $region13
  $region12: #{meaformer_forward.17} parent=0 // pred_region
    %15 = vst [vmem:[#allocation2] sm:$0xff] 0.0
    %16 = vst [vmem:[#allocation2 + $0x8] sm:$0xff] 0.0
    %17 = vst [vmem:[#allocation2 + $0x10] sm:$0xff] 0.0
    %18 = vst [vmem:[#allocation2 + $0x18] sm:$0xff] 0.0
    %19 = vst [vmem:[#allocation2 + $0x20] sm:$0xff] 0.0
    %20 = vst [vmem:[#allocation2 + $0x28] sm:$0xff] 0.0
    %21 = vst [vmem:[#allocation2 + $0x30] sm:$0xff] 0.0
    %22 = vst [vmem:[#allocation2 + $0x38] sm:$0xff] 0.0
  $region13: #{meaformer_forward.17} parent=0 // pred_fallthru
    _
  %v23 = vld [vmem:[%s0] sm:$0xf]
  %v24 = vld [vmem:[%s0 + $0x4] sm:$0xf]
  %v25 = vld [vmem:[%s0 + $0x8] sm:$0xf]
  %v26 = vld [vmem:[%s0 + $0xc] sm:$0xf]
  %v27 = vld [vmem:[%s0 + $0x10] sm:$0xf]
  %v28 = vld [vmem:[%s0 + $0x14] sm:$0xf]
  %v29 = vld [vmem:[%s0 + $0x18] sm:$0xf]
  %v30 = vld [vmem:[%s0 + $0x1c] sm:$0xf]
  %v31 = vld [vmem:[%s1] sm:$0xf]
  %v32 = vld [vmem:[%s1 + $0x4] sm:$0xf]
  %v33 = vld [vmem:[%s1 + $0x8] sm:$0xf]
  %v34 = vld [vmem:[%s1 + $0xc] sm:$0xf]
  %v35 = vld [vmem:[%s1 + $0x10] sm:$0xf]
  %v36 = vld [vmem:[%s1 + $0x14] sm:$0xf]
  %v37 = vld [vmem:[%s1 + $0x18] sm:$0xf]
  %v38 = vld [vmem:[%s1 + $0x1c] sm:$0xf]
  %v39 = vld [vmem:[%s1 + $0x20] sm:$0xf]
  %v40 = vld [vmem:[%s1 + $0x24] sm:$0xf]
  %v41 = vld [vmem:[%s1 + $0x28] sm:$0xf]
  %v42 = vld [vmem:[%s1 + $0x2c] sm:$0xf]
  %v43 = vld [vmem:[%s1 + $0x30] sm:$0xf]
  %v44 = vld [vmem:[%s1 + $0x34] sm:$0xf]
  %v45 = vld [vmem:[%s1 + $0x38] sm:$0xf]
  %v46 = vld [vmem:[%s1 + $0x3c] sm:$0xf]
  %v47 = vld [vmem:[#allocation2] sm:$0xff]
  %v48 = vld [vmem:[#allocation2 + $0x8] sm:$0xff]
  %v49 = vld [vmem:[#allocation2 + $0x10] sm:$0xff]
  %v50 = vld [vmem:[#allocation2 + $0x18] sm:$0xff]
  %v51 = vld [vmem:[#allocation2 + $0x20] sm:$0xff]
  %v52 = vld [vmem:[#allocation2 + $0x28] sm:$0xff]
  %v53 = vld [vmem:[#allocation2 + $0x30] sm:$0xff]
  %v54 = vld [vmem:[#allocation2 + $0x38] sm:$0xff]
  %v63 = vunpack.c.l.b16 %v23
  %v64 = vunpack.c.l.b16 %v24
  %v65 = vunpack.c.l.b16 %v25
  %v66 = vunpack.c.l.b16 %v26
  %v67 = vunpack.c.l.b16 %v27
  %v68 = vunpack.c.l.b16 %v28
  %v69 = vunpack.c.l.b16 %v29
  %v70 = vunpack.c.l.b16 %v30
  %v71 = vpack.c.b16 %v64, %v63
  %v72 = vpack.c.b16 %v66, %v65
  %v73 = vpack.c.b16 %v68, %v67
  %v74 = vpack.c.b16 %v70, %v69
  %v95 = vunpack.c.l.b16 %v31
  %v96 = vunpack.c.l.b16 %v32
  %v97 = vunpack.c.l.b16 %v33
  %v98 = vunpack.c.l.b16 %v34
  %v99 = vunpack.c.l.b16 %v35
  %v100 = vunpack.c.l.b16 %v36
  %v101 = vunpack.c.l.b16 %v37
  %v102 = vunpack.c.l.b16 %v38
  %v103 = vunpack.c.l.b16 %v39
  %v104 = vunpack.c.l.b16 %v40
  %v105 = vunpack.c.l.b16 %v41
  %v106 = vunpack.c.l.b16 %v42
  %v107 = vunpack.c.l.b16 %v43
  %v108 = vunpack.c.l.b16 %v44
  %v109 = vunpack.c.l.b16 %v45
  %v110 = vunpack.c.l.b16 %v46
  %v111 = vpack.c.b16 %v96, %v95
  %v112 = vpack.c.b16 %v98, %v97
  %v113 = vpack.c.b16 %v100, %v99
  %v114 = vpack.c.b16 %v102, %v101
  %v115 = vpack.c.b16 %v104, %v103
  %v116 = vpack.c.b16 %v106, %v105
  %v117 = vpack.c.b16 %v108, %v107
  %v118 = vpack.c.b16 %v110, %v109
  %127 = vmatpush.bf16.msra.mxu0 %v118
  %128 = vmatpush.bf16.msra.mxu0 %v117
  %129 = vmatpush.bf16.msra.mxu0 %v116
  %130 = vmatpush.bf16.msra.mxu0 %v115
  %131 = vmatpush.bf16.msra.mxu0 %v114
  %132 = vmatpush.bf16.msra.mxu0 %v113
  %133 = vmatpush.bf16.msra.mxu0 %v112
  %134 = vmatpush.bf16.msra.mxu0 %v111
  %135 = vmatmul.bf16.gmra.mxu0 %v71
  %v136 = vpop.f32.mrf.mxu0
  %v137 = vadd.f32 0.0, %v136
  %v138 = vpop.f32.mrf.mxu0
  %v139 = vadd.f32 0.0, %v138
  %140 = vmatmul.bf16.gmra.mxu0 %v72
  %v141 = vpop.f32.mrf.mxu0
  %v142 = vadd.f32 0.0, %v141
  %v143 = vpop.f32.mrf.mxu0
  %v144 = vadd.f32 0.0, %v143
  %145 = vmatmul.bf16.gmra.mxu0 %v73
  %v146 = vpop.f32.mrf.mxu0
  %v147 = vadd.f32 0.0, %v146
  %v148 = vpop.f32.mrf.mxu0
  %v149 = vadd.f32 0.0, %v148
  %150 = vmatmul.bf16.gmra.mxu0 %v74
  %v151 = vpop.f32.mrf.mxu0
  %v152 = vadd.f32 0.0, %v151
  %v153 = vpop.f32.mrf.mxu0
  %v154 = vadd.f32 0.0, %v153
  %155 = vdwg.mxu0
  %v156 = vadd.f32 %v47, %v137
  %v157 = vadd.f32 %v48, %v139
  %v158 = vadd.f32 %v49, %v142
  %v159 = vadd.f32 %v50, %v144
  %v160 = vadd.f32 %v51, %v147
  %v161 = vadd.f32 %v52, %v149
  %v162 = vadd.f32 %v53, %v152
  %v163 = vadd.f32 %v54, %v154
  %164 = vst [vmem:[#allocation2] sm:$0xff] %v156
  %165 = vst [vmem:[#allocation2 + $0x8] sm:$0xff] %v157
  %166 = vst [vmem:[#allocation2 + $0x10] sm:$0xff] %v158
  %167 = vst [vmem:[#allocation2 + $0x18] sm:$0xff] %v159
  %168 = vst [vmem:[#allocation2 + $0x20] sm:$0xff] %v160
  %169 = vst [vmem:[#allocation2 + $0x28] sm:$0xff] %v161
  %170 = vst [vmem:[#allocation2 + $0x30] sm:$0xff] %v162
  %171 = vst [vmem:[#allocation2 + $0x38] sm:$0xff] %v163
  // Predicated region
  $region14: #{meaformer_forward.17} parent=0 // pred_check
    %p172 = pneg %p11
  $region15: #{meaformer_forward.17} parent=0 // pred_check_branch
    %174 = sbr.rel (%p172) target = $region17
  $region16: #{meaformer_forward.17} parent=0 // pred_region
    %v175 = vld [vmem:[#allocation2] sm:$0xff]
    %v176 = vld [vmem:[#allocation2 + $0x8] sm:$0xff]
    %v177 = vld [vmem:[#allocation2 + $0x10] sm:$0xff]
    %v178 = vld [vmem:[#allocation2 + $0x18] sm:$0xff]
    %v179 = vld [vmem:[#allocation2 + $0x20] sm:$0xff]
    %v180 = vld [vmem:[#allocation2 + $0x28] sm:$0xff]
    %v181 = vld [vmem:[#allocation2 + $0x30] sm:$0xff]
    %v182 = vld [vmem:[#allocation2 + $0x38] sm:$0xff]
    %v183 = vpack.c.bf16 %v175, %v175
    %v184 = vpack.c.bf16 %v176, %v176
    %v185 = vpack.c.bf16 %v177, %v177
    %v186 = vpack.c.bf16 %v178, %v178
    %v187 = vpack.c.bf16 %v179, %v179
    %v188 = vpack.c.bf16 %v180, %v180
    %v189 = vpack.c.bf16 %v181, %v181
    %v190 = vpack.c.bf16 %v182, %v182
    %191 = vst [vmem:[%s2] sm:$0xf] %v183
    %192 = vst [vmem:[%s2 + $0x4] sm:$0xf] %v184
    %193 = vst [vmem:[%s2 + $0x8] sm:$0xf] %v185
    %194 = vst [vmem:[%s2 + $0xc] sm:$0xf] %v186
    %195 = vst [vmem:[%s2 + $0x10] sm:$0xf] %v187
    %196 = vst [vmem:[%s2 + $0x14] sm:$0xf] %v188
    %197 = vst [vmem:[%s2 + $0x18] sm:$0xf] %v189
    %198 = vst [vmem:[%s2 + $0x1c] sm:$0xf] %v190
  $region17: #{meaformer_forward.17} parent=0 // pred_fallthru
    _
  // Predicated region
  $region18: #{meaformer_forward.17} parent=0 // pred_check
    _
  $region19: #{meaformer_forward.17} parent=0 // pred_check_branch
    %200 = sbr.rel (0) target = $region21
  $region20: #{meaformer_forward.17} parent=0 // pred_region
    _
  $region21: #{meaformer_forward.17} parent=0 // pred_fallthru
    _
  // Predicated region
  $region22: #{meaformer_forward.17} parent=0 // pred_check
    _
  $region23: #{meaformer_forward.17} parent=0 // pred_check_branch
    %202 = sbr.rel (0) target = $region25
  $region24: #{meaformer_forward.17} parent=0 // pred_region
    _
  $region25: #{meaformer_forward.17} parent=0 // pred_fallthru
    _

// kernel: meaformer_forward.18
$region0: #{meaformer_forward.18}
  #allocation0 [shape = 'u32[]', space=smem, size = 0x4, offset = 0x4, fixed_abs, tag = 'smem constant byte address 0x4 - core index']
  #allocation1 [shape = 'u32[72,128]{1,0:T(1,128)}', space=vmem, size = 0x9000, scoped, tag = 'internal scratch']
  #allocation2 [shape = 'f32[64,128]{1,0:T(8,128)}', space=vmem, size = 0x8000, scoped, tag = 'scratch operand']
  %s0 = inlined_call_operand.vmem [shape: bf16[64,64], index: 0, kind: input, shape index: {}]
  %s1 = inlined_call_operand.vmem [shape: bf16[64,128], index: 1, kind: input, shape index: {}]
  %s2 = inlined_call_operand.vmem [shape: bf16[64,128], index: 2, kind: output, shape index: {}]
  %s3 = sld [smem:[#allocation0]]
  $region26: #{meaformer_forward.18} parent=0
    _
  %s5 = ssub.s32 1, %s3
  %s6 = scalar_select 0, %s5, %s3
  // Predicated region
  $region2: #{meaformer_forward.18} parent=0 // pred_check
    _
  $region3: #{meaformer_forward.18} parent=0 // pred_check_branch
    %8 = sbr.rel (0) target = $region5
  $region4: #{meaformer_forward.18} parent=0 // pred_region
    _
  $region5: #{meaformer_forward.18} parent=0 // pred_fallthru
    _
  // Predicated region
  $region6: #{meaformer_forward.18} parent=0 // pred_check
    _
  $region7: #{meaformer_forward.18} parent=0 // pred_check_branch
    %10 = sbr.rel (0) target = $region9
  $region8: #{meaformer_forward.18} parent=0 // pred_region
    _
  $region9: #{meaformer_forward.18} parent=0 // pred_fallthru
    _
  %p12 = scmp.eq.s32.totalorder 0, 0
  // Predicated region
  $region10: #{meaformer_forward.18} parent=0 // pred_check
    %p13 = pneg %p12
  $region11: #{meaformer_forward.18} parent=0 // pred_check_branch
    %15 = sbr.rel (%p13) target = $region13
  $region12: #{meaformer_forward.18} parent=0 // pred_region
    %16 = vst [vmem:[#allocation2] sm:$0xff] 0.0
    %17 = vst [vmem:[#allocation2 + $0x8] sm:$0xff] 0.0
    %18 = vst [vmem:[#allocation2 + $0x10] sm:$0xff] 0.0
    %19 = vst [vmem:[#allocation2 + $0x18] sm:$0xff] 0.0
    %20 = vst [vmem:[#allocation2 + $0x20] sm:$0xff] 0.0
    %21 = vst [vmem:[#allocation2 + $0x28] sm:$0xff] 0.0
    %22 = vst [vmem:[#allocation2 + $0x30] sm:$0xff] 0.0
    %23 = vst [vmem:[#allocation2 + $0x38] sm:$0xff] 0.0
  $region13: #{meaformer_forward.18} parent=0 // pred_fallthru
    _
  %v24 = vld [vmem:[%s0] sm:$0xf]
  %v25 = vld [vmem:[%s0 + $0x4] sm:$0xf]
  %v26 = vld [vmem:[%s0 + $0x8] sm:$0xf]
  %v27 = vld [vmem:[%s0 + $0xc] sm:$0xf]
  %v28 = vld [vmem:[%s0 + $0x10] sm:$0xf]
  %v29 = vld [vmem:[%s0 + $0x14] sm:$0xf]
  %v30 = vld [vmem:[%s0 + $0x18] sm:$0xf]
  %v31 = vld [vmem:[%s0 + $0x1c] sm:$0xf]
  %v32 = vld [vmem:[%s1] sm:$0xf]
  %v33 = vld [vmem:[%s1 + $0x4] sm:$0xf]
  %v34 = vld [vmem:[%s1 + $0x8] sm:$0xf]
  %v35 = vld [vmem:[%s1 + $0xc] sm:$0xf]
  %v36 = vld [vmem:[%s1 + $0x10] sm:$0xf]
  %v37 = vld [vmem:[%s1 + $0x14] sm:$0xf]
  %v38 = vld [vmem:[%s1 + $0x18] sm:$0xf]
  %v39 = vld [vmem:[%s1 + $0x1c] sm:$0xf]
  %v40 = vld [vmem:[#allocation2] sm:$0xff]
  %v41 = vld [vmem:[#allocation2 + $0x8] sm:$0xff]
  %v42 = vld [vmem:[#allocation2 + $0x10] sm:$0xff]
  %v43 = vld [vmem:[#allocation2 + $0x18] sm:$0xff]
  %v44 = vld [vmem:[#allocation2 + $0x20] sm:$0xff]
  %v45 = vld [vmem:[#allocation2 + $0x28] sm:$0xff]
  %v46 = vld [vmem:[#allocation2 + $0x30] sm:$0xff]
  %v47 = vld [vmem:[#allocation2 + $0x38] sm:$0xff]
  %v56 = vunpack.c.l.b16 %v24
  %v57 = vunpack.c.l.b16 %v25
  %v58 = vunpack.c.l.b16 %v26
  %v59 = vunpack.c.l.b16 %v27
  %v60 = vunpack.c.l.b16 %v28
  %v61 = vunpack.c.l.b16 %v29
  %v62 = vunpack.c.l.b16 %v30
  %v63 = vunpack.c.l.b16 %v31
  %v64 = vpack.c.b16 %v57, %v56
  %v65 = vpack.c.b16 %v59, %v58
  %v66 = vpack.c.b16 %v61, %v60
  %v67 = vpack.c.b16 %v63, %v62
  %v76 = vunpack.c.l.b16 %v32
  %v77 = vunpack.c.l.b16 %v33
  %v78 = vunpack.c.l.b16 %v34
  %v79 = vunpack.c.l.b16 %v35
  %v80 = vunpack.c.l.b16 %v36
  %v81 = vunpack.c.l.b16 %v37
  %v82 = vunpack.c.l.b16 %v38
  %v83 = vunpack.c.l.b16 %v39
  %v84 = vpack.c.b16 %v77, %v76
  %v85 = vpack.c.b16 %v79, %v78
  %v86 = vpack.c.b16 %v81, %v80
  %v87 = vpack.c.b16 %v83, %v82
  %vm92 = vcmask 523264
  %v94 = vsel %vm92, %v64, 0
  %v97 = vsel %vm92, %v65, 0
  %v100 = vsel %vm92, %v66, 0
  %v103 = vsel %vm92, %v67, 0
  %105 = vmatpush.bf16.msra.mxu0 0
  %106 = vmatpush.bf16.msra.mxu0 0
  %107 = vmatpush.bf16.msra.mxu0 0
  %108 = vmatpush.bf16.msra.mxu0 0
  %109 = vmatpush.bf16.msra.mxu0 %v87
  %110 = vmatpush.bf16.msra.mxu0 %v86
  %111 = vmatpush.bf16.msra.mxu0 %v85
  %112 = vmatpush.bf16.msra.mxu0 %v84
  %113 = vmatmul.bf16.gmra.mxu0 %v94
  %v114 = vpop.f32.mrf.mxu0
  %v115 = vadd.f32 0.0, %v114
  %v116 = vpop.f32.mrf.mxu0
  %v117 = vadd.f32 0.0, %v116
  %118 = vmatmul.bf16.gmra.mxu0 %v97
  %v119 = vpop.f32.mrf.mxu0
  %v120 = vadd.f32 0.0, %v119
  %v121 = vpop.f32.mrf.mxu0
  %v122 = vadd.f32 0.0, %v121
  %123 = vmatmul.bf16.gmra.mxu0 %v100
  %v124 = vpop.f32.mrf.mxu0
  %v125 = vadd.f32 0.0, %v124
  %v126 = vpop.f32.mrf.mxu0
  %v127 = vadd.f32 0.0, %v126
  %128 = vmatmul.bf16.gmra.mxu0 %v103
  %v129 = vpop.f32.mrf.mxu0
  %v130 = vadd.f32 0.0, %v129
  %v131 = vpop.f32.mrf.mxu0
  %v132 = vadd.f32 0.0, %v131
  %133 = vdwg.mxu0
  %v134 = vadd.f32 %v40, %v115
  %v135 = vadd.f32 %v41, %v117
  %v136 = vadd.f32 %v42, %v120
  %v137 = vadd.f32 %v43, %v122
  %v138 = vadd.f32 %v44, %v125
  %v139 = vadd.f32 %v45, %v127
  %v140 = vadd.f32 %v46, %v130
  %v141 = vadd.f32 %v47, %v132
  %142 = vst [vmem:[#allocation2] sm:$0xff] %v134
  %143 = vst [vmem:[#allocation2 + $0x8] sm:$0xff] %v135
  %144 = vst [vmem:[#allocation2 + $0x10] sm:$0xff] %v136
  %145 = vst [vmem:[#allocation2 + $0x18] sm:$0xff] %v137
  %146 = vst [vmem:[#allocation2 + $0x20] sm:$0xff] %v138
  %147 = vst [vmem:[#allocation2 + $0x28] sm:$0xff] %v139
  %148 = vst [vmem:[#allocation2 + $0x30] sm:$0xff] %v140
  %149 = vst [vmem:[#allocation2 + $0x38] sm:$0xff] %v141
  // Predicated region
  $region14: #{meaformer_forward.18} parent=0 // pred_check
    %p150 = pneg %p12
  $region15: #{meaformer_forward.18} parent=0 // pred_check_branch
    %152 = sbr.rel (%p150) target = $region17
  $region16: #{meaformer_forward.18} parent=0 // pred_region
    %v153 = vld [vmem:[#allocation2] sm:$0xff]
    %v154 = vld [vmem:[#allocation2 + $0x8] sm:$0xff]
    %v155 = vld [vmem:[#allocation2 + $0x10] sm:$0xff]
    %v156 = vld [vmem:[#allocation2 + $0x18] sm:$0xff]
    %v157 = vld [vmem:[#allocation2 + $0x20] sm:$0xff]
    %v158 = vld [vmem:[#allocation2 + $0x28] sm:$0xff]
    %v159 = vld [vmem:[#allocation2 + $0x30] sm:$0xff]
    %v160 = vld [vmem:[#allocation2 + $0x38] sm:$0xff]
    %v161 = vmax.f32 %v153, 0.0
    %v162 = vmax.f32 %v154, 0.0
    %v163 = vmax.f32 %v155, 0.0
    %v164 = vmax.f32 %v156, 0.0
    %v165 = vmax.f32 %v157, 0.0
    %v166 = vmax.f32 %v158, 0.0
    %v167 = vmax.f32 %v159, 0.0
    %v168 = vmax.f32 %v160, 0.0
    %v169 = vpack.c.bf16 %v161, %v161
    %v170 = vpack.c.bf16 %v162, %v162
    %v171 = vpack.c.bf16 %v163, %v163
    %v172 = vpack.c.bf16 %v164, %v164
    %v173 = vpack.c.bf16 %v165, %v165
    %v174 = vpack.c.bf16 %v166, %v166
    %v175 = vpack.c.bf16 %v167, %v167
    %v176 = vpack.c.bf16 %v168, %v168
    %177 = vst [vmem:[%s2] sm:$0xf] %v169
    %178 = vst [vmem:[%s2 + $0x4] sm:$0xf] %v170
    %179 = vst [vmem:[%s2 + $0x8] sm:$0xf] %v171
    %180 = vst [vmem:[%s2 + $0xc] sm:$0xf] %v172
    %181 = vst [vmem:[%s2 + $0x10] sm:$0xf] %v173
    %182 = vst [vmem:[%s2 + $0x14] sm:$0xf] %v174
    %183 = vst [vmem:[%s2 + $0x18] sm:$0xf] %v175
    %184 = vst [vmem:[%s2 + $0x1c] sm:$0xf] %v176
  $region17: #{meaformer_forward.18} parent=0 // pred_fallthru
    _
  // Predicated region
  $region18: #{meaformer_forward.18} parent=0 // pred_check
    _
  $region19: #{meaformer_forward.18} parent=0 // pred_check_branch
    %186 = sbr.rel (0) target = $region21
  $region20: #{meaformer_forward.18} parent=0 // pred_region
    _
  $region21: #{meaformer_forward.18} parent=0 // pred_fallthru
    _
  // Predicated region
  $region22: #{meaformer_forward.18} parent=0 // pred_check
    _
  $region23: #{meaformer_forward.18} parent=0 // pred_check_branch
    %188 = sbr.rel (0) target = $region25
  $region24: #{meaformer_forward.18} parent=0 // pred_region
    _
  $region25: #{meaformer_forward.18} parent=0 // pred_fallthru
    _

// kernel: meaformer_forward.21
$region0: #{meaformer_forward.21}
  #allocation0 [shape = 'u32[]', space=smem, size = 0x4, offset = 0x4, fixed_abs, tag = 'smem constant byte address 0x4 - core index']
  #allocation1 [shape = 'u32[72,128]{1,0:T(1,128)}', space=vmem, size = 0x9000, scoped, tag = 'internal scratch']
  %s0 = inlined_call_operand.vmem [shape: bf16[64,128], index: 0, kind: input, shape index: {}]
  %s1 = inlined_call_operand.vmem [shape: bf16[128,128], index: 1, kind: input, shape index: {}]
  %s2 = inlined_call_operand.vmem [shape: f32[1,128], index: 2, kind: input, shape index: {}]
  %s3 = inlined_call_operand.vmem [shape: f32[64,128], index: 3, kind: output, shape index: {}]
  %s4 = sld [smem:[#allocation0]]
  $region30: #{meaformer_forward.21} parent=0
    _
  %s6 = ssub.s32 1, %s4
  %s7 = scalar_select 0, %s6, %s4
  // Predicated region
  $region2: #{meaformer_forward.21} parent=0 // pred_check
    _
  $region3: #{meaformer_forward.21} parent=0 // pred_check_branch
    %9 = sbr.rel (0) target = $region5
  $region4: #{meaformer_forward.21} parent=0 // pred_region
    _
  $region5: #{meaformer_forward.21} parent=0 // pred_fallthru
    _
  // Predicated region
  $region6: #{meaformer_forward.21} parent=0 // pred_check
    _
  $region7: #{meaformer_forward.21} parent=0 // pred_check_branch
    %11 = sbr.rel (0) target = $region9
  $region8: #{meaformer_forward.21} parent=0 // pred_region
    _
  $region9: #{meaformer_forward.21} parent=0 // pred_fallthru
    _
  // Predicated region
  $region10: #{meaformer_forward.21} parent=0 // pred_check
    _
  $region11: #{meaformer_forward.21} parent=0 // pred_check_branch
    %13 = sbr.rel (0) target = $region13
  $region12: #{meaformer_forward.21} parent=0 // pred_region
    _
  $region13: #{meaformer_forward.21} parent=0 // pred_fallthru
    _
  %p14 = scmp.eq.s32.totalorder 0, 0
  // Predicated region
  $region14: #{meaformer_forward.21} parent=0 // pred_check
    %p15 = pneg %p14
  $region15: #{meaformer_forward.21} parent=0 // pred_check_branch
    %17 = sbr.rel (%p15) target = $region17
  $region16: #{meaformer_forward.21} parent=0 // pred_region
    %18 = vst [vmem:[%s3] sm:$0xff] 0.0
    %19 = vst [vmem:[%s3 + $0x8] sm:$0xff] 0.0
    %20 = vst [vmem:[%s3 + $0x10] sm:$0xff] 0.0
    %21 = vst [vmem:[%s3 + $0x18] sm:$0xff] 0.0
    %22 = vst [vmem:[%s3 + $0x20] sm:$0xff] 0.0
    %23 = vst [vmem:[%s3 + $0x28] sm:$0xff] 0.0
    %24 = vst [vmem:[%s3 + $0x30] sm:$0xff] 0.0
    %25 = vst [vmem:[%s3 + $0x38] sm:$0xff] 0.0
  $region17: #{meaformer_forward.21} parent=0 // pred_fallthru
    _
  %v26 = vld [vmem:[%s0] sm:$0xf]
  %v27 = vld [vmem:[%s0 + $0x4] sm:$0xf]
  %v28 = vld [vmem:[%s0 + $0x8] sm:$0xf]
  %v29 = vld [vmem:[%s0 + $0xc] sm:$0xf]
  %v30 = vld [vmem:[%s0 + $0x10] sm:$0xf]
  %v31 = vld [vmem:[%s0 + $0x14] sm:$0xf]
  %v32 = vld [vmem:[%s0 + $0x18] sm:$0xf]
  %v33 = vld [vmem:[%s0 + $0x1c] sm:$0xf]
  %v34 = vld [vmem:[%s1] sm:$0xf]
  %v35 = vld [vmem:[%s1 + $0x4] sm:$0xf]
  %v36 = vld [vmem:[%s1 + $0x8] sm:$0xf]
  %v37 = vld [vmem:[%s1 + $0xc] sm:$0xf]
  %v38 = vld [vmem:[%s1 + $0x10] sm:$0xf]
  %v39 = vld [vmem:[%s1 + $0x14] sm:$0xf]
  %v40 = vld [vmem:[%s1 + $0x18] sm:$0xf]
  %v41 = vld [vmem:[%s1 + $0x1c] sm:$0xf]
  %v42 = vld [vmem:[%s1 + $0x20] sm:$0xf]
  %v43 = vld [vmem:[%s1 + $0x24] sm:$0xf]
  %v44 = vld [vmem:[%s1 + $0x28] sm:$0xf]
  %v45 = vld [vmem:[%s1 + $0x2c] sm:$0xf]
  %v46 = vld [vmem:[%s1 + $0x30] sm:$0xf]
  %v47 = vld [vmem:[%s1 + $0x34] sm:$0xf]
  %v48 = vld [vmem:[%s1 + $0x38] sm:$0xf]
  %v49 = vld [vmem:[%s1 + $0x3c] sm:$0xf]
  %v50 = vld [vmem:[%s3] sm:$0xff]
  %v51 = vld [vmem:[%s3 + $0x8] sm:$0xff]
  %v52 = vld [vmem:[%s3 + $0x10] sm:$0xff]
  %v53 = vld [vmem:[%s3 + $0x18] sm:$0xff]
  %v54 = vld [vmem:[%s3 + $0x20] sm:$0xff]
  %v55 = vld [vmem:[%s3 + $0x28] sm:$0xff]
  %v56 = vld [vmem:[%s3 + $0x30] sm:$0xff]
  %v57 = vld [vmem:[%s3 + $0x38] sm:$0xff]
  %v66 = vunpack.c.l.b16 %v26
  %v67 = vunpack.c.l.b16 %v27
  %v68 = vunpack.c.l.b16 %v28
  %v69 = vunpack.c.l.b16 %v29
  %v70 = vunpack.c.l.b16 %v30
  %v71 = vunpack.c.l.b16 %v31
  %v72 = vunpack.c.l.b16 %v32
  %v73 = vunpack.c.l.b16 %v33
  %v74 = vpack.c.b16 %v67, %v66
  %v75 = vpack.c.b16 %v69, %v68
  %v76 = vpack.c.b16 %v71, %v70
  %v77 = vpack.c.b16 %v73, %v72
  %v98 = vunpack.c.l.b16 %v34
  %v99 = vunpack.c.l.b16 %v35
  %v100 = vunpack.c.l.b16 %v36
  %v101 = vunpack.c.l.b16 %v37
  %v102 = vunpack.c.l.b16 %v38
  %v103 = vunpack.c.l.b16 %v39
  %v104 = vunpack.c.l.b16 %v40
  %v105 = vunpack.c.l.b16 %v41
  %v106 = vunpack.c.l.b16 %v42
  %v107 = vunpack.c.l.b16 %v43
  %v108 = vunpack.c.l.b16 %v44
  %v109 = vunpack.c.l.b16 %v45
  %v110 = vunpack.c.l.b16 %v46
  %v111 = vunpack.c.l.b16 %v47
  %v112 = vunpack.c.l.b16 %v48
  %v113 = vunpack.c.l.b16 %v49
  %v114 = vpack.c.b16 %v99, %v98
  %v115 = vpack.c.b16 %v101, %v100
  %v116 = vpack.c.b16 %v103, %v102
  %v117 = vpack.c.b16 %v105, %v104
  %v118 = vpack.c.b16 %v107, %v106
  %v119 = vpack.c.b16 %v109, %v108
  %v120 = vpack.c.b16 %v111, %v110
  %v121 = vpack.c.b16 %v113, %v112
  %130 = vmatpush.bf16.msra.mxu0 %v121
  %131 = vmatpush.bf16.msra.mxu0 %v120
  %132 = vmatpush.bf16.msra.mxu0 %v119
  %133 = vmatpush.bf16.msra.mxu0 %v118
  %134 = vmatpush.bf16.msra.mxu0 %v117
  %135 = vmatpush.bf16.msra.mxu0 %v116
  %136 = vmatpush.bf16.msra.mxu0 %v115
  %137 = vmatpush.bf16.msra.mxu0 %v114
  %138 = vmatmul.bf16.gmra.mxu0 %v74
  %v139 = vpop.f32.mrf.mxu0
  %v140 = vadd.f32 0.0, %v139
  %v141 = vpop.f32.mrf.mxu0
  %v142 = vadd.f32 0.0, %v141
  %143 = vmatmul.bf16.gmra.mxu0 %v75
  %v144 = vpop.f32.mrf.mxu0
  %v145 = vadd.f32 0.0, %v144
  %v146 = vpop.f32.mrf.mxu0
  %v147 = vadd.f32 0.0, %v146
  %148 = vmatmul.bf16.gmra.mxu0 %v76
  %v149 = vpop.f32.mrf.mxu0
  %v150 = vadd.f32 0.0, %v149
  %v151 = vpop.f32.mrf.mxu0
  %v152 = vadd.f32 0.0, %v151
  %153 = vmatmul.bf16.gmra.mxu0 %v77
  %v154 = vpop.f32.mrf.mxu0
  %v155 = vadd.f32 0.0, %v154
  %v156 = vpop.f32.mrf.mxu0
  %v157 = vadd.f32 0.0, %v156
  %158 = vdwg.mxu0
  %v159 = vadd.f32 %v50, %v140
  %v160 = vadd.f32 %v51, %v142
  %v161 = vadd.f32 %v52, %v145
  %v162 = vadd.f32 %v53, %v147
  %v163 = vadd.f32 %v54, %v150
  %v164 = vadd.f32 %v55, %v152
  %v165 = vadd.f32 %v56, %v155
  %v166 = vadd.f32 %v57, %v157
  %167 = vst [vmem:[%s3] sm:$0xff] %v159
  %168 = vst [vmem:[%s3 + $0x8] sm:$0xff] %v160
  %169 = vst [vmem:[%s3 + $0x10] sm:$0xff] %v161
  %170 = vst [vmem:[%s3 + $0x18] sm:$0xff] %v162
  %171 = vst [vmem:[%s3 + $0x20] sm:$0xff] %v163
  %172 = vst [vmem:[%s3 + $0x28] sm:$0xff] %v164
  %173 = vst [vmem:[%s3 + $0x30] sm:$0xff] %v165
  %174 = vst [vmem:[%s3 + $0x38] sm:$0xff] %v166
  // Predicated region
  $region18: #{meaformer_forward.21} parent=0 // pred_check
    %p175 = pneg %p14
  $region19: #{meaformer_forward.21} parent=0 // pred_check_branch
    %177 = sbr.rel (%p175) target = $region21
  $region20: #{meaformer_forward.21} parent=0 // pred_region
    %v178 = vld [vmem:[%s3] sm:$0xff]
    %v179 = vld [vmem:[%s3 + $0x8] sm:$0xff]
    %v180 = vld [vmem:[%s3 + $0x10] sm:$0xff]
    %v181 = vld [vmem:[%s3 + $0x18] sm:$0xff]
    %v182 = vld [vmem:[%s3 + $0x20] sm:$0xff]
    %v183 = vld [vmem:[%s3 + $0x28] sm:$0xff]
    %v184 = vld [vmem:[%s3 + $0x30] sm:$0xff]
    %v185 = vld [vmem:[%s3 + $0x38] sm:$0xff]
    %v186 = vld [vmem:[%s2] sm:$0x1]
    %v188 = vperm.slane %v186, 0
    %v190 = vadd.f32 %v178, %v188
    %v191 = vadd.f32 %v179, %v188
    %v192 = vadd.f32 %v180, %v188
    %v193 = vadd.f32 %v181, %v188
    %v194 = vadd.f32 %v182, %v188
    %v195 = vadd.f32 %v183, %v188
    %v196 = vadd.f32 %v184, %v188
    %v197 = vadd.f32 %v185, %v188
    %198 = vst [vmem:[%s3] sm:$0xff] %v190
    %199 = vst [vmem:[%s3 + $0x8] sm:$0xff] %v191
    %200 = vst [vmem:[%s3 + $0x10] sm:$0xff] %v192
    %201 = vst [vmem:[%s3 + $0x18] sm:$0xff] %v193
    %202 = vst [vmem:[%s3 + $0x20] sm:$0xff] %v194
    %203 = vst [vmem:[%s3 + $0x28] sm:$0xff] %v195
    %204 = vst [vmem:[%s3 + $0x30] sm:$0xff] %v196
    %205 = vst [vmem:[%s3 + $0x38] sm:$0xff] %v197
  $region21: #{meaformer_forward.21} parent=0 // pred_fallthru
    _
  // Predicated region
  $region22: #{meaformer_forward.21} parent=0 // pred_check
    _
  $region23: #{meaformer_forward.21} parent=0 // pred_check_branch
    %207 = sbr.rel (0) target = $region25
  $region24: #{meaformer_forward.21} parent=0 // pred_region
    _
  $region25: #{meaformer_forward.21} parent=0 // pred_fallthru
    _
  // Predicated region
  $region26: #{meaformer_forward.21} parent=0 // pred_check
    _
  $region27: #{meaformer_forward.21} parent=0 // pred_check_branch
    %209 = sbr.rel (0) target = $region29
  $region28: #{meaformer_forward.21} parent=0 // pred_region
    _
  $region29: #{meaformer_forward.21} parent=0 // pred_fallthru
    _

// kernel: meaformer_forward.33
$region0: #{meaformer_forward.33}
  #allocation0 [shape = 'u32[]', space=smem, size = 0x4, offset = 0x4, fixed_abs, tag = 'smem constant byte address 0x4 - core index']
  #allocation1 [shape = 'u32[72,128]{1,0:T(1,128)}', space=vmem, size = 0x9000, scoped, tag = 'internal scratch']
  %s0 = inlined_call_operand.vmem [shape: bf16[8,128], index: 0, kind: input, shape index: {}]
  %s1 = inlined_call_operand.vmem [shape: bf16[8,128], index: 1, kind: input, shape index: {}]
  %s2 = inlined_call_operand.vmem [shape: f32[8,1], index: 2, kind: input, shape index: {}]
  %s3 = inlined_call_operand.vmem [shape: f32[1,8], index: 3, kind: input, shape index: {}]
  %s4 = inlined_call_operand.vmem [shape: f32[8,8], index: 4, kind: output, shape index: {}]
  %s5 = sld [smem:[#allocation0]]
  $region34: #{meaformer_forward.33} parent=0
    _
  %s7 = ssub.s32 1, %s5
  %s8 = scalar_select 0, %s7, %s5
  // Predicated region
  $region2: #{meaformer_forward.33} parent=0 // pred_check
    _
  $region3: #{meaformer_forward.33} parent=0 // pred_check_branch
    %10 = sbr.rel (0) target = $region5
  $region4: #{meaformer_forward.33} parent=0 // pred_region
    _
  $region5: #{meaformer_forward.33} parent=0 // pred_fallthru
    _
  // Predicated region
  $region6: #{meaformer_forward.33} parent=0 // pred_check
    _
  $region7: #{meaformer_forward.33} parent=0 // pred_check_branch
    %12 = sbr.rel (0) target = $region9
  $region8: #{meaformer_forward.33} parent=0 // pred_region
    _
  $region9: #{meaformer_forward.33} parent=0 // pred_fallthru
    _
  // Predicated region
  $region10: #{meaformer_forward.33} parent=0 // pred_check
    _
  $region11: #{meaformer_forward.33} parent=0 // pred_check_branch
    %14 = sbr.rel (0) target = $region13
  $region12: #{meaformer_forward.33} parent=0 // pred_region
    _
  $region13: #{meaformer_forward.33} parent=0 // pred_fallthru
    _
  // Predicated region
  $region14: #{meaformer_forward.33} parent=0 // pred_check
    _
  $region15: #{meaformer_forward.33} parent=0 // pred_check_branch
    %16 = sbr.rel (0) target = $region17
  $region16: #{meaformer_forward.33} parent=0 // pred_region
    _
  $region17: #{meaformer_forward.33} parent=0 // pred_fallthru
    _
  %p18 = scmp.eq.s32.totalorder 0, 0
  // Predicated region
  $region18: #{meaformer_forward.33} parent=0 // pred_check
    %p19 = pneg %p18
  $region19: #{meaformer_forward.33} parent=0 // pred_check_branch
    %21 = sbr.rel (%p19) target = $region21
  $region20: #{meaformer_forward.33} parent=0 // pred_region
    %vm22 = vcmask 64512
    %23 = vst.msk [vmem:[%s4] sm:$0xff] %vm22, 0.0
  $region21: #{meaformer_forward.33} parent=0 // pred_fallthru
    _
  %v24 = vld [vmem:[%s0] sm:$0xf]
  %v25 = vld [vmem:[%s1] sm:$0xf]
  %v26 = vld [vmem:[%s4] sm:$0xff]
  %27 = vmatpush.bf16.xpose.msra.mxu0 0
  %28 = vmatpush.bf16.xpose.msra.mxu0 0
  %29 = vmatpush.bf16.xpose.msra.mxu0 0
  %30 = vmatpush.bf16.xpose.msra.mxu0 0
  %31 = vmatpush.bf16.xpose.msra.mxu0 0
  %32 = vmatpush.bf16.xpose.msra.mxu0 0
  %33 = vmatpush.bf16.xpose.msra.mxu0 0
  %34 = vmatpush.bf16.xpose.msra.mxu0 %v25
  %35 = vmatmul.bf16.gmra.mxu0 %v24
  %v36 = vpop.f32.mrf.mxu0
  %v37 = vadd.f32 0.0, %v36
  %v38 = vpop.f32.mrf.mxu0
  %39 = vdwg.mxu0
  %v40 = vadd.f32 %v26, %v37
  %vm41 = vcmask 64512
  %42 = vst.msk [vmem:[%s4] sm:$0xff] %vm41, %v40
  // Predicated region
  $region22: #{meaformer_forward.33} parent=0 // pred_check
    %p43 = pneg %p18
  $region23: #{meaformer_forward.33} parent=0 // pred_check_branch
    %45 = sbr.rel (%p43) target = $region25
  $region24: #{meaformer_forward.33} parent=0 // pred_region
    %v46 = vld [vmem:[%s4] sm:$0xff]
    %v47 = vld [vmem:[%s2] sm:$0xff]
    %49 = vset.pattern.permute.xlu0 0
    %50 = vperm.xlu0 %49, %v47
    %v51 = vpop.permute.xlu0 %50
    %v53 = vmul.f32 %v46, %v51
    %v54 = vld [vmem:[%s3] sm:$0x1]
    %v56 = vperm.slane %v54, 0
    %v58 = vmul.f32 %v53, %v56
    %v59 = vmul.f32 %v58, 10.0
    %60 = vst.msk [vmem:[%s4] sm:$0xff] %vm41, %v59
  $region25: #{meaformer_forward.33} parent=0 // pred_fallthru
    _
  // Predicated region
  $region26: #{meaformer_forward.33} parent=0 // pred_check
    _
  $region27: #{meaformer_forward.33} parent=0 // pred_check_branch
    %62 = sbr.rel (0) target = $region29
  $region28: #{meaformer_forward.33} parent=0 // pred_region
    _
  $region29: #{meaformer_forward.33} parent=0 // pred_fallthru
    _
  // Predicated region
  $region30: #{meaformer_forward.33} parent=0 // pred_check
    _
  $region31: #{meaformer_forward.33} parent=0 // pred_check_branch
    %64 = sbr.rel (0) target = $region33
  $region32: #{meaformer_forward.33} parent=0 // pred_region
    _
  $region33: #{meaformer_forward.33} parent=0 // pred_fallthru
    _

// kernel: meaformer_forward.25
$region0: #{meaformer_forward.25}
  #allocation0 [shape = 'u32[]', space=smem, size = 0x4, offset = 0x4, fixed_abs, tag = 'smem constant byte address 0x4 - core index']
  #allocation1 [shape = 'u32[72,128]{1,0:T(1,128)}', space=vmem, size = 0x9000, scoped, tag = 'internal scratch']
  %s0 = inlined_call_operand.vmem [shape: bf16[8,512], index: 0, kind: input, shape index: {}]
  %s1 = inlined_call_operand.vmem [shape: bf16[8,512], index: 1, kind: input, shape index: {}]
  %s2 = inlined_call_operand.vmem [shape: f32[8,1], index: 2, kind: input, shape index: {}]
  %s3 = inlined_call_operand.vmem [shape: f32[1,8], index: 3, kind: input, shape index: {}]
  %s4 = inlined_call_operand.vmem [shape: f32[8,8], index: 4, kind: output, shape index: {}]
  %s5 = sld [smem:[#allocation0]]
  $region34: #{meaformer_forward.25} parent=0
    _
  %s7 = ssub.s32 1, %s5
  %s8 = scalar_select 0, %s7, %s5
  // Predicated region
  $region2: #{meaformer_forward.25} parent=0 // pred_check
    _
  $region3: #{meaformer_forward.25} parent=0 // pred_check_branch
    %10 = sbr.rel (0) target = $region5
  $region4: #{meaformer_forward.25} parent=0 // pred_region
    _
  $region5: #{meaformer_forward.25} parent=0 // pred_fallthru
    _
  // Predicated region
  $region6: #{meaformer_forward.25} parent=0 // pred_check
    _
  $region7: #{meaformer_forward.25} parent=0 // pred_check_branch
    %12 = sbr.rel (0) target = $region9
  $region8: #{meaformer_forward.25} parent=0 // pred_region
    _
  $region9: #{meaformer_forward.25} parent=0 // pred_fallthru
    _
  // Predicated region
  $region10: #{meaformer_forward.25} parent=0 // pred_check
    _
  $region11: #{meaformer_forward.25} parent=0 // pred_check_branch
    %14 = sbr.rel (0) target = $region13
  $region12: #{meaformer_forward.25} parent=0 // pred_region
    _
  $region13: #{meaformer_forward.25} parent=0 // pred_fallthru
    _
  // Predicated region
  $region14: #{meaformer_forward.25} parent=0 // pred_check
    _
  $region15: #{meaformer_forward.25} parent=0 // pred_check_branch
    %16 = sbr.rel (0) target = $region17
  $region16: #{meaformer_forward.25} parent=0 // pred_region
    _
  $region17: #{meaformer_forward.25} parent=0 // pred_fallthru
    _
  %p18 = scmp.eq.s32.totalorder 0, 0
  // Predicated region
  $region18: #{meaformer_forward.25} parent=0 // pred_check
    %p19 = pneg %p18
  $region19: #{meaformer_forward.25} parent=0 // pred_check_branch
    %21 = sbr.rel (%p19) target = $region21
  $region20: #{meaformer_forward.25} parent=0 // pred_region
    %vm22 = vcmask 64512
    %23 = vst.msk [vmem:[%s4] sm:$0xff] %vm22, 0.0
  $region21: #{meaformer_forward.25} parent=0 // pred_fallthru
    _
  %v24 = vld [vmem:[%s0] sm:$0xff]
  %v25 = vld [vmem:[%s0 + $0x8] sm:$0xff]
  %v26 = vld [vmem:[%s1] sm:$0xff]
  %v27 = vld [vmem:[%s1 + $0x8] sm:$0xff]
  %v28 = vld [vmem:[%s4] sm:$0xff]
  %v31 = vunpack.c.l.b16 %v24
  %v32 = vunpack.c.h.b16 %v24
  %v33 = vunpack.c.l.b16 %v25
  %v34 = vunpack.c.h.b16 %v25
  %v35 = vpack.c.b16 %v31, %v31
  %v36 = vpack.c.b16 %v32, %v32
  %v37 = vpack.c.b16 %v33, %v33
  %v38 = vpack.c.b16 %v34, %v34
  %v45 = vunpack.c.l.b16 %v26
  %v46 = vunpack.c.h.b16 %v26
  %v47 = vunpack.c.l.b16 %v27
  %v48 = vunpack.c.h.b16 %v27
  %v49 = vpack.c.b16 %v45, %v45
  %v50 = vpack.c.b16 %v46, %v46
  %v51 = vpack.c.b16 %v47, %v47
  %v52 = vpack.c.b16 %v48, %v48
  %57 = vmatpush.bf16.xpose.msra.mxu0 0
  %58 = vmatpush.bf16.xpose.msra.mxu0 0
  %59 = vmatpush.bf16.xpose.msra.mxu0 0
  %60 = vmatpush.bf16.xpose.msra.mxu0 0
  %61 = vmatpush.bf16.xpose.msra.mxu0 0
  %62 = vmatpush.bf16.xpose.msra.mxu0 0
  %63 = vmatpush.bf16.xpose.msra.mxu0 0
  %64 = vmatpush.bf16.xpose.msra.mxu0 %v49
  %65 = vmatmul.bf16.gmra.mxu0 %v35
  %v66 = vpop.f32.mrf.mxu0
  %v67 = vadd.f32 0.0, %v66
  %v68 = vpop.f32.mrf.mxu0
  %69 = vdwg.mxu0
  %70 = vmatpush.bf16.xpose.msra.mxu0 0
  %71 = vmatpush.bf16.xpose.msra.mxu0 0
  %72 = vmatpush.bf16.xpose.msra.mxu0 0
  %73 = vmatpush.bf16.xpose.msra.mxu0 0
  %74 = vmatpush.bf16.xpose.msra.mxu0 0
  %75 = vmatpush.bf16.xpose.msra.mxu0 0
  %76 = vmatpush.bf16.xpose.msra.mxu0 0
  %77 = vmatpush.bf16.xpose.msra.mxu0 %v50
  %78 = vmatmul.bf16.gmra.mxu0 %v36
  %v79 = vpop.f32.mrf.mxu0
  %v80 = vadd.f32 %v67, %v79
  %v81 = vpop.f32.mrf.mxu0
  %82 = vdwg.mxu0
  %83 = vmatpush.bf16.xpose.msra.mxu0 0
  %84 = vmatpush.bf16.xpose.msra.mxu0 0
  %85 = vmatpush.bf16.xpose.msra.mxu0 0
  %86 = vmatpush.bf16.xpose.msra.mxu0 0
  %87 = vmatpush.bf16.xpose.msra.mxu0 0
  %88 = vmatpush.bf16.xpose.msra.mxu0 0
  %89 = vmatpush.bf16.xpose.msra.mxu0 0
  %90 = vmatpush.bf16.xpose.msra.mxu0 %v51
  %91 = vmatmul.bf16.gmra.mxu0 %v37
  %v92 = vpop.f32.mrf.mxu0
  %v93 = vadd.f32 %v80, %v92
  %v94 = vpop.f32.mrf.mxu0
  %95 = vdwg.mxu0
  %96 = vmatpush.bf16.xpose.msra.mxu0 0
  %97 = vmatpush.bf16.xpose.msra.mxu0 0
  %98 = vmatpush.bf16.xpose.msra.mxu0 0
  %99 = vmatpush.bf16.xpose.msra.mxu0 0
  %100 = vmatpush.bf16.xpose.msra.mxu0 0
  %101 = vmatpush.bf16.xpose.msra.mxu0 0
  %102 = vmatpush.bf16.xpose.msra.mxu0 0
  %103 = vmatpush.bf16.xpose.msra.mxu0 %v52
  %104 = vmatmul.bf16.gmra.mxu0 %v38
  %v105 = vpop.f32.mrf.mxu0
  %v106 = vadd.f32 %v93, %v105
  %v107 = vpop.f32.mrf.mxu0
  %108 = vdwg.mxu0
  %v109 = vadd.f32 %v28, %v106
  %vm110 = vcmask 64512
  %111 = vst.msk [vmem:[%s4] sm:$0xff] %vm110, %v109
  // Predicated region
  $region22: #{meaformer_forward.25} parent=0 // pred_check
    %p112 = pneg %p18
  $region23: #{meaformer_forward.25} parent=0 // pred_check_branch
    %114 = sbr.rel (%p112) target = $region25
  $region24: #{meaformer_forward.25} parent=0 // pred_region
    %v115 = vld [vmem:[%s4] sm:$0xff]
    %v116 = vld [vmem:[%s2] sm:$0xff]
    %118 = vset.pattern.permute.xlu0 0
    %119 = vperm.xlu0 %118, %v116
    %v120 = vpop.permute.xlu0 %119
    %v122 = vmul.f32 %v115, %v120
    %v123 = vld [vmem:[%s3] sm:$0x1]
    %v125 = vperm.slane %v123, 0
    %v127 = vmul.f32 %v122, %v125
    %v128 = vmul.f32 %v127, 10.0
    %129 = vst.msk [vmem:[%s4] sm:$0xff] %vm110, %v128
  $region25: #{meaformer_forward.25} parent=0 // pred_fallthru
    _
  // Predicated region
  $region26: #{meaformer_forward.25} parent=0 // pred_check
    _
  $region27: #{meaformer_forward.25} parent=0 // pred_check_branch
    %131 = sbr.rel (0) target = $region29
  $region28: #{meaformer_forward.25} parent=0 // pred_region
    _
  $region29: #{meaformer_forward.25} parent=0 // pred_fallthru
    _
  // Predicated region
  $region30: #{meaformer_forward.25} parent=0 // pred_check
    _
  $region31: #{meaformer_forward.25} parent=0 // pred_check_branch
    %133 = sbr.rel (0) target = $region33
  $region32: #{meaformer_forward.25} parent=0 // pred_region
    _
  $region33: #{meaformer_forward.25} parent=0 // pred_fallthru
    _

// kernel: meaformer_forward.24
$region0: #{meaformer_forward.24}
  #allocation0 [shape = 'u32[]', space=smem, size = 0x4, offset = 0x4, fixed_abs, tag = 'smem constant byte address 0x4 - core index']
  #allocation1 [shape = 'u32[72,128]{1,0:T(1,128)}', space=vmem, size = 0x9000, scoped, tag = 'internal scratch']
  %s0 = inlined_call_operand.vmem [shape: f32[64,128], index: 0, kind: input, shape index: {}]
  %s1 = inlined_call_operand.vmem [shape: f32[64,128], index: 1, kind: input, shape index: {}]
  %s2 = inlined_call_operand.vmem [shape: f32[64,128], index: 2, kind: input, shape index: {}]
  %s3 = inlined_call_operand.vmem [shape: f32[64,128], index: 3, kind: input, shape index: {}]
  %s4 = inlined_call_operand.vmem [shape: bf16[128,384], index: 4, kind: input, shape index: {}]
  %s5 = inlined_call_operand.vmem [shape: bf16[128,128], index: 5, kind: input, shape index: {}]
  %s6 = inlined_call_operand.vmem [shape: f32[1,128], index: 6, kind: input, shape index: {}]
  %s7 = inlined_call_operand.vmem [shape: f32[1,128], index: 7, kind: input, shape index: {}]
  %s8 = inlined_call_operand.vmem [shape: bf16[128,256], index: 8, kind: input, shape index: {}]
  %s9 = inlined_call_operand.vmem [shape: f32[1,256], index: 9, kind: input, shape index: {}]
  %s10 = inlined_call_operand.vmem [shape: bf16[256,128], index: 10, kind: input, shape index: {}]
  %s11 = inlined_call_operand.vmem [shape: f32[1,128], index: 11, kind: input, shape index: {}]
  %s12 = inlined_call_operand.vmem [shape: f32[1,128], index: 12, kind: input, shape index: {}]
  %s13 = inlined_call_operand.vmem [shape: f32[1,128], index: 13, kind: input, shape index: {}]
  %s14 = inlined_call_operand.vmem [shape: f32[64,512], index: 14, kind: output, shape index: {0}]
  %s15 = inlined_call_operand.vmem [shape: f32[64,512], index: 15, kind: output, shape index: {1}]
  %16 = xla_tuple %s14, %s15
  %s17 = sld [smem:[#allocation0]]
  $region74: #{meaformer_forward.24} parent=0
    _
  %s19 = ssub.s32 1, %s17
  %s20 = scalar_select 0, %s19, %s17
  // Predicated region
  $region2: #{meaformer_forward.24} parent=0 // pred_check
    _
  $region3: #{meaformer_forward.24} parent=0 // pred_check_branch
    %22 = sbr.rel (0) target = $region5
  $region4: #{meaformer_forward.24} parent=0 // pred_region
    _
  $region5: #{meaformer_forward.24} parent=0 // pred_fallthru
    _
  // Predicated region
  $region6: #{meaformer_forward.24} parent=0 // pred_check
    _
  $region7: #{meaformer_forward.24} parent=0 // pred_check_branch
    %24 = sbr.rel (0) target = $region9
  $region8: #{meaformer_forward.24} parent=0 // pred_region
    _
  $region9: #{meaformer_forward.24} parent=0 // pred_fallthru
    _
  // Predicated region
  $region10: #{meaformer_forward.24} parent=0 // pred_check
    _
  $region11: #{meaformer_forward.24} parent=0 // pred_check_branch
    %26 = sbr.rel (0) target = $region13
  $region12: #{meaformer_forward.24} parent=0 // pred_region
    _
  $region13: #{meaformer_forward.24} parent=0 // pred_fallthru
    _
  // Predicated region
  $region14: #{meaformer_forward.24} parent=0 // pred_check
    _
  $region15: #{meaformer_forward.24} parent=0 // pred_check_branch
    %28 = sbr.rel (0) target = $region17
  $region16: #{meaformer_forward.24} parent=0 // pred_region
    _
  $region17: #{meaformer_forward.24} parent=0 // pred_fallthru
    _
  // Predicated region
  $region18: #{meaformer_forward.24} parent=0 // pred_check
    _
  $region19: #{meaformer_forward.24} parent=0 // pred_check_branch
    %30 = sbr.rel (0) target = $region21
  $region20: #{meaformer_forward.24} parent=0 // pred_region
    _
  $region21: #{meaformer_forward.24} parent=0 // pred_fallthru
    _
  // Predicated region
  $region22: #{meaformer_forward.24} parent=0 // pred_check
    _
  $region23: #{meaformer_forward.24} parent=0 // pred_check_branch
    %32 = sbr.rel (0) target = $region25
  $region24: #{meaformer_forward.24} parent=0 // pred_region
    _
  $region25: #{meaformer_forward.24} parent=0 // pred_fallthru
    _
  // Predicated region
  $region26: #{meaformer_forward.24} parent=0 // pred_check
    _
  $region27: #{meaformer_forward.24} parent=0 // pred_check_branch
    %34 = sbr.rel (0) target = $region29
  $region28: #{meaformer_forward.24} parent=0 // pred_region
    _
  $region29: #{meaformer_forward.24} parent=0 // pred_fallthru
    _
  // Predicated region
  $region30: #{meaformer_forward.24} parent=0 // pred_check
    _
  $region31: #{meaformer_forward.24} parent=0 // pred_check_branch
    %36 = sbr.rel (0) target = $region33
  $region32: #{meaformer_forward.24} parent=0 // pred_region
    _
  $region33: #{meaformer_forward.24} parent=0 // pred_fallthru
    _
  // Predicated region
  $region34: #{meaformer_forward.24} parent=0 // pred_check
    _
  $region35: #{meaformer_forward.24} parent=0 // pred_check_branch
    %38 = sbr.rel (0) target = $region37
  $region36: #{meaformer_forward.24} parent=0 // pred_region
    _
  $region37: #{meaformer_forward.24} parent=0 // pred_fallthru
    _
  // Predicated region
  $region38: #{meaformer_forward.24} parent=0 // pred_check
    _
  $region39: #{meaformer_forward.24} parent=0 // pred_check_branch
    %40 = sbr.rel (0) target = $region41
  $region40: #{meaformer_forward.24} parent=0 // pred_region
    _
  $region41: #{meaformer_forward.24} parent=0 // pred_fallthru
    _
  // Predicated region
  $region42: #{meaformer_forward.24} parent=0 // pred_check
    _
  $region43: #{meaformer_forward.24} parent=0 // pred_check_branch
    %42 = sbr.rel (0) target = $region45
  $region44: #{meaformer_forward.24} parent=0 // pred_region
    _
  $region45: #{meaformer_forward.24} parent=0 // pred_fallthru
    _
  // Predicated region
  $region46: #{meaformer_forward.24} parent=0 // pred_check
    _
  $region47: #{meaformer_forward.24} parent=0 // pred_check_branch
    %44 = sbr.rel (0) target = $region49
  $region48: #{meaformer_forward.24} parent=0 // pred_region
    _
  $region49: #{meaformer_forward.24} parent=0 // pred_fallthru
    _
  // Predicated region
  $region50: #{meaformer_forward.24} parent=0 // pred_check
    _
  $region51: #{meaformer_forward.24} parent=0 // pred_check_branch
    %46 = sbr.rel (0) target = $region53
  $region52: #{meaformer_forward.24} parent=0 // pred_region
    _
  $region53: #{meaformer_forward.24} parent=0 // pred_fallthru
    _
  // Predicated region
  $region54: #{meaformer_forward.24} parent=0 // pred_check
    _
  $region55: #{meaformer_forward.24} parent=0 // pred_check_branch
    %48 = sbr.rel (0) target = $region57
  $region56: #{meaformer_forward.24} parent=0 // pred_region
    _
  $region57: #{meaformer_forward.24} parent=0 // pred_fallthru
    _
  %v49 = vld [vmem:[%s0] sm:$0xff]
  %v50 = vld [vmem:[%s0 + $0x8] sm:$0xff]
  %v51 = vld [vmem:[%s0 + $0x10] sm:$0xff]
  %v52 = vld [vmem:[%s0 + $0x18] sm:$0xff]
  %v53 = vld [vmem:[%s0 + $0x20] sm:$0xff]
  %v54 = vld [vmem:[%s0 + $0x28] sm:$0xff]
  %v55 = vld [vmem:[%s0 + $0x30] sm:$0xff]
  %v56 = vld [vmem:[%s0 + $0x38] sm:$0xff]
  %v57 = vld [vmem:[%s1] sm:$0xff]
  %v58 = vld [vmem:[%s1 + $0x8] sm:$0xff]
  %v59 = vld [vmem:[%s1 + $0x10] sm:$0xff]
  %v60 = vld [vmem:[%s1 + $0x18] sm:$0xff]
  %v61 = vld [vmem:[%s1 + $0x20] sm:$0xff]
  %v62 = vld [vmem:[%s1 + $0x28] sm:$0xff]
  %v63 = vld [vmem:[%s1 + $0x30] sm:$0xff]
  %v64 = vld [vmem:[%s1 + $0x38] sm:$0xff]
  %v65 = vld [vmem:[%s2] sm:$0xff]
  %v66 = vld [vmem:[%s2 + $0x8] sm:$0xff]
  %v67 = vld [vmem:[%s2 + $0x10] sm:$0xff]
  %v68 = vld [vmem:[%s2 + $0x18] sm:$0xff]
  %v69 = vld [vmem:[%s2 + $0x20] sm:$0xff]
  %v70 = vld [vmem:[%s2 + $0x28] sm:$0xff]
  %v71 = vld [vmem:[%s2 + $0x30] sm:$0xff]
  %v72 = vld [vmem:[%s2 + $0x38] sm:$0xff]
  %v73 = vld [vmem:[%s3] sm:$0xff]
  %v74 = vld [vmem:[%s3 + $0x8] sm:$0xff]
  %v75 = vld [vmem:[%s3 + $0x10] sm:$0xff]
  %v76 = vld [vmem:[%s3 + $0x18] sm:$0xff]
  %v77 = vld [vmem:[%s3 + $0x20] sm:$0xff]
  %v78 = vld [vmem:[%s3 + $0x28] sm:$0xff]
  %v79 = vld [vmem:[%s3 + $0x30] sm:$0xff]
  %v80 = vld [vmem:[%s3 + $0x38] sm:$0xff]
  %v81 = vpack.c.bf16 %v50, %v49
  %v82 = vpack.c.bf16 %v52, %v51
  %v83 = vpack.c.bf16 %v54, %v53
  %v84 = vpack.c.bf16 %v56, %v55
  %v85 = vpack.c.bf16 %v58, %v57
  %v86 = vpack.c.bf16 %v60, %v59
  %v87 = vpack.c.bf16 %v62, %v61
  %v88 = vpack.c.bf16 %v64, %v63
  %v89 = vpack.c.bf16 %v66, %v65
  %v90 = vpack.c.bf16 %v68, %v67
  %v91 = vpack.c.bf16 %v70, %v69
  %v92 = vpack.c.bf16 %v72, %v71
  %v93 = vpack.c.bf16 %v74, %v73
  %v94 = vpack.c.bf16 %v76, %v75
  %v95 = vpack.c.bf16 %v78, %v77
  %v96 = vpack.c.bf16 %v80, %v79
  %v97 = vld [vmem:[%s4] sm:$0xff]
  %v98 = vld [vmem:[%s4 + $0x8] sm:$0xf]
  %v99 = vld [vmem:[%s4 + $0xc] sm:$0xff]
  %v100 = vld [vmem:[%s4 + $0x14] sm:$0xf]
  %v101 = vld [vmem:[%s4 + $0x18] sm:$0xff]
  %v102 = vld [vmem:[%s4 + $0x20] sm:$0xf]
  %v103 = vld [vmem:[%s4 + $0x24] sm:$0xff]
  %v104 = vld [vmem:[%s4 + $0x2c] sm:$0xf]
  %v105 = vld [vmem:[%s4 + $0x30] sm:$0xff]
  %v106 = vld [vmem:[%s4 + $0x38] sm:$0xf]
  %v107 = vld [vmem:[%s4 + $0x3c] sm:$0xff]
  %v108 = vld [vmem:[%s4 + $0x44] sm:$0xf]
  %v109 = vld [vmem:[%s4 + $0x48] sm:$0xff]
  %v110 = vld [vmem:[%s4 + $0x50] sm:$0xf]
  %v111 = vld [vmem:[%s4 + $0x54] sm:$0xff]
  %v112 = vld [vmem:[%s4 + $0x5c] sm:$0xf]
  %v113 = vld [vmem:[%s4 + $0x60] sm:$0xff]
  %v114 = vld [vmem:[%s4 + $0x68] sm:$0xf]
  %v115 = vld [vmem:[%s4 + $0x6c] sm:$0xff]
  %v116 = vld [vmem:[%s4 + $0x74] sm:$0xf]
  %v117 = vld [vmem:[%s4 + $0x78] sm:$0xff]
  %v118 = vld [vmem:[%s4 + $0x80] sm:$0xf]
  %v119 = vld [vmem:[%s4 + $0x84] sm:$0xff]
  %v120 = vld [vmem:[%s4 + $0x8c] sm:$0xf]
  %v121 = vld [vmem:[%s4 + $0x90] sm:$0xff]
  %v122 = vld [vmem:[%s4 + $0x98] sm:$0xf]
  %v123 = vld [vmem:[%s4 + $0x9c] sm:$0xff]
  %v124 = vld [vmem:[%s4 + $0xa4] sm:$0xf]
  %v125 = vld [vmem:[%s4 + $0xa8] sm:$0xff]
  %v126 = vld [vmem:[%s4 + $0xb0] sm:$0xf]
  %v127 = vld [vmem:[%s4 + $0xb4] sm:$0xff]
  %v128 = vld [vmem:[%s4 + $0xbc] sm:$0xf]
  %v161 = vunpack.c.l.b16 %v97
  %v162 = vunpack.c.h.b16 %v97
  %v163 = vunpack.c.l.b16 %v98
  %v164 = vunpack.c.l.b16 %v99
  %v165 = vunpack.c.h.b16 %v99
  %v166 = vunpack.c.l.b16 %v100
  %v167 = vunpack.c.l.b16 %v101
  %v168 = vunpack.c.h.b16 %v101
  %v169 = vunpack.c.l.b16 %v102
  %v170 = vunpack.c.l.b16 %v103
  %v171 = vunpack.c.h.b16 %v103
  %v172 = vunpack.c.l.b16 %v104
  %v173 = vunpack.c.l.b16 %v105
  %v174 = vunpack.c.h.b16 %v105
  %v175 = vunpack.c.l.b16 %v106
  %v176 = vunpack.c.l.b16 %v107
  %v177 = vunpack.c.h.b16 %v107
  %v178 = vunpack.c.l.b16 %v108
  %v179 = vunpack.c.l.b16 %v109
  %v180 = vunpack.c.h.b16 %v109
  %v181 = vunpack.c.l.b16 %v110
  %v182 = vunpack.c.l.b16 %v111
  %v183 = vunpack.c.h.b16 %v111
  %v184 = vunpack.c.l.b16 %v112
  %v185 = vunpack.c.l.b16 %v113
  %v186 = vunpack.c.h.b16 %v113
  %v187 = vunpack.c.l.b16 %v114
  %v188 = vunpack.c.l.b16 %v115
  %v189 = vunpack.c.h.b16 %v115
  %v190 = vunpack.c.l.b16 %v116
  %v191 = vunpack.c.l.b16 %v117
  %v192 = vunpack.c.h.b16 %v117
  %v193 = vunpack.c.l.b16 %v118
  %v194 = vunpack.c.l.b16 %v119
  %v195 = vunpack.c.h.b16 %v119
  %v196 = vunpack.c.l.b16 %v120
  %v197 = vunpack.c.l.b16 %v121
  %v198 = vunpack.c.h.b16 %v121
  %v199 = vunpack.c.l.b16 %v122
  %v200 = vunpack.c.l.b16 %v123
  %v201 = vunpack.c.h.b16 %v123
  %v202 = vunpack.c.l.b16 %v124
  %v203 = vunpack.c.l.b16 %v125
  %v204 = vunpack.c.h.b16 %v125
  %v205 = vunpack.c.l.b16 %v126
  %v206 = vunpack.c.l.b16 %v127
  %v207 = vunpack.c.h.b16 %v127
  %v208 = vunpack.c.l.b16 %v128
  %v209 = vpack.c.b16 %v164, %v161
  %v210 = vpack.c.b16 %v165, %v162
  %v211 = vpack.c.b16 %v166, %v163
  %v212 = vpack.c.b16 %v170, %v167
  %v213 = vpack.c.b16 %v171, %v168
  %v214 = vpack.c.b16 %v172, %v169
  %v215 = vpack.c.b16 %v176, %v173
  %v216 = vpack.c.b16 %v177, %v174
  %v217 = vpack.c.b16 %v178, %v175
  %v218 = vpack.c.b16 %v182, %v179
  %v219 = vpack.c.b16 %v183, %v180
  %v220 = vpack.c.b16 %v184, %v181
  %v221 = vpack.c.b16 %v188, %v185
  %v222 = vpack.c.b16 %v189, %v186
  %v223 = vpack.c.b16 %v190, %v187
  %v224 = vpack.c.b16 %v194, %v191
  %v225 = vpack.c.b16 %v195, %v192
  %v226 = vpack.c.b16 %v196, %v193
  %v227 = vpack.c.b16 %v200, %v197
  %v228 = vpack.c.b16 %v201, %v198
  %v229 = vpack.c.b16 %v202, %v199
  %v230 = vpack.c.b16 %v206, %v203
  %v231 = vpack.c.b16 %v207, %v204
  %v232 = vpack.c.b16 %v208, %v205
  %257 = vmatpush.bf16.msra.mxu0 %v230
  %258 = vmatpush.bf16.msra.mxu0 %v227
  %259 = vmatpush.bf16.msra.mxu0 %v224
  %260 = vmatpush.bf16.msra.mxu0 %v221
  %261 = vmatpush.bf16.msra.mxu0 %v218
  %262 = vmatpush.bf16.msra.mxu0 %v215
  %263 = vmatpush.bf16.msra.mxu0 %v212
  %264 = vmatpush.bf16.msra.mxu0 %v209
  %265 = vmatmul.bf16.gmra.mxu0 %v81
  %v266 = vpop.f32.mrf.mxu0
  %v267 = vadd.f32 0.0, %v266
  %v268 = vpop.f32.mrf.mxu0
  %v269 = vadd.f32 0.0, %v268
  %270 = vmatmul.bf16.gmra.mxu0 %v82
  %v271 = vpop.f32.mrf.mxu0
  %v272 = vadd.f32 0.0, %v271
  %v273 = vpop.f32.mrf.mxu0
  %v274 = vadd.f32 0.0, %v273
  %275 = vmatmul.bf16.gmra.mxu0 %v83
  %v276 = vpop.f32.mrf.mxu0
  %v277 = vadd.f32 0.0, %v276
  %v278 = vpop.f32.mrf.mxu0
  %v279 = vadd.f32 0.0, %v278
  %280 = vmatmul.bf16.gmra.mxu0 %v84
  %v281 = vpop.f32.mrf.mxu0
  %v282 = vadd.f32 0.0, %v281
  %v283 = vpop.f32.mrf.mxu0
  %v284 = vadd.f32 0.0, %v283
  %285 = vmatmul.bf16.gmra.mxu0 %v85
  %v286 = vpop.f32.mrf.mxu0
  %v287 = vadd.f32 0.0, %v286
  %v288 = vpop.f32.mrf.mxu0
  %v289 = vadd.f32 0.0, %v288
  %290 = vmatmul.bf16.gmra.mxu0 %v86
  %v291 = vpop.f32.mrf.mxu0
  %v292 = vadd.f32 0.0, %v291
  %v293 = vpop.f32.mrf.mxu0
  %v294 = vadd.f32 0.0, %v293
  %295 = vmatmul.bf16.gmra.mxu0 %v87
  %v296 = vpop.f32.mrf.mxu0
  %v297 = vadd.f32 0.0, %v296
  %v298 = vpop.f32.mrf.mxu0
  %v299 = vadd.f32 0.0, %v298
  %300 = vmatmul.bf16.gmra.mxu0 %v88
  %v301 = vpop.f32.mrf.mxu0
  %v302 = vadd.f32 0.0, %v301
  %v303 = vpop.f32.mrf.mxu0
  %v304 = vadd.f32 0.0, %v303
  %305 = vmatmul.bf16.gmra.mxu0 %v89
  %v306 = vpop.f32.mrf.mxu0
  %v307 = vadd.f32 0.0, %v306
  %v308 = vpop.f32.mrf.mxu0
  %v309 = vadd.f32 0.0, %v308
  %310 = vmatmul.bf16.gmra.mxu0 %v90
  %v311 = vpop.f32.mrf.mxu0
  %v312 = vadd.f32 0.0, %v311
  %v313 = vpop.f32.mrf.mxu0
  %v314 = vadd.f32 0.0, %v313
  %315 = vmatmul.bf16.gmra.mxu0 %v91
  %v316 = vpop.f32.mrf.mxu0
  %v317 = vadd.f32 0.0, %v316
  %v318 = vpop.f32.mrf.mxu0
  %v319 = vadd.f32 0.0, %v318
  %320 = vmatmul.bf16.gmra.mxu0 %v92
  %v321 = vpop.f32.mrf.mxu0
  %v322 = vadd.f32 0.0, %v321
  %v323 = vpop.f32.mrf.mxu0
  %v324 = vadd.f32 0.0, %v323
  %325 = vmatmul.bf16.gmra.mxu0 %v93
  %v326 = vpop.f32.mrf.mxu0
  %v327 = vadd.f32 0.0, %v326
  %v328 = vpop.f32.mrf.mxu0
  %v329 = vadd.f32 0.0, %v328
  %330 = vmatmul.bf16.gmra.mxu0 %v94
  %v331 = vpop.f32.mrf.mxu0
  %v332 = vadd.f32 0.0, %v331
  %v333 = vpop.f32.mrf.mxu0
  %v334 = vadd.f32 0.0, %v333
  %335 = vmatmul.bf16.gmra.mxu0 %v95
  %v336 = vpop.f32.mrf.mxu0
  %v337 = vadd.f32 0.0, %v336
  %v338 = vpop.f32.mrf.mxu0
  %v339 = vadd.f32 0.0, %v338
  %340 = vmatmul.bf16.gmra.mxu0 %v96
  %v341 = vpop.f32.mrf.mxu0
  %v342 = vadd.f32 0.0, %v341
  %v343 = vpop.f32.mrf.mxu0
  %v344 = vadd.f32 0.0, %v343
  %345 = vdwg.mxu0
  %346 = vmatpush.bf16.msra.mxu0 %v231
  %347 = vmatpush.bf16.msra.mxu0 %v228
  %348 = vmatpush.bf16.msra.mxu0 %v225
  %349 = vmatpush.bf16.msra.mxu0 %v222
  %350 = vmatpush.bf16.msra.mxu0 %v219
  %351 = vmatpush.bf16.msra.mxu0 %v216
  %352 = vmatpush.bf16.msra.mxu0 %v213
  %353 = vmatpush.bf16.msra.mxu0 %v210
  %354 = vmatmul.bf16.gmra.mxu0 %v81
  %v355 = vpop.f32.mrf.mxu0
  %v356 = vadd.f32 0.0, %v355
  %v357 = vpop.f32.mrf.mxu0
  %v358 = vadd.f32 0.0, %v357
  %359 = vmatmul.bf16.gmra.mxu0 %v82
  %v360 = vpop.f32.mrf.mxu0
  %v361 = vadd.f32 0.0, %v360
  %v362 = vpop.f32.mrf.mxu0
  %v363 = vadd.f32 0.0, %v362
  %364 = vmatmul.bf16.gmra.mxu0 %v83
  %v365 = vpop.f32.mrf.mxu0
  %v366 = vadd.f32 0.0, %v365
  %v367 = vpop.f32.mrf.mxu0
  %v368 = vadd.f32 0.0, %v367
  %369 = vmatmul.bf16.gmra.mxu0 %v84
  %v370 = vpop.f32.mrf.mxu0
  %v371 = vadd.f32 0.0, %v370
  %v372 = vpop.f32.mrf.mxu0
  %v373 = vadd.f32 0.0, %v372
  %374 = vmatmul.bf16.gmra.mxu0 %v85
  %v375 = vpop.f32.mrf.mxu0
  %v376 = vadd.f32 0.0, %v375
  %v377 = vpop.f32.mrf.mxu0
  %v378 = vadd.f32 0.0, %v377
  %379 = vmatmul.bf16.gmra.mxu0 %v86
  %v380 = vpop.f32.mrf.mxu0
  %v381 = vadd.f32 0.0, %v380
  %v382 = vpop.f32.mrf.mxu0
  %v383 = vadd.f32 0.0, %v382
  %384 = vmatmul.bf16.gmra.mxu0 %v87
  %v385 = vpop.f32.mrf.mxu0
  %v386 = vadd.f32 0.0, %v385
  %v387 = vpop.f32.mrf.mxu0
  %v388 = vadd.f32 0.0, %v387
  %389 = vmatmul.bf16.gmra.mxu0 %v88
  %v390 = vpop.f32.mrf.mxu0
  %v391 = vadd.f32 0.0, %v390
  %v392 = vpop.f32.mrf.mxu0
  %v393 = vadd.f32 0.0, %v392
  %394 = vmatmul.bf16.gmra.mxu0 %v89
  %v395 = vpop.f32.mrf.mxu0
  %v396 = vadd.f32 0.0, %v395
  %v397 = vpop.f32.mrf.mxu0
  %v398 = vadd.f32 0.0, %v397
  %399 = vmatmul.bf16.gmra.mxu0 %v90
  %v400 = vpop.f32.mrf.mxu0
  %v401 = vadd.f32 0.0, %v400
  %v402 = vpop.f32.mrf.mxu0
  %v403 = vadd.f32 0.0, %v402
  %404 = vmatmul.bf16.gmra.mxu0 %v91
  %v405 = vpop.f32.mrf.mxu0
  %v406 = vadd.f32 0.0, %v405
  %v407 = vpop.f32.mrf.mxu0
  %v408 = vadd.f32 0.0, %v407
  %409 = vmatmul.bf16.gmra.mxu0 %v92
  %v410 = vpop.f32.mrf.mxu0
  %v411 = vadd.f32 0.0, %v410
  %v412 = vpop.f32.mrf.mxu0
  %v413 = vadd.f32 0.0, %v412
  %414 = vmatmul.bf16.gmra.mxu0 %v93
  %v415 = vpop.f32.mrf.mxu0
  %v416 = vadd.f32 0.0, %v415
  %v417 = vpop.f32.mrf.mxu0
  %v418 = vadd.f32 0.0, %v417
  %419 = vmatmul.bf16.gmra.mxu0 %v94
  %v420 = vpop.f32.mrf.mxu0
  %v421 = vadd.f32 0.0, %v420
  %v422 = vpop.f32.mrf.mxu0
  %v423 = vadd.f32 0.0, %v422
  %424 = vmatmul.bf16.gmra.mxu0 %v95
  %v425 = vpop.f32.mrf.mxu0
  %v426 = vadd.f32 0.0, %v425
  %v427 = vpop.f32.mrf.mxu0
  %v428 = vadd.f32 0.0, %v427
  %429 = vmatmul.bf16.gmra.mxu0 %v96
  %v430 = vpop.f32.mrf.mxu0
  %v431 = vadd.f32 0.0, %v430
  %v432 = vpop.f32.mrf.mxu0
  %v433 = vadd.f32 0.0, %v432
  %434 = vdwg.mxu0
  %435 = vmatpush.bf16.msra.mxu0 %v232
  %436 = vmatpush.bf16.msra.mxu0 %v229
  %437 = vmatpush.bf16.msra.mxu0 %v226
  %438 = vmatpush.bf16.msra.mxu0 %v223
  %439 = vmatpush.bf16.msra.mxu0 %v220
  %440 = vmatpush.bf16.msra.mxu0 %v217
  %441 = vmatpush.bf16.msra.mxu0 %v214
  %442 = vmatpush.bf16.msra.mxu0 %v211
  %443 = vmatmul.bf16.gmra.mxu0 %v81
  %v444 = vpop.f32.mrf.mxu0
  %v445 = vadd.f32 0.0, %v444
  %v446 = vpop.f32.mrf.mxu0
  %v447 = vadd.f32 0.0, %v446
  %448 = vmatmul.bf16.gmra.mxu0 %v82
  %v449 = vpop.f32.mrf.mxu0
  %v450 = vadd.f32 0.0, %v449
  %v451 = vpop.f32.mrf.mxu0
  %v452 = vadd.f32 0.0, %v451
  %453 = vmatmul.bf16.gmra.mxu0 %v83
  %v454 = vpop.f32.mrf.mxu0
  %v455 = vadd.f32 0.0, %v454
  %v456 = vpop.f32.mrf.mxu0
  %v457 = vadd.f32 0.0, %v456
  %458 = vmatmul.bf16.gmra.mxu0 %v84
  %v459 = vpop.f32.mrf.mxu0
  %v460 = vadd.f32 0.0, %v459
  %v461 = vpop.f32.mrf.mxu0
  %v462 = vadd.f32 0.0, %v461
  %463 = vmatmul.bf16.gmra.mxu0 %v85
  %v464 = vpop.f32.mrf.mxu0
  %v465 = vadd.f32 0.0, %v464
  %v466 = vpop.f32.mrf.mxu0
  %v467 = vadd.f32 0.0, %v466
  %468 = vmatmul.bf16.gmra.mxu0 %v86
  %v469 = vpop.f32.mrf.mxu0
  %v470 = vadd.f32 0.0, %v469
  %v471 = vpop.f32.mrf.mxu0
  %v472 = vadd.f32 0.0, %v471
  %473 = vmatmul.bf16.gmra.mxu0 %v87
  %v474 = vpop.f32.mrf.mxu0
  %v475 = vadd.f32 0.0, %v474
  %v476 = vpop.f32.mrf.mxu0
  %v477 = vadd.f32 0.0, %v476
  %478 = vmatmul.bf16.gmra.mxu0 %v88
  %v479 = vpop.f32.mrf.mxu0
  %v480 = vadd.f32 0.0, %v479
  %v481 = vpop.f32.mrf.mxu0
  %v482 = vadd.f32 0.0, %v481
  %483 = vmatmul.bf16.gmra.mxu0 %v89
  %v484 = vpop.f32.mrf.mxu0
  %v485 = vadd.f32 0.0, %v484
  %v486 = vpop.f32.mrf.mxu0
  %v487 = vadd.f32 0.0, %v486
  %488 = vmatmul.bf16.gmra.mxu0 %v90
  %v489 = vpop.f32.mrf.mxu0
  %v490 = vadd.f32 0.0, %v489
  %v491 = vpop.f32.mrf.mxu0
  %v492 = vadd.f32 0.0, %v491
  %493 = vmatmul.bf16.gmra.mxu0 %v91
  %v494 = vpop.f32.mrf.mxu0
  %v495 = vadd.f32 0.0, %v494
  %v496 = vpop.f32.mrf.mxu0
  %v497 = vadd.f32 0.0, %v496
  %498 = vmatmul.bf16.gmra.mxu0 %v92
  %v499 = vpop.f32.mrf.mxu0
  %v500 = vadd.f32 0.0, %v499
  %v501 = vpop.f32.mrf.mxu0
  %v502 = vadd.f32 0.0, %v501
  %503 = vmatmul.bf16.gmra.mxu0 %v93
  %v504 = vpop.f32.mrf.mxu0
  %v505 = vadd.f32 0.0, %v504
  %v506 = vpop.f32.mrf.mxu0
  %v507 = vadd.f32 0.0, %v506
  %508 = vmatmul.bf16.gmra.mxu0 %v94
  %v509 = vpop.f32.mrf.mxu0
  %v510 = vadd.f32 0.0, %v509
  %v511 = vpop.f32.mrf.mxu0
  %v512 = vadd.f32 0.0, %v511
  %513 = vmatmul.bf16.gmra.mxu0 %v95
  %v514 = vpop.f32.mrf.mxu0
  %v515 = vadd.f32 0.0, %v514
  %v516 = vpop.f32.mrf.mxu0
  %v517 = vadd.f32 0.0, %v516
  %518 = vmatmul.bf16.gmra.mxu0 %v96
  %v519 = vpop.f32.mrf.mxu0
  %v520 = vadd.f32 0.0, %v519
  %v521 = vpop.f32.mrf.mxu0
  %v522 = vadd.f32 0.0, %v521
  %523 = vdwg.mxu0
  %v524 = vpack.c.bf16 %v356, %v267
  %v525 = vpack.c.bf16 %v445, %v445
  %v526 = vpack.c.bf16 %v358, %v269
  %v527 = vpack.c.bf16 %v447, %v447
  %v528 = vpack.c.bf16 %v361, %v272
  %v529 = vpack.c.bf16 %v450, %v450
  %v530 = vpack.c.bf16 %v363, %v274
  %v531 = vpack.c.bf16 %v452, %v452
  %v532 = vpack.c.bf16 %v366, %v277
  %v533 = vpack.c.bf16 %v455, %v455
  %v534 = vpack.c.bf16 %v368, %v279
  %v535 = vpack.c.bf16 %v457, %v457
  %v536 = vpack.c.bf16 %v371, %v282
  %v537 = vpack.c.bf16 %v460, %v460
  %v538 = vpack.c.bf16 %v373, %v284
  %v539 = vpack.c.bf16 %v462, %v462
  %v540 = vpack.c.bf16 %v376, %v287
  %v541 = vpack.c.bf16 %v465, %v465
  %v542 = vpack.c.bf16 %v378, %v289
  %v543 = vpack.c.bf16 %v467, %v467
  %v544 = vpack.c.bf16 %v381, %v292
  %v545 = vpack.c.bf16 %v470, %v470
  %v546 = vpack.c.bf16 %v383, %v294
  %v547 = vpack.c.bf16 %v472, %v472
  %v548 = vpack.c.bf16 %v386, %v297
  %v549 = vpack.c.bf16 %v475, %v475
  %v550 = vpack.c.bf16 %v388, %v299
  %v551 = vpack.c.bf16 %v477, %v477
  %v552 = vpack.c.bf16 %v391, %v302
  %v553 = vpack.c.bf16 %v480, %v480
  %v554 = vpack.c.bf16 %v393, %v304
  %v555 = vpack.c.bf16 %v482, %v482
  %v556 = vpack.c.bf16 %v396, %v307
  %v557 = vpack.c.bf16 %v485, %v485
  %v558 = vpack.c.bf16 %v398, %v309
  %v559 = vpack.c.bf16 %v487, %v487
  %v560 = vpack.c.bf16 %v401, %v312
  %v561 = vpack.c.bf16 %v490, %v490
  %v562 = vpack.c.bf16 %v403, %v314
  %v563 = vpack.c.bf16 %v492, %v492
  %v564 = vpack.c.bf16 %v406, %v317
  %v565 = vpack.c.bf16 %v495, %v495
  %v566 = vpack.c.bf16 %v408, %v319
  %v567 = vpack.c.bf16 %v497, %v497
  %v568 = vpack.c.bf16 %v411, %v322
  %v569 = vpack.c.bf16 %v500, %v500
  %v570 = vpack.c.bf16 %v413, %v324
  %v571 = vpack.c.bf16 %v502, %v502
  %v572 = vpack.c.bf16 %v416, %v327
  %v573 = vpack.c.bf16 %v505, %v505
  %v574 = vpack.c.bf16 %v418, %v329
  %v575 = vpack.c.bf16 %v507, %v507
  %v576 = vpack.c.bf16 %v421, %v332
  %v577 = vpack.c.bf16 %v510, %v510
  %v578 = vpack.c.bf16 %v423, %v334
  %v579 = vpack.c.bf16 %v512, %v512
  %v580 = vpack.c.bf16 %v426, %v337
  %v581 = vpack.c.bf16 %v515, %v515
  %v582 = vpack.c.bf16 %v428, %v339
  %v583 = vpack.c.bf16 %v517, %v517
  %v584 = vpack.c.bf16 %v431, %v342
  %v585 = vpack.c.bf16 %v520, %v520
  %v586 = vpack.c.bf16 %v433, %v344
  %v587 = vpack.c.bf16 %v522, %v522
  %v588 = vunpack.c.l.bf16 %v524
  %v589 = vunpack.c.l.bf16 %v526
  %v590 = vunpack.c.l.bf16 %v528
  %v591 = vunpack.c.l.bf16 %v530
  %v592 = vunpack.c.l.bf16 %v532
  %v593 = vunpack.c.l.bf16 %v534
  %v594 = vunpack.c.l.bf16 %v536
  %v595 = vunpack.c.l.bf16 %v538
  %v604 = vrot.slane %v524, 4
  %v605 = vrot.slane %v526, 4
  %v606 = vrot.slane %v528, 4
  %v607 = vrot.slane %v530, 4
  %v608 = vrot.slane %v532, 4
  %v609 = vrot.slane %v534, 4
  %v610 = vrot.slane %v536, 4
  %v611 = vrot.slane %v538, 4
  %v620 = vunpack.c.l.bf16 %v604
  %v621 = vunpack.c.l.bf16 %v605
  %v622 = vunpack.c.l.bf16 %v606
  %v623 = vunpack.c.l.bf16 %v607
  %v624 = vunpack.c.l.bf16 %v608
  %v625 = vunpack.c.l.bf16 %v609
  %v626 = vunpack.c.l.bf16 %v610
  %v627 = vunpack.c.l.bf16 %v611
  %v628 = vmul.f32 %v588, %v620
  %v629 = vmul.f32 %v589, %v621
  %v630 = vmul.f32 %v590, %v622
  %v631 = vmul.f32 %v591, %v623
  %v632 = vmul.f32 %v592, %v624
  %v633 = vmul.f32 %v593, %v625
  %v634 = vmul.f32 %v594, %v626
  %v635 = vmul.f32 %v595, %v627
  %636 = vadd.xlane.f32.xlu0 %v628
  %v637 = vpop.xlane.xlu0 %636
  %638 = vadd.xlane.f32.xlu0 %v629
  %v639 = vpop.xlane.xlu0 %638
  %640 = vadd.xlane.f32.xlu0 %v630
  %v641 = vpop.xlane.xlu0 %640
  %642 = vadd.xlane.f32.xlu0 %v631
  %v643 = vpop.xlane.xlu0 %642
  %644 = vadd.xlane.f32.xlu0 %v632
  %v645 = vpop.xlane.xlu0 %644
  %646 = vadd.xlane.f32.xlu0 %v633
  %v647 = vpop.xlane.xlu0 %646
  %648 = vadd.xlane.f32.xlu0 %v634
  %v649 = vpop.xlane.xlu0 %648
  %650 = vadd.xlane.f32.xlu0 %v635
  %v651 = vpop.xlane.xlu0 %650
  %v652 = vmul.f32 %v637, 0.088388346
  %v653 = vmul.f32 %v639, 0.088388346
  %v654 = vmul.f32 %v641, 0.088388346
  %v655 = vmul.f32 %v643, 0.088388346
  %v656 = vmul.f32 %v645, 0.088388346
  %v657 = vmul.f32 %v647, 0.088388346
  %v658 = vmul.f32 %v649, 0.088388346
  %v659 = vmul.f32 %v651, 0.088388346
  %v668 = vrot.slane %v540, 4
  %v669 = vrot.slane %v542, 4
  %v670 = vrot.slane %v544, 4
  %v671 = vrot.slane %v546, 4
  %v672 = vrot.slane %v548, 4
  %v673 = vrot.slane %v550, 4
  %v674 = vrot.slane %v552, 4
  %v675 = vrot.slane %v554, 4
  %v684 = vunpack.c.l.bf16 %v668
  %v685 = vunpack.c.l.bf16 %v669
  %v686 = vunpack.c.l.bf16 %v670
  %v687 = vunpack.c.l.bf16 %v671
  %v688 = vunpack.c.l.bf16 %v672
  %v689 = vunpack.c.l.bf16 %v673
  %v690 = vunpack.c.l.bf16 %v674
  %v691 = vunpack.c.l.bf16 %v675
  %v692 = vmul.f32 %v588, %v684
  %v693 = vmul.f32 %v589, %v685
  %v694 = vmul.f32 %v590, %v686
  %v695 = vmul.f32 %v591, %v687
  %v696 = vmul.f32 %v592, %v688
  %v697 = vmul.f32 %v593, %v689
  %v698 = vmul.f32 %v594, %v690
  %v699 = vmul.f32 %v595, %v691
  %700 = vadd.xlane.f32.xlu0 %v692
  %v701 = vpop.xlane.xlu0 %700
  %702 = vadd.xlane.f32.xlu0 %v693
  %v703 = vpop.xlane.xlu0 %702
  %704 = vadd.xlane.f32.xlu0 %v694
  %v705 = vpop.xlane.xlu0 %704
  %706 = vadd.xlane.f32.xlu0 %v695
  %v707 = vpop.xlane.xlu0 %706
  %708 = vadd.xlane.f32.xlu0 %v696
  %v709 = vpop.xlane.xlu0 %708
  %710 = vadd.xlane.f32.xlu0 %v697
  %v711 = vpop.xlane.xlu0 %710
  %712 = vadd.xlane.f32.xlu0 %v698
  %v713 = vpop.xlane.xlu0 %712
  %714 = vadd.xlane.f32.xlu0 %v699
  %v715 = vpop.xlane.xlu0 %714
  %v716 = vmul.f32 %v701, 0.088388346
  %v717 = vmul.f32 %v703, 0.088388346
  %v718 = vmul.f32 %v705, 0.088388346
  %v719 = vmul.f32 %v707, 0.088388346
  %v720 = vmul.f32 %v709, 0.088388346
  %v721 = vmul.f32 %v711, 0.088388346
  %v722 = vmul.f32 %v713, 0.088388346
  %v723 = vmul.f32 %v715, 0.088388346
  %v732 = vrot.slane %v556, 4
  %v733 = vrot.slane %v558, 4
  %v734 = vrot.slane %v560, 4
  %v735 = vrot.slane %v562, 4
  %v736 = vrot.slane %v564, 4
  %v737 = vrot.slane %v566, 4
  %v738 = vrot.slane %v568, 4
  %v739 = vrot.slane %v570, 4
  %v748 = vunpack.c.l.bf16 %v732
  %v749 = vunpack.c.l.bf16 %v733
  %v750 = vunpack.c.l.bf16 %v734
  %v751 = vunpack.c.l.bf16 %v735
  %v752 = vunpack.c.l.bf16 %v736
  %v753 = vunpack.c.l.bf16 %v737
  %v754 = vunpack.c.l.bf16 %v738
  %v755 = vunpack.c.l.bf16 %v739
  %v756 = vmul.f32 %v588, %v748
  %v757 = vmul.f32 %v589, %v749
  %v758 = vmul.f32 %v590, %v750
  %v759 = vmul.f32 %v591, %v751
  %v760 = vmul.f32 %v592, %v752
  %v761 = vmul.f32 %v593, %v753
  %v762 = vmul.f32 %v594, %v754
  %v763 = vmul.f32 %v595, %v755
  %764 = vadd.xlane.f32.xlu0 %v756
  %v765 = vpop.xlane.xlu0 %764
  %766 = vadd.xlane.f32.xlu0 %v757
  %v767 = vpop.xlane.xlu0 %766
  %768 = vadd.xlane.f32.xlu0 %v758
  %v769 = vpop.xlane.xlu0 %768
  %770 = vadd.xlane.f32.xlu0 %v759
  %v771 = vpop.xlane.xlu0 %770
  %772 = vadd.xlane.f32.xlu0 %v760
  %v773 = vpop.xlane.xlu0 %772
  %774 = vadd.xlane.f32.xlu0 %v761
  %v775 = vpop.xlane.xlu0 %774
  %776 = vadd.xlane.f32.xlu0 %v762
  %v777 = vpop.xlane.xlu0 %776
  %778 = vadd.xlane.f32.xlu0 %v763
  %v779 = vpop.xlane.xlu0 %778
  %v780 = vmul.f32 %v765, 0.088388346
  %v781 = vmul.f32 %v767, 0.088388346
  %v782 = vmul.f32 %v769, 0.088388346
  %v783 = vmul.f32 %v771, 0.088388346
  %v784 = vmul.f32 %v773, 0.088388346
  %v785 = vmul.f32 %v775, 0.088388346
  %v786 = vmul.f32 %v777, 0.088388346
  %v787 = vmul.f32 %v779, 0.088388346
  %v796 = vrot.slane %v572, 4
  %v797 = vrot.slane %v574, 4
  %v798 = vrot.slane %v576, 4
  %v799 = vrot.slane %v578, 4
  %v800 = vrot.slane %v580, 4
  %v801 = vrot.slane %v582, 4
  %v802 = vrot.slane %v584, 4
  %v803 = vrot.slane %v586, 4
  %v812 = vunpack.c.l.bf16 %v796
  %v813 = vunpack.c.l.bf16 %v797
  %v814 = vunpack.c.l.bf16 %v798
  %v815 = vunpack.c.l.bf16 %v799
  %v816 = vunpack.c.l.bf16 %v800
  %v817 = vunpack.c.l.bf16 %v801
  %v818 = vunpack.c.l.bf16 %v802
  %v819 = vunpack.c.l.bf16 %v803
  %v820 = vmul.f32 %v588, %v812
  %v821 = vmul.f32 %v589, %v813
  %v822 = vmul.f32 %v590, %v814
  %v823 = vmul.f32 %v591, %v815
  %v824 = vmul.f32 %v592, %v816
  %v825 = vmul.f32 %v593, %v817
  %v826 = vmul.f32 %v594, %v818
  %v827 = vmul.f32 %v595, %v819
  %828 = vadd.xlane.f32.xlu0 %v820
  %v829 = vpop.xlane.xlu0 %828
  %830 = vadd.xlane.f32.xlu0 %v821
  %v831 = vpop.xlane.xlu0 %830
  %832 = vadd.xlane.f32.xlu0 %v822
  %v833 = vpop.xlane.xlu0 %832
  %834 = vadd.xlane.f32.xlu0 %v823
  %v835 = vpop.xlane.xlu0 %834
  %836 = vadd.xlane.f32.xlu0 %v824
  %v837 = vpop.xlane.xlu0 %836
  %838 = vadd.xlane.f32.xlu0 %v825
  %v839 = vpop.xlane.xlu0 %838
  %840 = vadd.xlane.f32.xlu0 %v826
  %v841 = vpop.xlane.xlu0 %840
  %842 = vadd.xlane.f32.xlu0 %v827
  %v843 = vpop.xlane.xlu0 %842
  %v844 = vmul.f32 %v829, 0.088388346
  %v845 = vmul.f32 %v831, 0.088388346
  %v846 = vmul.f32 %v833, 0.088388346
  %v847 = vmul.f32 %v835, 0.088388346
  %v848 = vmul.f32 %v837, 0.088388346
  %v849 = vmul.f32 %v839, 0.088388346
  %v850 = vmul.f32 %v841, 0.088388346
  %v851 = vmul.f32 %v843, 0.088388346
  %v852 = vmax.f32 %v652, %v716
  %v853 = vmax.f32 %v653, %v717
  %v854 = vmax.f32 %v654, %v718
  %v855 = vmax.f32 %v655, %v719
  %v856 = vmax.f32 %v656, %v720
  %v857 = vmax.f32 %v657, %v721
  %v858 = vmax.f32 %v658, %v722
  %v859 = vmax.f32 %v659, %v723
  %v860 = vmax.f32 %v780, %v844
  %v861 = vmax.f32 %v781, %v845
  %v862 = vmax.f32 %v782, %v846
  %v863 = vmax.f32 %v783, %v847
  %v864 = vmax.f32 %v784, %v848
  %v865 = vmax.f32 %v785, %v849
  %v866 = vmax.f32 %v786, %v850
  %v867 = vmax.f32 %v787, %v851
  %v868 = vmax.f32 %v852, %v860
  %v869 = vmax.f32 %v853, %v861
  %v870 = vmax.f32 %v854, %v862
  %v871 = vmax.f32 %v855, %v863
  %v872 = vmax.f32 %v856, %v864
  %v873 = vmax.f32 %v857, %v865
  %v874 = vmax.f32 %v858, %v866
  %v875 = vmax.f32 %v859, %v867
  %v876 = vsub.f32 %v652, %v868
  %v877 = vsub.f32 %v653, %v869
  %v878 = vsub.f32 %v654, %v870
  %v879 = vsub.f32 %v655, %v871
  %v880 = vsub.f32 %v656, %v872
  %v881 = vsub.f32 %v657, %v873
  %v882 = vsub.f32 %v658, %v874
  %v883 = vsub.f32 %v659, %v875
  %v884 = vmul.f32 %v876, 1.442695
  %v885 = vpow.pop %v884
  %v886 = vmul.f32 %v877, 1.442695
  %v887 = vpow.pop %v886
  %v888 = vmul.f32 %v878, 1.442695
  %v889 = vpow.pop %v888
  %v890 = vmul.f32 %v879, 1.442695
  %v891 = vpow.pop %v890
  %v892 = vmul.f32 %v880, 1.442695
  %v893 = vpow.pop %v892
  %v894 = vmul.f32 %v881, 1.442695
  %v895 = vpow.pop %v894
  %v896 = vmul.f32 %v882, 1.442695
  %v897 = vpow.pop %v896
  %v898 = vmul.f32 %v883, 1.442695
  %v899 = vpow.pop %v898
  %v900 = vsub.f32 %v716, %v868
  %v901 = vsub.f32 %v717, %v869
  %v902 = vsub.f32 %v718, %v870
  %v903 = vsub.f32 %v719, %v871
  %v904 = vsub.f32 %v720, %v872
  %v905 = vsub.f32 %v721, %v873
  %v906 = vsub.f32 %v722, %v874
  %v907 = vsub.f32 %v723, %v875
  %v908 = vmul.f32 %v900, 1.442695
  %v909 = vpow.pop %v908
  %v910 = vmul.f32 %v901, 1.442695
  %v911 = vpow.pop %v910
  %v912 = vmul.f32 %v902, 1.442695
  %v913 = vpow.pop %v912
  %v914 = vmul.f32 %v903, 1.442695
  %v915 = vpow.pop %v914
  %v916 = vmul.f32 %v904, 1.442695
  %v917 = vpow.pop %v916
  %v918 = vmul.f32 %v905, 1.442695
  %v919 = vpow.pop %v918
  %v920 = vmul.f32 %v906, 1.442695
  %v921 = vpow.pop %v920
  %v922 = vmul.f32 %v907, 1.442695
  %v923 = vpow.pop %v922
  %v924 = vsub.f32 %v780, %v868
  %v925 = vsub.f32 %v781, %v869
  %v926 = vsub.f32 %v782, %v870
  %v927 = vsub.f32 %v783, %v871
  %v928 = vsub.f32 %v784, %v872
  %v929 = vsub.f32 %v785, %v873
  %v930 = vsub.f32 %v786, %v874
  %v931 = vsub.f32 %v787, %v875
  %v932 = vmul.f32 %v924, 1.442695
  %v933 = vpow.pop %v932
  %v934 = vmul.f32 %v925, 1.442695
  %v935 = vpow.pop %v934
  %v936 = vmul.f32 %v926, 1.442695
  %v937 = vpow.pop %v936
  %v938 = vmul.f32 %v927, 1.442695
  %v939 = vpow.pop %v938
  %v940 = vmul.f32 %v928, 1.442695
  %v941 = vpow.pop %v940
  %v942 = vmul.f32 %v929, 1.442695
  %v943 = vpow.pop %v942
  %v944 = vmul.f32 %v930, 1.442695
  %v945 = vpow.pop %v944
  %v946 = vmul.f32 %v931, 1.442695
  %v947 = vpow.pop %v946
  %v948 = vsub.f32 %v844, %v868
  %v949 = vsub.f32 %v845, %v869
  %v950 = vsub.f32 %v846, %v870
  %v951 = vsub.f32 %v847, %v871
  %v952 = vsub.f32 %v848, %v872
  %v953 = vsub.f32 %v849, %v873
  %v954 = vsub.f32 %v850, %v874
  %v955 = vsub.f32 %v851, %v875
  %v956 = vmul.f32 %v948, 1.442695
  %v957 = vpow.pop %v956
  %v958 = vmul.f32 %v949, 1.442695
  %v959 = vpow.pop %v958
  %v960 = vmul.f32 %v950, 1.442695
  %v961 = vpow.pop %v960
  %v962 = vmul.f32 %v951, 1.442695
  %v963 = vpow.pop %v962
  %v964 = vmul.f32 %v952, 1.442695
  %v965 = vpow.pop %v964
  %v966 = vmul.f32 %v953, 1.442695
  %v967 = vpow.pop %v966
  %v968 = vmul.f32 %v954, 1.442695
  %v969 = vpow.pop %v968
  %v970 = vmul.f32 %v955, 1.442695
  %v971 = vpow.pop %v970
  %v972 = vadd.f32 %v885, %v909
  %v973 = vadd.f32 %v887, %v911
  %v974 = vadd.f32 %v889, %v913
  %v975 = vadd.f32 %v891, %v915
  %v976 = vadd.f32 %v893, %v917
  %v977 = vadd.f32 %v895, %v919
  %v978 = vadd.f32 %v897, %v921
  %v979 = vadd.f32 %v899, %v923
  %v980 = vadd.f32 %v972, %v933
  %v981 = vadd.f32 %v973, %v935
  %v982 = vadd.f32 %v974, %v937
  %v983 = vadd.f32 %v975, %v939
  %v984 = vadd.f32 %v976, %v941
  %v985 = vadd.f32 %v977, %v943
  %v986 = vadd.f32 %v978, %v945
  %v987 = vadd.f32 %v979, %v947
  %v988 = vadd.f32 %v980, %v957
  %v989 = vadd.f32 %v981, %v959
  %v990 = vadd.f32 %v982, %v961
  %v991 = vadd.f32 %v983, %v963
  %v992 = vadd.f32 %v984, %v965
  %v993 = vadd.f32 %v985, %v967
  %v994 = vadd.f32 %v986, %v969
  %v995 = vadd.f32 %v987, %v971
  %v996 = vrcp.pop %v988
  %v997 = vrcp.pop %v989
  %v998 = vrcp.pop %v990
  %v999 = vrcp.pop %v991
  %v1000 = vrcp.pop %v992
  %v1001 = vrcp.pop %v993
  %v1002 = vrcp.pop %v994
  %v1003 = vrcp.pop %v995
  %v1004 = vmul.f32 %v885, %v996
  %v1005 = vmul.f32 %v887, %v997
  %v1006 = vmul.f32 %v889, %v998
  %v1007 = vmul.f32 %v891, %v999
  %v1008 = vmul.f32 %v893, %v1000
  %v1009 = vmul.f32 %v895, %v1001
  %v1010 = vmul.f32 %v897, %v1002
  %v1011 = vmul.f32 %v899, %v1003
  %v1012 = vmul.f32 %v909, %v996
  %v1013 = vmul.f32 %v911, %v997
  %v1014 = vmul.f32 %v913, %v998
  %v1015 = vmul.f32 %v915, %v999
  %v1016 = vmul.f32 %v917, %v1000
  %v1017 = vmul.f32 %v919, %v1001
  %v1018 = vmul.f32 %v921, %v1002
  %v1019 = vmul.f32 %v923, %v1003
  %v1020 = vmul.f32 %v933, %v996
  %v1021 = vmul.f32 %v935, %v997
  %v1022 = vmul.f32 %v937, %v998
  %v1023 = vmul.f32 %v939, %v999
  %v1024 = vmul.f32 %v941, %v1000
  %v1025 = vmul.f32 %v943, %v1001
  %v1026 = vmul.f32 %v945, %v1002
  %v1027 = vmul.f32 %v947, %v1003
  %v1028 = vmul.f32 %v957, %v996
  %v1029 = vmul.f32 %v959, %v997
  %v1030 = vmul.f32 %v961, %v998
  %v1031 = vmul.f32 %v963, %v999
  %v1032 = vmul.f32 %v965, %v1000
  %v1033 = vmul.f32 %v967, %v1001
  %v1034 = vmul.f32 %v969, %v1002
  %v1035 = vmul.f32 %v971, %v1003
  %v1036 = vunpack.c.l.bf16 %v540
  %v1037 = vunpack.c.l.bf16 %v542
  %v1038 = vunpack.c.l.bf16 %v544
  %v1039 = vunpack.c.l.bf16 %v546
  %v1040 = vunpack.c.l.bf16 %v548
  %v1041 = vunpack.c.l.bf16 %v550
  %v1042 = vunpack.c.l.bf16 %v552
  %v1043 = vunpack.c.l.bf16 %v554
  %v1044 = vmul.f32 %v1036, %v620
  %v1045 = vmul.f32 %v1037, %v621
  %v1046 = vmul.f32 %v1038, %v622
  %v1047 = vmul.f32 %v1039, %v623
  %v1048 = vmul.f32 %v1040, %v624
  %v1049 = vmul.f32 %v1041, %v625
  %v1050 = vmul.f32 %v1042, %v626
  %v1051 = vmul.f32 %v1043, %v627
  %1052 = vadd.xlane.f32.xlu0 %v1044
  %v1053 = vpop.xlane.xlu0 %1052
  %1054 = vadd.xlane.f32.xlu0 %v1045
  %v1055 = vpop.xlane.xlu0 %1054
  %1056 = vadd.xlane.f32.xlu0 %v1046
  %v1057 = vpop.xlane.xlu0 %1056
  %1058 = vadd.xlane.f32.xlu0 %v1047
  %v1059 = vpop.xlane.xlu0 %1058
  %1060 = vadd.xlane.f32.xlu0 %v1048
  %v1061 = vpop.xlane.xlu0 %1060
  %1062 = vadd.xlane.f32.xlu0 %v1049
  %v1063 = vpop.xlane.xlu0 %1062
  %1064 = vadd.xlane.f32.xlu0 %v1050
  %v1065 = vpop.xlane.xlu0 %1064
  %1066 = vadd.xlane.f32.xlu0 %v1051
  %v1067 = vpop.xlane.xlu0 %1066
  %v1068 = vmul.f32 %v1053, 0.088388346
  %v1069 = vmul.f32 %v1055, 0.088388346
  %v1070 = vmul.f32 %v1057, 0.088388346
  %v1071 = vmul.f32 %v1059, 0.088388346
  %v1072 = vmul.f32 %v1061, 0.088388346
  %v1073 = vmul.f32 %v1063, 0.088388346
  %v1074 = vmul.f32 %v1065, 0.088388346
  %v1075 = vmul.f32 %v1067, 0.088388346
  %v1076 = vmul.f32 %v1036, %v684
  %v1077 = vmul.f32 %v1037, %v685
  %v1078 = vmul.f32 %v1038, %v686
  %v1079 = vmul.f32 %v1039, %v687
  %v1080 = vmul.f32 %v1040, %v688
  %v1081 = vmul.f32 %v1041, %v689
  %v1082 = vmul.f32 %v1042, %v690
  %v1083 = vmul.f32 %v1043, %v691
  %1084 = vadd.xlane.f32.xlu0 %v1076
  %v1085 = vpop.xlane.xlu0 %1084
  %1086 = vadd.xlane.f32.xlu0 %v1077
  %v1087 = vpop.xlane.xlu0 %1086
  %1088 = vadd.xlane.f32.xlu0 %v1078
  %v1089 = vpop.xlane.xlu0 %1088
  %1090 = vadd.xlane.f32.xlu0 %v1079
  %v1091 = vpop.xlane.xlu0 %1090
  %1092 = vadd.xlane.f32.xlu0 %v1080
  %v1093 = vpop.xlane.xlu0 %1092
  %1094 = vadd.xlane.f32.xlu0 %v1081
  %v1095 = vpop.xlane.xlu0 %1094
  %1096 = vadd.xlane.f32.xlu0 %v1082
  %v1097 = vpop.xlane.xlu0 %1096
  %1098 = vadd.xlane.f32.xlu0 %v1083
  %v1099 = vpop.xlane.xlu0 %1098
  %v1100 = vmul.f32 %v1085, 0.088388346
  %v1101 = vmul.f32 %v1087, 0.088388346
  %v1102 = vmul.f32 %v1089, 0.088388346
  %v1103 = vmul.f32 %v1091, 0.088388346
  %v1104 = vmul.f32 %v1093, 0.088388346
  %v1105 = vmul.f32 %v1095, 0.088388346
  %v1106 = vmul.f32 %v1097, 0.088388346
  %v1107 = vmul.f32 %v1099, 0.088388346
  %v1108 = vmul.f32 %v1036, %v748
  %v1109 = vmul.f32 %v1037, %v749
  %v1110 = vmul.f32 %v1038, %v750
  %v1111 = vmul.f32 %v1039, %v751
  %v1112 = vmul.f32 %v1040, %v752
  %v1113 = vmul.f32 %v1041, %v753
  %v1114 = vmul.f32 %v1042, %v754
  %v1115 = vmul.f32 %v1043, %v755
  %1116 = vadd.xlane.f32.xlu0 %v1108
  %v1117 = vpop.xlane.xlu0 %1116
  %1118 = vadd.xlane.f32.xlu0 %v1109
  %v1119 = vpop.xlane.xlu0 %1118
  %1120 = vadd.xlane.f32.xlu0 %v1110
  %v1121 = vpop.xlane.xlu0 %1120
  %1122 = vadd.xlane.f32.xlu0 %v1111
  %v1123 = vpop.xlane.xlu0 %1122
  %1124 = vadd.xlane.f32.xlu0 %v1112
  %v1125 = vpop.xlane.xlu0 %1124
  %1126 = vadd.xlane.f32.xlu0 %v1113
  %v1127 = vpop.xlane.xlu0 %1126
  %1128 = vadd.xlane.f32.xlu0 %v1114
  %v1129 = vpop.xlane.xlu0 %1128
  %1130 = vadd.xlane.f32.xlu0 %v1115
  %v1131 = vpop.xlane.xlu0 %1130
  %v1132 = vmul.f32 %v1117, 0.088388346
  %v1133 = vmul.f32 %v1119, 0.088388346
  %v1134 = vmul.f32 %v1121, 0.088388346
  %v1135 = vmul.f32 %v1123, 0.088388346
  %v1136 = vmul.f32 %v1125, 0.088388346
  %v1137 = vmul.f32 %v1127, 0.088388346
  %v1138 = vmul.f32 %v1129, 0.088388346
  %v1139 = vmul.f32 %v1131, 0.088388346
  %v1140 = vmul.f32 %v1036, %v812
  %v1141 = vmul.f32 %v1037, %v813
  %v1142 = vmul.f32 %v1038, %v814
  %v1143 = vmul.f32 %v1039, %v815
  %v1144 = vmul.f32 %v1040, %v816
  %v1145 = vmul.f32 %v1041, %v817
  %v1146 = vmul.f32 %v1042, %v818
  %v1147 = vmul.f32 %v1043, %v819
  %1148 = vadd.xlane.f32.xlu0 %v1140
  %v1149 = vpop.xlane.xlu0 %1148
  %1150 = vadd.xlane.f32.xlu0 %v1141
  %v1151 = vpop.xlane.xlu0 %1150
  %1152 = vadd.xlane.f32.xlu0 %v1142
  %v1153 = vpop.xlane.xlu0 %1152
  %1154 = vadd.xlane.f32.xlu0 %v1143
  %v1155 = vpop.xlane.xlu0 %1154
  %1156 = vadd.xlane.f32.xlu0 %v1144
  %v1157 = vpop.xlane.xlu0 %1156
  %1158 = vadd.xlane.f32.xlu0 %v1145
  %v1159 = vpop.xlane.xlu0 %1158
  %1160 = vadd.xlane.f32.xlu0 %v1146
  %v1161 = vpop.xlane.xlu0 %1160
  %1162 = vadd.xlane.f32.xlu0 %v1147
  %v1163 = vpop.xlane.xlu0 %1162
  %v1164 = vmul.f32 %v1149, 0.088388346
  %v1165 = vmul.f32 %v1151, 0.088388346
  %v1166 = vmul.f32 %v1153, 0.088388346
  %v1167 = vmul.f32 %v1155, 0.088388346
  %v1168 = vmul.f32 %v1157, 0.088388346
  %v1169 = vmul.f32 %v1159, 0.088388346
  %v1170 = vmul.f32 %v1161, 0.088388346
  %v1171 = vmul.f32 %v1163, 0.088388346
  %v1172 = vmax.f32 %v1068, %v1100
  %v1173 = vmax.f32 %v1069, %v1101
  %v1174 = vmax.f32 %v1070, %v1102
  %v1175 = vmax.f32 %v1071, %v1103
  %v1176 = vmax.f32 %v1072, %v1104
  %v1177 = vmax.f32 %v1073, %v1105
  %v1178 = vmax.f32 %v1074, %v1106
  %v1179 = vmax.f32 %v1075, %v1107
  %v1180 = vmax.f32 %v1132, %v1164
  %v1181 = vmax.f32 %v1133, %v1165
  %v1182 = vmax.f32 %v1134, %v1166
  %v1183 = vmax.f32 %v1135, %v1167
  %v1184 = vmax.f32 %v1136, %v1168
  %v1185 = vmax.f32 %v1137, %v1169
  %v1186 = vmax.f32 %v1138, %v1170
  %v1187 = vmax.f32 %v1139, %v1171
  %v1188 = vmax.f32 %v1172, %v1180
  %v1189 = vmax.f32 %v1173, %v1181
  %v1190 = vmax.f32 %v1174, %v1182
  %v1191 = vmax.f32 %v1175, %v1183
  %v1192 = vmax.f32 %v1176, %v1184
  %v1193 = vmax.f32 %v1177, %v1185
  %v1194 = vmax.f32 %v1178, %v1186
  %v1195 = vmax.f32 %v1179, %v1187
  %v1196 = vsub.f32 %v1068, %v1188
  %v1197 = vsub.f32 %v1069, %v1189
  %v1198 = vsub.f32 %v1070, %v1190
  %v1199 = vsub.f32 %v1071, %v1191
  %v1200 = vsub.f32 %v1072, %v1192
  %v1201 = vsub.f32 %v1073, %v1193
  %v1202 = vsub.f32 %v1074, %v1194
  %v1203 = vsub.f32 %v1075, %v1195
  %v1204 = vmul.f32 %v1196, 1.442695
  %v1205 = vpow.pop %v1204
  %v1206 = vmul.f32 %v1197, 1.442695
  %v1207 = vpow.pop %v1206
  %v1208 = vmul.f32 %v1198, 1.442695
  %v1209 = vpow.pop %v1208
  %v1210 = vmul.f32 %v1199, 1.442695
  %v1211 = vpow.pop %v1210
  %v1212 = vmul.f32 %v1200, 1.442695
  %v1213 = vpow.pop %v1212
  %v1214 = vmul.f32 %v1201, 1.442695
  %v1215 = vpow.pop %v1214
  %v1216 = vmul.f32 %v1202, 1.442695
  %v1217 = vpow.pop %v1216
  %v1218 = vmul.f32 %v1203, 1.442695
  %v1219 = vpow.pop %v1218
  %v1220 = vsub.f32 %v1100, %v1188
  %v1221 = vsub.f32 %v1101, %v1189
  %v1222 = vsub.f32 %v1102, %v1190
  %v1223 = vsub.f32 %v1103, %v1191
  %v1224 = vsub.f32 %v1104, %v1192
  %v1225 = vsub.f32 %v1105, %v1193
  %v1226 = vsub.f32 %v1106, %v1194
  %v1227 = vsub.f32 %v1107, %v1195
  %v1228 = vmul.f32 %v1220, 1.442695
  %v1229 = vpow.pop %v1228
  %v1230 = vmul.f32 %v1221, 1.442695
  %v1231 = vpow.pop %v1230
  %v1232 = vmul.f32 %v1222, 1.442695
  %v1233 = vpow.pop %v1232
  %v1234 = vmul.f32 %v1223, 1.442695
  %v1235 = vpow.pop %v1234
  %v1236 = vmul.f32 %v1224, 1.442695
  %v1237 = vpow.pop %v1236
  %v1238 = vmul.f32 %v1225, 1.442695
  %v1239 = vpow.pop %v1238
  %v1240 = vmul.f32 %v1226, 1.442695
  %v1241 = vpow.pop %v1240
  %v1242 = vmul.f32 %v1227, 1.442695
  %v1243 = vpow.pop %v1242
  %v1244 = vsub.f32 %v1132, %v1188
  %v1245 = vsub.f32 %v1133, %v1189
  %v1246 = vsub.f32 %v1134, %v1190
  %v1247 = vsub.f32 %v1135, %v1191
  %v1248 = vsub.f32 %v1136, %v1192
  %v1249 = vsub.f32 %v1137, %v1193
  %v1250 = vsub.f32 %v1138, %v1194
  %v1251 = vsub.f32 %v1139, %v1195
  %v1252 = vmul.f32 %v1244, 1.442695
  %v1253 = vpow.pop %v1252
  %v1254 = vmul.f32 %v1245, 1.442695
  %v1255 = vpow.pop %v1254
  %v1256 = vmul.f32 %v1246, 1.442695
  %v1257 = vpow.pop %v1256
  %v1258 = vmul.f32 %v1247, 1.442695
  %v1259 = vpow.pop %v1258
  %v1260 = vmul.f32 %v1248, 1.442695
  %v1261 = vpow.pop %v1260
  %v1262 = vmul.f32 %v1249, 1.442695
  %v1263 = vpow.pop %v1262
  %v1264 = vmul.f32 %v1250, 1.442695
  %v1265 = vpow.pop %v1264
  %v1266 = vmul.f32 %v1251, 1.442695
  %v1267 = vpow.pop %v1266
  %v1268 = vsub.f32 %v1164, %v1188
  %v1269 = vsub.f32 %v1165, %v1189
  %v1270 = vsub.f32 %v1166, %v1190
  %v1271 = vsub.f32 %v1167, %v1191
  %v1272 = vsub.f32 %v1168, %v1192
  %v1273 = vsub.f32 %v1169, %v1193
  %v1274 = vsub.f32 %v1170, %v1194
  %v1275 = vsub.f32 %v1171, %v1195
  %v1276 = vmul.f32 %v1268, 1.442695
  %v1277 = vpow.pop %v1276
  %v1278 = vmul.f32 %v1269, 1.442695
  %v1279 = vpow.pop %v1278
  %v1280 = vmul.f32 %v1270, 1.442695
  %v1281 = vpow.pop %v1280
  %v1282 = vmul.f32 %v1271, 1.442695
  %v1283 = vpow.pop %v1282
  %v1284 = vmul.f32 %v1272, 1.442695
  %v1285 = vpow.pop %v1284
  %v1286 = vmul.f32 %v1273, 1.442695
  %v1287 = vpow.pop %v1286
  %v1288 = vmul.f32 %v1274, 1.442695
  %v1289 = vpow.pop %v1288
  %v1290 = vmul.f32 %v1275, 1.442695
  %v1291 = vpow.pop %v1290
  %v1292 = vadd.f32 %v1205, %v1229
  %v1293 = vadd.f32 %v1207, %v1231
  %v1294 = vadd.f32 %v1209, %v1233
  %v1295 = vadd.f32 %v1211, %v1235
  %v1296 = vadd.f32 %v1213, %v1237
  %v1297 = vadd.f32 %v1215, %v1239
  %v1298 = vadd.f32 %v1217, %v1241
  %v1299 = vadd.f32 %v1219, %v1243
  %v1300 = vadd.f32 %v1292, %v1253
  %v1301 = vadd.f32 %v1293, %v1255
  %v1302 = vadd.f32 %v1294, %v1257
  %v1303 = vadd.f32 %v1295, %v1259
  %v1304 = vadd.f32 %v1296, %v1261
  %v1305 = vadd.f32 %v1297, %v1263
  %v1306 = vadd.f32 %v1298, %v1265
  %v1307 = vadd.f32 %v1299, %v1267
  %v1308 = vadd.f32 %v1300, %v1277
  %v1309 = vadd.f32 %v1301, %v1279
  %v1310 = vadd.f32 %v1302, %v1281
  %v1311 = vadd.f32 %v1303, %v1283
  %v1312 = vadd.f32 %v1304, %v1285
  %v1313 = vadd.f32 %v1305, %v1287
  %v1314 = vadd.f32 %v1306, %v1289
  %v1315 = vadd.f32 %v1307, %v1291
  %v1316 = vrcp.pop %v1308
  %v1317 = vrcp.pop %v1309
  %v1318 = vrcp.pop %v1310
  %v1319 = vrcp.pop %v1311
  %v1320 = vrcp.pop %v1312
  %v1321 = vrcp.pop %v1313
  %v1322 = vrcp.pop %v1314
  %v1323 = vrcp.pop %v1315
  %v1324 = vmul.f32 %v1205, %v1316
  %v1325 = vmul.f32 %v1207, %v1317
  %v1326 = vmul.f32 %v1209, %v1318
  %v1327 = vmul.f32 %v1211, %v1319
  %v1328 = vmul.f32 %v1213, %v1320
  %v1329 = vmul.f32 %v1215, %v1321
  %v1330 = vmul.f32 %v1217, %v1322
  %v1331 = vmul.f32 %v1219, %v1323
  %v1332 = vmul.f32 %v1229, %v1316
  %v1333 = vmul.f32 %v1231, %v1317
  %v1334 = vmul.f32 %v1233, %v1318
  %v1335 = vmul.f32 %v1235, %v1319
  %v1336 = vmul.f32 %v1237, %v1320
  %v1337 = vmul.f32 %v1239, %v1321
  %v1338 = vmul.f32 %v1241, %v1322
  %v1339 = vmul.f32 %v1243, %v1323
  %v1340 = vmul.f32 %v1253, %v1316
  %v1341 = vmul.f32 %v1255, %v1317
  %v1342 = vmul.f32 %v1257, %v1318
  %v1343 = vmul.f32 %v1259, %v1319
  %v1344 = vmul.f32 %v1261, %v1320
  %v1345 = vmul.f32 %v1263, %v1321
  %v1346 = vmul.f32 %v1265, %v1322
  %v1347 = vmul.f32 %v1267, %v1323
  %v1348 = vmul.f32 %v1277, %v1316
  %v1349 = vmul.f32 %v1279, %v1317
  %v1350 = vmul.f32 %v1281, %v1318
  %v1351 = vmul.f32 %v1283, %v1319
  %v1352 = vmul.f32 %v1285, %v1320
  %v1353 = vmul.f32 %v1287, %v1321
  %v1354 = vmul.f32 %v1289, %v1322
  %v1355 = vmul.f32 %v1291, %v1323
  %v1356 = vunpack.c.l.bf16 %v556
  %v1357 = vunpack.c.l.bf16 %v558
  %v1358 = vunpack.c.l.bf16 %v560
  %v1359 = vunpack.c.l.bf16 %v562
  %v1360 = vunpack.c.l.bf16 %v564
  %v1361 = vunpack.c.l.bf16 %v566
  %v1362 = vunpack.c.l.bf16 %v568
  %v1363 = vunpack.c.l.bf16 %v570
  %v1364 = vmul.f32 %v1356, %v620
  %v1365 = vmul.f32 %v1357, %v621
  %v1366 = vmul.f32 %v1358, %v622
  %v1367 = vmul.f32 %v1359, %v623
  %v1368 = vmul.f32 %v1360, %v624
  %v1369 = vmul.f32 %v1361, %v625
  %v1370 = vmul.f32 %v1362, %v626
  %v1371 = vmul.f32 %v1363, %v627
  %1372 = vadd.xlane.f32.xlu0 %v1364
  %v1373 = vpop.xlane.xlu0 %1372
  %1374 = vadd.xlane.f32.xlu0 %v1365
  %v1375 = vpop.xlane.xlu0 %1374
  %1376 = vadd.xlane.f32.xlu0 %v1366
  %v1377 = vpop.xlane.xlu0 %1376
  %1378 = vadd.xlane.f32.xlu0 %v1367
  %v1379 = vpop.xlane.xlu0 %1378
  %1380 = vadd.xlane.f32.xlu0 %v1368
  %v1381 = vpop.xlane.xlu0 %1380
  %1382 = vadd.xlane.f32.xlu0 %v1369
  %v1383 = vpop.xlane.xlu0 %1382
  %1384 = vadd.xlane.f32.xlu0 %v1370
  %v1385 = vpop.xlane.xlu0 %1384
  %1386 = vadd.xlane.f32.xlu0 %v1371
  %v1387 = vpop.xlane.xlu0 %1386
  %v1388 = vmul.f32 %v1373, 0.088388346
  %v1389 = vmul.f32 %v1375, 0.088388346
  %v1390 = vmul.f32 %v1377, 0.088388346
  %v1391 = vmul.f32 %v1379, 0.088388346
  %v1392 = vmul.f32 %v1381, 0.088388346
  %v1393 = vmul.f32 %v1383, 0.088388346
  %v1394 = vmul.f32 %v1385, 0.088388346
  %v1395 = vmul.f32 %v1387, 0.088388346
  %v1396 = vmul.f32 %v1356, %v684
  %v1397 = vmul.f32 %v1357, %v685
  %v1398 = vmul.f32 %v1358, %v686
  %v1399 = vmul.f32 %v1359, %v687
  %v1400 = vmul.f32 %v1360, %v688
  %v1401 = vmul.f32 %v1361, %v689
  %v1402 = vmul.f32 %v1362, %v690
  %v1403 = vmul.f32 %v1363, %v691
  %1404 = vadd.xlane.f32.xlu0 %v1396
  %v1405 = vpop.xlane.xlu0 %1404
  %1406 = vadd.xlane.f32.xlu0 %v1397
  %v1407 = vpop.xlane.xlu0 %1406
  %1408 = vadd.xlane.f32.xlu0 %v1398
  %v1409 = vpop.xlane.xlu0 %1408
  %1410 = vadd.xlane.f32.xlu0 %v1399
  %v1411 = vpop.xlane.xlu0 %1410
  %1412 = vadd.xlane.f32.xlu0 %v1400
  %v1413 = vpop.xlane.xlu0 %1412
  %1414 = vadd.xlane.f32.xlu0 %v1401
  %v1415 = vpop.xlane.xlu0 %1414
  %1416 = vadd.xlane.f32.xlu0 %v1402
  %v1417 = vpop.xlane.xlu0 %1416
  %1418 = vadd.xlane.f32.xlu0 %v1403
  %v1419 = vpop.xlane.xlu0 %1418
  %v1420 = vmul.f32 %v1405, 0.088388346
  %v1421 = vmul.f32 %v1407, 0.088388346
  %v1422 = vmul.f32 %v1409, 0.088388346
  %v1423 = vmul.f32 %v1411, 0.088388346
  %v1424 = vmul.f32 %v1413, 0.088388346
  %v1425 = vmul.f32 %v1415, 0.088388346
  %v1426 = vmul.f32 %v1417, 0.088388346
  %v1427 = vmul.f32 %v1419, 0.088388346
  %v1428 = vmul.f32 %v1356, %v748
  %v1429 = vmul.f32 %v1357, %v749
  %v1430 = vmul.f32 %v1358, %v750
  %v1431 = vmul.f32 %v1359, %v751
  %v1432 = vmul.f32 %v1360, %v752
  %v1433 = vmul.f32 %v1361, %v753
  %v1434 = vmul.f32 %v1362, %v754
  %v1435 = vmul.f32 %v1363, %v755
  %1436 = vadd.xlane.f32.xlu0 %v1428
  %v1437 = vpop.xlane.xlu0 %1436
  %1438 = vadd.xlane.f32.xlu0 %v1429
  %v1439 = vpop.xlane.xlu0 %1438
  %1440 = vadd.xlane.f32.xlu0 %v1430
  %v1441 = vpop.xlane.xlu0 %1440
  %1442 = vadd.xlane.f32.xlu0 %v1431
  %v1443 = vpop.xlane.xlu0 %1442
  %1444 = vadd.xlane.f32.xlu0 %v1432
  %v1445 = vpop.xlane.xlu0 %1444
  %1446 = vadd.xlane.f32.xlu0 %v1433
  %v1447 = vpop.xlane.xlu0 %1446
  %1448 = vadd.xlane.f32.xlu0 %v1434
  %v1449 = vpop.xlane.xlu0 %1448
  %1450 = vadd.xlane.f32.xlu0 %v1435
  %v1451 = vpop.xlane.xlu0 %1450
  %v1452 = vmul.f32 %v1437, 0.088388346
  %v1453 = vmul.f32 %v1439, 0.088388346
  %v1454 = vmul.f32 %v1441, 0.088388346
  %v1455 = vmul.f32 %v1443, 0.088388346
  %v1456 = vmul.f32 %v1445, 0.088388346
  %v1457 = vmul.f32 %v1447, 0.088388346
  %v1458 = vmul.f32 %v1449, 0.088388346
  %v1459 = vmul.f32 %v1451, 0.088388346
  %v1460 = vmul.f32 %v1356, %v812
  %v1461 = vmul.f32 %v1357, %v813
  %v1462 = vmul.f32 %v1358, %v814
  %v1463 = vmul.f32 %v1359, %v815
  %v1464 = vmul.f32 %v1360, %v816
  %v1465 = vmul.f32 %v1361, %v817
  %v1466 = vmul.f32 %v1362, %v818
  %v1467 = vmul.f32 %v1363, %v819
  %1468 = vadd.xlane.f32.xlu0 %v1460
  %v1469 = vpop.xlane.xlu0 %1468
  %1470 = vadd.xlane.f32.xlu0 %v1461
  %v1471 = vpop.xlane.xlu0 %1470
  %1472 = vadd.xlane.f32.xlu0 %v1462
  %v1473 = vpop.xlane.xlu0 %1472
  %1474 = vadd.xlane.f32.xlu0 %v1463
  %v1475 = vpop.xlane.xlu0 %1474
  %1476 = vadd.xlane.f32.xlu0 %v1464
  %v1477 = vpop.xlane.xlu0 %1476
  %1478 = vadd.xlane.f32.xlu0 %v1465
  %v1479 = vpop.xlane.xlu0 %1478
  %1480 = vadd.xlane.f32.xlu0 %v1466
  %v1481 = vpop.xlane.xlu0 %1480
  %1482 = vadd.xlane.f32.xlu0 %v1467
  %v1483 = vpop.xlane.xlu0 %1482
  %v1484 = vmul.f32 %v1469, 0.088388346
  %v1485 = vmul.f32 %v1471, 0.088388346
  %v1486 = vmul.f32 %v1473, 0.088388346
  %v1487 = vmul.f32 %v1475, 0.088388346
  %v1488 = vmul.f32 %v1477, 0.088388346
  %v1489 = vmul.f32 %v1479, 0.088388346
  %v1490 = vmul.f32 %v1481, 0.088388346
  %v1491 = vmul.f32 %v1483, 0.088388346
  %v1492 = vmax.f32 %v1388, %v1420
  %v1493 = vmax.f32 %v1389, %v1421
  %v1494 = vmax.f32 %v1390, %v1422
  %v1495 = vmax.f32 %v1391, %v1423
  %v1496 = vmax.f32 %v1392, %v1424
  %v1497 = vmax.f32 %v1393, %v1425
  %v1498 = vmax.f32 %v1394, %v1426
  %v1499 = vmax.f32 %v1395, %v1427
  %v1500 = vmax.f32 %v1452, %v1484
  %v1501 = vmax.f32 %v1453, %v1485
  %v1502 = vmax.f32 %v1454, %v1486
  %v1503 = vmax.f32 %v1455, %v1487
  %v1504 = vmax.f32 %v1456, %v1488
  %v1505 = vmax.f32 %v1457, %v1489
  %v1506 = vmax.f32 %v1458, %v1490
  %v1507 = vmax.f32 %v1459, %v1491
  %v1508 = vmax.f32 %v1492, %v1500
  %v1509 = vmax.f32 %v1493, %v1501
  %v1510 = vmax.f32 %v1494, %v1502
  %v1511 = vmax.f32 %v1495, %v1503
  %v1512 = vmax.f32 %v1496, %v1504
  %v1513 = vmax.f32 %v1497, %v1505
  %v1514 = vmax.f32 %v1498, %v1506
  %v1515 = vmax.f32 %v1499, %v1507
  %v1516 = vsub.f32 %v1388, %v1508
  %v1517 = vsub.f32 %v1389, %v1509
  %v1518 = vsub.f32 %v1390, %v1510
  %v1519 = vsub.f32 %v1391, %v1511
  %v1520 = vsub.f32 %v1392, %v1512
  %v1521 = vsub.f32 %v1393, %v1513
  %v1522 = vsub.f32 %v1394, %v1514
  %v1523 = vsub.f32 %v1395, %v1515
  %v1524 = vmul.f32 %v1516, 1.442695
  %v1525 = vpow.pop %v1524
  %v1526 = vmul.f32 %v1517, 1.442695
  %v1527 = vpow.pop %v1526
  %v1528 = vmul.f32 %v1518, 1.442695
  %v1529 = vpow.pop %v1528
  %v1530 = vmul.f32 %v1519, 1.442695
  %v1531 = vpow.pop %v1530
  %v1532 = vmul.f32 %v1520, 1.442695
  %v1533 = vpow.pop %v1532
  %v1534 = vmul.f32 %v1521, 1.442695
  %v1535 = vpow.pop %v1534
  %v1536 = vmul.f32 %v1522, 1.442695
  %v1537 = vpow.pop %v1536
  %v1538 = vmul.f32 %v1523, 1.442695
  %v1539 = vpow.pop %v1538
  %v1540 = vsub.f32 %v1420, %v1508
  %v1541 = vsub.f32 %v1421, %v1509
  %v1542 = vsub.f32 %v1422, %v1510
  %v1543 = vsub.f32 %v1423, %v1511
  %v1544 = vsub.f32 %v1424, %v1512
  %v1545 = vsub.f32 %v1425, %v1513
  %v1546 = vsub.f32 %v1426, %v1514
  %v1547 = vsub.f32 %v1427, %v1515
  %v1548 = vmul.f32 %v1540, 1.442695
  %v1549 = vpow.pop %v1548
  %v1550 = vmul.f32 %v1541, 1.442695
  %v1551 = vpow.pop %v1550
  %v1552 = vmul.f32 %v1542, 1.442695
  %v1553 = vpow.pop %v1552
  %v1554 = vmul.f32 %v1543, 1.442695
  %v1555 = vpow.pop %v1554
  %v1556 = vmul.f32 %v1544, 1.442695
  %v1557 = vpow.pop %v1556
  %v1558 = vmul.f32 %v1545, 1.442695
  %v1559 = vpow.pop %v1558
  %v1560 = vmul.f32 %v1546, 1.442695
  %v1561 = vpow.pop %v1560
  %v1562 = vmul.f32 %v1547, 1.442695
  %v1563 = vpow.pop %v1562
  %v1564 = vsub.f32 %v1452, %v1508
  %v1565 = vsub.f32 %v1453, %v1509
  %v1566 = vsub.f32 %v1454, %v1510
  %v1567 = vsub.f32 %v1455, %v1511
  %v1568 = vsub.f32 %v1456, %v1512
  %v1569 = vsub.f32 %v1457, %v1513
  %v1570 = vsub.f32 %v1458, %v1514
  %v1571 = vsub.f32 %v1459, %v1515
  %v1572 = vmul.f32 %v1564, 1.442695
  %v1573 = vpow.pop %v1572
  %v1574 = vmul.f32 %v1565, 1.442695
  %v1575 = vpow.pop %v1574
  %v1576 = vmul.f32 %v1566, 1.442695
  %v1577 = vpow.pop %v1576
  %v1578 = vmul.f32 %v1567, 1.442695
  %v1579 = vpow.pop %v1578
  %v1580 = vmul.f32 %v1568, 1.442695
  %v1581 = vpow.pop %v1580
  %v1582 = vmul.f32 %v1569, 1.442695
  %v1583 = vpow.pop %v1582
  %v1584 = vmul.f32 %v1570, 1.442695
  %v1585 = vpow.pop %v1584
  %v1586 = vmul.f32 %v1571, 1.442695
  %v1587 = vpow.pop %v1586
  %v1588 = vsub.f32 %v1484, %v1508
  %v1589 = vsub.f32 %v1485, %v1509
  %v1590 = vsub.f32 %v1486, %v1510
  %v1591 = vsub.f32 %v1487, %v1511
  %v1592 = vsub.f32 %v1488, %v1512
  %v1593 = vsub.f32 %v1489, %v1513
  %v1594 = vsub.f32 %v1490, %v1514
  %v1595 = vsub.f32 %v1491, %v1515
  %v1596 = vmul.f32 %v1588, 1.442695
  %v1597 = vpow.pop %v1596
  %v1598 = vmul.f32 %v1589, 1.442695
  %v1599 = vpow.pop %v1598
  %v1600 = vmul.f32 %v1590, 1.442695
  %v1601 = vpow.pop %v1600
  %v1602 = vmul.f32 %v1591, 1.442695
  %v1603 = vpow.pop %v1602
  %v1604 = vmul.f32 %v1592, 1.442695
  %v1605 = vpow.pop %v1604
  %v1606 = vmul.f32 %v1593, 1.442695
  %v1607 = vpow.pop %v1606
  %v1608 = vmul.f32 %v1594, 1.442695
  %v1609 = vpow.pop %v1608
  %v1610 = vmul.f32 %v1595, 1.442695
  %v1611 = vpow.pop %v1610
  %v1612 = vadd.f32 %v1525, %v1549
  %v1613 = vadd.f32 %v1527, %v1551
  %v1614 = vadd.f32 %v1529, %v1553
  %v1615 = vadd.f32 %v1531, %v1555
  %v1616 = vadd.f32 %v1533, %v1557
  %v1617 = vadd.f32 %v1535, %v1559
  %v1618 = vadd.f32 %v1537, %v1561
  %v1619 = vadd.f32 %v1539, %v1563
  %v1620 = vadd.f32 %v1612, %v1573
  %v1621 = vadd.f32 %v1613, %v1575
  %v1622 = vadd.f32 %v1614, %v1577
  %v1623 = vadd.f32 %v1615, %v1579
  %v1624 = vadd.f32 %v1616, %v1581
  %v1625 = vadd.f32 %v1617, %v1583
  %v1626 = vadd.f32 %v1618, %v1585
  %v1627 = vadd.f32 %v1619, %v1587
  %v1628 = vadd.f32 %v1620, %v1597
  %v1629 = vadd.f32 %v1621, %v1599
  %v1630 = vadd.f32 %v1622, %v1601
  %v1631 = vadd.f32 %v1623, %v1603
  %v1632 = vadd.f32 %v1624, %v1605
  %v1633 = vadd.f32 %v1625, %v1607
  %v1634 = vadd.f32 %v1626, %v1609
  %v1635 = vadd.f32 %v1627, %v1611
  %v1636 = vrcp.pop %v1628
  %v1637 = vrcp.pop %v1629
  %v1638 = vrcp.pop %v1630
  %v1639 = vrcp.pop %v1631
  %v1640 = vrcp.pop %v1632
  %v1641 = vrcp.pop %v1633
  %v1642 = vrcp.pop %v1634
  %v1643 = vrcp.pop %v1635
  %v1644 = vmul.f32 %v1525, %v1636
  %v1645 = vmul.f32 %v1527, %v1637
  %v1646 = vmul.f32 %v1529, %v1638
  %v1647 = vmul.f32 %v1531, %v1639
  %v1648 = vmul.f32 %v1533, %v1640
  %v1649 = vmul.f32 %v1535, %v1641
  %v1650 = vmul.f32 %v1537, %v1642
  %v1651 = vmul.f32 %v1539, %v1643
  %v1652 = vmul.f32 %v1549, %v1636
  %v1653 = vmul.f32 %v1551, %v1637
  %v1654 = vmul.f32 %v1553, %v1638
  %v1655 = vmul.f32 %v1555, %v1639
  %v1656 = vmul.f32 %v1557, %v1640
  %v1657 = vmul.f32 %v1559, %v1641
  %v1658 = vmul.f32 %v1561, %v1642
  %v1659 = vmul.f32 %v1563, %v1643
  %v1660 = vmul.f32 %v1573, %v1636
  %v1661 = vmul.f32 %v1575, %v1637
  %v1662 = vmul.f32 %v1577, %v1638
  %v1663 = vmul.f32 %v1579, %v1639
  %v1664 = vmul.f32 %v1581, %v1640
  %v1665 = vmul.f32 %v1583, %v1641
  %v1666 = vmul.f32 %v1585, %v1642
  %v1667 = vmul.f32 %v1587, %v1643
  %v1668 = vmul.f32 %v1597, %v1636
  %v1669 = vmul.f32 %v1599, %v1637
  %v1670 = vmul.f32 %v1601, %v1638
  %v1671 = vmul.f32 %v1603, %v1639
  %v1672 = vmul.f32 %v1605, %v1640
  %v1673 = vmul.f32 %v1607, %v1641
  %v1674 = vmul.f32 %v1609, %v1642
  %v1675 = vmul.f32 %v1611, %v1643
  %v1676 = vunpack.c.l.bf16 %v572
  %v1677 = vunpack.c.l.bf16 %v574
  %v1678 = vunpack.c.l.bf16 %v576
  %v1679 = vunpack.c.l.bf16 %v578
  %v1680 = vunpack.c.l.bf16 %v580
  %v1681 = vunpack.c.l.bf16 %v582
  %v1682 = vunpack.c.l.bf16 %v584
  %v1683 = vunpack.c.l.bf16 %v586
  %v1684 = vmul.f32 %v1676, %v620
  %v1685 = vmul.f32 %v1677, %v621
  %v1686 = vmul.f32 %v1678, %v622
  %v1687 = vmul.f32 %v1679, %v623
  %v1688 = vmul.f32 %v1680, %v624
  %v1689 = vmul.f32 %v1681, %v625
  %v1690 = vmul.f32 %v1682, %v626
  %v1691 = vmul.f32 %v1683, %v627
  %1692 = vadd.xlane.f32.xlu0 %v1684
  %v1693 = vpop.xlane.xlu0 %1692
  %1694 = vadd.xlane.f32.xlu0 %v1685
  %v1695 = vpop.xlane.xlu0 %1694
  %1696 = vadd.xlane.f32.xlu0 %v1686
  %v1697 = vpop.xlane.xlu0 %1696
  %1698 = vadd.xlane.f32.xlu0 %v1687
  %v1699 = vpop.xlane.xlu0 %1698
  %1700 = vadd.xlane.f32.xlu0 %v1688
  %v1701 = vpop.xlane.xlu0 %1700
  %1702 = vadd.xlane.f32.xlu0 %v1689
  %v1703 = vpop.xlane.xlu0 %1702
  %1704 = vadd.xlane.f32.xlu0 %v1690
  %v1705 = vpop.xlane.xlu0 %1704
  %1706 = vadd.xlane.f32.xlu0 %v1691
  %v1707 = vpop.xlane.xlu0 %1706
  %v1708 = vmul.f32 %v1693, 0.088388346
  %v1709 = vmul.f32 %v1695, 0.088388346
  %v1710 = vmul.f32 %v1697, 0.088388346
  %v1711 = vmul.f32 %v1699, 0.088388346
  %v1712 = vmul.f32 %v1701, 0.088388346
  %v1713 = vmul.f32 %v1703, 0.088388346
  %v1714 = vmul.f32 %v1705, 0.088388346
  %v1715 = vmul.f32 %v1707, 0.088388346
  %v1716 = vmul.f32 %v1676, %v684
  %v1717 = vmul.f32 %v1677, %v685
  %v1718 = vmul.f32 %v1678, %v686
  %v1719 = vmul.f32 %v1679, %v687
  %v1720 = vmul.f32 %v1680, %v688
  %v1721 = vmul.f32 %v1681, %v689
  %v1722 = vmul.f32 %v1682, %v690
  %v1723 = vmul.f32 %v1683, %v691
  %1724 = vadd.xlane.f32.xlu0 %v1716
  %v1725 = vpop.xlane.xlu0 %1724
  %1726 = vadd.xlane.f32.xlu0 %v1717
  %v1727 = vpop.xlane.xlu0 %1726
  %1728 = vadd.xlane.f32.xlu0 %v1718
  %v1729 = vpop.xlane.xlu0 %1728
  %1730 = vadd.xlane.f32.xlu0 %v1719
  %v1731 = vpop.xlane.xlu0 %1730
  %1732 = vadd.xlane.f32.xlu0 %v1720
  %v1733 = vpop.xlane.xlu0 %1732
  %1734 = vadd.xlane.f32.xlu0 %v1721
  %v1735 = vpop.xlane.xlu0 %1734
  %1736 = vadd.xlane.f32.xlu0 %v1722
  %v1737 = vpop.xlane.xlu0 %1736
  %1738 = vadd.xlane.f32.xlu0 %v1723
  %v1739 = vpop.xlane.xlu0 %1738
  %v1740 = vmul.f32 %v1725, 0.088388346
  %v1741 = vmul.f32 %v1727, 0.088388346
  %v1742 = vmul.f32 %v1729, 0.088388346
  %v1743 = vmul.f32 %v1731, 0.088388346
  %v1744 = vmul.f32 %v1733, 0.088388346
  %v1745 = vmul.f32 %v1735, 0.088388346
  %v1746 = vmul.f32 %v1737, 0.088388346
  %v1747 = vmul.f32 %v1739, 0.088388346
  %v1748 = vmul.f32 %v1676, %v748
  %v1749 = vmul.f32 %v1677, %v749
  %v1750 = vmul.f32 %v1678, %v750
  %v1751 = vmul.f32 %v1679, %v751
  %v1752 = vmul.f32 %v1680, %v752
  %v1753 = vmul.f32 %v1681, %v753
  %v1754 = vmul.f32 %v1682, %v754
  %v1755 = vmul.f32 %v1683, %v755
  %1756 = vadd.xlane.f32.xlu0 %v1748
  %v1757 = vpop.xlane.xlu0 %1756
  %1758 = vadd.xlane.f32.xlu0 %v1749
  %v1759 = vpop.xlane.xlu0 %1758
  %1760 = vadd.xlane.f32.xlu0 %v1750
  %v1761 = vpop.xlane.xlu0 %1760
  %1762 = vadd.xlane.f32.xlu0 %v1751
  %v1763 = vpop.xlane.xlu0 %1762
  %1764 = vadd.xlane.f32.xlu0 %v1752
  %v1765 = vpop.xlane.xlu0 %1764
  %1766 = vadd.xlane.f32.xlu0 %v1753
  %v1767 = vpop.xlane.xlu0 %1766
  %1768 = vadd.xlane.f32.xlu0 %v1754
  %v1769 = vpop.xlane.xlu0 %1768
  %1770 = vadd.xlane.f32.xlu0 %v1755
  %v1771 = vpop.xlane.xlu0 %1770
  %v1772 = vmul.f32 %v1757, 0.088388346
  %v1773 = vmul.f32 %v1759, 0.088388346
  %v1774 = vmul.f32 %v1761, 0.088388346
  %v1775 = vmul.f32 %v1763, 0.088388346
  %v1776 = vmul.f32 %v1765, 0.088388346
  %v1777 = vmul.f32 %v1767, 0.088388346
  %v1778 = vmul.f32 %v1769, 0.088388346
  %v1779 = vmul.f32 %v1771, 0.088388346
  %v1780 = vmul.f32 %v1676, %v812
  %v1781 = vmul.f32 %v1677, %v813
  %v1782 = vmul.f32 %v1678, %v814
  %v1783 = vmul.f32 %v1679, %v815
  %v1784 = vmul.f32 %v1680, %v816
  %v1785 = vmul.f32 %v1681, %v817
  %v1786 = vmul.f32 %v1682, %v818
  %v1787 = vmul.f32 %v1683, %v819
  %1788 = vadd.xlane.f32.xlu0 %v1780
  %v1789 = vpop.xlane.xlu0 %1788
  %1790 = vadd.xlane.f32.xlu0 %v1781
  %v1791 = vpop.xlane.xlu0 %1790
  %1792 = vadd.xlane.f32.xlu0 %v1782
  %v1793 = vpop.xlane.xlu0 %1792
  %1794 = vadd.xlane.f32.xlu0 %v1783
  %v1795 = vpop.xlane.xlu0 %1794
  %1796 = vadd.xlane.f32.xlu0 %v1784
  %v1797 = vpop.xlane.xlu0 %1796
  %1798 = vadd.xlane.f32.xlu0 %v1785
  %v1799 = vpop.xlane.xlu0 %1798
  %1800 = vadd.xlane.f32.xlu0 %v1786
  %v1801 = vpop.xlane.xlu0 %1800
  %1802 = vadd.xlane.f32.xlu0 %v1787
  %v1803 = vpop.xlane.xlu0 %1802
  %v1804 = vmul.f32 %v1789, 0.088388346
  %v1805 = vmul.f32 %v1791, 0.088388346
  %v1806 = vmul.f32 %v1793, 0.088388346
  %v1807 = vmul.f32 %v1795, 0.088388346
  %v1808 = vmul.f32 %v1797, 0.088388346
  %v1809 = vmul.f32 %v1799, 0.088388346
  %v1810 = vmul.f32 %v1801, 0.088388346
  %v1811 = vmul.f32 %v1803, 0.088388346
  %v1812 = vmax.f32 %v1708, %v1740
  %v1813 = vmax.f32 %v1709, %v1741
  %v1814 = vmax.f32 %v1710, %v1742
  %v1815 = vmax.f32 %v1711, %v1743
  %v1816 = vmax.f32 %v1712, %v1744
  %v1817 = vmax.f32 %v1713, %v1745
  %v1818 = vmax.f32 %v1714, %v1746
  %v1819 = vmax.f32 %v1715, %v1747
  %v1820 = vmax.f32 %v1772, %v1804
  %v1821 = vmax.f32 %v1773, %v1805
  %v1822 = vmax.f32 %v1774, %v1806
  %v1823 = vmax.f32 %v1775, %v1807
  %v1824 = vmax.f32 %v1776, %v1808
  %v1825 = vmax.f32 %v1777, %v1809
  %v1826 = vmax.f32 %v1778, %v1810
  %v1827 = vmax.f32 %v1779, %v1811
  %v1828 = vmax.f32 %v1812, %v1820
  %v1829 = vmax.f32 %v1813, %v1821
  %v1830 = vmax.f32 %v1814, %v1822
  %v1831 = vmax.f32 %v1815, %v1823
  %v1832 = vmax.f32 %v1816, %v1824
  %v1833 = vmax.f32 %v1817, %v1825
  %v1834 = vmax.f32 %v1818, %v1826
  %v1835 = vmax.f32 %v1819, %v1827
  %v1836 = vsub.f32 %v1708, %v1828
  %v1837 = vsub.f32 %v1709, %v1829
  %v1838 = vsub.f32 %v1710, %v1830
  %v1839 = vsub.f32 %v1711, %v1831
  %v1840 = vsub.f32 %v1712, %v1832
  %v1841 = vsub.f32 %v1713, %v1833
  %v1842 = vsub.f32 %v1714, %v1834
  %v1843 = vsub.f32 %v1715, %v1835
  %v1844 = vmul.f32 %v1836, 1.442695
  %v1845 = vpow.pop %v1844
  %v1846 = vmul.f32 %v1837, 1.442695
  %v1847 = vpow.pop %v1846
  %v1848 = vmul.f32 %v1838, 1.442695
  %v1849 = vpow.pop %v1848
  %v1850 = vmul.f32 %v1839, 1.442695
  %v1851 = vpow.pop %v1850
  %v1852 = vmul.f32 %v1840, 1.442695
  %v1853 = vpow.pop %v1852
  %v1854 = vmul.f32 %v1841, 1.442695
  %v1855 = vpow.pop %v1854
  %v1856 = vmul.f32 %v1842, 1.442695
  %v1857 = vpow.pop %v1856
  %v1858 = vmul.f32 %v1843, 1.442695
  %v1859 = vpow.pop %v1858
  %v1860 = vsub.f32 %v1740, %v1828
  %v1861 = vsub.f32 %v1741, %v1829
  %v1862 = vsub.f32 %v1742, %v1830
  %v1863 = vsub.f32 %v1743, %v1831
  %v1864 = vsub.f32 %v1744, %v1832
  %v1865 = vsub.f32 %v1745, %v1833
  %v1866 = vsub.f32 %v1746, %v1834
  %v1867 = vsub.f32 %v1747, %v1835
  %v1868 = vmul.f32 %v1860, 1.442695
  %v1869 = vpow.pop %v1868
  %v1870 = vmul.f32 %v1861, 1.442695
  %v1871 = vpow.pop %v1870
  %v1872 = vmul.f32 %v1862, 1.442695
  %v1873 = vpow.pop %v1872
  %v1874 = vmul.f32 %v1863, 1.442695
  %v1875 = vpow.pop %v1874
  %v1876 = vmul.f32 %v1864, 1.442695
  %v1877 = vpow.pop %v1876
  %v1878 = vmul.f32 %v1865, 1.442695
  %v1879 = vpow.pop %v1878
  %v1880 = vmul.f32 %v1866, 1.442695
  %v1881 = vpow.pop %v1880
  %v1882 = vmul.f32 %v1867, 1.442695
  %v1883 = vpow.pop %v1882
  %v1884 = vsub.f32 %v1772, %v1828
  %v1885 = vsub.f32 %v1773, %v1829
  %v1886 = vsub.f32 %v1774, %v1830
  %v1887 = vsub.f32 %v1775, %v1831
  %v1888 = vsub.f32 %v1776, %v1832
  %v1889 = vsub.f32 %v1777, %v1833
  %v1890 = vsub.f32 %v1778, %v1834
  %v1891 = vsub.f32 %v1779, %v1835
  %v1892 = vmul.f32 %v1884, 1.442695
  %v1893 = vpow.pop %v1892
  %v1894 = vmul.f32 %v1885, 1.442695
  %v1895 = vpow.pop %v1894
  %v1896 = vmul.f32 %v1886, 1.442695
  %v1897 = vpow.pop %v1896
  %v1898 = vmul.f32 %v1887, 1.442695
  %v1899 = vpow.pop %v1898
  %v1900 = vmul.f32 %v1888, 1.442695
  %v1901 = vpow.pop %v1900
  %v1902 = vmul.f32 %v1889, 1.442695
  %v1903 = vpow.pop %v1902
  %v1904 = vmul.f32 %v1890, 1.442695
  %v1905 = vpow.pop %v1904
  %v1906 = vmul.f32 %v1891, 1.442695
  %v1907 = vpow.pop %v1906
  %v1908 = vsub.f32 %v1804, %v1828
  %v1909 = vsub.f32 %v1805, %v1829
  %v1910 = vsub.f32 %v1806, %v1830
  %v1911 = vsub.f32 %v1807, %v1831
  %v1912 = vsub.f32 %v1808, %v1832
  %v1913 = vsub.f32 %v1809, %v1833
  %v1914 = vsub.f32 %v1810, %v1834
  %v1915 = vsub.f32 %v1811, %v1835
  %v1916 = vmul.f32 %v1908, 1.442695
  %v1917 = vpow.pop %v1916
  %v1918 = vmul.f32 %v1909, 1.442695
  %v1919 = vpow.pop %v1918
  %v1920 = vmul.f32 %v1910, 1.442695
  %v1921 = vpow.pop %v1920
  %v1922 = vmul.f32 %v1911, 1.442695
  %v1923 = vpow.pop %v1922
  %v1924 = vmul.f32 %v1912, 1.442695
  %v1925 = vpow.pop %v1924
  %v1926 = vmul.f32 %v1913, 1.442695
  %v1927 = vpow.pop %v1926
  %v1928 = vmul.f32 %v1914, 1.442695
  %v1929 = vpow.pop %v1928
  %v1930 = vmul.f32 %v1915, 1.442695
  %v1931 = vpow.pop %v1930
  %v1932 = vadd.f32 %v1845, %v1869
  %v1933 = vadd.f32 %v1847, %v1871
  %v1934 = vadd.f32 %v1849, %v1873
  %v1935 = vadd.f32 %v1851, %v1875
  %v1936 = vadd.f32 %v1853, %v1877
  %v1937 = vadd.f32 %v1855, %v1879
  %v1938 = vadd.f32 %v1857, %v1881
  %v1939 = vadd.f32 %v1859, %v1883
  %v1940 = vadd.f32 %v1932, %v1893
  %v1941 = vadd.f32 %v1933, %v1895
  %v1942 = vadd.f32 %v1934, %v1897
  %v1943 = vadd.f32 %v1935, %v1899
  %v1944 = vadd.f32 %v1936, %v1901
  %v1945 = vadd.f32 %v1937, %v1903
  %v1946 = vadd.f32 %v1938, %v1905
  %v1947 = vadd.f32 %v1939, %v1907
  %v1948 = vadd.f32 %v1940, %v1917
  %v1949 = vadd.f32 %v1941, %v1919
  %v1950 = vadd.f32 %v1942, %v1921
  %v1951 = vadd.f32 %v1943, %v1923
  %v1952 = vadd.f32 %v1944, %v1925
  %v1953 = vadd.f32 %v1945, %v1927
  %v1954 = vadd.f32 %v1946, %v1929
  %v1955 = vadd.f32 %v1947, %v1931
  %v1956 = vrcp.pop %v1948
  %v1957 = vrcp.pop %v1949
  %v1958 = vrcp.pop %v1950
  %v1959 = vrcp.pop %v1951
  %v1960 = vrcp.pop %v1952
  %v1961 = vrcp.pop %v1953
  %v1962 = vrcp.pop %v1954
  %v1963 = vrcp.pop %v1955
  %v1964 = vmul.f32 %v1845, %v1956
  %v1965 = vmul.f32 %v1847, %v1957
  %v1966 = vmul.f32 %v1849, %v1958
  %v1967 = vmul.f32 %v1851, %v1959
  %v1968 = vmul.f32 %v1853, %v1960
  %v1969 = vmul.f32 %v1855, %v1961
  %v1970 = vmul.f32 %v1857, %v1962
  %v1971 = vmul.f32 %v1859, %v1963
  %v1972 = vmul.f32 %v1869, %v1956
  %v1973 = vmul.f32 %v1871, %v1957
  %v1974 = vmul.f32 %v1873, %v1958
  %v1975 = vmul.f32 %v1875, %v1959
  %v1976 = vmul.f32 %v1877, %v1960
  %v1977 = vmul.f32 %v1879, %v1961
  %v1978 = vmul.f32 %v1881, %v1962
  %v1979 = vmul.f32 %v1883, %v1963
  %v1980 = vmul.f32 %v1893, %v1956
  %v1981 = vmul.f32 %v1895, %v1957
  %v1982 = vmul.f32 %v1897, %v1958
  %v1983 = vmul.f32 %v1899, %v1959
  %v1984 = vmul.f32 %v1901, %v1960
  %v1985 = vmul.f32 %v1903, %v1961
  %v1986 = vmul.f32 %v1905, %v1962
  %v1987 = vmul.f32 %v1907, %v1963
  %v1988 = vmul.f32 %v1917, %v1956
  %v1989 = vmul.f32 %v1919, %v1957
  %v1990 = vmul.f32 %v1921, %v1958
  %v1991 = vmul.f32 %v1923, %v1959
  %v1992 = vmul.f32 %v1925, %v1960
  %v1993 = vmul.f32 %v1927, %v1961
  %v1994 = vmul.f32 %v1929, %v1962
  %v1995 = vmul.f32 %v1931, %v1963
  %v1996 = vadd.f32 %v1004, %v1324
  %v1997 = vadd.f32 %v1005, %v1325
  %v1998 = vadd.f32 %v1006, %v1326
  %v1999 = vadd.f32 %v1007, %v1327
  %v2000 = vadd.f32 %v1008, %v1328
  %v2001 = vadd.f32 %v1009, %v1329
  %v2002 = vadd.f32 %v1010, %v1330
  %v2003 = vadd.f32 %v1011, %v1331
  %v2004 = vadd.f32 %v1996, %v1644
  %v2005 = vadd.f32 %v1997, %v1645
  %v2006 = vadd.f32 %v1998, %v1646
  %v2007 = vadd.f32 %v1999, %v1647
  %v2008 = vadd.f32 %v2000, %v1648
  %v2009 = vadd.f32 %v2001, %v1649
  %v2010 = vadd.f32 %v2002, %v1650
  %v2011 = vadd.f32 %v2003, %v1651
  %v2012 = vadd.f32 %v2004, %v1964
  %v2013 = vadd.f32 %v2005, %v1965
  %v2014 = vadd.f32 %v2006, %v1966
  %v2015 = vadd.f32 %v2007, %v1967
  %v2016 = vadd.f32 %v2008, %v1968
  %v2017 = vadd.f32 %v2009, %v1969
  %v2018 = vadd.f32 %v2010, %v1970
  %v2019 = vadd.f32 %v2011, %v1971
  %v2020 = vmul.f32 %v2012, 0.25
  %v2021 = vmul.f32 %v2013, 0.25
  %v2022 = vmul.f32 %v2014, 0.25
  %v2023 = vmul.f32 %v2015, 0.25
  %v2024 = vmul.f32 %v2016, 0.25
  %v2025 = vmul.f32 %v2017, 0.25
  %v2026 = vmul.f32 %v2018, 0.25
  %v2027 = vmul.f32 %v2019, 0.25
  %v2028 = vadd.f32 %v1012, %v1332
  %v2029 = vadd.f32 %v1013, %v1333
  %v2030 = vadd.f32 %v1014, %v1334
  %v2031 = vadd.f32 %v1015, %v1335
  %v2032 = vadd.f32 %v1016, %v1336
  %v2033 = vadd.f32 %v1017, %v1337
  %v2034 = vadd.f32 %v1018, %v1338
  %v2035 = vadd.f32 %v1019, %v1339
  %v2036 = vadd.f32 %v2028, %v1652
  %v2037 = vadd.f32 %v2029, %v1653
  %v2038 = vadd.f32 %v2030, %v1654
  %v2039 = vadd.f32 %v2031, %v1655
  %v2040 = vadd.f32 %v2032, %v1656
  %v2041 = vadd.f32 %v2033, %v1657
  %v2042 = vadd.f32 %v2034, %v1658
  %v2043 = vadd.f32 %v2035, %v1659
  %v2044 = vadd.f32 %v2036, %v1972
  %v2045 = vadd.f32 %v2037, %v1973
  %v2046 = vadd.f32 %v2038, %v1974
  %v2047 = vadd.f32 %v2039, %v1975
  %v2048 = vadd.f32 %v2040, %v1976
  %v2049 = vadd.f32 %v2041, %v1977
  %v2050 = vadd.f32 %v2042, %v1978
  %v2051 = vadd.f32 %v2043, %v1979
  %v2052 = vmul.f32 %v2044, 0.25
  %v2053 = vmul.f32 %v2045, 0.25
  %v2054 = vmul.f32 %v2046, 0.25
  %v2055 = vmul.f32 %v2047, 0.25
  %v2056 = vmul.f32 %v2048, 0.25
  %v2057 = vmul.f32 %v2049, 0.25
  %v2058 = vmul.f32 %v2050, 0.25
  %v2059 = vmul.f32 %v2051, 0.25
  %v2060 = vadd.f32 %v1020, %v1340
  %v2061 = vadd.f32 %v1021, %v1341
  %v2062 = vadd.f32 %v1022, %v1342
  %v2063 = vadd.f32 %v1023, %v1343
  %v2064 = vadd.f32 %v1024, %v1344
  %v2065 = vadd.f32 %v1025, %v1345
  %v2066 = vadd.f32 %v1026, %v1346
  %v2067 = vadd.f32 %v1027, %v1347
  %v2068 = vadd.f32 %v2060, %v1660
  %v2069 = vadd.f32 %v2061, %v1661
  %v2070 = vadd.f32 %v2062, %v1662
  %v2071 = vadd.f32 %v2063, %v1663
  %v2072 = vadd.f32 %v2064, %v1664
  %v2073 = vadd.f32 %v2065, %v1665
  %v2074 = vadd.f32 %v2066, %v1666
  %v2075 = vadd.f32 %v2067, %v1667
  %v2076 = vadd.f32 %v2068, %v1980
  %v2077 = vadd.f32 %v2069, %v1981
  %v2078 = vadd.f32 %v2070, %v1982
  %v2079 = vadd.f32 %v2071, %v1983
  %v2080 = vadd.f32 %v2072, %v1984
  %v2081 = vadd.f32 %v2073, %v1985
  %v2082 = vadd.f32 %v2074, %v1986
  %v2083 = vadd.f32 %v2075, %v1987
  %v2084 = vmul.f32 %v2076, 0.25
  %v2085 = vmul.f32 %v2077, 0.25
  %v2086 = vmul.f32 %v2078, 0.25
  %v2087 = vmul.f32 %v2079, 0.25
  %v2088 = vmul.f32 %v2080, 0.25
  %v2089 = vmul.f32 %v2081, 0.25
  %v2090 = vmul.f32 %v2082, 0.25
  %v2091 = vmul.f32 %v2083, 0.25
  %v2092 = vadd.f32 %v1028, %v1348
  %v2093 = vadd.f32 %v1029, %v1349
  %v2094 = vadd.f32 %v1030, %v1350
  %v2095 = vadd.f32 %v1031, %v1351
  %v2096 = vadd.f32 %v1032, %v1352
  %v2097 = vadd.f32 %v1033, %v1353
  %v2098 = vadd.f32 %v1034, %v1354
  %v2099 = vadd.f32 %v1035, %v1355
  %v2100 = vadd.f32 %v2092, %v1668
  %v2101 = vadd.f32 %v2093, %v1669
  %v2102 = vadd.f32 %v2094, %v1670
  %v2103 = vadd.f32 %v2095, %v1671
  %v2104 = vadd.f32 %v2096, %v1672
  %v2105 = vadd.f32 %v2097, %v1673
  %v2106 = vadd.f32 %v2098, %v1674
  %v2107 = vadd.f32 %v2099, %v1675
  %v2108 = vadd.f32 %v2100, %v1988
  %v2109 = vadd.f32 %v2101, %v1989
  %v2110 = vadd.f32 %v2102, %v1990
  %v2111 = vadd.f32 %v2103, %v1991
  %v2112 = vadd.f32 %v2104, %v1992
  %v2113 = vadd.f32 %v2105, %v1993
  %v2114 = vadd.f32 %v2106, %v1994
  %v2115 = vadd.f32 %v2107, %v1995
  %v2116 = vmul.f32 %v2108, 0.25
  %v2117 = vmul.f32 %v2109, 0.25
  %v2118 = vmul.f32 %v2110, 0.25
  %v2119 = vmul.f32 %v2111, 0.25
  %v2120 = vmul.f32 %v2112, 0.25
  %v2121 = vmul.f32 %v2113, 0.25
  %v2122 = vmul.f32 %v2114, 0.25
  %v2123 = vmul.f32 %v2115, 0.25
  %v2124 = vmax.f32 %v2020, %v2052
  %v2125 = vmax.f32 %v2021, %v2053
  %v2126 = vmax.f32 %v2022, %v2054
  %v2127 = vmax.f32 %v2023, %v2055
  %v2128 = vmax.f32 %v2024, %v2056
  %v2129 = vmax.f32 %v2025, %v2057
  %v2130 = vmax.f32 %v2026, %v2058
  %v2131 = vmax.f32 %v2027, %v2059
  %v2132 = vmax.f32 %v2084, %v2116
  %v2133 = vmax.f32 %v2085, %v2117
  %v2134 = vmax.f32 %v2086, %v2118
  %v2135 = vmax.f32 %v2087, %v2119
  %v2136 = vmax.f32 %v2088, %v2120
  %v2137 = vmax.f32 %v2089, %v2121
  %v2138 = vmax.f32 %v2090, %v2122
  %v2139 = vmax.f32 %v2091, %v2123
  %v2140 = vmax.f32 %v2124, %v2132
  %v2141 = vmax.f32 %v2125, %v2133
  %v2142 = vmax.f32 %v2126, %v2134
  %v2143 = vmax.f32 %v2127, %v2135
  %v2144 = vmax.f32 %v2128, %v2136
  %v2145 = vmax.f32 %v2129, %v2137
  %v2146 = vmax.f32 %v2130, %v2138
  %v2147 = vmax.f32 %v2131, %v2139
  %v2148 = vsub.f32 %v2020, %v2140
  %v2149 = vsub.f32 %v2021, %v2141
  %v2150 = vsub.f32 %v2022, %v2142
  %v2151 = vsub.f32 %v2023, %v2143
  %v2152 = vsub.f32 %v2024, %v2144
  %v2153 = vsub.f32 %v2025, %v2145
  %v2154 = vsub.f32 %v2026, %v2146
  %v2155 = vsub.f32 %v2027, %v2147
  %v2156 = vmul.f32 %v2148, 1.442695
  %v2157 = vpow.pop %v2156
  %v2158 = vmul.f32 %v2149, 1.442695
  %v2159 = vpow.pop %v2158
  %v2160 = vmul.f32 %v2150, 1.442695
  %v2161 = vpow.pop %v2160
  %v2162 = vmul.f32 %v2151, 1.442695
  %v2163 = vpow.pop %v2162
  %v2164 = vmul.f32 %v2152, 1.442695
  %v2165 = vpow.pop %v2164
  %v2166 = vmul.f32 %v2153, 1.442695
  %v2167 = vpow.pop %v2166
  %v2168 = vmul.f32 %v2154, 1.442695
  %v2169 = vpow.pop %v2168
  %v2170 = vmul.f32 %v2155, 1.442695
  %v2171 = vpow.pop %v2170
  %v2172 = vsub.f32 %v2052, %v2140
  %v2173 = vsub.f32 %v2053, %v2141
  %v2174 = vsub.f32 %v2054, %v2142
  %v2175 = vsub.f32 %v2055, %v2143
  %v2176 = vsub.f32 %v2056, %v2144
  %v2177 = vsub.f32 %v2057, %v2145
  %v2178 = vsub.f32 %v2058, %v2146
  %v2179 = vsub.f32 %v2059, %v2147
  %v2180 = vmul.f32 %v2172, 1.442695
  %v2181 = vpow.pop %v2180
  %v2182 = vmul.f32 %v2173, 1.442695
  %v2183 = vpow.pop %v2182
  %v2184 = vmul.f32 %v2174, 1.442695
  %v2185 = vpow.pop %v2184
  %v2186 = vmul.f32 %v2175, 1.442695
  %v2187 = vpow.pop %v2186
  %v2188 = vmul.f32 %v2176, 1.442695
  %v2189 = vpow.pop %v2188
  %v2190 = vmul.f32 %v2177, 1.442695
  %v2191 = vpow.pop %v2190
  %v2192 = vmul.f32 %v2178, 1.442695
  %v2193 = vpow.pop %v2192
  %v2194 = vmul.f32 %v2179, 1.442695
  %v2195 = vpow.pop %v2194
  %v2196 = vsub.f32 %v2084, %v2140
  %v2197 = vsub.f32 %v2085, %v2141
  %v2198 = vsub.f32 %v2086, %v2142
  %v2199 = vsub.f32 %v2087, %v2143
  %v2200 = vsub.f32 %v2088, %v2144
  %v2201 = vsub.f32 %v2089, %v2145
  %v2202 = vsub.f32 %v2090, %v2146
  %v2203 = vsub.f32 %v2091, %v2147
  %v2204 = vmul.f32 %v2196, 1.442695
  %v2205 = vpow.pop %v2204
  %v2206 = vmul.f32 %v2197, 1.442695
  %v2207 = vpow.pop %v2206
  %v2208 = vmul.f32 %v2198, 1.442695
  %v2209 = vpow.pop %v2208
  %v2210 = vmul.f32 %v2199, 1.442695
  %v2211 = vpow.pop %v2210
  %v2212 = vmul.f32 %v2200, 1.442695
  %v2213 = vpow.pop %v2212
  %v2214 = vmul.f32 %v2201, 1.442695
  %v2215 = vpow.pop %v2214
  %v2216 = vmul.f32 %v2202, 1.442695
  %v2217 = vpow.pop %v2216
  %v2218 = vmul.f32 %v2203, 1.442695
  %v2219 = vpow.pop %v2218
  %v2220 = vsub.f32 %v2116, %v2140
  %v2221 = vsub.f32 %v2117, %v2141
  %v2222 = vsub.f32 %v2118, %v2142
  %v2223 = vsub.f32 %v2119, %v2143
  %v2224 = vsub.f32 %v2120, %v2144
  %v2225 = vsub.f32 %v2121, %v2145
  %v2226 = vsub.f32 %v2122, %v2146
  %v2227 = vsub.f32 %v2123, %v2147
  %v2228 = vmul.f32 %v2220, 1.442695
  %v2229 = vpow.pop %v2228
  %v2230 = vmul.f32 %v2221, 1.442695
  %v2231 = vpow.pop %v2230
  %v2232 = vmul.f32 %v2222, 1.442695
  %v2233 = vpow.pop %v2232
  %v2234 = vmul.f32 %v2223, 1.442695
  %v2235 = vpow.pop %v2234
  %v2236 = vmul.f32 %v2224, 1.442695
  %v2237 = vpow.pop %v2236
  %v2238 = vmul.f32 %v2225, 1.442695
  %v2239 = vpow.pop %v2238
  %v2240 = vmul.f32 %v2226, 1.442695
  %v2241 = vpow.pop %v2240
  %v2242 = vmul.f32 %v2227, 1.442695
  %v2243 = vpow.pop %v2242
  %v2244 = vadd.f32 %v2157, %v2181
  %v2245 = vadd.f32 %v2159, %v2183
  %v2246 = vadd.f32 %v2161, %v2185
  %v2247 = vadd.f32 %v2163, %v2187
  %v2248 = vadd.f32 %v2165, %v2189
  %v2249 = vadd.f32 %v2167, %v2191
  %v2250 = vadd.f32 %v2169, %v2193
  %v2251 = vadd.f32 %v2171, %v2195
  %v2252 = vadd.f32 %v2244, %v2205
  %v2253 = vadd.f32 %v2245, %v2207
  %v2254 = vadd.f32 %v2246, %v2209
  %v2255 = vadd.f32 %v2247, %v2211
  %v2256 = vadd.f32 %v2248, %v2213
  %v2257 = vadd.f32 %v2249, %v2215
  %v2258 = vadd.f32 %v2250, %v2217
  %v2259 = vadd.f32 %v2251, %v2219
  %v2260 = vadd.f32 %v2252, %v2229
  %v2261 = vadd.f32 %v2253, %v2231
  %v2262 = vadd.f32 %v2254, %v2233
  %v2263 = vadd.f32 %v2255, %v2235
  %v2264 = vadd.f32 %v2256, %v2237
  %v2265 = vadd.f32 %v2257, %v2239
  %v2266 = vadd.f32 %v2258, %v2241
  %v2267 = vadd.f32 %v2259, %v2243
  %v2268 = vrcp.pop %v2260
  %v2269 = vrcp.pop %v2261
  %v2270 = vrcp.pop %v2262
  %v2271 = vrcp.pop %v2263
  %v2272 = vrcp.pop %v2264
  %v2273 = vrcp.pop %v2265
  %v2274 = vrcp.pop %v2266
  %v2275 = vrcp.pop %v2267
  %v2276 = vmul.f32 %v2157, %v2268
  %v2277 = vmul.f32 %v2159, %v2269
  %v2278 = vmul.f32 %v2161, %v2270
  %v2279 = vmul.f32 %v2163, %v2271
  %v2280 = vmul.f32 %v2165, %v2272
  %v2281 = vmul.f32 %v2167, %v2273
  %v2282 = vmul.f32 %v2169, %v2274
  %v2283 = vmul.f32 %v2171, %v2275
  %v2284 = vmul.f32 %v2181, %v2268
  %v2285 = vmul.f32 %v2183, %v2269
  %v2286 = vmul.f32 %v2185, %v2270
  %v2287 = vmul.f32 %v2187, %v2271
  %v2288 = vmul.f32 %v2189, %v2272
  %v2289 = vmul.f32 %v2191, %v2273
  %v2290 = vmul.f32 %v2193, %v2274
  %v2291 = vmul.f32 %v2195, %v2275
  %v2292 = vmul.f32 %v2205, %v2268
  %v2293 = vmul.f32 %v2207, %v2269
  %v2294 = vmul.f32 %v2209, %v2270
  %v2295 = vmul.f32 %v2211, %v2271
  %v2296 = vmul.f32 %v2213, %v2272
  %v2297 = vmul.f32 %v2215, %v2273
  %v2298 = vmul.f32 %v2217, %v2274
  %v2299 = vmul.f32 %v2219, %v2275
  %v2300 = vmul.f32 %v2229, %v2268
  %v2301 = vmul.f32 %v2231, %v2269
  %v2302 = vmul.f32 %v2233, %v2270
  %v2303 = vmul.f32 %v2235, %v2271
  %v2304 = vmul.f32 %v2237, %v2272
  %v2305 = vmul.f32 %v2239, %v2273
  %v2306 = vmul.f32 %v2241, %v2274
  %v2307 = vmul.f32 %v2243, %v2275
  %v2308 = vunpack.c.l.bf16 %v525
  %v2309 = vunpack.c.l.bf16 %v527
  %v2310 = vunpack.c.l.bf16 %v529
  %v2311 = vunpack.c.l.bf16 %v531
  %v2312 = vunpack.c.l.bf16 %v533
  %v2313 = vunpack.c.l.bf16 %v535
  %v2314 = vunpack.c.l.bf16 %v537
  %v2315 = vunpack.c.l.bf16 %v539
  %v2316 = vmul.f32 %v1004, %v2308
  %v2317 = vmul.f32 %v1005, %v2309
  %v2318 = vmul.f32 %v1006, %v2310
  %v2319 = vmul.f32 %v1007, %v2311
  %v2320 = vmul.f32 %v1008, %v2312
  %v2321 = vmul.f32 %v1009, %v2313
  %v2322 = vmul.f32 %v1010, %v2314
  %v2323 = vmul.f32 %v1011, %v2315
  %v2324 = vunpack.c.l.bf16 %v541
  %v2325 = vunpack.c.l.bf16 %v543
  %v2326 = vunpack.c.l.bf16 %v545
  %v2327 = vunpack.c.l.bf16 %v547
  %v2328 = vunpack.c.l.bf16 %v549
  %v2329 = vunpack.c.l.bf16 %v551
  %v2330 = vunpack.c.l.bf16 %v553
  %v2331 = vunpack.c.l.bf16 %v555
  %v2332 = vmul.f32 %v1012, %v2324
  %v2333 = vmul.f32 %v1013, %v2325
  %v2334 = vmul.f32 %v1014, %v2326
  %v2335 = vmul.f32 %v1015, %v2327
  %v2336 = vmul.f32 %v1016, %v2328
  %v2337 = vmul.f32 %v1017, %v2329
  %v2338 = vmul.f32 %v1018, %v2330
  %v2339 = vmul.f32 %v1019, %v2331
  %v2340 = vadd.f32 %v2316, %v2332
  %v2341 = vadd.f32 %v2317, %v2333
  %v2342 = vadd.f32 %v2318, %v2334
  %v2343 = vadd.f32 %v2319, %v2335
  %v2344 = vadd.f32 %v2320, %v2336
  %v2345 = vadd.f32 %v2321, %v2337
  %v2346 = vadd.f32 %v2322, %v2338
  %v2347 = vadd.f32 %v2323, %v2339
  %v2348 = vunpack.c.l.bf16 %v557
  %v2349 = vunpack.c.l.bf16 %v559
  %v2350 = vunpack.c.l.bf16 %v561
  %v2351 = vunpack.c.l.bf16 %v563
  %v2352 = vunpack.c.l.bf16 %v565
  %v2353 = vunpack.c.l.bf16 %v567
  %v2354 = vunpack.c.l.bf16 %v569
  %v2355 = vunpack.c.l.bf16 %v571
  %v2356 = vmul.f32 %v1020, %v2348
  %v2357 = vmul.f32 %v1021, %v2349
  %v2358 = vmul.f32 %v1022, %v2350
  %v2359 = vmul.f32 %v1023, %v2351
  %v2360 = vmul.f32 %v1024, %v2352
  %v2361 = vmul.f32 %v1025, %v2353
  %v2362 = vmul.f32 %v1026, %v2354
  %v2363 = vmul.f32 %v1027, %v2355
  %v2364 = vadd.f32 %v2340, %v2356
  %v2365 = vadd.f32 %v2341, %v2357
  %v2366 = vadd.f32 %v2342, %v2358
  %v2367 = vadd.f32 %v2343, %v2359
  %v2368 = vadd.f32 %v2344, %v2360
  %v2369 = vadd.f32 %v2345, %v2361
  %v2370 = vadd.f32 %v2346, %v2362
  %v2371 = vadd.f32 %v2347, %v2363
  %v2372 = vunpack.c.l.bf16 %v573
  %v2373 = vunpack.c.l.bf16 %v575
  %v2374 = vunpack.c.l.bf16 %v577
  %v2375 = vunpack.c.l.bf16 %v579
  %v2376 = vunpack.c.l.bf16 %v581
  %v2377 = vunpack.c.l.bf16 %v583
  %v2378 = vunpack.c.l.bf16 %v585
  %v2379 = vunpack.c.l.bf16 %v587
  %v2380 = vmul.f32 %v1028, %v2372
  %v2381 = vmul.f32 %v1029, %v2373
  %v2382 = vmul.f32 %v1030, %v2374
  %v2383 = vmul.f32 %v1031, %v2375
  %v2384 = vmul.f32 %v1032, %v2376
  %v2385 = vmul.f32 %v1033, %v2377
  %v2386 = vmul.f32 %v1034, %v2378
  %v2387 = vmul.f32 %v1035, %v2379
  %v2388 = vadd.f32 %v2364, %v2380
  %v2389 = vadd.f32 %v2365, %v2381
  %v2390 = vadd.f32 %v2366, %v2382
  %v2391 = vadd.f32 %v2367, %v2383
  %v2392 = vadd.f32 %v2368, %v2384
  %v2393 = vadd.f32 %v2369, %v2385
  %v2394 = vadd.f32 %v2370, %v2386
  %v2395 = vadd.f32 %v2371, %v2387
  %v2396 = vmul.f32 %v1324, %v2308
  %v2397 = vmul.f32 %v1325, %v2309
  %v2398 = vmul.f32 %v1326, %v2310
  %v2399 = vmul.f32 %v1327, %v2311
  %v2400 = vmul.f32 %v1328, %v2312
  %v2401 = vmul.f32 %v1329, %v2313
  %v2402 = vmul.f32 %v1330, %v2314
  %v2403 = vmul.f32 %v1331, %v2315
  %v2404 = vmul.f32 %v1332, %v2324
  %v2405 = vmul.f32 %v1333, %v2325
  %v2406 = vmul.f32 %v1334, %v2326
  %v2407 = vmul.f32 %v1335, %v2327
  %v2408 = vmul.f32 %v1336, %v2328
  %v2409 = vmul.f32 %v1337, %v2329
  %v2410 = vmul.f32 %v1338, %v2330
  %v2411 = vmul.f32 %v1339, %v2331
  %v2412 = vadd.f32 %v2396, %v2404
  %v2413 = vadd.f32 %v2397, %v2405
  %v2414 = vadd.f32 %v2398, %v2406
  %v2415 = vadd.f32 %v2399, %v2407
  %v2416 = vadd.f32 %v2400, %v2408
  %v2417 = vadd.f32 %v2401, %v2409
  %v2418 = vadd.f32 %v2402, %v2410
  %v2419 = vadd.f32 %v2403, %v2411
  %v2420 = vmul.f32 %v1340, %v2348
  %v2421 = vmul.f32 %v1341, %v2349
  %v2422 = vmul.f32 %v1342, %v2350
  %v2423 = vmul.f32 %v1343, %v2351
  %v2424 = vmul.f32 %v1344, %v2352
  %v2425 = vmul.f32 %v1345, %v2353
  %v2426 = vmul.f32 %v1346, %v2354
  %v2427 = vmul.f32 %v1347, %v2355
  %v2428 = vadd.f32 %v2412, %v2420
  %v2429 = vadd.f32 %v2413, %v2421
  %v2430 = vadd.f32 %v2414, %v2422
  %v2431 = vadd.f32 %v2415, %v2423
  %v2432 = vadd.f32 %v2416, %v2424
  %v2433 = vadd.f32 %v2417, %v2425
  %v2434 = vadd.f32 %v2418, %v2426
  %v2435 = vadd.f32 %v2419, %v2427
  %v2436 = vmul.f32 %v1348, %v2372
  %v2437 = vmul.f32 %v1349, %v2373
  %v2438 = vmul.f32 %v1350, %v2374
  %v2439 = vmul.f32 %v1351, %v2375
  %v2440 = vmul.f32 %v1352, %v2376
  %v2441 = vmul.f32 %v1353, %v2377
  %v2442 = vmul.f32 %v1354, %v2378
  %v2443 = vmul.f32 %v1355, %v2379
  %v2444 = vadd.f32 %v2428, %v2436
  %v2445 = vadd.f32 %v2429, %v2437
  %v2446 = vadd.f32 %v2430, %v2438
  %v2447 = vadd.f32 %v2431, %v2439
  %v2448 = vadd.f32 %v2432, %v2440
  %v2449 = vadd.f32 %v2433, %v2441
  %v2450 = vadd.f32 %v2434, %v2442
  %v2451 = vadd.f32 %v2435, %v2443
  %v2452 = vmul.f32 %v1644, %v2308
  %v2453 = vmul.f32 %v1645, %v2309
  %v2454 = vmul.f32 %v1646, %v2310
  %v2455 = vmul.f32 %v1647, %v2311
  %v2456 = vmul.f32 %v1648, %v2312
  %v2457 = vmul.f32 %v1649, %v2313
  %v2458 = vmul.f32 %v1650, %v2314
  %v2459 = vmul.f32 %v1651, %v2315
  %v2460 = vmul.f32 %v1652, %v2324
  %v2461 = vmul.f32 %v1653, %v2325
  %v2462 = vmul.f32 %v1654, %v2326
  %v2463 = vmul.f32 %v1655, %v2327
  %v2464 = vmul.f32 %v1656, %v2328
  %v2465 = vmul.f32 %v1657, %v2329
  %v2466 = vmul.f32 %v1658, %v2330
  %v2467 = vmul.f32 %v1659, %v2331
  %v2468 = vadd.f32 %v2452, %v2460
  %v2469 = vadd.f32 %v2453, %v2461
  %v2470 = vadd.f32 %v2454, %v2462
  %v2471 = vadd.f32 %v2455, %v2463
  %v2472 = vadd.f32 %v2456, %v2464
  %v2473 = vadd.f32 %v2457, %v2465
  %v2474 = vadd.f32 %v2458, %v2466
  %v2475 = vadd.f32 %v2459, %v2467
  %v2476 = vmul.f32 %v1660, %v2348
  %v2477 = vmul.f32 %v1661, %v2349
  %v2478 = vmul.f32 %v1662, %v2350
  %v2479 = vmul.f32 %v1663, %v2351
  %v2480 = vmul.f32 %v1664, %v2352
  %v2481 = vmul.f32 %v1665, %v2353
  %v2482 = vmul.f32 %v1666, %v2354
  %v2483 = vmul.f32 %v1667, %v2355
  %v2484 = vadd.f32 %v2468, %v2476
  %v2485 = vadd.f32 %v2469, %v2477
  %v2486 = vadd.f32 %v2470, %v2478
  %v2487 = vadd.f32 %v2471, %v2479
  %v2488 = vadd.f32 %v2472, %v2480
  %v2489 = vadd.f32 %v2473, %v2481
  %v2490 = vadd.f32 %v2474, %v2482
  %v2491 = vadd.f32 %v2475, %v2483
  %v2492 = vmul.f32 %v1668, %v2372
  %v2493 = vmul.f32 %v1669, %v2373
  %v2494 = vmul.f32 %v1670, %v2374
  %v2495 = vmul.f32 %v1671, %v2375
  %v2496 = vmul.f32 %v1672, %v2376
  %v2497 = vmul.f32 %v1673, %v2377
  %v2498 = vmul.f32 %v1674, %v2378
  %v2499 = vmul.f32 %v1675, %v2379
  %v2500 = vadd.f32 %v2484, %v2492
  %v2501 = vadd.f32 %v2485, %v2493
  %v2502 = vadd.f32 %v2486, %v2494
  %v2503 = vadd.f32 %v2487, %v2495
  %v2504 = vadd.f32 %v2488, %v2496
  %v2505 = vadd.f32 %v2489, %v2497
  %v2506 = vadd.f32 %v2490, %v2498
  %v2507 = vadd.f32 %v2491, %v2499
  %v2508 = vmul.f32 %v1964, %v2308
  %v2509 = vmul.f32 %v1965, %v2309
  %v2510 = vmul.f32 %v1966, %v2310
  %v2511 = vmul.f32 %v1967, %v2311
  %v2512 = vmul.f32 %v1968, %v2312
  %v2513 = vmul.f32 %v1969, %v2313
  %v2514 = vmul.f32 %v1970, %v2314
  %v2515 = vmul.f32 %v1971, %v2315
  %v2516 = vmul.f32 %v1972, %v2324
  %v2517 = vmul.f32 %v1973, %v2325
  %v2518 = vmul.f32 %v1974, %v2326
  %v2519 = vmul.f32 %v1975, %v2327
  %v2520 = vmul.f32 %v1976, %v2328
  %v2521 = vmul.f32 %v1977, %v2329
  %v2522 = vmul.f32 %v1978, %v2330
  %v2523 = vmul.f32 %v1979, %v2331
  %v2524 = vadd.f32 %v2508, %v2516
  %v2525 = vadd.f32 %v2509, %v2517
  %v2526 = vadd.f32 %v2510, %v2518
  %v2527 = vadd.f32 %v2511, %v2519
  %v2528 = vadd.f32 %v2512, %v2520
  %v2529 = vadd.f32 %v2513, %v2521
  %v2530 = vadd.f32 %v2514, %v2522
  %v2531 = vadd.f32 %v2515, %v2523
  %v2532 = vmul.f32 %v1980, %v2348
  %v2533 = vmul.f32 %v1981, %v2349
  %v2534 = vmul.f32 %v1982, %v2350
  %v2535 = vmul.f32 %v1983, %v2351
  %v2536 = vmul.f32 %v1984, %v2352
  %v2537 = vmul.f32 %v1985, %v2353
  %v2538 = vmul.f32 %v1986, %v2354
  %v2539 = vmul.f32 %v1987, %v2355
  %v2540 = vadd.f32 %v2524, %v2532
  %v2541 = vadd.f32 %v2525, %v2533
  %v2542 = vadd.f32 %v2526, %v2534
  %v2543 = vadd.f32 %v2527, %v2535
  %v2544 = vadd.f32 %v2528, %v2536
  %v2545 = vadd.f32 %v2529, %v2537
  %v2546 = vadd.f32 %v2530, %v2538
  %v2547 = vadd.f32 %v2531, %v2539
  %v2548 = vmul.f32 %v1988, %v2372
  %v2549 = vmul.f32 %v1989, %v2373
  %v2550 = vmul.f32 %v1990, %v2374
  %v2551 = vmul.f32 %v1991, %v2375
  %v2552 = vmul.f32 %v1992, %v2376
  %v2553 = vmul.f32 %v1993, %v2377
  %v2554 = vmul.f32 %v1994, %v2378
  %v2555 = vmul.f32 %v1995, %v2379
  %v2556 = vadd.f32 %v2540, %v2548
  %v2557 = vadd.f32 %v2541, %v2549
  %v2558 = vadd.f32 %v2542, %v2550
  %v2559 = vadd.f32 %v2543, %v2551
  %v2560 = vadd.f32 %v2544, %v2552
  %v2561 = vadd.f32 %v2545, %v2553
  %v2562 = vadd.f32 %v2546, %v2554
  %v2563 = vadd.f32 %v2547, %v2555
  %v2564 = vpack.c.bf16 %v2389, %v2388
  %v2565 = vpack.c.bf16 %v2391, %v2390
  %v2566 = vpack.c.bf16 %v2393, %v2392
  %v2567 = vpack.c.bf16 %v2395, %v2394
  %v2568 = vpack.c.bf16 %v2445, %v2444
  %v2569 = vpack.c.bf16 %v2447, %v2446
  %v2570 = vpack.c.bf16 %v2449, %v2448
  %v2571 = vpack.c.bf16 %v2451, %v2450
  %v2572 = vpack.c.bf16 %v2501, %v2500
  %v2573 = vpack.c.bf16 %v2503, %v2502
  %v2574 = vpack.c.bf16 %v2505, %v2504
  %v2575 = vpack.c.bf16 %v2507, %v2506
  %v2576 = vpack.c.bf16 %v2557, %v2556
  %v2577 = vpack.c.bf16 %v2559, %v2558
  %v2578 = vpack.c.bf16 %v2561, %v2560
  %v2579 = vpack.c.bf16 %v2563, %v2562
  %v2580 = vld [vmem:[%s5] sm:$0xf]
  %v2581 = vld [vmem:[%s5 + $0x4] sm:$0xf]
  %v2582 = vld [vmem:[%s5 + $0x8] sm:$0xf]
  %v2583 = vld [vmem:[%s5 + $0xc] sm:$0xf]
  %v2584 = vld [vmem:[%s5 + $0x10] sm:$0xf]
  %v2585 = vld [vmem:[%s5 + $0x14] sm:$0xf]
  %v2586 = vld [vmem:[%s5 + $0x18] sm:$0xf]
  %v2587 = vld [vmem:[%s5 + $0x1c] sm:$0xf]
  %v2588 = vld [vmem:[%s5 + $0x20] sm:$0xf]
  %v2589 = vld [vmem:[%s5 + $0x24] sm:$0xf]
  %v2590 = vld [vmem:[%s5 + $0x28] sm:$0xf]
  %v2591 = vld [vmem:[%s5 + $0x2c] sm:$0xf]
  %v2592 = vld [vmem:[%s5 + $0x30] sm:$0xf]
  %v2593 = vld [vmem:[%s5 + $0x34] sm:$0xf]
  %v2594 = vld [vmem:[%s5 + $0x38] sm:$0xf]
  %v2595 = vld [vmem:[%s5 + $0x3c] sm:$0xf]
  %v2612 = vunpack.c.l.b16 %v2580
  %v2613 = vunpack.c.l.b16 %v2581
  %v2614 = vunpack.c.l.b16 %v2582
  %v2615 = vunpack.c.l.b16 %v2583
  %v2616 = vunpack.c.l.b16 %v2584
  %v2617 = vunpack.c.l.b16 %v2585
  %v2618 = vunpack.c.l.b16 %v2586
  %v2619 = vunpack.c.l.b16 %v2587
  %v2620 = vunpack.c.l.b16 %v2588
  %v2621 = vunpack.c.l.b16 %v2589
  %v2622 = vunpack.c.l.b16 %v2590
  %v2623 = vunpack.c.l.b16 %v2591
  %v2624 = vunpack.c.l.b16 %v2592
  %v2625 = vunpack.c.l.b16 %v2593
  %v2626 = vunpack.c.l.b16 %v2594
  %v2627 = vunpack.c.l.b16 %v2595
  %v2628 = vpack.c.b16 %v2613, %v2612
  %v2629 = vpack.c.b16 %v2615, %v2614
  %v2630 = vpack.c.b16 %v2617, %v2616
  %v2631 = vpack.c.b16 %v2619, %v2618
  %v2632 = vpack.c.b16 %v2621, %v2620
  %v2633 = vpack.c.b16 %v2623, %v2622
  %v2634 = vpack.c.b16 %v2625, %v2624
  %v2635 = vpack.c.b16 %v2627, %v2626
  %2644 = vmatpush.bf16.msra.mxu0 %v2635
  %2645 = vmatpush.bf16.msra.mxu0 %v2634
  %2646 = vmatpush.bf16.msra.mxu0 %v2633
  %2647 = vmatpush.bf16.msra.mxu0 %v2632
  %2648 = vmatpush.bf16.msra.mxu0 %v2631
  %2649 = vmatpush.bf16.msra.mxu0 %v2630
  %2650 = vmatpush.bf16.msra.mxu0 %v2629
  %2651 = vmatpush.bf16.msra.mxu0 %v2628
  %2652 = vmatmul.bf16.gmra.mxu0 %v2564
  %v2653 = vpop.f32.mrf.mxu0
  %v2654 = vadd.f32 0.0, %v2653
  %v2655 = vpop.f32.mrf.mxu0
  %v2656 = vadd.f32 0.0, %v2655
  %2657 = vmatmul.bf16.gmra.mxu0 %v2565
  %v2658 = vpop.f32.mrf.mxu0
  %v2659 = vadd.f32 0.0, %v2658
  %v2660 = vpop.f32.mrf.mxu0
  %v2661 = vadd.f32 0.0, %v2660
  %2662 = vmatmul.bf16.gmra.mxu0 %v2566
  %v2663 = vpop.f32.mrf.mxu0
  %v2664 = vadd.f32 0.0, %v2663
  %v2665 = vpop.f32.mrf.mxu0
  %v2666 = vadd.f32 0.0, %v2665
  %2667 = vmatmul.bf16.gmra.mxu0 %v2567
  %v2668 = vpop.f32.mrf.mxu0
  %v2669 = vadd.f32 0.0, %v2668
  %v2670 = vpop.f32.mrf.mxu0
  %v2671 = vadd.f32 0.0, %v2670
  %2672 = vmatmul.bf16.gmra.mxu0 %v2568
  %v2673 = vpop.f32.mrf.mxu0
  %v2674 = vadd.f32 0.0, %v2673
  %v2675 = vpop.f32.mrf.mxu0
  %v2676 = vadd.f32 0.0, %v2675
  %2677 = vmatmul.bf16.gmra.mxu0 %v2569
  %v2678 = vpop.f32.mrf.mxu0
  %v2679 = vadd.f32 0.0, %v2678
  %v2680 = vpop.f32.mrf.mxu0
  %v2681 = vadd.f32 0.0, %v2680
  %2682 = vmatmul.bf16.gmra.mxu0 %v2570
  %v2683 = vpop.f32.mrf.mxu0
  %v2684 = vadd.f32 0.0, %v2683
  %v2685 = vpop.f32.mrf.mxu0
  %v2686 = vadd.f32 0.0, %v2685
  %2687 = vmatmul.bf16.gmra.mxu0 %v2571
  %v2688 = vpop.f32.mrf.mxu0
  %v2689 = vadd.f32 0.0, %v2688
  %v2690 = vpop.f32.mrf.mxu0
  %v2691 = vadd.f32 0.0, %v2690
  %2692 = vmatmul.bf16.gmra.mxu0 %v2572
  %v2693 = vpop.f32.mrf.mxu0
  %v2694 = vadd.f32 0.0, %v2693
  %v2695 = vpop.f32.mrf.mxu0
  %v2696 = vadd.f32 0.0, %v2695
  %2697 = vmatmul.bf16.gmra.mxu0 %v2573
  %v2698 = vpop.f32.mrf.mxu0
  %v2699 = vadd.f32 0.0, %v2698
  %v2700 = vpop.f32.mrf.mxu0
  %v2701 = vadd.f32 0.0, %v2700
  %2702 = vmatmul.bf16.gmra.mxu0 %v2574
  %v2703 = vpop.f32.mrf.mxu0
  %v2704 = vadd.f32 0.0, %v2703
  %v2705 = vpop.f32.mrf.mxu0
  %v2706 = vadd.f32 0.0, %v2705
  %2707 = vmatmul.bf16.gmra.mxu0 %v2575
  %v2708 = vpop.f32.mrf.mxu0
  %v2709 = vadd.f32 0.0, %v2708
  %v2710 = vpop.f32.mrf.mxu0
  %v2711 = vadd.f32 0.0, %v2710
  %2712 = vmatmul.bf16.gmra.mxu0 %v2576
  %v2713 = vpop.f32.mrf.mxu0
  %v2714 = vadd.f32 0.0, %v2713
  %v2715 = vpop.f32.mrf.mxu0
  %v2716 = vadd.f32 0.0, %v2715
  %2717 = vmatmul.bf16.gmra.mxu0 %v2577
  %v2718 = vpop.f32.mrf.mxu0
  %v2719 = vadd.f32 0.0, %v2718
  %v2720 = vpop.f32.mrf.mxu0
  %v2721 = vadd.f32 0.0, %v2720
  %2722 = vmatmul.bf16.gmra.mxu0 %v2578
  %v2723 = vpop.f32.mrf.mxu0
  %v2724 = vadd.f32 0.0, %v2723
  %v2725 = vpop.f32.mrf.mxu0
  %v2726 = vadd.f32 0.0, %v2725
  %2727 = vmatmul.bf16.gmra.mxu0 %v2579
  %v2728 = vpop.f32.mrf.mxu0
  %v2729 = vadd.f32 0.0, %v2728
  %v2730 = vpop.f32.mrf.mxu0
  %v2731 = vadd.f32 0.0, %v2730
  %2732 = vdwg.mxu0
  %v2733 = vadd.f32 %v49, %v2654
  %v2734 = vadd.f32 %v50, %v2656
  %v2735 = vadd.f32 %v51, %v2659
  %v2736 = vadd.f32 %v52, %v2661
  %v2737 = vadd.f32 %v53, %v2664
  %v2738 = vadd.f32 %v54, %v2666
  %v2739 = vadd.f32 %v55, %v2669
  %v2740 = vadd.f32 %v56, %v2671
  %v2741 = vadd.f32 %v57, %v2674
  %v2742 = vadd.f32 %v58, %v2676
  %v2743 = vadd.f32 %v59, %v2679
  %v2744 = vadd.f32 %v60, %v2681
  %v2745 = vadd.f32 %v61, %v2684
  %v2746 = vadd.f32 %v62, %v2686
  %v2747 = vadd.f32 %v63, %v2689
  %v2748 = vadd.f32 %v64, %v2691
  %v2749 = vadd.f32 %v65, %v2694
  %v2750 = vadd.f32 %v66, %v2696
  %v2751 = vadd.f32 %v67, %v2699
  %v2752 = vadd.f32 %v68, %v2701
  %v2753 = vadd.f32 %v69, %v2704
  %v2754 = vadd.f32 %v70, %v2706
  %v2755 = vadd.f32 %v71, %v2709
  %v2756 = vadd.f32 %v72, %v2711
  %v2757 = vadd.f32 %v73, %v2714
  %v2758 = vadd.f32 %v74, %v2716
  %v2759 = vadd.f32 %v75, %v2719
  %v2760 = vadd.f32 %v76, %v2721
  %v2761 = vadd.f32 %v77, %v2724
  %v2762 = vadd.f32 %v78, %v2726
  %v2763 = vadd.f32 %v79, %v2729
  %v2764 = vadd.f32 %v80, %v2731
  %2765 = vadd.xlane.f32.xlu0 %v2733
  %v2766 = vpop.xlane.xlu0 %2765
  %2767 = vadd.xlane.f32.xlu0 %v2734
  %v2768 = vpop.xlane.xlu0 %2767
  %2769 = vadd.xlane.f32.xlu0 %v2735
  %v2770 = vpop.xlane.xlu0 %2769
  %2771 = vadd.xlane.f32.xlu0 %v2736
  %v2772 = vpop.xlane.xlu0 %2771
  %2773 = vadd.xlane.f32.xlu0 %v2737
  %v2774 = vpop.xlane.xlu0 %2773
  %2775 = vadd.xlane.f32.xlu0 %v2738
  %v2776 = vpop.xlane.xlu0 %2775
  %2777 = vadd.xlane.f32.xlu0 %v2739
  %v2778 = vpop.xlane.xlu0 %2777
  %2779 = vadd.xlane.f32.xlu0 %v2740
  %v2780 = vpop.xlane.xlu0 %2779
  %2781 = vadd.xlane.f32.xlu0 %v2741
  %v2782 = vpop.xlane.xlu0 %2781
  %2783 = vadd.xlane.f32.xlu0 %v2742
  %v2784 = vpop.xlane.xlu0 %2783
  %2785 = vadd.xlane.f32.xlu0 %v2743
  %v2786 = vpop.xlane.xlu0 %2785
  %2787 = vadd.xlane.f32.xlu0 %v2744
  %v2788 = vpop.xlane.xlu0 %2787
  %2789 = vadd.xlane.f32.xlu0 %v2745
  %v2790 = vpop.xlane.xlu0 %2789
  %2791 = vadd.xlane.f32.xlu0 %v2746
  %v2792 = vpop.xlane.xlu0 %2791
  %2793 = vadd.xlane.f32.xlu0 %v2747
  %v2794 = vpop.xlane.xlu0 %2793
  %2795 = vadd.xlane.f32.xlu0 %v2748
  %v2796 = vpop.xlane.xlu0 %2795
  %2797 = vadd.xlane.f32.xlu0 %v2749
  %v2798 = vpop.xlane.xlu0 %2797
  %2799 = vadd.xlane.f32.xlu0 %v2750
  %v2800 = vpop.xlane.xlu0 %2799
  %2801 = vadd.xlane.f32.xlu0 %v2751
  %v2802 = vpop.xlane.xlu0 %2801
  %2803 = vadd.xlane.f32.xlu0 %v2752
  %v2804 = vpop.xlane.xlu0 %2803
  %2805 = vadd.xlane.f32.xlu0 %v2753
  %v2806 = vpop.xlane.xlu0 %2805
  %2807 = vadd.xlane.f32.xlu0 %v2754
  %v2808 = vpop.xlane.xlu0 %2807
  %2809 = vadd.xlane.f32.xlu0 %v2755
  %v2810 = vpop.xlane.xlu0 %2809
  %2811 = vadd.xlane.f32.xlu0 %v2756
  %v2812 = vpop.xlane.xlu0 %2811
  %2813 = vadd.xlane.f32.xlu0 %v2757
  %v2814 = vpop.xlane.xlu0 %2813
  %2815 = vadd.xlane.f32.xlu0 %v2758
  %v2816 = vpop.xlane.xlu0 %2815
  %2817 = vadd.xlane.f32.xlu0 %v2759
  %v2818 = vpop.xlane.xlu0 %2817
  %2819 = vadd.xlane.f32.xlu0 %v2760
  %v2820 = vpop.xlane.xlu0 %2819
  %2821 = vadd.xlane.f32.xlu0 %v2761
  %v2822 = vpop.xlane.xlu0 %2821
  %2823 = vadd.xlane.f32.xlu0 %v2762
  %v2824 = vpop.xlane.xlu0 %2823
  %2825 = vadd.xlane.f32.xlu0 %v2763
  %v2826 = vpop.xlane.xlu0 %2825
  %2827 = vadd.xlane.f32.xlu0 %v2764
  %v2828 = vpop.xlane.xlu0 %2827
  %v2829 = vrcp.pop 128.0
  %v2830 = vmul.f32 128.0, %v2829
  %v2831 = vsub.f32 1.0, %v2830
  %v2832 = vmul.f32 %v2829, %v2831
  %v2833 = vadd.f32 %v2829, %v2832
  %vm2834 = vweird.f32 %v2829
  %v2835 = vsel %vm2834, %v2829, %v2833
  %v2836 = vmul.f32 %v2766, %v2835
  %v2837 = vmul.f32 %v2768, %v2835
  %v2838 = vmul.f32 %v2770, %v2835
  %v2839 = vmul.f32 %v2772, %v2835
  %v2840 = vmul.f32 %v2774, %v2835
  %v2841 = vmul.f32 %v2776, %v2835
  %v2842 = vmul.f32 %v2778, %v2835
  %v2843 = vmul.f32 %v2780, %v2835
  %v2844 = vmul.f32 %v2782, %v2835
  %v2845 = vmul.f32 %v2784, %v2835
  %v2846 = vmul.f32 %v2786, %v2835
  %v2847 = vmul.f32 %v2788, %v2835
  %v2848 = vmul.f32 %v2790, %v2835
  %v2849 = vmul.f32 %v2792, %v2835
  %v2850 = vmul.f32 %v2794, %v2835
  %v2851 = vmul.f32 %v2796, %v2835
  %v2852 = vmul.f32 %v2798, %v2835
  %v2853 = vmul.f32 %v2800, %v2835
  %v2854 = vmul.f32 %v2802, %v2835
  %v2855 = vmul.f32 %v2804, %v2835
  %v2856 = vmul.f32 %v2806, %v2835
  %v2857 = vmul.f32 %v2808, %v2835
  %v2858 = vmul.f32 %v2810, %v2835
  %v2859 = vmul.f32 %v2812, %v2835
  %v2860 = vmul.f32 %v2814, %v2835
  %v2861 = vmul.f32 %v2816, %v2835
  %v2862 = vmul.f32 %v2818, %v2835
  %v2863 = vmul.f32 %v2820, %v2835
  %v2864 = vmul.f32 %v2822, %v2835
  %v2865 = vmul.f32 %v2824, %v2835
  %v2866 = vmul.f32 %v2826, %v2835
  %v2867 = vmul.f32 %v2828, %v2835
  %v2868 = vsub.f32 %v2733, %v2836
  %v2869 = vsub.f32 %v2734, %v2837
  %v2870 = vsub.f32 %v2735, %v2838
  %v2871 = vsub.f32 %v2736, %v2839
  %v2872 = vsub.f32 %v2737, %v2840
  %v2873 = vsub.f32 %v2738, %v2841
  %v2874 = vsub.f32 %v2739, %v2842
  %v2875 = vsub.f32 %v2740, %v2843
  %v2876 = vsub.f32 %v2741, %v2844
  %v2877 = vsub.f32 %v2742, %v2845
  %v2878 = vsub.f32 %v2743, %v2846
  %v2879 = vsub.f32 %v2744, %v2847
  %v2880 = vsub.f32 %v2745, %v2848
  %v2881 = vsub.f32 %v2746, %v2849
  %v2882 = vsub.f32 %v2747, %v2850
  %v2883 = vsub.f32 %v2748, %v2851
  %v2884 = vsub.f32 %v2749, %v2852
  %v2885 = vsub.f32 %v2750, %v2853
  %v2886 = vsub.f32 %v2751, %v2854
  %v2887 = vsub.f32 %v2752, %v2855
  %v2888 = vsub.f32 %v2753, %v2856
  %v2889 = vsub.f32 %v2754, %v2857
  %v2890 = vsub.f32 %v2755, %v2858
  %v2891 = vsub.f32 %v2756, %v2859
  %v2892 = vsub.f32 %v2757, %v2860
  %v2893 = vsub.f32 %v2758, %v2861
  %v2894 = vsub.f32 %v2759, %v2862
  %v2895 = vsub.f32 %v2760, %v2863
  %v2896 = vsub.f32 %v2761, %v2864
  %v2897 = vsub.f32 %v2762, %v2865
  %v2898 = vsub.f32 %v2763, %v2866
  %v2899 = vsub.f32 %v2764, %v2867
  %v2900 = vmul.f32 %v2868, %v2868
  %v2901 = vmul.f32 %v2869, %v2869
  %v2902 = vmul.f32 %v2870, %v2870
  %v2903 = vmul.f32 %v2871, %v2871
  %v2904 = vmul.f32 %v2872, %v2872
  %v2905 = vmul.f32 %v2873, %v2873
  %v2906 = vmul.f32 %v2874, %v2874
  %v2907 = vmul.f32 %v2875, %v2875
  %v2908 = vmul.f32 %v2876, %v2876
  %v2909 = vmul.f32 %v2877, %v2877
  %v2910 = vmul.f32 %v2878, %v2878
  %v2911 = vmul.f32 %v2879, %v2879
  %v2912 = vmul.f32 %v2880, %v2880
  %v2913 = vmul.f32 %v2881, %v2881
  %v2914 = vmul.f32 %v2882, %v2882
  %v2915 = vmul.f32 %v2883, %v2883
  %v2916 = vmul.f32 %v2884, %v2884
  %v2917 = vmul.f32 %v2885, %v2885
  %v2918 = vmul.f32 %v2886, %v2886
  %v2919 = vmul.f32 %v2887, %v2887
  %v2920 = vmul.f32 %v2888, %v2888
  %v2921 = vmul.f32 %v2889, %v2889
  %v2922 = vmul.f32 %v2890, %v2890
  %v2923 = vmul.f32 %v2891, %v2891
  %v2924 = vmul.f32 %v2892, %v2892
  %v2925 = vmul.f32 %v2893, %v2893
  %v2926 = vmul.f32 %v2894, %v2894
  %v2927 = vmul.f32 %v2895, %v2895
  %v2928 = vmul.f32 %v2896, %v2896
  %v2929 = vmul.f32 %v2897, %v2897
  %v2930 = vmul.f32 %v2898, %v2898
  %v2931 = vmul.f32 %v2899, %v2899
  %2932 = vadd.xlane.f32.xlu0 %v2900
  %v2933 = vpop.xlane.xlu0 %2932
  %2934 = vadd.xlane.f32.xlu0 %v2901
  %v2935 = vpop.xlane.xlu0 %2934
  %2936 = vadd.xlane.f32.xlu0 %v2902
  %v2937 = vpop.xlane.xlu0 %2936
  %2938 = vadd.xlane.f32.xlu0 %v2903
  %v2939 = vpop.xlane.xlu0 %2938
  %2940 = vadd.xlane.f32.xlu0 %v2904
  %v2941 = vpop.xlane.xlu0 %2940
  %2942 = vadd.xlane.f32.xlu0 %v2905
  %v2943 = vpop.xlane.xlu0 %2942
  %2944 = vadd.xlane.f32.xlu0 %v2906
  %v2945 = vpop.xlane.xlu0 %2944
  %2946 = vadd.xlane.f32.xlu0 %v2907
  %v2947 = vpop.xlane.xlu0 %2946
  %2948 = vadd.xlane.f32.xlu0 %v2908
  %v2949 = vpop.xlane.xlu0 %2948
  %2950 = vadd.xlane.f32.xlu0 %v2909
  %v2951 = vpop.xlane.xlu0 %2950
  %2952 = vadd.xlane.f32.xlu0 %v2910
  %v2953 = vpop.xlane.xlu0 %2952
  %2954 = vadd.xlane.f32.xlu0 %v2911
  %v2955 = vpop.xlane.xlu0 %2954
  %2956 = vadd.xlane.f32.xlu0 %v2912
  %v2957 = vpop.xlane.xlu0 %2956
  %2958 = vadd.xlane.f32.xlu0 %v2913
  %v2959 = vpop.xlane.xlu0 %2958
  %2960 = vadd.xlane.f32.xlu0 %v2914
  %v2961 = vpop.xlane.xlu0 %2960
  %2962 = vadd.xlane.f32.xlu0 %v2915
  %v2963 = vpop.xlane.xlu0 %2962
  %2964 = vadd.xlane.f32.xlu0 %v2916
  %v2965 = vpop.xlane.xlu0 %2964
  %2966 = vadd.xlane.f32.xlu0 %v2917
  %v2967 = vpop.xlane.xlu0 %2966
  %2968 = vadd.xlane.f32.xlu0 %v2918
  %v2969 = vpop.xlane.xlu0 %2968
  %2970 = vadd.xlane.f32.xlu0 %v2919
  %v2971 = vpop.xlane.xlu0 %2970
  %2972 = vadd.xlane.f32.xlu0 %v2920
  %v2973 = vpop.xlane.xlu0 %2972
  %2974 = vadd.xlane.f32.xlu0 %v2921
  %v2975 = vpop.xlane.xlu0 %2974
  %2976 = vadd.xlane.f32.xlu0 %v2922
  %v2977 = vpop.xlane.xlu0 %2976
  %2978 = vadd.xlane.f32.xlu0 %v2923
  %v2979 = vpop.xlane.xlu0 %2978
  %2980 = vadd.xlane.f32.xlu0 %v2924
  %v2981 = vpop.xlane.xlu0 %2980
  %2982 = vadd.xlane.f32.xlu0 %v2925
  %v2983 = vpop.xlane.xlu0 %2982
  %2984 = vadd.xlane.f32.xlu0 %v2926
  %v2985 = vpop.xlane.xlu0 %2984
  %2986 = vadd.xlane.f32.xlu0 %v2927
  %v2987 = vpop.xlane.xlu0 %2986
  %2988 = vadd.xlane.f32.xlu0 %v2928
  %v2989 = vpop.xlane.xlu0 %2988
  %2990 = vadd.xlane.f32.xlu0 %v2929
  %v2991 = vpop.xlane.xlu0 %2990
  %2992 = vadd.xlane.f32.xlu0 %v2930
  %v2993 = vpop.xlane.xlu0 %2992
  %2994 = vadd.xlane.f32.xlu0 %v2931
  %v2995 = vpop.xlane.xlu0 %2994
  %v2996 = vmul.f32 %v2933, %v2835
  %v2997 = vmul.f32 %v2935, %v2835
  %v2998 = vmul.f32 %v2937, %v2835
  %v2999 = vmul.f32 %v2939, %v2835
  %v3000 = vmul.f32 %v2941, %v2835
  %v3001 = vmul.f32 %v2943, %v2835
  %v3002 = vmul.f32 %v2945, %v2835
  %v3003 = vmul.f32 %v2947, %v2835
  %v3004 = vmul.f32 %v2949, %v2835
  %v3005 = vmul.f32 %v2951, %v2835
  %v3006 = vmul.f32 %v2953, %v2835
  %v3007 = vmul.f32 %v2955, %v2835
  %v3008 = vmul.f32 %v2957, %v2835
  %v3009 = vmul.f32 %v2959, %v2835
  %v3010 = vmul.f32 %v2961, %v2835
  %v3011 = vmul.f32 %v2963, %v2835
  %v3012 = vmul.f32 %v2965, %v2835
  %v3013 = vmul.f32 %v2967, %v2835
  %v3014 = vmul.f32 %v2969, %v2835
  %v3015 = vmul.f32 %v2971, %v2835
  %v3016 = vmul.f32 %v2973, %v2835
  %v3017 = vmul.f32 %v2975, %v2835
  %v3018 = vmul.f32 %v2977, %v2835
  %v3019 = vmul.f32 %v2979, %v2835
  %v3020 = vmul.f32 %v2981, %v2835
  %v3021 = vmul.f32 %v2983, %v2835
  %v3022 = vmul.f32 %v2985, %v2835
  %v3023 = vmul.f32 %v2987, %v2835
  %v3024 = vmul.f32 %v2989, %v2835
  %v3025 = vmul.f32 %v2991, %v2835
  %v3026 = vmul.f32 %v2993, %v2835
  %v3027 = vmul.f32 %v2995, %v2835
  %v3028 = vadd.f32 %v2996, 1e-05
  %v3029 = vadd.f32 %v2997, 1e-05
  %v3030 = vadd.f32 %v2998, 1e-05
  %v3031 = vadd.f32 %v2999, 1e-05
  %v3032 = vadd.f32 %v3000, 1e-05
  %v3033 = vadd.f32 %v3001, 1e-05
  %v3034 = vadd.f32 %v3002, 1e-05
  %v3035 = vadd.f32 %v3003, 1e-05
  %v3036 = vadd.f32 %v3004, 1e-05
  %v3037 = vadd.f32 %v3005, 1e-05
  %v3038 = vadd.f32 %v3006, 1e-05
  %v3039 = vadd.f32 %v3007, 1e-05
  %v3040 = vadd.f32 %v3008, 1e-05
  %v3041 = vadd.f32 %v3009, 1e-05
  %v3042 = vadd.f32 %v3010, 1e-05
  %v3043 = vadd.f32 %v3011, 1e-05
  %v3044 = vadd.f32 %v3012, 1e-05
  %v3045 = vadd.f32 %v3013, 1e-05
  %v3046 = vadd.f32 %v3014, 1e-05
  %v3047 = vadd.f32 %v3015, 1e-05
  %v3048 = vadd.f32 %v3016, 1e-05
  %v3049 = vadd.f32 %v3017, 1e-05
  %v3050 = vadd.f32 %v3018, 1e-05
  %v3051 = vadd.f32 %v3019, 1e-05
  %v3052 = vadd.f32 %v3020, 1e-05
  %v3053 = vadd.f32 %v3021, 1e-05
  %v3054 = vadd.f32 %v3022, 1e-05
  %v3055 = vadd.f32 %v3023, 1e-05
  %v3056 = vadd.f32 %v3024, 1e-05
  %v3057 = vadd.f32 %v3025, 1e-05
  %v3058 = vadd.f32 %v3026, 1e-05
  %v3059 = vadd.f32 %v3027, 1e-05
  %v3060 = vrsqrt.pop %v3028
  %v3061 = vmul.f32 %v3060, %v3028
  %v3062 = vmul.f32 %v3061, %v3060
  %v3063 = vmul.f32 0.5, %v3062
  %v3064 = vsub.f32 1.5, %v3063
  %v3065 = vmul.f32 %v3060, %v3064
  %vm3066 = vweird.f32 %v3028
  %vm3067 = vweird.f32 %v3060
  %vm3068 = vmor %vm3066, %vm3067
  %v3069 = vsel %vm3068, %v3060, %v3065
  %v3070 = vrsqrt.pop %v3029
  %v3071 = vmul.f32 %v3070, %v3029
  %v3072 = vmul.f32 %v3071, %v3070
  %v3073 = vmul.f32 0.5, %v3072
  %v3074 = vsub.f32 1.5, %v3073
  %v3075 = vmul.f32 %v3070, %v3074
  %vm3076 = vweird.f32 %v3029
  %vm3077 = vweird.f32 %v3070
  %vm3078 = vmor %vm3076, %vm3077
  %v3079 = vsel %vm3078, %v3070, %v3075
  %v3080 = vrsqrt.pop %v3030
  %v3081 = vmul.f32 %v3080, %v3030
  %v3082 = vmul.f32 %v3081, %v3080
  %v3083 = vmul.f32 0.5, %v3082
  %v3084 = vsub.f32 1.5, %v3083
  %v3085 = vmul.f32 %v3080, %v3084
  %vm3086 = vweird.f32 %v3030
  %vm3087 = vweird.f32 %v3080
  %vm3088 = vmor %vm3086, %vm3087
  %v3089 = vsel %vm3088, %v3080, %v3085
  %v3090 = vrsqrt.pop %v3031
  %v3091 = vmul.f32 %v3090, %v3031
  %v3092 = vmul.f32 %v3091, %v3090
  %v3093 = vmul.f32 0.5, %v3092
  %v3094 = vsub.f32 1.5, %v3093
  %v3095 = vmul.f32 %v3090, %v3094
  %vm3096 = vweird.f32 %v3031
  %vm3097 = vweird.f32 %v3090
  %vm3098 = vmor %vm3096, %vm3097
  %v3099 = vsel %vm3098, %v3090, %v3095
  %v3100 = vrsqrt.pop %v3032
  %v3101 = vmul.f32 %v3100, %v3032
  %v3102 = vmul.f32 %v3101, %v3100
  %v3103 = vmul.f32 0.5, %v3102
  %v3104 = vsub.f32 1.5, %v3103
  %v3105 = vmul.f32 %v3100, %v3104
  %vm3106 = vweird.f32 %v3032
  %vm3107 = vweird.f32 %v3100
  %vm3108 = vmor %vm3106, %vm3107
  %v3109 = vsel %vm3108, %v3100, %v3105
  %v3110 = vrsqrt.pop %v3033
  %v3111 = vmul.f32 %v3110, %v3033
  %v3112 = vmul.f32 %v3111, %v3110
  %v3113 = vmul.f32 0.5, %v3112
  %v3114 = vsub.f32 1.5, %v3113
  %v3115 = vmul.f32 %v3110, %v3114
  %vm3116 = vweird.f32 %v3033
  %vm3117 = vweird.f32 %v3110
  %vm3118 = vmor %vm3116, %vm3117
  %v3119 = vsel %vm3118, %v3110, %v3115
  %v3120 = vrsqrt.pop %v3034
  %v3121 = vmul.f32 %v3120, %v3034
  %v3122 = vmul.f32 %v3121, %v3120
  %v3123 = vmul.f32 0.5, %v3122
  %v3124 = vsub.f32 1.5, %v3123
  %v3125 = vmul.f32 %v3120, %v3124
  %vm3126 = vweird.f32 %v3034
  %vm3127 = vweird.f32 %v3120
  %vm3128 = vmor %vm3126, %vm3127
  %v3129 = vsel %vm3128, %v3120, %v3125
  %v3130 = vrsqrt.pop %v3035
  %v3131 = vmul.f32 %v3130, %v3035
  %v3132 = vmul.f32 %v3131, %v3130
  %v3133 = vmul.f32 0.5, %v3132
  %v3134 = vsub.f32 1.5, %v3133
  %v3135 = vmul.f32 %v3130, %v3134
  %vm3136 = vweird.f32 %v3035
  %vm3137 = vweird.f32 %v3130
  %vm3138 = vmor %vm3136, %vm3137
  %v3139 = vsel %vm3138, %v3130, %v3135
  %v3140 = vrsqrt.pop %v3036
  %v3141 = vmul.f32 %v3140, %v3036
  %v3142 = vmul.f32 %v3141, %v3140
  %v3143 = vmul.f32 0.5, %v3142
  %v3144 = vsub.f32 1.5, %v3143
  %v3145 = vmul.f32 %v3140, %v3144
  %vm3146 = vweird.f32 %v3036
  %vm3147 = vweird.f32 %v3140
  %vm3148 = vmor %vm3146, %vm3147
  %v3149 = vsel %vm3148, %v3140, %v3145
  %v3150 = vrsqrt.pop %v3037
  %v3151 = vmul.f32 %v3150, %v3037
  %v3152 = vmul.f32 %v3151, %v3150
  %v3153 = vmul.f32 0.5, %v3152
  %v3154 = vsub.f32 1.5, %v3153
  %v3155 = vmul.f32 %v3150, %v3154
  %vm3156 = vweird.f32 %v3037
  %vm3157 = vweird.f32 %v3150
  %vm3158 = vmor %vm3156, %vm3157
  %v3159 = vsel %vm3158, %v3150, %v3155
  %v3160 = vrsqrt.pop %v3038
  %v3161 = vmul.f32 %v3160, %v3038
  %v3162 = vmul.f32 %v3161, %v3160
  %v3163 = vmul.f32 0.5, %v3162
  %v3164 = vsub.f32 1.5, %v3163
  %v3165 = vmul.f32 %v3160, %v3164
  %vm3166 = vweird.f32 %v3038
  %vm3167 = vweird.f32 %v3160
  %vm3168 = vmor %vm3166, %vm3167
  %v3169 = vsel %vm3168, %v3160, %v3165
  %v3170 = vrsqrt.pop %v3039
  %v3171 = vmul.f32 %v3170, %v3039
  %v3172 = vmul.f32 %v3171, %v3170
  %v3173 = vmul.f32 0.5, %v3172
  %v3174 = vsub.f32 1.5, %v3173
  %v3175 = vmul.f32 %v3170, %v3174
  %vm3176 = vweird.f32 %v3039
  %vm3177 = vweird.f32 %v3170
  %vm3178 = vmor %vm3176, %vm3177
  %v3179 = vsel %vm3178, %v3170, %v3175
  %v3180 = vrsqrt.pop %v3040
  %v3181 = vmul.f32 %v3180, %v3040
  %v3182 = vmul.f32 %v3181, %v3180
  %v3183 = vmul.f32 0.5, %v3182
  %v3184 = vsub.f32 1.5, %v3183
  %v3185 = vmul.f32 %v3180, %v3184
  %vm3186 = vweird.f32 %v3040
  %vm3187 = vweird.f32 %v3180
  %vm3188 = vmor %vm3186, %vm3187
  %v3189 = vsel %vm3188, %v3180, %v3185
  %v3190 = vrsqrt.pop %v3041
  %v3191 = vmul.f32 %v3190, %v3041
  %v3192 = vmul.f32 %v3191, %v3190
  %v3193 = vmul.f32 0.5, %v3192
  %v3194 = vsub.f32 1.5, %v3193
  %v3195 = vmul.f32 %v3190, %v3194
  %vm3196 = vweird.f32 %v3041
  %vm3197 = vweird.f32 %v3190
  %vm3198 = vmor %vm3196, %vm3197
  %v3199 = vsel %vm3198, %v3190, %v3195
  %v3200 = vrsqrt.pop %v3042
  %v3201 = vmul.f32 %v3200, %v3042
  %v3202 = vmul.f32 %v3201, %v3200
  %v3203 = vmul.f32 0.5, %v3202
  %v3204 = vsub.f32 1.5, %v3203
  %v3205 = vmul.f32 %v3200, %v3204
  %vm3206 = vweird.f32 %v3042
  %vm3207 = vweird.f32 %v3200
  %vm3208 = vmor %vm3206, %vm3207
  %v3209 = vsel %vm3208, %v3200, %v3205
  %v3210 = vrsqrt.pop %v3043
  %v3211 = vmul.f32 %v3210, %v3043
  %v3212 = vmul.f32 %v3211, %v3210
  %v3213 = vmul.f32 0.5, %v3212
  %v3214 = vsub.f32 1.5, %v3213
  %v3215 = vmul.f32 %v3210, %v3214
  %vm3216 = vweird.f32 %v3043
  %vm3217 = vweird.f32 %v3210
  %vm3218 = vmor %vm3216, %vm3217
  %v3219 = vsel %vm3218, %v3210, %v3215
  %v3220 = vrsqrt.pop %v3044
  %v3221 = vmul.f32 %v3220, %v3044
  %v3222 = vmul.f32 %v3221, %v3220
  %v3223 = vmul.f32 0.5, %v3222
  %v3224 = vsub.f32 1.5, %v3223
  %v3225 = vmul.f32 %v3220, %v3224
  %vm3226 = vweird.f32 %v3044
  %vm3227 = vweird.f32 %v3220
  %vm3228 = vmor %vm3226, %vm3227
  %v3229 = vsel %vm3228, %v3220, %v3225
  %v3230 = vrsqrt.pop %v3045
  %v3231 = vmul.f32 %v3230, %v3045
  %v3232 = vmul.f32 %v3231, %v3230
  %v3233 = vmul.f32 0.5, %v3232
  %v3234 = vsub.f32 1.5, %v3233
  %v3235 = vmul.f32 %v3230, %v3234
  %vm3236 = vweird.f32 %v3045
  %vm3237 = vweird.f32 %v3230
  %vm3238 = vmor %vm3236, %vm3237
  %v3239 = vsel %vm3238, %v3230, %v3235
  %v3240 = vrsqrt.pop %v3046
  %v3241 = vmul.f32 %v3240, %v3046
  %v3242 = vmul.f32 %v3241, %v3240
  %v3243 = vmul.f32 0.5, %v3242
  %v3244 = vsub.f32 1.5, %v3243
  %v3245 = vmul.f32 %v3240, %v3244
  %vm3246 = vweird.f32 %v3046
  %vm3247 = vweird.f32 %v3240
  %vm3248 = vmor %vm3246, %vm3247
  %v3249 = vsel %vm3248, %v3240, %v3245
  %v3250 = vrsqrt.pop %v3047
  %v3251 = vmul.f32 %v3250, %v3047
  %v3252 = vmul.f32 %v3251, %v3250
  %v3253 = vmul.f32 0.5, %v3252
  %v3254 = vsub.f32 1.5, %v3253
  %v3255 = vmul.f32 %v3250, %v3254
  %vm3256 = vweird.f32 %v3047
  %vm3257 = vweird.f32 %v3250
  %vm3258 = vmor %vm3256, %vm3257
  %v3259 = vsel %vm3258, %v3250, %v3255
  %v3260 = vrsqrt.pop %v3048
  %v3261 = vmul.f32 %v3260, %v3048
  %v3262 = vmul.f32 %v3261, %v3260
  %v3263 = vmul.f32 0.5, %v3262
  %v3264 = vsub.f32 1.5, %v3263
  %v3265 = vmul.f32 %v3260, %v3264
  %vm3266 = vweird.f32 %v3048
  %vm3267 = vweird.f32 %v3260
  %vm3268 = vmor %vm3266, %vm3267
  %v3269 = vsel %vm3268, %v3260, %v3265
  %v3270 = vrsqrt.pop %v3049
  %v3271 = vmul.f32 %v3270, %v3049
  %v3272 = vmul.f32 %v3271, %v3270
  %v3273 = vmul.f32 0.5, %v3272
  %v3274 = vsub.f32 1.5, %v3273
  %v3275 = vmul.f32 %v3270, %v3274
  %vm3276 = vweird.f32 %v3049
  %vm3277 = vweird.f32 %v3270
  %vm3278 = vmor %vm3276, %vm3277
  %v3279 = vsel %vm3278, %v3270, %v3275
  %v3280 = vrsqrt.pop %v3050
  %v3281 = vmul.f32 %v3280, %v3050
  %v3282 = vmul.f32 %v3281, %v3280
  %v3283 = vmul.f32 0.5, %v3282
  %v3284 = vsub.f32 1.5, %v3283
  %v3285 = vmul.f32 %v3280, %v3284
  %vm3286 = vweird.f32 %v3050
  %vm3287 = vweird.f32 %v3280
  %vm3288 = vmor %vm3286, %vm3287
  %v3289 = vsel %vm3288, %v3280, %v3285
  %v3290 = vrsqrt.pop %v3051
  %v3291 = vmul.f32 %v3290, %v3051
  %v3292 = vmul.f32 %v3291, %v3290
  %v3293 = vmul.f32 0.5, %v3292
  %v3294 = vsub.f32 1.5, %v3293
  %v3295 = vmul.f32 %v3290, %v3294
  %vm3296 = vweird.f32 %v3051
  %vm3297 = vweird.f32 %v3290
  %vm3298 = vmor %vm3296, %vm3297
  %v3299 = vsel %vm3298, %v3290, %v3295
  %v3300 = vrsqrt.pop %v3052
  %v3301 = vmul.f32 %v3300, %v3052
  %v3302 = vmul.f32 %v3301, %v3300
  %v3303 = vmul.f32 0.5, %v3302
  %v3304 = vsub.f32 1.5, %v3303
  %v3305 = vmul.f32 %v3300, %v3304
  %vm3306 = vweird.f32 %v3052
  %vm3307 = vweird.f32 %v3300
  %vm3308 = vmor %vm3306, %vm3307
  %v3309 = vsel %vm3308, %v3300, %v3305
  %v3310 = vrsqrt.pop %v3053
  %v3311 = vmul.f32 %v3310, %v3053
  %v3312 = vmul.f32 %v3311, %v3310
  %v3313 = vmul.f32 0.5, %v3312
  %v3314 = vsub.f32 1.5, %v3313
  %v3315 = vmul.f32 %v3310, %v3314
  %vm3316 = vweird.f32 %v3053
  %vm3317 = vweird.f32 %v3310
  %vm3318 = vmor %vm3316, %vm3317
  %v3319 = vsel %vm3318, %v3310, %v3315
  %v3320 = vrsqrt.pop %v3054
  %v3321 = vmul.f32 %v3320, %v3054
  %v3322 = vmul.f32 %v3321, %v3320
  %v3323 = vmul.f32 0.5, %v3322
  %v3324 = vsub.f32 1.5, %v3323
  %v3325 = vmul.f32 %v3320, %v3324
  %vm3326 = vweird.f32 %v3054
  %vm3327 = vweird.f32 %v3320
  %vm3328 = vmor %vm3326, %vm3327
  %v3329 = vsel %vm3328, %v3320, %v3325
  %v3330 = vrsqrt.pop %v3055
  %v3331 = vmul.f32 %v3330, %v3055
  %v3332 = vmul.f32 %v3331, %v3330
  %v3333 = vmul.f32 0.5, %v3332
  %v3334 = vsub.f32 1.5, %v3333
  %v3335 = vmul.f32 %v3330, %v3334
  %vm3336 = vweird.f32 %v3055
  %vm3337 = vweird.f32 %v3330
  %vm3338 = vmor %vm3336, %vm3337
  %v3339 = vsel %vm3338, %v3330, %v3335
  %v3340 = vrsqrt.pop %v3056
  %v3341 = vmul.f32 %v3340, %v3056
  %v3342 = vmul.f32 %v3341, %v3340
  %v3343 = vmul.f32 0.5, %v3342
  %v3344 = vsub.f32 1.5, %v3343
  %v3345 = vmul.f32 %v3340, %v3344
  %vm3346 = vweird.f32 %v3056
  %vm3347 = vweird.f32 %v3340
  %vm3348 = vmor %vm3346, %vm3347
  %v3349 = vsel %vm3348, %v3340, %v3345
  %v3350 = vrsqrt.pop %v3057
  %v3351 = vmul.f32 %v3350, %v3057
  %v3352 = vmul.f32 %v3351, %v3350
  %v3353 = vmul.f32 0.5, %v3352
  %v3354 = vsub.f32 1.5, %v3353
  %v3355 = vmul.f32 %v3350, %v3354
  %vm3356 = vweird.f32 %v3057
  %vm3357 = vweird.f32 %v3350
  %vm3358 = vmor %vm3356, %vm3357
  %v3359 = vsel %vm3358, %v3350, %v3355
  %v3360 = vrsqrt.pop %v3058
  %v3361 = vmul.f32 %v3360, %v3058
  %v3362 = vmul.f32 %v3361, %v3360
  %v3363 = vmul.f32 0.5, %v3362
  %v3364 = vsub.f32 1.5, %v3363
  %v3365 = vmul.f32 %v3360, %v3364
  %vm3366 = vweird.f32 %v3058
  %vm3367 = vweird.f32 %v3360
  %vm3368 = vmor %vm3366, %vm3367
  %v3369 = vsel %vm3368, %v3360, %v3365
  %v3370 = vrsqrt.pop %v3059
  %v3371 = vmul.f32 %v3370, %v3059
  %v3372 = vmul.f32 %v3371, %v3370
  %v3373 = vmul.f32 0.5, %v3372
  %v3374 = vsub.f32 1.5, %v3373
  %v3375 = vmul.f32 %v3370, %v3374
  %vm3376 = vweird.f32 %v3059
  %vm3377 = vweird.f32 %v3370
  %vm3378 = vmor %vm3376, %vm3377
  %v3379 = vsel %vm3378, %v3370, %v3375
  %v3380 = vmul.f32 %v2868, %v3069
  %v3381 = vmul.f32 %v2869, %v3079
  %v3382 = vmul.f32 %v2870, %v3089
  %v3383 = vmul.f32 %v2871, %v3099
  %v3384 = vmul.f32 %v2872, %v3109
  %v3385 = vmul.f32 %v2873, %v3119
  %v3386 = vmul.f32 %v2874, %v3129
  %v3387 = vmul.f32 %v2875, %v3139
  %v3388 = vmul.f32 %v2876, %v3149
  %v3389 = vmul.f32 %v2877, %v3159
  %v3390 = vmul.f32 %v2878, %v3169
  %v3391 = vmul.f32 %v2879, %v3179
  %v3392 = vmul.f32 %v2880, %v3189
  %v3393 = vmul.f32 %v2881, %v3199
  %v3394 = vmul.f32 %v2882, %v3209
  %v3395 = vmul.f32 %v2883, %v3219
  %v3396 = vmul.f32 %v2884, %v3229
  %v3397 = vmul.f32 %v2885, %v3239
  %v3398 = vmul.f32 %v2886, %v3249
  %v3399 = vmul.f32 %v2887, %v3259
  %v3400 = vmul.f32 %v2888, %v3269
  %v3401 = vmul.f32 %v2889, %v3279
  %v3402 = vmul.f32 %v2890, %v3289
  %v3403 = vmul.f32 %v2891, %v3299
  %v3404 = vmul.f32 %v2892, %v3309
  %v3405 = vmul.f32 %v2893, %v3319
  %v3406 = vmul.f32 %v2894, %v3329
  %v3407 = vmul.f32 %v2895, %v3339
  %v3408 = vmul.f32 %v2896, %v3349
  %v3409 = vmul.f32 %v2897, %v3359
  %v3410 = vmul.f32 %v2898, %v3369
  %v3411 = vmul.f32 %v2899, %v3379
  %v3412 = vld [vmem:[%s6] sm:$0x1]
  %v3414 = vperm.slane %v3412, 0
  %v3416 = vmul.f32 %v3380, %v3414
  %v3417 = vmul.f32 %v3381, %v3414
  %v3418 = vmul.f32 %v3382, %v3414
  %v3419 = vmul.f32 %v3383, %v3414
  %v3420 = vmul.f32 %v3384, %v3414
  %v3421 = vmul.f32 %v3385, %v3414
  %v3422 = vmul.f32 %v3386, %v3414
  %v3423 = vmul.f32 %v3387, %v3414
  %v3424 = vmul.f32 %v3388, %v3414
  %v3425 = vmul.f32 %v3389, %v3414
  %v3426 = vmul.f32 %v3390, %v3414
  %v3427 = vmul.f32 %v3391, %v3414
  %v3428 = vmul.f32 %v3392, %v3414
  %v3429 = vmul.f32 %v3393, %v3414
  %v3430 = vmul.f32 %v3394, %v3414
  %v3431 = vmul.f32 %v3395, %v3414
  %v3432 = vmul.f32 %v3396, %v3414
  %v3433 = vmul.f32 %v3397, %v3414
  %v3434 = vmul.f32 %v3398, %v3414
  %v3435 = vmul.f32 %v3399, %v3414
  %v3436 = vmul.f32 %v3400, %v3414
  %v3437 = vmul.f32 %v3401, %v3414
  %v3438 = vmul.f32 %v3402, %v3414
  %v3439 = vmul.f32 %v3403, %v3414
  %v3440 = vmul.f32 %v3404, %v3414
  %v3441 = vmul.f32 %v3405, %v3414
  %v3442 = vmul.f32 %v3406, %v3414
  %v3443 = vmul.f32 %v3407, %v3414
  %v3444 = vmul.f32 %v3408, %v3414
  %v3445 = vmul.f32 %v3409, %v3414
  %v3446 = vmul.f32 %v3410, %v3414
  %v3447 = vmul.f32 %v3411, %v3414
  %v3448 = vld [vmem:[%s7] sm:$0x1]
  %v3450 = vperm.slane %v3448, 0
  %v3452 = vadd.f32 %v3416, %v3450
  %v3453 = vadd.f32 %v3417, %v3450
  %v3454 = vadd.f32 %v3418, %v3450
  %v3455 = vadd.f32 %v3419, %v3450
  %v3456 = vadd.f32 %v3420, %v3450
  %v3457 = vadd.f32 %v3421, %v3450
  %v3458 = vadd.f32 %v3422, %v3450
  %v3459 = vadd.f32 %v3423, %v3450
  %v3460 = vadd.f32 %v3424, %v3450
  %v3461 = vadd.f32 %v3425, %v3450
  %v3462 = vadd.f32 %v3426, %v3450
  %v3463 = vadd.f32 %v3427, %v3450
  %v3464 = vadd.f32 %v3428, %v3450
  %v3465 = vadd.f32 %v3429, %v3450
  %v3466 = vadd.f32 %v3430, %v3450
  %v3467 = vadd.f32 %v3431, %v3450
  %v3468 = vadd.f32 %v3432, %v3450
  %v3469 = vadd.f32 %v3433, %v3450
  %v3470 = vadd.f32 %v3434, %v3450
  %v3471 = vadd.f32 %v3435, %v3450
  %v3472 = vadd.f32 %v3436, %v3450
  %v3473 = vadd.f32 %v3437, %v3450
  %v3474 = vadd.f32 %v3438, %v3450
  %v3475 = vadd.f32 %v3439, %v3450
  %v3476 = vadd.f32 %v3440, %v3450
  %v3477 = vadd.f32 %v3441, %v3450
  %v3478 = vadd.f32 %v3442, %v3450
  %v3479 = vadd.f32 %v3443, %v3450
  %v3480 = vadd.f32 %v3444, %v3450
  %v3481 = vadd.f32 %v3445, %v3450
  %v3482 = vadd.f32 %v3446, %v3450
  %v3483 = vadd.f32 %v3447, %v3450
  %v3484 = vpack.c.bf16 %v3453, %v3452
  %v3485 = vpack.c.bf16 %v3455, %v3454
  %v3486 = vpack.c.bf16 %v3457, %v3456
  %v3487 = vpack.c.bf16 %v3459, %v3458
  %v3488 = vpack.c.bf16 %v3461, %v3460
  %v3489 = vpack.c.bf16 %v3463, %v3462
  %v3490 = vpack.c.bf16 %v3465, %v3464
  %v3491 = vpack.c.bf16 %v3467, %v3466
  %v3492 = vpack.c.bf16 %v3469, %v3468
  %v3493 = vpack.c.bf16 %v3471, %v3470
  %v3494 = vpack.c.bf16 %v3473, %v3472
  %v3495 = vpack.c.bf16 %v3475, %v3474
  %v3496 = vpack.c.bf16 %v3477, %v3476
  %v3497 = vpack.c.bf16 %v3479, %v3478
  %v3498 = vpack.c.bf16 %v3481, %v3480
  %v3499 = vpack.c.bf16 %v3483, %v3482
  %v3500 = vld [vmem:[%s8] sm:$0xff]
  %v3501 = vld [vmem:[%s8 + $0x8] sm:$0xff]
  %v3502 = vld [vmem:[%s8 + $0x10] sm:$0xff]
  %v3503 = vld [vmem:[%s8 + $0x18] sm:$0xff]
  %v3504 = vld [vmem:[%s8 + $0x20] sm:$0xff]
  %v3505 = vld [vmem:[%s8 + $0x28] sm:$0xff]
  %v3506 = vld [vmem:[%s8 + $0x30] sm:$0xff]
  %v3507 = vld [vmem:[%s8 + $0x38] sm:$0xff]
  %v3508 = vld [vmem:[%s8 + $0x40] sm:$0xff]
  %v3509 = vld [vmem:[%s8 + $0x48] sm:$0xff]
  %v3510 = vld [vmem:[%s8 + $0x50] sm:$0xff]
  %v3511 = vld [vmem:[%s8 + $0x58] sm:$0xff]
  %v3512 = vld [vmem:[%s8 + $0x60] sm:$0xff]
  %v3513 = vld [vmem:[%s8 + $0x68] sm:$0xff]
  %v3514 = vld [vmem:[%s8 + $0x70] sm:$0xff]
  %v3515 = vld [vmem:[%s8 + $0x78] sm:$0xff]
  %v3516 = vld [vmem:[%s9] sm:$0x3]
  %v3518 = vperm.slane %v3516, 0
  %v3519 = vperm.slane %v3516, 1
  %v3538 = vunpack.c.l.b16 %v3500
  %v3539 = vunpack.c.h.b16 %v3500
  %v3540 = vunpack.c.l.b16 %v3501
  %v3541 = vunpack.c.h.b16 %v3501
  %v3542 = vunpack.c.l.b16 %v3502
  %v3543 = vunpack.c.h.b16 %v3502
  %v3544 = vunpack.c.l.b16 %v3503
  %v3545 = vunpack.c.h.b16 %v3503
  %v3546 = vunpack.c.l.b16 %v3504
  %v3547 = vunpack.c.h.b16 %v3504
  %v3548 = vunpack.c.l.b16 %v3505
  %v3549 = vunpack.c.h.b16 %v3505
  %v3550 = vunpack.c.l.b16 %v3506
  %v3551 = vunpack.c.h.b16 %v3506
  %v3552 = vunpack.c.l.b16 %v3507
  %v3553 = vunpack.c.h.b16 %v3507
  %v3554 = vunpack.c.l.b16 %v3508
  %v3555 = vunpack.c.h.b16 %v3508
  %v3556 = vunpack.c.l.b16 %v3509
  %v3557 = vunpack.c.h.b16 %v3509
  %v3558 = vunpack.c.l.b16 %v3510
  %v3559 = vunpack.c.h.b16 %v3510
  %v3560 = vunpack.c.l.b16 %v3511
  %v3561 = vunpack.c.h.b16 %v3511
  %v3562 = vunpack.c.l.b16 %v3512
  %v3563 = vunpack.c.h.b16 %v3512
  %v3564 = vunpack.c.l.b16 %v3513
  %v3565 = vunpack.c.h.b16 %v3513
  %v3566 = vunpack.c.l.b16 %v3514
  %v3567 = vunpack.c.h.b16 %v3514
  %v3568 = vunpack.c.l.b16 %v3515
  %v3569 = vunpack.c.h.b16 %v3515
  %v3570 = vpack.c.b16 %v3540, %v3538
  %v3571 = vpack.c.b16 %v3541, %v3539
  %v3572 = vpack.c.b16 %v3544, %v3542
  %v3573 = vpack.c.b16 %v3545, %v3543
  %v3574 = vpack.c.b16 %v3548, %v3546
  %v3575 = vpack.c.b16 %v3549, %v3547
  %v3576 = vpack.c.b16 %v3552, %v3550
  %v3577 = vpack.c.b16 %v3553, %v3551
  %v3578 = vpack.c.b16 %v3556, %v3554
  %v3579 = vpack.c.b16 %v3557, %v3555
  %v3580 = vpack.c.b16 %v3560, %v3558
  %v3581 = vpack.c.b16 %v3561, %v3559
  %v3582 = vpack.c.b16 %v3564, %v3562
  %v3583 = vpack.c.b16 %v3565, %v3563
  %v3584 = vpack.c.b16 %v3568, %v3566
  %v3585 = vpack.c.b16 %v3569, %v3567
  %3602 = vmatpush.bf16.msra.mxu0 %v3584
  %3603 = vmatpush.bf16.msra.mxu0 %v3582
  %3604 = vmatpush.bf16.msra.mxu0 %v3580
  %3605 = vmatpush.bf16.msra.mxu0 %v3578
  %3606 = vmatpush.bf16.msra.mxu0 %v3576
  %3607 = vmatpush.bf16.msra.mxu0 %v3574
  %3608 = vmatpush.bf16.msra.mxu0 %v3572
  %3609 = vmatpush.bf16.msra.mxu0 %v3570
  %3610 = vmatmul.bf16.gmra.mxu0 %v3484
  %v3611 = vpop.f32.mrf.mxu0
  %v3612 = vadd.f32 %v3518, %v3611
  %v3613 = vpop.f32.mrf.mxu0
  %v3614 = vadd.f32 %v3518, %v3613
  %3615 = vmatmul.bf16.gmra.mxu0 %v3485
  %v3616 = vpop.f32.mrf.mxu0
  %v3617 = vadd.f32 %v3518, %v3616
  %v3618 = vpop.f32.mrf.mxu0
  %v3619 = vadd.f32 %v3518, %v3618
  %3620 = vmatmul.bf16.gmra.mxu0 %v3486
  %v3621 = vpop.f32.mrf.mxu0
  %v3622 = vadd.f32 %v3518, %v3621
  %v3623 = vpop.f32.mrf.mxu0
  %v3624 = vadd.f32 %v3518, %v3623
  %3625 = vmatmul.bf16.gmra.mxu0 %v3487
  %v3626 = vpop.f32.mrf.mxu0
  %v3627 = vadd.f32 %v3518, %v3626
  %v3628 = vpop.f32.mrf.mxu0
  %v3629 = vadd.f32 %v3518, %v3628
  %3630 = vmatmul.bf16.gmra.mxu0 %v3488
  %v3631 = vpop.f32.mrf.mxu0
  %v3632 = vadd.f32 %v3518, %v3631
  %v3633 = vpop.f32.mrf.mxu0
  %v3634 = vadd.f32 %v3518, %v3633
  %3635 = vmatmul.bf16.gmra.mxu0 %v3489
  %v3636 = vpop.f32.mrf.mxu0
  %v3637 = vadd.f32 %v3518, %v3636
  %v3638 = vpop.f32.mrf.mxu0
  %v3639 = vadd.f32 %v3518, %v3638
  %3640 = vmatmul.bf16.gmra.mxu0 %v3490
  %v3641 = vpop.f32.mrf.mxu0
  %v3642 = vadd.f32 %v3518, %v3641
  %v3643 = vpop.f32.mrf.mxu0
  %v3644 = vadd.f32 %v3518, %v3643
  %3645 = vmatmul.bf16.gmra.mxu0 %v3491
  %v3646 = vpop.f32.mrf.mxu0
  %v3647 = vadd.f32 %v3518, %v3646
  %v3648 = vpop.f32.mrf.mxu0
  %v3649 = vadd.f32 %v3518, %v3648
  %3650 = vmatmul.bf16.gmra.mxu0 %v3492
  %v3651 = vpop.f32.mrf.mxu0
  %v3652 = vadd.f32 %v3518, %v3651
  %v3653 = vpop.f32.mrf.mxu0
  %v3654 = vadd.f32 %v3518, %v3653
  %3655 = vmatmul.bf16.gmra.mxu0 %v3493
  %v3656 = vpop.f32.mrf.mxu0
  %v3657 = vadd.f32 %v3518, %v3656
  %v3658 = vpop.f32.mrf.mxu0
  %v3659 = vadd.f32 %v3518, %v3658
  %3660 = vmatmul.bf16.gmra.mxu0 %v3494
  %v3661 = vpop.f32.mrf.mxu0
  %v3662 = vadd.f32 %v3518, %v3661
  %v3663 = vpop.f32.mrf.mxu0
  %v3664 = vadd.f32 %v3518, %v3663
  %3665 = vmatmul.bf16.gmra.mxu0 %v3495
  %v3666 = vpop.f32.mrf.mxu0
  %v3667 = vadd.f32 %v3518, %v3666
  %v3668 = vpop.f32.mrf.mxu0
  %v3669 = vadd.f32 %v3518, %v3668
  %3670 = vmatmul.bf16.gmra.mxu0 %v3496
  %v3671 = vpop.f32.mrf.mxu0
  %v3672 = vadd.f32 %v3518, %v3671
  %v3673 = vpop.f32.mrf.mxu0
  %v3674 = vadd.f32 %v3518, %v3673
  %3675 = vmatmul.bf16.gmra.mxu0 %v3497
  %v3676 = vpop.f32.mrf.mxu0
  %v3677 = vadd.f32 %v3518, %v3676
  %v3678 = vpop.f32.mrf.mxu0
  %v3679 = vadd.f32 %v3518, %v3678
  %3680 = vmatmul.bf16.gmra.mxu0 %v3498
  %v3681 = vpop.f32.mrf.mxu0
  %v3682 = vadd.f32 %v3518, %v3681
  %v3683 = vpop.f32.mrf.mxu0
  %v3684 = vadd.f32 %v3518, %v3683
  %3685 = vmatmul.bf16.gmra.mxu0 %v3499
  %v3686 = vpop.f32.mrf.mxu0
  %v3687 = vadd.f32 %v3518, %v3686
  %v3688 = vpop.f32.mrf.mxu0
  %v3689 = vadd.f32 %v3518, %v3688
  %3690 = vdwg.mxu0
  %3691 = vmatpush.bf16.msra.mxu0 %v3585
  %3692 = vmatpush.bf16.msra.mxu0 %v3583
  %3693 = vmatpush.bf16.msra.mxu0 %v3581
  %3694 = vmatpush.bf16.msra.mxu0 %v3579
  %3695 = vmatpush.bf16.msra.mxu0 %v3577
  %3696 = vmatpush.bf16.msra.mxu0 %v3575
  %3697 = vmatpush.bf16.msra.mxu0 %v3573
  %3698 = vmatpush.bf16.msra.mxu0 %v3571
  %3699 = vmatmul.bf16.gmra.mxu0 %v3484
  %v3700 = vpop.f32.mrf.mxu0
  %v3701 = vadd.f32 %v3519, %v3700
  %v3702 = vpop.f32.mrf.mxu0
  %v3703 = vadd.f32 %v3519, %v3702
  %3704 = vmatmul.bf16.gmra.mxu0 %v3485
  %v3705 = vpop.f32.mrf.mxu0
  %v3706 = vadd.f32 %v3519, %v3705
  %v3707 = vpop.f32.mrf.mxu0
  %v3708 = vadd.f32 %v3519, %v3707
  %3709 = vmatmul.bf16.gmra.mxu0 %v3486
  %v3710 = vpop.f32.mrf.mxu0
  %v3711 = vadd.f32 %v3519, %v3710
  %v3712 = vpop.f32.mrf.mxu0
  %v3713 = vadd.f32 %v3519, %v3712
  %3714 = vmatmul.bf16.gmra.mxu0 %v3487
  %v3715 = vpop.f32.mrf.mxu0
  %v3716 = vadd.f32 %v3519, %v3715
  %v3717 = vpop.f32.mrf.mxu0
  %v3718 = vadd.f32 %v3519, %v3717
  %3719 = vmatmul.bf16.gmra.mxu0 %v3488
  %v3720 = vpop.f32.mrf.mxu0
  %v3721 = vadd.f32 %v3519, %v3720
  %v3722 = vpop.f32.mrf.mxu0
  %v3723 = vadd.f32 %v3519, %v3722
  %3724 = vmatmul.bf16.gmra.mxu0 %v3489
  %v3725 = vpop.f32.mrf.mxu0
  %v3726 = vadd.f32 %v3519, %v3725
  %v3727 = vpop.f32.mrf.mxu0
  %v3728 = vadd.f32 %v3519, %v3727
  %3729 = vmatmul.bf16.gmra.mxu0 %v3490
  %v3730 = vpop.f32.mrf.mxu0
  %v3731 = vadd.f32 %v3519, %v3730
  %v3732 = vpop.f32.mrf.mxu0
  %v3733 = vadd.f32 %v3519, %v3732
  %3734 = vmatmul.bf16.gmra.mxu0 %v3491
  %v3735 = vpop.f32.mrf.mxu0
  %v3736 = vadd.f32 %v3519, %v3735
  %v3737 = vpop.f32.mrf.mxu0
  %v3738 = vadd.f32 %v3519, %v3737
  %3739 = vmatmul.bf16.gmra.mxu0 %v3492
  %v3740 = vpop.f32.mrf.mxu0
  %v3741 = vadd.f32 %v3519, %v3740
  %v3742 = vpop.f32.mrf.mxu0
  %v3743 = vadd.f32 %v3519, %v3742
  %3744 = vmatmul.bf16.gmra.mxu0 %v3493
  %v3745 = vpop.f32.mrf.mxu0
  %v3746 = vadd.f32 %v3519, %v3745
  %v3747 = vpop.f32.mrf.mxu0
  %v3748 = vadd.f32 %v3519, %v3747
  %3749 = vmatmul.bf16.gmra.mxu0 %v3494
  %v3750 = vpop.f32.mrf.mxu0
  %v3751 = vadd.f32 %v3519, %v3750
  %v3752 = vpop.f32.mrf.mxu0
  %v3753 = vadd.f32 %v3519, %v3752
  %3754 = vmatmul.bf16.gmra.mxu0 %v3495
  %v3755 = vpop.f32.mrf.mxu0
  %v3756 = vadd.f32 %v3519, %v3755
  %v3757 = vpop.f32.mrf.mxu0
  %v3758 = vadd.f32 %v3519, %v3757
  %3759 = vmatmul.bf16.gmra.mxu0 %v3496
  %v3760 = vpop.f32.mrf.mxu0
  %v3761 = vadd.f32 %v3519, %v3760
  %v3762 = vpop.f32.mrf.mxu0
  %v3763 = vadd.f32 %v3519, %v3762
  %3764 = vmatmul.bf16.gmra.mxu0 %v3497
  %v3765 = vpop.f32.mrf.mxu0
  %v3766 = vadd.f32 %v3519, %v3765
  %v3767 = vpop.f32.mrf.mxu0
  %v3768 = vadd.f32 %v3519, %v3767
  %3769 = vmatmul.bf16.gmra.mxu0 %v3498
  %v3770 = vpop.f32.mrf.mxu0
  %v3771 = vadd.f32 %v3519, %v3770
  %v3772 = vpop.f32.mrf.mxu0
  %v3773 = vadd.f32 %v3519, %v3772
  %3774 = vmatmul.bf16.gmra.mxu0 %v3499
  %v3775 = vpop.f32.mrf.mxu0
  %v3776 = vadd.f32 %v3519, %v3775
  %v3777 = vpop.f32.mrf.mxu0
  %v3778 = vadd.f32 %v3519, %v3777
  %3779 = vdwg.mxu0
  %v3780 = vmax.f32 %v3612, 0.0
  %v3781 = vmax.f32 %v3701, 0.0
  %v3782 = vmax.f32 %v3614, 0.0
  %v3783 = vmax.f32 %v3703, 0.0
  %v3784 = vmax.f32 %v3617, 0.0
  %v3785 = vmax.f32 %v3706, 0.0
  %v3786 = vmax.f32 %v3619, 0.0
  %v3787 = vmax.f32 %v3708, 0.0
  %v3788 = vmax.f32 %v3622, 0.0
  %v3789 = vmax.f32 %v3711, 0.0
  %v3790 = vmax.f32 %v3624, 0.0
  %v3791 = vmax.f32 %v3713, 0.0
  %v3792 = vmax.f32 %v3627, 0.0
  %v3793 = vmax.f32 %v3716, 0.0
  %v3794 = vmax.f32 %v3629, 0.0
  %v3795 = vmax.f32 %v3718, 0.0
  %v3796 = vmax.f32 %v3632, 0.0
  %v3797 = vmax.f32 %v3721, 0.0
  %v3798 = vmax.f32 %v3634, 0.0
  %v3799 = vmax.f32 %v3723, 0.0
  %v3800 = vmax.f32 %v3637, 0.0
  %v3801 = vmax.f32 %v3726, 0.0
  %v3802 = vmax.f32 %v3639, 0.0
  %v3803 = vmax.f32 %v3728, 0.0
  %v3804 = vmax.f32 %v3642, 0.0
  %v3805 = vmax.f32 %v3731, 0.0
  %v3806 = vmax.f32 %v3644, 0.0
  %v3807 = vmax.f32 %v3733, 0.0
  %v3808 = vmax.f32 %v3647, 0.0
  %v3809 = vmax.f32 %v3736, 0.0
  %v3810 = vmax.f32 %v3649, 0.0
  %v3811 = vmax.f32 %v3738, 0.0
  %v3812 = vmax.f32 %v3652, 0.0
  %v3813 = vmax.f32 %v3741, 0.0
  %v3814 = vmax.f32 %v3654, 0.0
  %v3815 = vmax.f32 %v3743, 0.0
  %v3816 = vmax.f32 %v3657, 0.0
  %v3817 = vmax.f32 %v3746, 0.0
  %v3818 = vmax.f32 %v3659, 0.0
  %v3819 = vmax.f32 %v3748, 0.0
  %v3820 = vmax.f32 %v3662, 0.0
  %v3821 = vmax.f32 %v3751, 0.0
  %v3822 = vmax.f32 %v3664, 0.0
  %v3823 = vmax.f32 %v3753, 0.0
  %v3824 = vmax.f32 %v3667, 0.0
  %v3825 = vmax.f32 %v3756, 0.0
  %v3826 = vmax.f32 %v3669, 0.0
  %v3827 = vmax.f32 %v3758, 0.0
  %v3828 = vmax.f32 %v3672, 0.0
  %v3829 = vmax.f32 %v3761, 0.0
  %v3830 = vmax.f32 %v3674, 0.0
  %v3831 = vmax.f32 %v3763, 0.0
  %v3832 = vmax.f32 %v3677, 0.0
  %v3833 = vmax.f32 %v3766, 0.0
  %v3834 = vmax.f32 %v3679, 0.0
  %v3835 = vmax.f32 %v3768, 0.0
  %v3836 = vmax.f32 %v3682, 0.0
  %v3837 = vmax.f32 %v3771, 0.0
  %v3838 = vmax.f32 %v3684, 0.0
  %v3839 = vmax.f32 %v3773, 0.0
  %v3840 = vmax.f32 %v3687, 0.0
  %v3841 = vmax.f32 %v3776, 0.0
  %v3842 = vmax.f32 %v3689, 0.0
  %v3843 = vmax.f32 %v3778, 0.0
  %v3844 = vpack.c.bf16 %v3782, %v3780
  %v3845 = vpack.c.bf16 %v3783, %v3781
  %v3846 = vpack.c.bf16 %v3786, %v3784
  %v3847 = vpack.c.bf16 %v3787, %v3785
  %v3848 = vpack.c.bf16 %v3790, %v3788
  %v3849 = vpack.c.bf16 %v3791, %v3789
  %v3850 = vpack.c.bf16 %v3794, %v3792
  %v3851 = vpack.c.bf16 %v3795, %v3793
  %v3852 = vpack.c.bf16 %v3798, %v3796
  %v3853 = vpack.c.bf16 %v3799, %v3797
  %v3854 = vpack.c.bf16 %v3802, %v3800
  %v3855 = vpack.c.bf16 %v3803, %v3801
  %v3856 = vpack.c.bf16 %v3806, %v3804
  %v3857 = vpack.c.bf16 %v3807, %v3805
  %v3858 = vpack.c.bf16 %v3810, %v3808
  %v3859 = vpack.c.bf16 %v3811, %v3809
  %v3860 = vpack.c.bf16 %v3814, %v3812
  %v3861 = vpack.c.bf16 %v3815, %v3813
  %v3862 = vpack.c.bf16 %v3818, %v3816
  %v3863 = vpack.c.bf16 %v3819, %v3817
  %v3864 = vpack.c.bf16 %v3822, %v3820
  %v3865 = vpack.c.bf16 %v3823, %v3821
  %v3866 = vpack.c.bf16 %v3826, %v3824
  %v3867 = vpack.c.bf16 %v3827, %v3825
  %v3868 = vpack.c.bf16 %v3830, %v3828
  %v3869 = vpack.c.bf16 %v3831, %v3829
  %v3870 = vpack.c.bf16 %v3834, %v3832
  %v3871 = vpack.c.bf16 %v3835, %v3833
  %v3872 = vpack.c.bf16 %v3838, %v3836
  %v3873 = vpack.c.bf16 %v3839, %v3837
  %v3874 = vpack.c.bf16 %v3842, %v3840
  %v3875 = vpack.c.bf16 %v3843, %v3841
  %v3876 = vld [vmem:[%s10] sm:$0xf]
  %v3877 = vld [vmem:[%s10 + $0x4] sm:$0xf]
  %v3878 = vld [vmem:[%s10 + $0x8] sm:$0xf]
  %v3879 = vld [vmem:[%s10 + $0xc] sm:$0xf]
  %v3880 = vld [vmem:[%s10 + $0x10] sm:$0xf]
  %v3881 = vld [vmem:[%s10 + $0x14] sm:$0xf]
  %v3882 = vld [vmem:[%s10 + $0x18] sm:$0xf]
  %v3883 = vld [vmem:[%s10 + $0x1c] sm:$0xf]
  %v3884 = vld [vmem:[%s10 + $0x20] sm:$0xf]
  %v3885 = vld [vmem:[%s10 + $0x24] sm:$0xf]
  %v3886 = vld [vmem:[%s10 + $0x28] sm:$0xf]
  %v3887 = vld [vmem:[%s10 + $0x2c] sm:$0xf]
  %v3888 = vld [vmem:[%s10 + $0x30] sm:$0xf]
  %v3889 = vld [vmem:[%s10 + $0x34] sm:$0xf]
  %v3890 = vld [vmem:[%s10 + $0x38] sm:$0xf]
  %v3891 = vld [vmem:[%s10 + $0x3c] sm:$0xf]
  %v3892 = vld [vmem:[%s10 + $0x40] sm:$0xf]
  %v3893 = vld [vmem:[%s10 + $0x44] sm:$0xf]
  %v3894 = vld [vmem:[%s10 + $0x48] sm:$0xf]
  %v3895 = vld [vmem:[%s10 + $0x4c] sm:$0xf]
  %v3896 = vld [vmem:[%s10 + $0x50] sm:$0xf]
  %v3897 = vld [vmem:[%s10 + $0x54] sm:$0xf]
  %v3898 = vld [vmem:[%s10 + $0x58] sm:$0xf]
  %v3899 = vld [vmem:[%s10 + $0x5c] sm:$0xf]
  %v3900 = vld [vmem:[%s10 + $0x60] sm:$0xf]
  %v3901 = vld [vmem:[%s10 + $0x64] sm:$0xf]
  %v3902 = vld [vmem:[%s10 + $0x68] sm:$0xf]
  %v3903 = vld [vmem:[%s10 + $0x6c] sm:$0xf]
  %v3904 = vld [vmem:[%s10 + $0x70] sm:$0xf]
  %v3905 = vld [vmem:[%s10 + $0x74] sm:$0xf]
  %v3906 = vld [vmem:[%s10 + $0x78] sm:$0xf]
  %v3907 = vld [vmem:[%s10 + $0x7c] sm:$0xf]
  %v3908 = vld [vmem:[%s11] sm:$0x1]
  %v3910 = vperm.slane %v3908, 0
  %v3944 = vunpack.c.l.b16 %v3876
  %v3945 = vunpack.c.l.b16 %v3877
  %v3946 = vunpack.c.l.b16 %v3878
  %v3947 = vunpack.c.l.b16 %v3879
  %v3948 = vunpack.c.l.b16 %v3880
  %v3949 = vunpack.c.l.b16 %v3881
  %v3950 = vunpack.c.l.b16 %v3882
  %v3951 = vunpack.c.l.b16 %v3883
  %v3952 = vunpack.c.l.b16 %v3884
  %v3953 = vunpack.c.l.b16 %v3885
  %v3954 = vunpack.c.l.b16 %v3886
  %v3955 = vunpack.c.l.b16 %v3887
  %v3956 = vunpack.c.l.b16 %v3888
  %v3957 = vunpack.c.l.b16 %v3889
  %v3958 = vunpack.c.l.b16 %v3890
  %v3959 = vunpack.c.l.b16 %v3891
  %v3960 = vunpack.c.l.b16 %v3892
  %v3961 = vunpack.c.l.b16 %v3893
  %v3962 = vunpack.c.l.b16 %v3894
  %v3963 = vunpack.c.l.b16 %v3895
  %v3964 = vunpack.c.l.b16 %v3896
  %v3965 = vunpack.c.l.b16 %v3897
  %v3966 = vunpack.c.l.b16 %v3898
  %v3967 = vunpack.c.l.b16 %v3899
  %v3968 = vunpack.c.l.b16 %v3900
  %v3969 = vunpack.c.l.b16 %v3901
  %v3970 = vunpack.c.l.b16 %v3902
  %v3971 = vunpack.c.l.b16 %v3903
  %v3972 = vunpack.c.l.b16 %v3904
  %v3973 = vunpack.c.l.b16 %v3905
  %v3974 = vunpack.c.l.b16 %v3906
  %v3975 = vunpack.c.l.b16 %v3907
  %v3976 = vpack.c.b16 %v3945, %v3944
  %v3977 = vpack.c.b16 %v3947, %v3946
  %v3978 = vpack.c.b16 %v3949, %v3948
  %v3979 = vpack.c.b16 %v3951, %v3950
  %v3980 = vpack.c.b16 %v3953, %v3952
  %v3981 = vpack.c.b16 %v3955, %v3954
  %v3982 = vpack.c.b16 %v3957, %v3956
  %v3983 = vpack.c.b16 %v3959, %v3958
  %v3984 = vpack.c.b16 %v3961, %v3960
  %v3985 = vpack.c.b16 %v3963, %v3962
  %v3986 = vpack.c.b16 %v3965, %v3964
  %v3987 = vpack.c.b16 %v3967, %v3966
  %v3988 = vpack.c.b16 %v3969, %v3968
  %v3989 = vpack.c.b16 %v3971, %v3970
  %v3990 = vpack.c.b16 %v3973, %v3972
  %v3991 = vpack.c.b16 %v3975, %v3974
  %4008 = vmatpush.bf16.msra.mxu0 %v3983
  %4009 = vmatpush.bf16.msra.mxu0 %v3982
  %4010 = vmatpush.bf16.msra.mxu0 %v3981
  %4011 = vmatpush.bf16.msra.mxu0 %v3980
  %4012 = vmatpush.bf16.msra.mxu0 %v3979
  %4013 = vmatpush.bf16.msra.mxu0 %v3978
  %4014 = vmatpush.bf16.msra.mxu0 %v3977
  %4015 = vmatpush.bf16.msra.mxu0 %v3976
  %4016 = vmatmul.bf16.gmra.mxu0 %v3844
  %v4017 = vpop.f32.mrf.mxu0
  %v4018 = vadd.f32 %v3910, %v4017
  %v4019 = vpop.f32.mrf.mxu0
  %v4020 = vadd.f32 %v3910, %v4019
  %4021 = vmatmul.bf16.gmra.mxu0 %v3846
  %v4022 = vpop.f32.mrf.mxu0
  %v4023 = vadd.f32 %v3910, %v4022
  %v4024 = vpop.f32.mrf.mxu0
  %v4025 = vadd.f32 %v3910, %v4024
  %4026 = vmatmul.bf16.gmra.mxu0 %v3848
  %v4027 = vpop.f32.mrf.mxu0
  %v4028 = vadd.f32 %v3910, %v4027
  %v4029 = vpop.f32.mrf.mxu0
  %v4030 = vadd.f32 %v3910, %v4029
  %4031 = vmatmul.bf16.gmra.mxu0 %v3850
  %v4032 = vpop.f32.mrf.mxu0
  %v4033 = vadd.f32 %v3910, %v4032
  %v4034 = vpop.f32.mrf.mxu0
  %v4035 = vadd.f32 %v3910, %v4034
  %4036 = vmatmul.bf16.gmra.mxu0 %v3852
  %v4037 = vpop.f32.mrf.mxu0
  %v4038 = vadd.f32 %v3910, %v4037
  %v4039 = vpop.f32.mrf.mxu0
  %v4040 = vadd.f32 %v3910, %v4039
  %4041 = vmatmul.bf16.gmra.mxu0 %v3854
  %v4042 = vpop.f32.mrf.mxu0
  %v4043 = vadd.f32 %v3910, %v4042
  %v4044 = vpop.f32.mrf.mxu0
  %v4045 = vadd.f32 %v3910, %v4044
  %4046 = vmatmul.bf16.gmra.mxu0 %v3856
  %v4047 = vpop.f32.mrf.mxu0
  %v4048 = vadd.f32 %v3910, %v4047
  %v4049 = vpop.f32.mrf.mxu0
  %v4050 = vadd.f32 %v3910, %v4049
  %4051 = vmatmul.bf16.gmra.mxu0 %v3858
  %v4052 = vpop.f32.mrf.mxu0
  %v4053 = vadd.f32 %v3910, %v4052
  %v4054 = vpop.f32.mrf.mxu0
  %v4055 = vadd.f32 %v3910, %v4054
  %4056 = vmatmul.bf16.gmra.mxu0 %v3860
  %v4057 = vpop.f32.mrf.mxu0
  %v4058 = vadd.f32 %v3910, %v4057
  %v4059 = vpop.f32.mrf.mxu0
  %v4060 = vadd.f32 %v3910, %v4059
  %4061 = vmatmul.bf16.gmra.mxu0 %v3862
  %v4062 = vpop.f32.mrf.mxu0
  %v4063 = vadd.f32 %v3910, %v4062
  %v4064 = vpop.f32.mrf.mxu0
  %v4065 = vadd.f32 %v3910, %v4064
  %4066 = vmatmul.bf16.gmra.mxu0 %v3864
  %v4067 = vpop.f32.mrf.mxu0
  %v4068 = vadd.f32 %v3910, %v4067
  %v4069 = vpop.f32.mrf.mxu0
  %v4070 = vadd.f32 %v3910, %v4069
  %4071 = vmatmul.bf16.gmra.mxu0 %v3866
  %v4072 = vpop.f32.mrf.mxu0
  %v4073 = vadd.f32 %v3910, %v4072
  %v4074 = vpop.f32.mrf.mxu0
  %v4075 = vadd.f32 %v3910, %v4074
  %4076 = vmatmul.bf16.gmra.mxu0 %v3868
  %v4077 = vpop.f32.mrf.mxu0
  %v4078 = vadd.f32 %v3910, %v4077
  %v4079 = vpop.f32.mrf.mxu0
  %v4080 = vadd.f32 %v3910, %v4079
  %4081 = vmatmul.bf16.gmra.mxu0 %v3870
  %v4082 = vpop.f32.mrf.mxu0
  %v4083 = vadd.f32 %v3910, %v4082
  %v4084 = vpop.f32.mrf.mxu0
  %v4085 = vadd.f32 %v3910, %v4084
  %4086 = vmatmul.bf16.gmra.mxu0 %v3872
  %v4087 = vpop.f32.mrf.mxu0
  %v4088 = vadd.f32 %v3910, %v4087
  %v4089 = vpop.f32.mrf.mxu0
  %v4090 = vadd.f32 %v3910, %v4089
  %4091 = vmatmul.bf16.gmra.mxu0 %v3874
  %v4092 = vpop.f32.mrf.mxu0
  %v4093 = vadd.f32 %v3910, %v4092
  %v4094 = vpop.f32.mrf.mxu0
  %v4095 = vadd.f32 %v3910, %v4094
  %4096 = vdwg.mxu0
  %4097 = vmatpush.bf16.msra.mxu0 %v3991
  %4098 = vmatpush.bf16.msra.mxu0 %v3990
  %4099 = vmatpush.bf16.msra.mxu0 %v3989
  %4100 = vmatpush.bf16.msra.mxu0 %v3988
  %4101 = vmatpush.bf16.msra.mxu0 %v3987
  %4102 = vmatpush.bf16.msra.mxu0 %v3986
  %4103 = vmatpush.bf16.msra.mxu0 %v3985
  %4104 = vmatpush.bf16.msra.mxu0 %v3984
  %4105 = vmatmul.bf16.gmra.mxu0 %v3845
  %v4106 = vpop.f32.mrf.mxu0
  %v4107 = vadd.f32 %v4018, %v4106
  %v4108 = vpop.f32.mrf.mxu0
  %v4109 = vadd.f32 %v4020, %v4108
  %4110 = vmatmul.bf16.gmra.mxu0 %v3847
  %v4111 = vpop.f32.mrf.mxu0
  %v4112 = vadd.f32 %v4023, %v4111
  %v4113 = vpop.f32.mrf.mxu0
  %v4114 = vadd.f32 %v4025, %v4113
  %4115 = vmatmul.bf16.gmra.mxu0 %v3849
  %v4116 = vpop.f32.mrf.mxu0
  %v4117 = vadd.f32 %v4028, %v4116
  %v4118 = vpop.f32.mrf.mxu0
  %v4119 = vadd.f32 %v4030, %v4118
  %4120 = vmatmul.bf16.gmra.mxu0 %v3851
  %v4121 = vpop.f32.mrf.mxu0
  %v4122 = vadd.f32 %v4033, %v4121
  %v4123 = vpop.f32.mrf.mxu0
  %v4124 = vadd.f32 %v4035, %v4123
  %4125 = vmatmul.bf16.gmra.mxu0 %v3853
  %v4126 = vpop.f32.mrf.mxu0
  %v4127 = vadd.f32 %v4038, %v4126
  %v4128 = vpop.f32.mrf.mxu0
  %v4129 = vadd.f32 %v4040, %v4128
  %4130 = vmatmul.bf16.gmra.mxu0 %v3855
  %v4131 = vpop.f32.mrf.mxu0
  %v4132 = vadd.f32 %v4043, %v4131
  %v4133 = vpop.f32.mrf.mxu0
  %v4134 = vadd.f32 %v4045, %v4133
  %4135 = vmatmul.bf16.gmra.mxu0 %v3857
  %v4136 = vpop.f32.mrf.mxu0
  %v4137 = vadd.f32 %v4048, %v4136
  %v4138 = vpop.f32.mrf.mxu0
  %v4139 = vadd.f32 %v4050, %v4138
  %4140 = vmatmul.bf16.gmra.mxu0 %v3859
  %v4141 = vpop.f32.mrf.mxu0
  %v4142 = vadd.f32 %v4053, %v4141
  %v4143 = vpop.f32.mrf.mxu0
  %v4144 = vadd.f32 %v4055, %v4143
  %4145 = vmatmul.bf16.gmra.mxu0 %v3861
  %v4146 = vpop.f32.mrf.mxu0
  %v4147 = vadd.f32 %v4058, %v4146
  %v4148 = vpop.f32.mrf.mxu0
  %v4149 = vadd.f32 %v4060, %v4148
  %4150 = vmatmul.bf16.gmra.mxu0 %v3863
  %v4151 = vpop.f32.mrf.mxu0
  %v4152 = vadd.f32 %v4063, %v4151
  %v4153 = vpop.f32.mrf.mxu0
  %v4154 = vadd.f32 %v4065, %v4153
  %4155 = vmatmul.bf16.gmra.mxu0 %v3865
  %v4156 = vpop.f32.mrf.mxu0
  %v4157 = vadd.f32 %v4068, %v4156
  %v4158 = vpop.f32.mrf.mxu0
  %v4159 = vadd.f32 %v4070, %v4158
  %4160 = vmatmul.bf16.gmra.mxu0 %v3867
  %v4161 = vpop.f32.mrf.mxu0
  %v4162 = vadd.f32 %v4073, %v4161
  %v4163 = vpop.f32.mrf.mxu0
  %v4164 = vadd.f32 %v4075, %v4163
  %4165 = vmatmul.bf16.gmra.mxu0 %v3869
  %v4166 = vpop.f32.mrf.mxu0
  %v4167 = vadd.f32 %v4078, %v4166
  %v4168 = vpop.f32.mrf.mxu0
  %v4169 = vadd.f32 %v4080, %v4168
  %4170 = vmatmul.bf16.gmra.mxu0 %v3871
  %v4171 = vpop.f32.mrf.mxu0
  %v4172 = vadd.f32 %v4083, %v4171
  %v4173 = vpop.f32.mrf.mxu0
  %v4174 = vadd.f32 %v4085, %v4173
  %4175 = vmatmul.bf16.gmra.mxu0 %v3873
  %v4176 = vpop.f32.mrf.mxu0
  %v4177 = vadd.f32 %v4088, %v4176
  %v4178 = vpop.f32.mrf.mxu0
  %v4179 = vadd.f32 %v4090, %v4178
  %4180 = vmatmul.bf16.gmra.mxu0 %v3875
  %v4181 = vpop.f32.mrf.mxu0
  %v4182 = vadd.f32 %v4093, %v4181
  %v4183 = vpop.f32.mrf.mxu0
  %v4184 = vadd.f32 %v4095, %v4183
  %4185 = vdwg.mxu0
  %v4186 = vadd.f32 %v3452, %v4107
  %v4187 = vadd.f32 %v3453, %v4109
  %v4188 = vadd.f32 %v3454, %v4112
  %v4189 = vadd.f32 %v3455, %v4114
  %v4190 = vadd.f32 %v3456, %v4117
  %v4191 = vadd.f32 %v3457, %v4119
  %v4192 = vadd.f32 %v3458, %v4122
  %v4193 = vadd.f32 %v3459, %v4124
  %v4194 = vadd.f32 %v3460, %v4127
  %v4195 = vadd.f32 %v3461, %v4129
  %v4196 = vadd.f32 %v3462, %v4132
  %v4197 = vadd.f32 %v3463, %v4134
  %v4198 = vadd.f32 %v3464, %v4137
  %v4199 = vadd.f32 %v3465, %v4139
  %v4200 = vadd.f32 %v3466, %v4142
  %v4201 = vadd.f32 %v3467, %v4144
  %v4202 = vadd.f32 %v3468, %v4147
  %v4203 = vadd.f32 %v3469, %v4149
  %v4204 = vadd.f32 %v3470, %v4152
  %v4205 = vadd.f32 %v3471, %v4154
  %v4206 = vadd.f32 %v3472, %v4157
  %v4207 = vadd.f32 %v3473, %v4159
  %v4208 = vadd.f32 %v3474, %v4162
  %v4209 = vadd.f32 %v3475, %v4164
  %v4210 = vadd.f32 %v3476, %v4167
  %v4211 = vadd.f32 %v3477, %v4169
  %v4212 = vadd.f32 %v3478, %v4172
  %v4213 = vadd.f32 %v3479, %v4174
  %v4214 = vadd.f32 %v3480, %v4177
  %v4215 = vadd.f32 %v3481, %v4179
  %v4216 = vadd.f32 %v3482, %v4182
  %v4217 = vadd.f32 %v3483, %v4184
  %4218 = vadd.xlane.f32.xlu0 %v4186
  %v4219 = vpop.xlane.xlu0 %4218
  %4220 = vadd.xlane.f32.xlu0 %v4187
  %v4221 = vpop.xlane.xlu0 %4220
  %4222 = vadd.xlane.f32.xlu0 %v4188
  %v4223 = vpop.xlane.xlu0 %4222
  %4224 = vadd.xlane.f32.xlu0 %v4189
  %v4225 = vpop.xlane.xlu0 %4224
  %4226 = vadd.xlane.f32.xlu0 %v4190
  %v4227 = vpop.xlane.xlu0 %4226
  %4228 = vadd.xlane.f32.xlu0 %v4191
  %v4229 = vpop.xlane.xlu0 %4228
  %4230 = vadd.xlane.f32.xlu0 %v4192
  %v4231 = vpop.xlane.xlu0 %4230
  %4232 = vadd.xlane.f32.xlu0 %v4193
  %v4233 = vpop.xlane.xlu0 %4232
  %4234 = vadd.xlane.f32.xlu0 %v4194
  %v4235 = vpop.xlane.xlu0 %4234
  %4236 = vadd.xlane.f32.xlu0 %v4195
  %v4237 = vpop.xlane.xlu0 %4236
  %4238 = vadd.xlane.f32.xlu0 %v4196
  %v4239 = vpop.xlane.xlu0 %4238
  %4240 = vadd.xlane.f32.xlu0 %v4197
  %v4241 = vpop.xlane.xlu0 %4240
  %4242 = vadd.xlane.f32.xlu0 %v4198
  %v4243 = vpop.xlane.xlu0 %4242
  %4244 = vadd.xlane.f32.xlu0 %v4199
  %v4245 = vpop.xlane.xlu0 %4244
  %4246 = vadd.xlane.f32.xlu0 %v4200
  %v4247 = vpop.xlane.xlu0 %4246
  %4248 = vadd.xlane.f32.xlu0 %v4201
  %v4249 = vpop.xlane.xlu0 %4248
  %4250 = vadd.xlane.f32.xlu0 %v4202
  %v4251 = vpop.xlane.xlu0 %4250
  %4252 = vadd.xlane.f32.xlu0 %v4203
  %v4253 = vpop.xlane.xlu0 %4252
  %4254 = vadd.xlane.f32.xlu0 %v4204
  %v4255 = vpop.xlane.xlu0 %4254
  %4256 = vadd.xlane.f32.xlu0 %v4205
  %v4257 = vpop.xlane.xlu0 %4256
  %4258 = vadd.xlane.f32.xlu0 %v4206
  %v4259 = vpop.xlane.xlu0 %4258
  %4260 = vadd.xlane.f32.xlu0 %v4207
  %v4261 = vpop.xlane.xlu0 %4260
  %4262 = vadd.xlane.f32.xlu0 %v4208
  %v4263 = vpop.xlane.xlu0 %4262
  %4264 = vadd.xlane.f32.xlu0 %v4209
  %v4265 = vpop.xlane.xlu0 %4264
  %4266 = vadd.xlane.f32.xlu0 %v4210
  %v4267 = vpop.xlane.xlu0 %4266
  %4268 = vadd.xlane.f32.xlu0 %v4211
  %v4269 = vpop.xlane.xlu0 %4268
  %4270 = vadd.xlane.f32.xlu0 %v4212
  %v4271 = vpop.xlane.xlu0 %4270
  %4272 = vadd.xlane.f32.xlu0 %v4213
  %v4273 = vpop.xlane.xlu0 %4272
  %4274 = vadd.xlane.f32.xlu0 %v4214
  %v4275 = vpop.xlane.xlu0 %4274
  %4276 = vadd.xlane.f32.xlu0 %v4215
  %v4277 = vpop.xlane.xlu0 %4276
  %4278 = vadd.xlane.f32.xlu0 %v4216
  %v4279 = vpop.xlane.xlu0 %4278
  %4280 = vadd.xlane.f32.xlu0 %v4217
  %v4281 = vpop.xlane.xlu0 %4280
  %v4282 = vmul.f32 %v4219, %v2835
  %v4283 = vmul.f32 %v4221, %v2835
  %v4284 = vmul.f32 %v4223, %v2835
  %v4285 = vmul.f32 %v4225, %v2835
  %v4286 = vmul.f32 %v4227, %v2835
  %v4287 = vmul.f32 %v4229, %v2835
  %v4288 = vmul.f32 %v4231, %v2835
  %v4289 = vmul.f32 %v4233, %v2835
  %v4290 = vmul.f32 %v4235, %v2835
  %v4291 = vmul.f32 %v4237, %v2835
  %v4292 = vmul.f32 %v4239, %v2835
  %v4293 = vmul.f32 %v4241, %v2835
  %v4294 = vmul.f32 %v4243, %v2835
  %v4295 = vmul.f32 %v4245, %v2835
  %v4296 = vmul.f32 %v4247, %v2835
  %v4297 = vmul.f32 %v4249, %v2835
  %v4298 = vmul.f32 %v4251, %v2835
  %v4299 = vmul.f32 %v4253, %v2835
  %v4300 = vmul.f32 %v4255, %v2835
  %v4301 = vmul.f32 %v4257, %v2835
  %v4302 = vmul.f32 %v4259, %v2835
  %v4303 = vmul.f32 %v4261, %v2835
  %v4304 = vmul.f32 %v4263, %v2835
  %v4305 = vmul.f32 %v4265, %v2835
  %v4306 = vmul.f32 %v4267, %v2835
  %v4307 = vmul.f32 %v4269, %v2835
  %v4308 = vmul.f32 %v4271, %v2835
  %v4309 = vmul.f32 %v4273, %v2835
  %v4310 = vmul.f32 %v4275, %v2835
  %v4311 = vmul.f32 %v4277, %v2835
  %v4312 = vmul.f32 %v4279, %v2835
  %v4313 = vmul.f32 %v4281, %v2835
  %v4314 = vsub.f32 %v4186, %v4282
  %v4315 = vsub.f32 %v4187, %v4283
  %v4316 = vsub.f32 %v4188, %v4284
  %v4317 = vsub.f32 %v4189, %v4285
  %v4318 = vsub.f32 %v4190, %v4286
  %v4319 = vsub.f32 %v4191, %v4287
  %v4320 = vsub.f32 %v4192, %v4288
  %v4321 = vsub.f32 %v4193, %v4289
  %v4322 = vsub.f32 %v4194, %v4290
  %v4323 = vsub.f32 %v4195, %v4291
  %v4324 = vsub.f32 %v4196, %v4292
  %v4325 = vsub.f32 %v4197, %v4293
  %v4326 = vsub.f32 %v4198, %v4294
  %v4327 = vsub.f32 %v4199, %v4295
  %v4328 = vsub.f32 %v4200, %v4296
  %v4329 = vsub.f32 %v4201, %v4297
  %v4330 = vsub.f32 %v4202, %v4298
  %v4331 = vsub.f32 %v4203, %v4299
  %v4332 = vsub.f32 %v4204, %v4300
  %v4333 = vsub.f32 %v4205, %v4301
  %v4334 = vsub.f32 %v4206, %v4302
  %v4335 = vsub.f32 %v4207, %v4303
  %v4336 = vsub.f32 %v4208, %v4304
  %v4337 = vsub.f32 %v4209, %v4305
  %v4338 = vsub.f32 %v4210, %v4306
  %v4339 = vsub.f32 %v4211, %v4307
  %v4340 = vsub.f32 %v4212, %v4308
  %v4341 = vsub.f32 %v4213, %v4309
  %v4342 = vsub.f32 %v4214, %v4310
  %v4343 = vsub.f32 %v4215, %v4311
  %v4344 = vsub.f32 %v4216, %v4312
  %v4345 = vsub.f32 %v4217, %v4313
  %v4346 = vmul.f32 %v4314, %v4314
  %v4347 = vmul.f32 %v4315, %v4315
  %v4348 = vmul.f32 %v4316, %v4316
  %v4349 = vmul.f32 %v4317, %v4317
  %v4350 = vmul.f32 %v4318, %v4318
  %v4351 = vmul.f32 %v4319, %v4319
  %v4352 = vmul.f32 %v4320, %v4320
  %v4353 = vmul.f32 %v4321, %v4321
  %v4354 = vmul.f32 %v4322, %v4322
  %v4355 = vmul.f32 %v4323, %v4323
  %v4356 = vmul.f32 %v4324, %v4324
  %v4357 = vmul.f32 %v4325, %v4325
  %v4358 = vmul.f32 %v4326, %v4326
  %v4359 = vmul.f32 %v4327, %v4327
  %v4360 = vmul.f32 %v4328, %v4328
  %v4361 = vmul.f32 %v4329, %v4329
  %v4362 = vmul.f32 %v4330, %v4330
  %v4363 = vmul.f32 %v4331, %v4331
  %v4364 = vmul.f32 %v4332, %v4332
  %v4365 = vmul.f32 %v4333, %v4333
  %v4366 = vmul.f32 %v4334, %v4334
  %v4367 = vmul.f32 %v4335, %v4335
  %v4368 = vmul.f32 %v4336, %v4336
  %v4369 = vmul.f32 %v4337, %v4337
  %v4370 = vmul.f32 %v4338, %v4338
  %v4371 = vmul.f32 %v4339, %v4339
  %v4372 = vmul.f32 %v4340, %v4340
  %v4373 = vmul.f32 %v4341, %v4341
  %v4374 = vmul.f32 %v4342, %v4342
  %v4375 = vmul.f32 %v4343, %v4343
  %v4376 = vmul.f32 %v4344, %v4344
  %v4377 = vmul.f32 %v4345, %v4345
  %4378 = vadd.xlane.f32.xlu0 %v4346
  %v4379 = vpop.xlane.xlu0 %4378
  %4380 = vadd.xlane.f32.xlu0 %v4347
  %v4381 = vpop.xlane.xlu0 %4380
  %4382 = vadd.xlane.f32.xlu0 %v4348
  %v4383 = vpop.xlane.xlu0 %4382
  %4384 = vadd.xlane.f32.xlu0 %v4349
  %v4385 = vpop.xlane.xlu0 %4384
  %4386 = vadd.xlane.f32.xlu0 %v4350
  %v4387 = vpop.xlane.xlu0 %4386
  %4388 = vadd.xlane.f32.xlu0 %v4351
  %v4389 = vpop.xlane.xlu0 %4388
  %4390 = vadd.xlane.f32.xlu0 %v4352
  %v4391 = vpop.xlane.xlu0 %4390
  %4392 = vadd.xlane.f32.xlu0 %v4353
  %v4393 = vpop.xlane.xlu0 %4392
  %4394 = vadd.xlane.f32.xlu0 %v4354
  %v4395 = vpop.xlane.xlu0 %4394
  %4396 = vadd.xlane.f32.xlu0 %v4355
  %v4397 = vpop.xlane.xlu0 %4396
  %4398 = vadd.xlane.f32.xlu0 %v4356
  %v4399 = vpop.xlane.xlu0 %4398
  %4400 = vadd.xlane.f32.xlu0 %v4357
  %v4401 = vpop.xlane.xlu0 %4400
  %4402 = vadd.xlane.f32.xlu0 %v4358
  %v4403 = vpop.xlane.xlu0 %4402
  %4404 = vadd.xlane.f32.xlu0 %v4359
  %v4405 = vpop.xlane.xlu0 %4404
  %4406 = vadd.xlane.f32.xlu0 %v4360
  %v4407 = vpop.xlane.xlu0 %4406
  %4408 = vadd.xlane.f32.xlu0 %v4361
  %v4409 = vpop.xlane.xlu0 %4408
  %4410 = vadd.xlane.f32.xlu0 %v4362
  %v4411 = vpop.xlane.xlu0 %4410
  %4412 = vadd.xlane.f32.xlu0 %v4363
  %v4413 = vpop.xlane.xlu0 %4412
  %4414 = vadd.xlane.f32.xlu0 %v4364
  %v4415 = vpop.xlane.xlu0 %4414
  %4416 = vadd.xlane.f32.xlu0 %v4365
  %v4417 = vpop.xlane.xlu0 %4416
  %4418 = vadd.xlane.f32.xlu0 %v4366
  %v4419 = vpop.xlane.xlu0 %4418
  %4420 = vadd.xlane.f32.xlu0 %v4367
  %v4421 = vpop.xlane.xlu0 %4420
  %4422 = vadd.xlane.f32.xlu0 %v4368
  %v4423 = vpop.xlane.xlu0 %4422
  %4424 = vadd.xlane.f32.xlu0 %v4369
  %v4425 = vpop.xlane.xlu0 %4424
  %4426 = vadd.xlane.f32.xlu0 %v4370
  %v4427 = vpop.xlane.xlu0 %4426
  %4428 = vadd.xlane.f32.xlu0 %v4371
  %v4429 = vpop.xlane.xlu0 %4428
  %4430 = vadd.xlane.f32.xlu0 %v4372
  %v4431 = vpop.xlane.xlu0 %4430
  %4432 = vadd.xlane.f32.xlu0 %v4373
  %v4433 = vpop.xlane.xlu0 %4432
  %4434 = vadd.xlane.f32.xlu0 %v4374
  %v4435 = vpop.xlane.xlu0 %4434
  %4436 = vadd.xlane.f32.xlu0 %v4375
  %v4437 = vpop.xlane.xlu0 %4436
  %4438 = vadd.xlane.f32.xlu0 %v4376
  %v4439 = vpop.xlane.xlu0 %4438
  %4440 = vadd.xlane.f32.xlu0 %v4377
  %v4441 = vpop.xlane.xlu0 %4440
  %v4442 = vmul.f32 %v4379, %v2835
  %v4443 = vmul.f32 %v4381, %v2835
  %v4444 = vmul.f32 %v4383, %v2835
  %v4445 = vmul.f32 %v4385, %v2835
  %v4446 = vmul.f32 %v4387, %v2835
  %v4447 = vmul.f32 %v4389, %v2835
  %v4448 = vmul.f32 %v4391, %v2835
  %v4449 = vmul.f32 %v4393, %v2835
  %v4450 = vmul.f32 %v4395, %v2835
  %v4451 = vmul.f32 %v4397, %v2835
  %v4452 = vmul.f32 %v4399, %v2835
  %v4453 = vmul.f32 %v4401, %v2835
  %v4454 = vmul.f32 %v4403, %v2835
  %v4455 = vmul.f32 %v4405, %v2835
  %v4456 = vmul.f32 %v4407, %v2835
  %v4457 = vmul.f32 %v4409, %v2835
  %v4458 = vmul.f32 %v4411, %v2835
  %v4459 = vmul.f32 %v4413, %v2835
  %v4460 = vmul.f32 %v4415, %v2835
  %v4461 = vmul.f32 %v4417, %v2835
  %v4462 = vmul.f32 %v4419, %v2835
  %v4463 = vmul.f32 %v4421, %v2835
  %v4464 = vmul.f32 %v4423, %v2835
  %v4465 = vmul.f32 %v4425, %v2835
  %v4466 = vmul.f32 %v4427, %v2835
  %v4467 = vmul.f32 %v4429, %v2835
  %v4468 = vmul.f32 %v4431, %v2835
  %v4469 = vmul.f32 %v4433, %v2835
  %v4470 = vmul.f32 %v4435, %v2835
  %v4471 = vmul.f32 %v4437, %v2835
  %v4472 = vmul.f32 %v4439, %v2835
  %v4473 = vmul.f32 %v4441, %v2835
  %v4474 = vadd.f32 %v4442, 1e-05
  %v4475 = vadd.f32 %v4443, 1e-05
  %v4476 = vadd.f32 %v4444, 1e-05
  %v4477 = vadd.f32 %v4445, 1e-05
  %v4478 = vadd.f32 %v4446, 1e-05
  %v4479 = vadd.f32 %v4447, 1e-05
  %v4480 = vadd.f32 %v4448, 1e-05
  %v4481 = vadd.f32 %v4449, 1e-05
  %v4482 = vadd.f32 %v4450, 1e-05
  %v4483 = vadd.f32 %v4451, 1e-05
  %v4484 = vadd.f32 %v4452, 1e-05
  %v4485 = vadd.f32 %v4453, 1e-05
  %v4486 = vadd.f32 %v4454, 1e-05
  %v4487 = vadd.f32 %v4455, 1e-05
  %v4488 = vadd.f32 %v4456, 1e-05
  %v4489 = vadd.f32 %v4457, 1e-05
  %v4490 = vadd.f32 %v4458, 1e-05
  %v4491 = vadd.f32 %v4459, 1e-05
  %v4492 = vadd.f32 %v4460, 1e-05
  %v4493 = vadd.f32 %v4461, 1e-05
  %v4494 = vadd.f32 %v4462, 1e-05
  %v4495 = vadd.f32 %v4463, 1e-05
  %v4496 = vadd.f32 %v4464, 1e-05
  %v4497 = vadd.f32 %v4465, 1e-05
  %v4498 = vadd.f32 %v4466, 1e-05
  %v4499 = vadd.f32 %v4467, 1e-05
  %v4500 = vadd.f32 %v4468, 1e-05
  %v4501 = vadd.f32 %v4469, 1e-05
  %v4502 = vadd.f32 %v4470, 1e-05
  %v4503 = vadd.f32 %v4471, 1e-05
  %v4504 = vadd.f32 %v4472, 1e-05
  %v4505 = vadd.f32 %v4473, 1e-05
  %v4506 = vrsqrt.pop %v4474
  %v4507 = vmul.f32 %v4506, %v4474
  %v4508 = vmul.f32 %v4507, %v4506
  %v4509 = vmul.f32 0.5, %v4508
  %v4510 = vsub.f32 1.5, %v4509
  %v4511 = vmul.f32 %v4506, %v4510
  %vm4512 = vweird.f32 %v4474
  %vm4513 = vweird.f32 %v4506
  %vm4514 = vmor %vm4512, %vm4513
  %v4515 = vsel %vm4514, %v4506, %v4511
  %v4516 = vrsqrt.pop %v4475
  %v4517 = vmul.f32 %v4516, %v4475
  %v4518 = vmul.f32 %v4517, %v4516
  %v4519 = vmul.f32 0.5, %v4518
  %v4520 = vsub.f32 1.5, %v4519
  %v4521 = vmul.f32 %v4516, %v4520
  %vm4522 = vweird.f32 %v4475
  %vm4523 = vweird.f32 %v4516
  %vm4524 = vmor %vm4522, %vm4523
  %v4525 = vsel %vm4524, %v4516, %v4521
  %v4526 = vrsqrt.pop %v4476
  %v4527 = vmul.f32 %v4526, %v4476
  %v4528 = vmul.f32 %v4527, %v4526
  %v4529 = vmul.f32 0.5, %v4528
  %v4530 = vsub.f32 1.5, %v4529
  %v4531 = vmul.f32 %v4526, %v4530
  %vm4532 = vweird.f32 %v4476
  %vm4533 = vweird.f32 %v4526
  %vm4534 = vmor %vm4532, %vm4533
  %v4535 = vsel %vm4534, %v4526, %v4531
  %v4536 = vrsqrt.pop %v4477
  %v4537 = vmul.f32 %v4536, %v4477
  %v4538 = vmul.f32 %v4537, %v4536
  %v4539 = vmul.f32 0.5, %v4538
  %v4540 = vsub.f32 1.5, %v4539
  %v4541 = vmul.f32 %v4536, %v4540
  %vm4542 = vweird.f32 %v4477
  %vm4543 = vweird.f32 %v4536
  %vm4544 = vmor %vm4542, %vm4543
  %v4545 = vsel %vm4544, %v4536, %v4541
  %v4546 = vrsqrt.pop %v4478
  %v4547 = vmul.f32 %v4546, %v4478
  %v4548 = vmul.f32 %v4547, %v4546
  %v4549 = vmul.f32 0.5, %v4548
  %v4550 = vsub.f32 1.5, %v4549
  %v4551 = vmul.f32 %v4546, %v4550
  %vm4552 = vweird.f32 %v4478
  %vm4553 = vweird.f32 %v4546
  %vm4554 = vmor %vm4552, %vm4553
  %v4555 = vsel %vm4554, %v4546, %v4551
  %v4556 = vrsqrt.pop %v4479
  %v4557 = vmul.f32 %v4556, %v4479
  %v4558 = vmul.f32 %v4557, %v4556
  %v4559 = vmul.f32 0.5, %v4558
  %v4560 = vsub.f32 1.5, %v4559
  %v4561 = vmul.f32 %v4556, %v4560
  %vm4562 = vweird.f32 %v4479
  %vm4563 = vweird.f32 %v4556
  %vm4564 = vmor %vm4562, %vm4563
  %v4565 = vsel %vm4564, %v4556, %v4561
  %v4566 = vrsqrt.pop %v4480
  %v4567 = vmul.f32 %v4566, %v4480
  %v4568 = vmul.f32 %v4567, %v4566
  %v4569 = vmul.f32 0.5, %v4568
  %v4570 = vsub.f32 1.5, %v4569
  %v4571 = vmul.f32 %v4566, %v4570
  %vm4572 = vweird.f32 %v4480
  %vm4573 = vweird.f32 %v4566
  %vm4574 = vmor %vm4572, %vm4573
  %v4575 = vsel %vm4574, %v4566, %v4571
  %v4576 = vrsqrt.pop %v4481
  %v4577 = vmul.f32 %v4576, %v4481
  %v4578 = vmul.f32 %v4577, %v4576
  %v4579 = vmul.f32 0.5, %v4578
  %v4580 = vsub.f32 1.5, %v4579
  %v4581 = vmul.f32 %v4576, %v4580
  %vm4582 = vweird.f32 %v4481
  %vm4583 = vweird.f32 %v4576
  %vm4584 = vmor %vm4582, %vm4583
  %v4585 = vsel %vm4584, %v4576, %v4581
  %v4586 = vrsqrt.pop %v4482
  %v4587 = vmul.f32 %v4586, %v4482
  %v4588 = vmul.f32 %v4587, %v4586
  %v4589 = vmul.f32 0.5, %v4588
  %v4590 = vsub.f32 1.5, %v4589
  %v4591 = vmul.f32 %v4586, %v4590
  %vm4592 = vweird.f32 %v4482
  %vm4593 = vweird.f32 %v4586
  %vm4594 = vmor %vm4592, %vm4593
  %v4595 = vsel %vm4594, %v4586, %v4591
  %v4596 = vrsqrt.pop %v4483
  %v4597 = vmul.f32 %v4596, %v4483
  %v4598 = vmul.f32 %v4597, %v4596
  %v4599 = vmul.f32 0.5, %v4598
  %v4600 = vsub.f32 1.5, %v4599
  %v4601 = vmul.f32 %v4596, %v4600
  %vm4602 = vweird.f32 %v4483
  %vm4603 = vweird.f32 %v4596
  %vm4604 = vmor %vm4602, %vm4603
  %v4605 = vsel %vm4604, %v4596, %v4601
  %v4606 = vrsqrt.pop %v4484
  %v4607 = vmul.f32 %v4606, %v4484
  %v4608 = vmul.f32 %v4607, %v4606
  %v4609 = vmul.f32 0.5, %v4608
  %v4610 = vsub.f32 1.5, %v4609
  %v4611 = vmul.f32 %v4606, %v4610
  %vm4612 = vweird.f32 %v4484
  %vm4613 = vweird.f32 %v4606
  %vm4614 = vmor %vm4612, %vm4613
  %v4615 = vsel %vm4614, %v4606, %v4611
  %v4616 = vrsqrt.pop %v4485
  %v4617 = vmul.f32 %v4616, %v4485
  %v4618 = vmul.f32 %v4617, %v4616
  %v4619 = vmul.f32 0.5, %v4618
  %v4620 = vsub.f32 1.5, %v4619
  %v4621 = vmul.f32 %v4616, %v4620
  %vm4622 = vweird.f32 %v4485
  %vm4623 = vweird.f32 %v4616
  %vm4624 = vmor %vm4622, %vm4623
  %v4625 = vsel %vm4624, %v4616, %v4621
  %v4626 = vrsqrt.pop %v4486
  %v4627 = vmul.f32 %v4626, %v4486
  %v4628 = vmul.f32 %v4627, %v4626
  %v4629 = vmul.f32 0.5, %v4628
  %v4630 = vsub.f32 1.5, %v4629
  %v4631 = vmul.f32 %v4626, %v4630
  %vm4632 = vweird.f32 %v4486
  %vm4633 = vweird.f32 %v4626
  %vm4634 = vmor %vm4632, %vm4633
  %v4635 = vsel %vm4634, %v4626, %v4631
  %v4636 = vrsqrt.pop %v4487
  %v4637 = vmul.f32 %v4636, %v4487
  %v4638 = vmul.f32 %v4637, %v4636
  %v4639 = vmul.f32 0.5, %v4638
  %v4640 = vsub.f32 1.5, %v4639
  %v4641 = vmul.f32 %v4636, %v4640
  %vm4642 = vweird.f32 %v4487
  %vm4643 = vweird.f32 %v4636
  %vm4644 = vmor %vm4642, %vm4643
  %v4645 = vsel %vm4644, %v4636, %v4641
  %v4646 = vrsqrt.pop %v4488
  %v4647 = vmul.f32 %v4646, %v4488
  %v4648 = vmul.f32 %v4647, %v4646
  %v4649 = vmul.f32 0.5, %v4648
  %v4650 = vsub.f32 1.5, %v4649
  %v4651 = vmul.f32 %v4646, %v4650
  %vm4652 = vweird.f32 %v4488
  %vm4653 = vweird.f32 %v4646
  %vm4654 = vmor %vm4652, %vm4653
  %v4655 = vsel %vm4654, %v4646, %v4651
  %v4656 = vrsqrt.pop %v4489
  %v4657 = vmul.f32 %v4656, %v4489
  %v4658 = vmul.f32 %v4657, %v4656
  %v4659 = vmul.f32 0.5, %v4658
  %v4660 = vsub.f32 1.5, %v4659
  %v4661 = vmul.f32 %v4656, %v4660
  %vm4662 = vweird.f32 %v4489
  %vm4663 = vweird.f32 %v4656
  %vm4664 = vmor %vm4662, %vm4663
  %v4665 = vsel %vm4664, %v4656, %v4661
  %v4666 = vrsqrt.pop %v4490
  %v4667 = vmul.f32 %v4666, %v4490
  %v4668 = vmul.f32 %v4667, %v4666
  %v4669 = vmul.f32 0.5, %v4668
  %v4670 = vsub.f32 1.5, %v4669
  %v4671 = vmul.f32 %v4666, %v4670
  %vm4672 = vweird.f32 %v4490
  %vm4673 = vweird.f32 %v4666
  %vm4674 = vmor %vm4672, %vm4673
  %v4675 = vsel %vm4674, %v4666, %v4671
  %v4676 = vrsqrt.pop %v4491
  %v4677 = vmul.f32 %v4676, %v4491
  %v4678 = vmul.f32 %v4677, %v4676
  %v4679 = vmul.f32 0.5, %v4678
  %v4680 = vsub.f32 1.5, %v4679
  %v4681 = vmul.f32 %v4676, %v4680
  %vm4682 = vweird.f32 %v4491
  %vm4683 = vweird.f32 %v4676
  %vm4684 = vmor %vm4682, %vm4683
  %v4685 = vsel %vm4684, %v4676, %v4681
  %v4686 = vrsqrt.pop %v4492
  %v4687 = vmul.f32 %v4686, %v4492
  %v4688 = vmul.f32 %v4687, %v4686
  %v4689 = vmul.f32 0.5, %v4688
  %v4690 = vsub.f32 1.5, %v4689
  %v4691 = vmul.f32 %v4686, %v4690
  %vm4692 = vweird.f32 %v4492
  %vm4693 = vweird.f32 %v4686
  %vm4694 = vmor %vm4692, %vm4693
  %v4695 = vsel %vm4694, %v4686, %v4691
  %v4696 = vrsqrt.pop %v4493
  %v4697 = vmul.f32 %v4696, %v4493
  %v4698 = vmul.f32 %v4697, %v4696
  %v4699 = vmul.f32 0.5, %v4698
  %v4700 = vsub.f32 1.5, %v4699
  %v4701 = vmul.f32 %v4696, %v4700
  %vm4702 = vweird.f32 %v4493
  %vm4703 = vweird.f32 %v4696
  %vm4704 = vmor %vm4702, %vm4703
  %v4705 = vsel %vm4704, %v4696, %v4701
  %v4706 = vrsqrt.pop %v4494
  %v4707 = vmul.f32 %v4706, %v4494
  %v4708 = vmul.f32 %v4707, %v4706
  %v4709 = vmul.f32 0.5, %v4708
  %v4710 = vsub.f32 1.5, %v4709
  %v4711 = vmul.f32 %v4706, %v4710
  %vm4712 = vweird.f32 %v4494
  %vm4713 = vweird.f32 %v4706
  %vm4714 = vmor %vm4712, %vm4713
  %v4715 = vsel %vm4714, %v4706, %v4711
  %v4716 = vrsqrt.pop %v4495
  %v4717 = vmul.f32 %v4716, %v4495
  %v4718 = vmul.f32 %v4717, %v4716
  %v4719 = vmul.f32 0.5, %v4718
  %v4720 = vsub.f32 1.5, %v4719
  %v4721 = vmul.f32 %v4716, %v4720
  %vm4722 = vweird.f32 %v4495
  %vm4723 = vweird.f32 %v4716
  %vm4724 = vmor %vm4722, %vm4723
  %v4725 = vsel %vm4724, %v4716, %v4721
  %v4726 = vrsqrt.pop %v4496
  %v4727 = vmul.f32 %v4726, %v4496
  %v4728 = vmul.f32 %v4727, %v4726
  %v4729 = vmul.f32 0.5, %v4728
  %v4730 = vsub.f32 1.5, %v4729
  %v4731 = vmul.f32 %v4726, %v4730
  %vm4732 = vweird.f32 %v4496
  %vm4733 = vweird.f32 %v4726
  %vm4734 = vmor %vm4732, %vm4733
  %v4735 = vsel %vm4734, %v4726, %v4731
  %v4736 = vrsqrt.pop %v4497
  %v4737 = vmul.f32 %v4736, %v4497
  %v4738 = vmul.f32 %v4737, %v4736
  %v4739 = vmul.f32 0.5, %v4738
  %v4740 = vsub.f32 1.5, %v4739
  %v4741 = vmul.f32 %v4736, %v4740
  %vm4742 = vweird.f32 %v4497
  %vm4743 = vweird.f32 %v4736
  %vm4744 = vmor %vm4742, %vm4743
  %v4745 = vsel %vm4744, %v4736, %v4741
  %v4746 = vrsqrt.pop %v4498
  %v4747 = vmul.f32 %v4746, %v4498
  %v4748 = vmul.f32 %v4747, %v4746
  %v4749 = vmul.f32 0.5, %v4748
  %v4750 = vsub.f32 1.5, %v4749
  %v4751 = vmul.f32 %v4746, %v4750
  %vm4752 = vweird.f32 %v4498
  %vm4753 = vweird.f32 %v4746
  %vm4754 = vmor %vm4752, %vm4753
  %v4755 = vsel %vm4754, %v4746, %v4751
  %v4756 = vrsqrt.pop %v4499
  %v4757 = vmul.f32 %v4756, %v4499
  %v4758 = vmul.f32 %v4757, %v4756
  %v4759 = vmul.f32 0.5, %v4758
  %v4760 = vsub.f32 1.5, %v4759
  %v4761 = vmul.f32 %v4756, %v4760
  %vm4762 = vweird.f32 %v4499
  %vm4763 = vweird.f32 %v4756
  %vm4764 = vmor %vm4762, %vm4763
  %v4765 = vsel %vm4764, %v4756, %v4761
  %v4766 = vrsqrt.pop %v4500
  %v4767 = vmul.f32 %v4766, %v4500
  %v4768 = vmul.f32 %v4767, %v4766
  %v4769 = vmul.f32 0.5, %v4768
  %v4770 = vsub.f32 1.5, %v4769
  %v4771 = vmul.f32 %v4766, %v4770
  %vm4772 = vweird.f32 %v4500
  %vm4773 = vweird.f32 %v4766
  %vm4774 = vmor %vm4772, %vm4773
  %v4775 = vsel %vm4774, %v4766, %v4771
  %v4776 = vrsqrt.pop %v4501
  %v4777 = vmul.f32 %v4776, %v4501
  %v4778 = vmul.f32 %v4777, %v4776
  %v4779 = vmul.f32 0.5, %v4778
  %v4780 = vsub.f32 1.5, %v4779
  %v4781 = vmul.f32 %v4776, %v4780
  %vm4782 = vweird.f32 %v4501
  %vm4783 = vweird.f32 %v4776
  %vm4784 = vmor %vm4782, %vm4783
  %v4785 = vsel %vm4784, %v4776, %v4781
  %v4786 = vrsqrt.pop %v4502
  %v4787 = vmul.f32 %v4786, %v4502
  %v4788 = vmul.f32 %v4787, %v4786
  %v4789 = vmul.f32 0.5, %v4788
  %v4790 = vsub.f32 1.5, %v4789
  %v4791 = vmul.f32 %v4786, %v4790
  %vm4792 = vweird.f32 %v4502
  %vm4793 = vweird.f32 %v4786
  %vm4794 = vmor %vm4792, %vm4793
  %v4795 = vsel %vm4794, %v4786, %v4791
  %v4796 = vrsqrt.pop %v4503
  %v4797 = vmul.f32 %v4796, %v4503
  %v4798 = vmul.f32 %v4797, %v4796
  %v4799 = vmul.f32 0.5, %v4798
  %v4800 = vsub.f32 1.5, %v4799
  %v4801 = vmul.f32 %v4796, %v4800
  %vm4802 = vweird.f32 %v4503
  %vm4803 = vweird.f32 %v4796
  %vm4804 = vmor %vm4802, %vm4803
  %v4805 = vsel %vm4804, %v4796, %v4801
  %v4806 = vrsqrt.pop %v4504
  %v4807 = vmul.f32 %v4806, %v4504
  %v4808 = vmul.f32 %v4807, %v4806
  %v4809 = vmul.f32 0.5, %v4808
  %v4810 = vsub.f32 1.5, %v4809
  %v4811 = vmul.f32 %v4806, %v4810
  %vm4812 = vweird.f32 %v4504
  %vm4813 = vweird.f32 %v4806
  %vm4814 = vmor %vm4812, %vm4813
  %v4815 = vsel %vm4814, %v4806, %v4811
  %v4816 = vrsqrt.pop %v4505
  %v4817 = vmul.f32 %v4816, %v4505
  %v4818 = vmul.f32 %v4817, %v4816
  %v4819 = vmul.f32 0.5, %v4818
  %v4820 = vsub.f32 1.5, %v4819
  %v4821 = vmul.f32 %v4816, %v4820
  %vm4822 = vweird.f32 %v4505
  %vm4823 = vweird.f32 %v4816
  %vm4824 = vmor %vm4822, %vm4823
  %v4825 = vsel %vm4824, %v4816, %v4821
  %v4826 = vmul.f32 %v4314, %v4515
  %v4827 = vmul.f32 %v4315, %v4525
  %v4828 = vmul.f32 %v4316, %v4535
  %v4829 = vmul.f32 %v4317, %v4545
  %v4830 = vmul.f32 %v4318, %v4555
  %v4831 = vmul.f32 %v4319, %v4565
  %v4832 = vmul.f32 %v4320, %v4575
  %v4833 = vmul.f32 %v4321, %v4585
  %v4834 = vmul.f32 %v4322, %v4595
  %v4835 = vmul.f32 %v4323, %v4605
  %v4836 = vmul.f32 %v4324, %v4615
  %v4837 = vmul.f32 %v4325, %v4625
  %v4838 = vmul.f32 %v4326, %v4635
  %v4839 = vmul.f32 %v4327, %v4645
  %v4840 = vmul.f32 %v4328, %v4655
  %v4841 = vmul.f32 %v4329, %v4665
  %v4842 = vmul.f32 %v4330, %v4675
  %v4843 = vmul.f32 %v4331, %v4685
  %v4844 = vmul.f32 %v4332, %v4695
  %v4845 = vmul.f32 %v4333, %v4705
  %v4846 = vmul.f32 %v4334, %v4715
  %v4847 = vmul.f32 %v4335, %v4725
  %v4848 = vmul.f32 %v4336, %v4735
  %v4849 = vmul.f32 %v4337, %v4745
  %v4850 = vmul.f32 %v4338, %v4755
  %v4851 = vmul.f32 %v4339, %v4765
  %v4852 = vmul.f32 %v4340, %v4775
  %v4853 = vmul.f32 %v4341, %v4785
  %v4854 = vmul.f32 %v4342, %v4795
  %v4855 = vmul.f32 %v4343, %v4805
  %v4856 = vmul.f32 %v4344, %v4815
  %v4857 = vmul.f32 %v4345, %v4825
  %v4858 = vld [vmem:[%s12] sm:$0x1]
  %v4860 = vperm.slane %v4858, 0
  %v4862 = vmul.f32 %v4826, %v4860
  %v4863 = vmul.f32 %v4827, %v4860
  %v4864 = vmul.f32 %v4828, %v4860
  %v4865 = vmul.f32 %v4829, %v4860
  %v4866 = vmul.f32 %v4830, %v4860
  %v4867 = vmul.f32 %v4831, %v4860
  %v4868 = vmul.f32 %v4832, %v4860
  %v4869 = vmul.f32 %v4833, %v4860
  %v4870 = vmul.f32 %v4834, %v4860
  %v4871 = vmul.f32 %v4835, %v4860
  %v4872 = vmul.f32 %v4836, %v4860
  %v4873 = vmul.f32 %v4837, %v4860
  %v4874 = vmul.f32 %v4838, %v4860
  %v4875 = vmul.f32 %v4839, %v4860
  %v4876 = vmul.f32 %v4840, %v4860
  %v4877 = vmul.f32 %v4841, %v4860
  %v4878 = vmul.f32 %v4842, %v4860
  %v4879 = vmul.f32 %v4843, %v4860
  %v4880 = vmul.f32 %v4844, %v4860
  %v4881 = vmul.f32 %v4845, %v4860
  %v4882 = vmul.f32 %v4846, %v4860
  %v4883 = vmul.f32 %v4847, %v4860
  %v4884 = vmul.f32 %v4848, %v4860
  %v4885 = vmul.f32 %v4849, %v4860
  %v4886 = vmul.f32 %v4850, %v4860
  %v4887 = vmul.f32 %v4851, %v4860
  %v4888 = vmul.f32 %v4852, %v4860
  %v4889 = vmul.f32 %v4853, %v4860
  %v4890 = vmul.f32 %v4854, %v4860
  %v4891 = vmul.f32 %v4855, %v4860
  %v4892 = vmul.f32 %v4856, %v4860
  %v4893 = vmul.f32 %v4857, %v4860
  %v4894 = vld [vmem:[%s13] sm:$0x1]
  %v4896 = vperm.slane %v4894, 0
  %v4898 = vadd.f32 %v4862, %v4896
  %v4899 = vadd.f32 %v4863, %v4896
  %v4900 = vadd.f32 %v4864, %v4896
  %v4901 = vadd.f32 %v4865, %v4896
  %v4902 = vadd.f32 %v4866, %v4896
  %v4903 = vadd.f32 %v4867, %v4896
  %v4904 = vadd.f32 %v4868, %v4896
  %v4905 = vadd.f32 %v4869, %v4896
  %v4906 = vadd.f32 %v4870, %v4896
  %v4907 = vadd.f32 %v4871, %v4896
  %v4908 = vadd.f32 %v4872, %v4896
  %v4909 = vadd.f32 %v4873, %v4896
  %v4910 = vadd.f32 %v4874, %v4896
  %v4911 = vadd.f32 %v4875, %v4896
  %v4912 = vadd.f32 %v4876, %v4896
  %v4913 = vadd.f32 %v4877, %v4896
  %v4914 = vadd.f32 %v4878, %v4896
  %v4915 = vadd.f32 %v4879, %v4896
  %v4916 = vadd.f32 %v4880, %v4896
  %v4917 = vadd.f32 %v4881, %v4896
  %v4918 = vadd.f32 %v4882, %v4896
  %v4919 = vadd.f32 %v4883, %v4896
  %v4920 = vadd.f32 %v4884, %v4896
  %v4921 = vadd.f32 %v4885, %v4896
  %v4922 = vadd.f32 %v4886, %v4896
  %v4923 = vadd.f32 %v4887, %v4896
  %v4924 = vadd.f32 %v4888, %v4896
  %v4925 = vadd.f32 %v4889, %v4896
  %v4926 = vadd.f32 %v4890, %v4896
  %v4927 = vadd.f32 %v4891, %v4896
  %v4928 = vadd.f32 %v4892, %v4896
  %v4929 = vadd.f32 %v4893, %v4896
  %v4930 = vmul.f32 %v49, %v49
  %v4931 = vmul.f32 %v50, %v50
  %v4932 = vmul.f32 %v51, %v51
  %v4933 = vmul.f32 %v52, %v52
  %v4934 = vmul.f32 %v53, %v53
  %v4935 = vmul.f32 %v54, %v54
  %v4936 = vmul.f32 %v55, %v55
  %v4937 = vmul.f32 %v56, %v56
  %4938 = vadd.xlane.f32.xlu0 %v4930
  %v4939 = vpop.xlane.xlu0 %4938
  %4940 = vadd.xlane.f32.xlu0 %v4931
  %v4941 = vpop.xlane.xlu0 %4940
  %4942 = vadd.xlane.f32.xlu0 %v4932
  %v4943 = vpop.xlane.xlu0 %4942
  %4944 = vadd.xlane.f32.xlu0 %v4933
  %v4945 = vpop.xlane.xlu0 %4944
  %4946 = vadd.xlane.f32.xlu0 %v4934
  %v4947 = vpop.xlane.xlu0 %4946
  %4948 = vadd.xlane.f32.xlu0 %v4935
  %v4949 = vpop.xlane.xlu0 %4948
  %4950 = vadd.xlane.f32.xlu0 %v4936
  %v4951 = vpop.xlane.xlu0 %4950
  %4952 = vadd.xlane.f32.xlu0 %v4937
  %v4953 = vpop.xlane.xlu0 %4952
  %v4954 = vmax.f32 %v4939, 1e-24
  %v4955 = vmax.f32 %v4941, 1e-24
  %v4956 = vmax.f32 %v4943, 1e-24
  %v4957 = vmax.f32 %v4945, 1e-24
  %v4958 = vmax.f32 %v4947, 1e-24
  %v4959 = vmax.f32 %v4949, 1e-24
  %v4960 = vmax.f32 %v4951, 1e-24
  %v4961 = vmax.f32 %v4953, 1e-24
  %v4962 = vrsqrt.pop %v4954
  %v4963 = vmul.f32 %v4962, %v4954
  %v4964 = vmul.f32 %v4963, %v4962
  %v4965 = vmul.f32 0.5, %v4964
  %v4966 = vsub.f32 1.5, %v4965
  %v4967 = vmul.f32 %v4962, %v4966
  %vm4968 = vweird.f32 %v4954
  %vm4969 = vweird.f32 %v4962
  %vm4970 = vmor %vm4968, %vm4969
  %v4971 = vsel %vm4970, %v4962, %v4967
  %v4972 = vrsqrt.pop %v4955
  %v4973 = vmul.f32 %v4972, %v4955
  %v4974 = vmul.f32 %v4973, %v4972
  %v4975 = vmul.f32 0.5, %v4974
  %v4976 = vsub.f32 1.5, %v4975
  %v4977 = vmul.f32 %v4972, %v4976
  %vm4978 = vweird.f32 %v4955
  %vm4979 = vweird.f32 %v4972
  %vm4980 = vmor %vm4978, %vm4979
  %v4981 = vsel %vm4980, %v4972, %v4977
  %v4982 = vrsqrt.pop %v4956
  %v4983 = vmul.f32 %v4982, %v4956
  %v4984 = vmul.f32 %v4983, %v4982
  %v4985 = vmul.f32 0.5, %v4984
  %v4986 = vsub.f32 1.5, %v4985
  %v4987 = vmul.f32 %v4982, %v4986
  %vm4988 = vweird.f32 %v4956
  %vm4989 = vweird.f32 %v4982
  %vm4990 = vmor %vm4988, %vm4989
  %v4991 = vsel %vm4990, %v4982, %v4987
  %v4992 = vrsqrt.pop %v4957
  %v4993 = vmul.f32 %v4992, %v4957
  %v4994 = vmul.f32 %v4993, %v4992
  %v4995 = vmul.f32 0.5, %v4994
  %v4996 = vsub.f32 1.5, %v4995
  %v4997 = vmul.f32 %v4992, %v4996
  %vm4998 = vweird.f32 %v4957
  %vm4999 = vweird.f32 %v4992
  %vm5000 = vmor %vm4998, %vm4999
  %v5001 = vsel %vm5000, %v4992, %v4997
  %v5002 = vrsqrt.pop %v4958
  %v5003 = vmul.f32 %v5002, %v4958
  %v5004 = vmul.f32 %v5003, %v5002
  %v5005 = vmul.f32 0.5, %v5004
  %v5006 = vsub.f32 1.5, %v5005
  %v5007 = vmul.f32 %v5002, %v5006
  %vm5008 = vweird.f32 %v4958
  %vm5009 = vweird.f32 %v5002
  %vm5010 = vmor %vm5008, %vm5009
  %v5011 = vsel %vm5010, %v5002, %v5007
  %v5012 = vrsqrt.pop %v4959
  %v5013 = vmul.f32 %v5012, %v4959
  %v5014 = vmul.f32 %v5013, %v5012
  %v5015 = vmul.f32 0.5, %v5014
  %v5016 = vsub.f32 1.5, %v5015
  %v5017 = vmul.f32 %v5012, %v5016
  %vm5018 = vweird.f32 %v4959
  %vm5019 = vweird.f32 %v5012
  %vm5020 = vmor %vm5018, %vm5019
  %v5021 = vsel %vm5020, %v5012, %v5017
  %v5022 = vrsqrt.pop %v4960
  %v5023 = vmul.f32 %v5022, %v4960
  %v5024 = vmul.f32 %v5023, %v5022
  %v5025 = vmul.f32 0.5, %v5024
  %v5026 = vsub.f32 1.5, %v5025
  %v5027 = vmul.f32 %v5022, %v5026
  %vm5028 = vweird.f32 %v4960
  %vm5029 = vweird.f32 %v5022
  %vm5030 = vmor %vm5028, %vm5029
  %v5031 = vsel %vm5030, %v5022, %v5027
  %v5032 = vrsqrt.pop %v4961
  %v5033 = vmul.f32 %v5032, %v4961
  %v5034 = vmul.f32 %v5033, %v5032
  %v5035 = vmul.f32 0.5, %v5034
  %v5036 = vsub.f32 1.5, %v5035
  %v5037 = vmul.f32 %v5032, %v5036
  %vm5038 = vweird.f32 %v4961
  %vm5039 = vweird.f32 %v5032
  %vm5040 = vmor %vm5038, %vm5039
  %v5041 = vsel %vm5040, %v5032, %v5037
  %v5042 = vmul.f32 %v2276, %v49
  %v5043 = vmul.f32 %v2277, %v50
  %v5044 = vmul.f32 %v2278, %v51
  %v5045 = vmul.f32 %v2279, %v52
  %v5046 = vmul.f32 %v2280, %v53
  %v5047 = vmul.f32 %v2281, %v54
  %v5048 = vmul.f32 %v2282, %v55
  %v5049 = vmul.f32 %v2283, %v56
  %v5050 = vmul.f32 %v5042, %v4971
  %v5051 = vmul.f32 %v5043, %v4981
  %v5052 = vmul.f32 %v5044, %v4991
  %v5053 = vmul.f32 %v5045, %v5001
  %v5054 = vmul.f32 %v5046, %v5011
  %v5055 = vmul.f32 %v5047, %v5021
  %v5056 = vmul.f32 %v5048, %v5031
  %v5057 = vmul.f32 %v5049, %v5041
  %v5058 = vmul.f32 %v4898, %v4898
  %v5059 = vmul.f32 %v4899, %v4899
  %v5060 = vmul.f32 %v4900, %v4900
  %v5061 = vmul.f32 %v4901, %v4901
  %v5062 = vmul.f32 %v4902, %v4902
  %v5063 = vmul.f32 %v4903, %v4903
  %v5064 = vmul.f32 %v4904, %v4904
  %v5065 = vmul.f32 %v4905, %v4905
  %5066 = vadd.xlane.f32.xlu0 %v5058
  %v5067 = vpop.xlane.xlu0 %5066
  %5068 = vadd.xlane.f32.xlu0 %v5059
  %v5069 = vpop.xlane.xlu0 %5068
  %5070 = vadd.xlane.f32.xlu0 %v5060
  %v5071 = vpop.xlane.xlu0 %5070
  %5072 = vadd.xlane.f32.xlu0 %v5061
  %v5073 = vpop.xlane.xlu0 %5072
  %5074 = vadd.xlane.f32.xlu0 %v5062
  %v5075 = vpop.xlane.xlu0 %5074
  %5076 = vadd.xlane.f32.xlu0 %v5063
  %v5077 = vpop.xlane.xlu0 %5076
  %5078 = vadd.xlane.f32.xlu0 %v5064
  %v5079 = vpop.xlane.xlu0 %5078
  %5080 = vadd.xlane.f32.xlu0 %v5065
  %v5081 = vpop.xlane.xlu0 %5080
  %v5082 = vmax.f32 %v5067, 1e-24
  %v5083 = vmax.f32 %v5069, 1e-24
  %v5084 = vmax.f32 %v5071, 1e-24
  %v5085 = vmax.f32 %v5073, 1e-24
  %v5086 = vmax.f32 %v5075, 1e-24
  %v5087 = vmax.f32 %v5077, 1e-24
  %v5088 = vmax.f32 %v5079, 1e-24
  %v5089 = vmax.f32 %v5081, 1e-24
  %v5090 = vrsqrt.pop %v5082
  %v5091 = vmul.f32 %v5090, %v5082
  %v5092 = vmul.f32 %v5091, %v5090
  %v5093 = vmul.f32 0.5, %v5092
  %v5094 = vsub.f32 1.5, %v5093
  %v5095 = vmul.f32 %v5090, %v5094
  %vm5096 = vweird.f32 %v5082
  %vm5097 = vweird.f32 %v5090
  %vm5098 = vmor %vm5096, %vm5097
  %v5099 = vsel %vm5098, %v5090, %v5095
  %v5100 = vrsqrt.pop %v5083
  %v5101 = vmul.f32 %v5100, %v5083
  %v5102 = vmul.f32 %v5101, %v5100
  %v5103 = vmul.f32 0.5, %v5102
  %v5104 = vsub.f32 1.5, %v5103
  %v5105 = vmul.f32 %v5100, %v5104
  %vm5106 = vweird.f32 %v5083
  %vm5107 = vweird.f32 %v5100
  %vm5108 = vmor %vm5106, %vm5107
  %v5109 = vsel %vm5108, %v5100, %v5105
  %v5110 = vrsqrt.pop %v5084
  %v5111 = vmul.f32 %v5110, %v5084
  %v5112 = vmul.f32 %v5111, %v5110
  %v5113 = vmul.f32 0.5, %v5112
  %v5114 = vsub.f32 1.5, %v5113
  %v5115 = vmul.f32 %v5110, %v5114
  %vm5116 = vweird.f32 %v5084
  %vm5117 = vweird.f32 %v5110
  %vm5118 = vmor %vm5116, %vm5117
  %v5119 = vsel %vm5118, %v5110, %v5115
  %v5120 = vrsqrt.pop %v5085
  %v5121 = vmul.f32 %v5120, %v5085
  %v5122 = vmul.f32 %v5121, %v5120
  %v5123 = vmul.f32 0.5, %v5122
  %v5124 = vsub.f32 1.5, %v5123
  %v5125 = vmul.f32 %v5120, %v5124
  %vm5126 = vweird.f32 %v5085
  %vm5127 = vweird.f32 %v5120
  %vm5128 = vmor %vm5126, %vm5127
  %v5129 = vsel %vm5128, %v5120, %v5125
  %v5130 = vrsqrt.pop %v5086
  %v5131 = vmul.f32 %v5130, %v5086
  %v5132 = vmul.f32 %v5131, %v5130
  %v5133 = vmul.f32 0.5, %v5132
  %v5134 = vsub.f32 1.5, %v5133
  %v5135 = vmul.f32 %v5130, %v5134
  %vm5136 = vweird.f32 %v5086
  %vm5137 = vweird.f32 %v5130
  %vm5138 = vmor %vm5136, %vm5137
  %v5139 = vsel %vm5138, %v5130, %v5135
  %v5140 = vrsqrt.pop %v5087
  %v5141 = vmul.f32 %v5140, %v5087
  %v5142 = vmul.f32 %v5141, %v5140
  %v5143 = vmul.f32 0.5, %v5142
  %v5144 = vsub.f32 1.5, %v5143
  %v5145 = vmul.f32 %v5140, %v5144
  %vm5146 = vweird.f32 %v5087
  %vm5147 = vweird.f32 %v5140
  %vm5148 = vmor %vm5146, %vm5147
  %v5149 = vsel %vm5148, %v5140, %v5145
  %v5150 = vrsqrt.pop %v5088
  %v5151 = vmul.f32 %v5150, %v5088
  %v5152 = vmul.f32 %v5151, %v5150
  %v5153 = vmul.f32 0.5, %v5152
  %v5154 = vsub.f32 1.5, %v5153
  %v5155 = vmul.f32 %v5150, %v5154
  %vm5156 = vweird.f32 %v5088
  %vm5157 = vweird.f32 %v5150
  %vm5158 = vmor %vm5156, %vm5157
  %v5159 = vsel %vm5158, %v5150, %v5155
  %v5160 = vrsqrt.pop %v5089
  %v5161 = vmul.f32 %v5160, %v5089
  %v5162 = vmul.f32 %v5161, %v5160
  %v5163 = vmul.f32 0.5, %v5162
  %v5164 = vsub.f32 1.5, %v5163
  %v5165 = vmul.f32 %v5160, %v5164
  %vm5166 = vweird.f32 %v5089
  %vm5167 = vweird.f32 %v5160
  %vm5168 = vmor %vm5166, %vm5167
  %v5169 = vsel %vm5168, %v5160, %v5165
  %v5170 = vmul.f32 %v4898, %v5099
  %v5171 = vmul.f32 %v4899, %v5109
  %v5172 = vmul.f32 %v4900, %v5119
  %v5173 = vmul.f32 %v4901, %v5129
  %v5174 = vmul.f32 %v4902, %v5139
  %v5175 = vmul.f32 %v4903, %v5149
  %v5176 = vmul.f32 %v4904, %v5159
  %v5177 = vmul.f32 %v4905, %v5169
  %v5178 = vmul.f32 %v57, %v57
  %v5179 = vmul.f32 %v58, %v58
  %v5180 = vmul.f32 %v59, %v59
  %v5181 = vmul.f32 %v60, %v60
  %v5182 = vmul.f32 %v61, %v61
  %v5183 = vmul.f32 %v62, %v62
  %v5184 = vmul.f32 %v63, %v63
  %v5185 = vmul.f32 %v64, %v64
  %5186 = vadd.xlane.f32.xlu0 %v5178
  %v5187 = vpop.xlane.xlu0 %5186
  %5188 = vadd.xlane.f32.xlu0 %v5179
  %v5189 = vpop.xlane.xlu0 %5188
  %5190 = vadd.xlane.f32.xlu0 %v5180
  %v5191 = vpop.xlane.xlu0 %5190
  %5192 = vadd.xlane.f32.xlu0 %v5181
  %v5193 = vpop.xlane.xlu0 %5192
  %5194 = vadd.xlane.f32.xlu0 %v5182
  %v5195 = vpop.xlane.xlu0 %5194
  %5196 = vadd.xlane.f32.xlu0 %v5183
  %v5197 = vpop.xlane.xlu0 %5196
  %5198 = vadd.xlane.f32.xlu0 %v5184
  %v5199 = vpop.xlane.xlu0 %5198
  %5200 = vadd.xlane.f32.xlu0 %v5185
  %v5201 = vpop.xlane.xlu0 %5200
  %v5202 = vmax.f32 %v5187, 1e-24
  %v5203 = vmax.f32 %v5189, 1e-24
  %v5204 = vmax.f32 %v5191, 1e-24
  %v5205 = vmax.f32 %v5193, 1e-24
  %v5206 = vmax.f32 %v5195, 1e-24
  %v5207 = vmax.f32 %v5197, 1e-24
  %v5208 = vmax.f32 %v5199, 1e-24
  %v5209 = vmax.f32 %v5201, 1e-24
  %v5210 = vrsqrt.pop %v5202
  %v5211 = vmul.f32 %v5210, %v5202
  %v5212 = vmul.f32 %v5211, %v5210
  %v5213 = vmul.f32 0.5, %v5212
  %v5214 = vsub.f32 1.5, %v5213
  %v5215 = vmul.f32 %v5210, %v5214
  %vm5216 = vweird.f32 %v5202
  %vm5217 = vweird.f32 %v5210
  %vm5218 = vmor %vm5216, %vm5217
  %v5219 = vsel %vm5218, %v5210, %v5215
  %v5220 = vrsqrt.pop %v5203
  %v5221 = vmul.f32 %v5220, %v5203
  %v5222 = vmul.f32 %v5221, %v5220
  %v5223 = vmul.f32 0.5, %v5222
  %v5224 = vsub.f32 1.5, %v5223
  %v5225 = vmul.f32 %v5220, %v5224
  %vm5226 = vweird.f32 %v5203
  %vm5227 = vweird.f32 %v5220
  %vm5228 = vmor %vm5226, %vm5227
  %v5229 = vsel %vm5228, %v5220, %v5225
  %v5230 = vrsqrt.pop %v5204
  %v5231 = vmul.f32 %v5230, %v5204
  %v5232 = vmul.f32 %v5231, %v5230
  %v5233 = vmul.f32 0.5, %v5232
  %v5234 = vsub.f32 1.5, %v5233
  %v5235 = vmul.f32 %v5230, %v5234
  %vm5236 = vweird.f32 %v5204
  %vm5237 = vweird.f32 %v5230
  %vm5238 = vmor %vm5236, %vm5237
  %v5239 = vsel %vm5238, %v5230, %v5235
  %v5240 = vrsqrt.pop %v5205
  %v5241 = vmul.f32 %v5240, %v5205
  %v5242 = vmul.f32 %v5241, %v5240
  %v5243 = vmul.f32 0.5, %v5242
  %v5244 = vsub.f32 1.5, %v5243
  %v5245 = vmul.f32 %v5240, %v5244
  %vm5246 = vweird.f32 %v5205
  %vm5247 = vweird.f32 %v5240
  %vm5248 = vmor %vm5246, %vm5247
  %v5249 = vsel %vm5248, %v5240, %v5245
  %v5250 = vrsqrt.pop %v5206
  %v5251 = vmul.f32 %v5250, %v5206
  %v5252 = vmul.f32 %v5251, %v5250
  %v5253 = vmul.f32 0.5, %v5252
  %v5254 = vsub.f32 1.5, %v5253
  %v5255 = vmul.f32 %v5250, %v5254
  %vm5256 = vweird.f32 %v5206
  %vm5257 = vweird.f32 %v5250
  %vm5258 = vmor %vm5256, %vm5257
  %v5259 = vsel %vm5258, %v5250, %v5255
  %v5260 = vrsqrt.pop %v5207
  %v5261 = vmul.f32 %v5260, %v5207
  %v5262 = vmul.f32 %v5261, %v5260
  %v5263 = vmul.f32 0.5, %v5262
  %v5264 = vsub.f32 1.5, %v5263
  %v5265 = vmul.f32 %v5260, %v5264
  %vm5266 = vweird.f32 %v5207
  %vm5267 = vweird.f32 %v5260
  %vm5268 = vmor %vm5266, %vm5267
  %v5269 = vsel %vm5268, %v5260, %v5265
  %v5270 = vrsqrt.pop %v5208
  %v5271 = vmul.f32 %v5270, %v5208
  %v5272 = vmul.f32 %v5271, %v5270
  %v5273 = vmul.f32 0.5, %v5272
  %v5274 = vsub.f32 1.5, %v5273
  %v5275 = vmul.f32 %v5270, %v5274
  %vm5276 = vweird.f32 %v5208
  %vm5277 = vweird.f32 %v5270
  %vm5278 = vmor %vm5276, %vm5277
  %v5279 = vsel %vm5278, %v5270, %v5275
  %v5280 = vrsqrt.pop %v5209
  %v5281 = vmul.f32 %v5280, %v5209
  %v5282 = vmul.f32 %v5281, %v5280
  %v5283 = vmul.f32 0.5, %v5282
  %v5284 = vsub.f32 1.5, %v5283
  %v5285 = vmul.f32 %v5280, %v5284
  %vm5286 = vweird.f32 %v5209
  %vm5287 = vweird.f32 %v5280
  %vm5288 = vmor %vm5286, %vm5287
  %v5289 = vsel %vm5288, %v5280, %v5285
  %v5290 = vmul.f32 %v2284, %v57
  %v5291 = vmul.f32 %v2285, %v58
  %v5292 = vmul.f32 %v2286, %v59
  %v5293 = vmul.f32 %v2287, %v60
  %v5294 = vmul.f32 %v2288, %v61
  %v5295 = vmul.f32 %v2289, %v62
  %v5296 = vmul.f32 %v2290, %v63
  %v5297 = vmul.f32 %v2291, %v64
  %v5298 = vmul.f32 %v5290, %v5219
  %v5299 = vmul.f32 %v5291, %v5229
  %v5300 = vmul.f32 %v5292, %v5239
  %v5301 = vmul.f32 %v5293, %v5249
  %v5302 = vmul.f32 %v5294, %v5259
  %v5303 = vmul.f32 %v5295, %v5269
  %v5304 = vmul.f32 %v5296, %v5279
  %v5305 = vmul.f32 %v5297, %v5289
  %v5306 = vmul.f32 %v4906, %v4906
  %v5307 = vmul.f32 %v4907, %v4907
  %v5308 = vmul.f32 %v4908, %v4908
  %v5309 = vmul.f32 %v4909, %v4909
  %v5310 = vmul.f32 %v4910, %v4910
  %v5311 = vmul.f32 %v4911, %v4911
  %v5312 = vmul.f32 %v4912, %v4912
  %v5313 = vmul.f32 %v4913, %v4913
  %5314 = vadd.xlane.f32.xlu0 %v5306
  %v5315 = vpop.xlane.xlu0 %5314
  %5316 = vadd.xlane.f32.xlu0 %v5307
  %v5317 = vpop.xlane.xlu0 %5316
  %5318 = vadd.xlane.f32.xlu0 %v5308
  %v5319 = vpop.xlane.xlu0 %5318
  %5320 = vadd.xlane.f32.xlu0 %v5309
  %v5321 = vpop.xlane.xlu0 %5320
  %5322 = vadd.xlane.f32.xlu0 %v5310
  %v5323 = vpop.xlane.xlu0 %5322
  %5324 = vadd.xlane.f32.xlu0 %v5311
  %v5325 = vpop.xlane.xlu0 %5324
  %5326 = vadd.xlane.f32.xlu0 %v5312
  %v5327 = vpop.xlane.xlu0 %5326
  %5328 = vadd.xlane.f32.xlu0 %v5313
  %v5329 = vpop.xlane.xlu0 %5328
  %v5330 = vmax.f32 %v5315, 1e-24
  %v5331 = vmax.f32 %v5317, 1e-24
  %v5332 = vmax.f32 %v5319, 1e-24
  %v5333 = vmax.f32 %v5321, 1e-24
  %v5334 = vmax.f32 %v5323, 1e-24
  %v5335 = vmax.f32 %v5325, 1e-24
  %v5336 = vmax.f32 %v5327, 1e-24
  %v5337 = vmax.f32 %v5329, 1e-24
  %v5338 = vrsqrt.pop %v5330
  %v5339 = vmul.f32 %v5338, %v5330
  %v5340 = vmul.f32 %v5339, %v5338
  %v5341 = vmul.f32 0.5, %v5340
  %v5342 = vsub.f32 1.5, %v5341
  %v5343 = vmul.f32 %v5338, %v5342
  %vm5344 = vweird.f32 %v5330
  %vm5345 = vweird.f32 %v5338
  %vm5346 = vmor %vm5344, %vm5345
  %v5347 = vsel %vm5346, %v5338, %v5343
  %v5348 = vrsqrt.pop %v5331
  %v5349 = vmul.f32 %v5348, %v5331
  %v5350 = vmul.f32 %v5349, %v5348
  %v5351 = vmul.f32 0.5, %v5350
  %v5352 = vsub.f32 1.5, %v5351
  %v5353 = vmul.f32 %v5348, %v5352
  %vm5354 = vweird.f32 %v5331
  %vm5355 = vweird.f32 %v5348
  %vm5356 = vmor %vm5354, %vm5355
  %v5357 = vsel %vm5356, %v5348, %v5353
  %v5358 = vrsqrt.pop %v5332
  %v5359 = vmul.f32 %v5358, %v5332
  %v5360 = vmul.f32 %v5359, %v5358
  %v5361 = vmul.f32 0.5, %v5360
  %v5362 = vsub.f32 1.5, %v5361
  %v5363 = vmul.f32 %v5358, %v5362
  %vm5364 = vweird.f32 %v5332
  %vm5365 = vweird.f32 %v5358
  %vm5366 = vmor %vm5364, %vm5365
  %v5367 = vsel %vm5366, %v5358, %v5363
  %v5368 = vrsqrt.pop %v5333
  %v5369 = vmul.f32 %v5368, %v5333
  %v5370 = vmul.f32 %v5369, %v5368
  %v5371 = vmul.f32 0.5, %v5370
  %v5372 = vsub.f32 1.5, %v5371
  %v5373 = vmul.f32 %v5368, %v5372
  %vm5374 = vweird.f32 %v5333
  %vm5375 = vweird.f32 %v5368
  %vm5376 = vmor %vm5374, %vm5375
  %v5377 = vsel %vm5376, %v5368, %v5373
  %v5378 = vrsqrt.pop %v5334
  %v5379 = vmul.f32 %v5378, %v5334
  %v5380 = vmul.f32 %v5379, %v5378
  %v5381 = vmul.f32 0.5, %v5380
  %v5382 = vsub.f32 1.5, %v5381
  %v5383 = vmul.f32 %v5378, %v5382
  %vm5384 = vweird.f32 %v5334
  %vm5385 = vweird.f32 %v5378
  %vm5386 = vmor %vm5384, %vm5385
  %v5387 = vsel %vm5386, %v5378, %v5383
  %v5388 = vrsqrt.pop %v5335
  %v5389 = vmul.f32 %v5388, %v5335
  %v5390 = vmul.f32 %v5389, %v5388
  %v5391 = vmul.f32 0.5, %v5390
  %v5392 = vsub.f32 1.5, %v5391
  %v5393 = vmul.f32 %v5388, %v5392
  %vm5394 = vweird.f32 %v5335
  %vm5395 = vweird.f32 %v5388
  %vm5396 = vmor %vm5394, %vm5395
  %v5397 = vsel %vm5396, %v5388, %v5393
  %v5398 = vrsqrt.pop %v5336
  %v5399 = vmul.f32 %v5398, %v5336
  %v5400 = vmul.f32 %v5399, %v5398
  %v5401 = vmul.f32 0.5, %v5400
  %v5402 = vsub.f32 1.5, %v5401
  %v5403 = vmul.f32 %v5398, %v5402
  %vm5404 = vweird.f32 %v5336
  %vm5405 = vweird.f32 %v5398
  %vm5406 = vmor %vm5404, %vm5405
  %v5407 = vsel %vm5406, %v5398, %v5403
  %v5408 = vrsqrt.pop %v5337
  %v5409 = vmul.f32 %v5408, %v5337
  %v5410 = vmul.f32 %v5409, %v5408
  %v5411 = vmul.f32 0.5, %v5410
  %v5412 = vsub.f32 1.5, %v5411
  %v5413 = vmul.f32 %v5408, %v5412
  %vm5414 = vweird.f32 %v5337
  %vm5415 = vweird.f32 %v5408
  %vm5416 = vmor %vm5414, %vm5415
  %v5417 = vsel %vm5416, %v5408, %v5413
  %v5418 = vmul.f32 %v4906, %v5347
  %v5419 = vmul.f32 %v4907, %v5357
  %v5420 = vmul.f32 %v4908, %v5367
  %v5421 = vmul.f32 %v4909, %v5377
  %v5422 = vmul.f32 %v4910, %v5387
  %v5423 = vmul.f32 %v4911, %v5397
  %v5424 = vmul.f32 %v4912, %v5407
  %v5425 = vmul.f32 %v4913, %v5417
  %v5426 = vmul.f32 %v65, %v65
  %v5427 = vmul.f32 %v66, %v66
  %v5428 = vmul.f32 %v67, %v67
  %v5429 = vmul.f32 %v68, %v68
  %v5430 = vmul.f32 %v69, %v69
  %v5431 = vmul.f32 %v70, %v70
  %v5432 = vmul.f32 %v71, %v71
  %v5433 = vmul.f32 %v72, %v72
  %5434 = vadd.xlane.f32.xlu0 %v5426
  %v5435 = vpop.xlane.xlu0 %5434
  %5436 = vadd.xlane.f32.xlu0 %v5427
  %v5437 = vpop.xlane.xlu0 %5436
  %5438 = vadd.xlane.f32.xlu0 %v5428
  %v5439 = vpop.xlane.xlu0 %5438
  %5440 = vadd.xlane.f32.xlu0 %v5429
  %v5441 = vpop.xlane.xlu0 %5440
  %5442 = vadd.xlane.f32.xlu0 %v5430
  %v5443 = vpop.xlane.xlu0 %5442
  %5444 = vadd.xlane.f32.xlu0 %v5431
  %v5445 = vpop.xlane.xlu0 %5444
  %5446 = vadd.xlane.f32.xlu0 %v5432
  %v5447 = vpop.xlane.xlu0 %5446
  %5448 = vadd.xlane.f32.xlu0 %v5433
  %v5449 = vpop.xlane.xlu0 %5448
  %v5450 = vmax.f32 %v5435, 1e-24
  %v5451 = vmax.f32 %v5437, 1e-24
  %v5452 = vmax.f32 %v5439, 1e-24
  %v5453 = vmax.f32 %v5441, 1e-24
  %v5454 = vmax.f32 %v5443, 1e-24
  %v5455 = vmax.f32 %v5445, 1e-24
  %v5456 = vmax.f32 %v5447, 1e-24
  %v5457 = vmax.f32 %v5449, 1e-24
  %v5458 = vrsqrt.pop %v5450
  %v5459 = vmul.f32 %v5458, %v5450
  %v5460 = vmul.f32 %v5459, %v5458
  %v5461 = vmul.f32 0.5, %v5460
  %v5462 = vsub.f32 1.5, %v5461
  %v5463 = vmul.f32 %v5458, %v5462
  %vm5464 = vweird.f32 %v5450
  %vm5465 = vweird.f32 %v5458
  %vm5466 = vmor %vm5464, %vm5465
  %v5467 = vsel %vm5466, %v5458, %v5463
  %v5468 = vrsqrt.pop %v5451
  %v5469 = vmul.f32 %v5468, %v5451
  %v5470 = vmul.f32 %v5469, %v5468
  %v5471 = vmul.f32 0.5, %v5470
  %v5472 = vsub.f32 1.5, %v5471
  %v5473 = vmul.f32 %v5468, %v5472
  %vm5474 = vweird.f32 %v5451
  %vm5475 = vweird.f32 %v5468
  %vm5476 = vmor %vm5474, %vm5475
  %v5477 = vsel %vm5476, %v5468, %v5473
  %v5478 = vrsqrt.pop %v5452
  %v5479 = vmul.f32 %v5478, %v5452
  %v5480 = vmul.f32 %v5479, %v5478
  %v5481 = vmul.f32 0.5, %v5480
  %v5482 = vsub.f32 1.5, %v5481
  %v5483 = vmul.f32 %v5478, %v5482
  %vm5484 = vweird.f32 %v5452
  %vm5485 = vweird.f32 %v5478
  %vm5486 = vmor %vm5484, %vm5485
  %v5487 = vsel %vm5486, %v5478, %v5483
  %v5488 = vrsqrt.pop %v5453
  %v5489 = vmul.f32 %v5488, %v5453
  %v5490 = vmul.f32 %v5489, %v5488
  %v5491 = vmul.f32 0.5, %v5490
  %v5492 = vsub.f32 1.5, %v5491
  %v5493 = vmul.f32 %v5488, %v5492
  %vm5494 = vweird.f32 %v5453
  %vm5495 = vweird.f32 %v5488
  %vm5496 = vmor %vm5494, %vm5495
  %v5497 = vsel %vm5496, %v5488, %v5493
  %v5498 = vrsqrt.pop %v5454
  %v5499 = vmul.f32 %v5498, %v5454
  %v5500 = vmul.f32 %v5499, %v5498
  %v5501 = vmul.f32 0.5, %v5500
  %v5502 = vsub.f32 1.5, %v5501
  %v5503 = vmul.f32 %v5498, %v5502
  %vm5504 = vweird.f32 %v5454
  %vm5505 = vweird.f32 %v5498
  %vm5506 = vmor %vm5504, %vm5505
  %v5507 = vsel %vm5506, %v5498, %v5503
  %v5508 = vrsqrt.pop %v5455
  %v5509 = vmul.f32 %v5508, %v5455
  %v5510 = vmul.f32 %v5509, %v5508
  %v5511 = vmul.f32 0.5, %v5510
  %v5512 = vsub.f32 1.5, %v5511
  %v5513 = vmul.f32 %v5508, %v5512
  %vm5514 = vweird.f32 %v5455
  %vm5515 = vweird.f32 %v5508
  %vm5516 = vmor %vm5514, %vm5515
  %v5517 = vsel %vm5516, %v5508, %v5513
  %v5518 = vrsqrt.pop %v5456
  %v5519 = vmul.f32 %v5518, %v5456
  %v5520 = vmul.f32 %v5519, %v5518
  %v5521 = vmul.f32 0.5, %v5520
  %v5522 = vsub.f32 1.5, %v5521
  %v5523 = vmul.f32 %v5518, %v5522
  %vm5524 = vweird.f32 %v5456
  %vm5525 = vweird.f32 %v5518
  %vm5526 = vmor %vm5524, %vm5525
  %v5527 = vsel %vm5526, %v5518, %v5523
  %v5528 = vrsqrt.pop %v5457
  %v5529 = vmul.f32 %v5528, %v5457
  %v5530 = vmul.f32 %v5529, %v5528
  %v5531 = vmul.f32 0.5, %v5530
  %v5532 = vsub.f32 1.5, %v5531
  %v5533 = vmul.f32 %v5528, %v5532
  %vm5534 = vweird.f32 %v5457
  %vm5535 = vweird.f32 %v5528
  %vm5536 = vmor %vm5534, %vm5535
  %v5537 = vsel %vm5536, %v5528, %v5533
  %v5538 = vmul.f32 %v2292, %v65
  %v5539 = vmul.f32 %v2293, %v66
  %v5540 = vmul.f32 %v2294, %v67
  %v5541 = vmul.f32 %v2295, %v68
  %v5542 = vmul.f32 %v2296, %v69
  %v5543 = vmul.f32 %v2297, %v70
  %v5544 = vmul.f32 %v2298, %v71
  %v5545 = vmul.f32 %v2299, %v72
  %v5546 = vmul.f32 %v5538, %v5467
  %v5547 = vmul.f32 %v5539, %v5477
  %v5548 = vmul.f32 %v5540, %v5487
  %v5549 = vmul.f32 %v5541, %v5497
  %v5550 = vmul.f32 %v5542, %v5507
  %v5551 = vmul.f32 %v5543, %v5517
  %v5552 = vmul.f32 %v5544, %v5527
  %v5553 = vmul.f32 %v5545, %v5537
  %v5554 = vmul.f32 %v4914, %v4914
  %v5555 = vmul.f32 %v4915, %v4915
  %v5556 = vmul.f32 %v4916, %v4916
  %v5557 = vmul.f32 %v4917, %v4917
  %v5558 = vmul.f32 %v4918, %v4918
  %v5559 = vmul.f32 %v4919, %v4919
  %v5560 = vmul.f32 %v4920, %v4920
  %v5561 = vmul.f32 %v4921, %v4921
  %5562 = vadd.xlane.f32.xlu0 %v5554
  %v5563 = vpop.xlane.xlu0 %5562
  %5564 = vadd.xlane.f32.xlu0 %v5555
  %v5565 = vpop.xlane.xlu0 %5564
  %5566 = vadd.xlane.f32.xlu0 %v5556
  %v5567 = vpop.xlane.xlu0 %5566
  %5568 = vadd.xlane.f32.xlu0 %v5557
  %v5569 = vpop.xlane.xlu0 %5568
  %5570 = vadd.xlane.f32.xlu0 %v5558
  %v5571 = vpop.xlane.xlu0 %5570
  %5572 = vadd.xlane.f32.xlu0 %v5559
  %v5573 = vpop.xlane.xlu0 %5572
  %5574 = vadd.xlane.f32.xlu0 %v5560
  %v5575 = vpop.xlane.xlu0 %5574
  %5576 = vadd.xlane.f32.xlu0 %v5561
  %v5577 = vpop.xlane.xlu0 %5576
  %v5578 = vmax.f32 %v5563, 1e-24
  %v5579 = vmax.f32 %v5565, 1e-24
  %v5580 = vmax.f32 %v5567, 1e-24
  %v5581 = vmax.f32 %v5569, 1e-24
  %v5582 = vmax.f32 %v5571, 1e-24
  %v5583 = vmax.f32 %v5573, 1e-24
  %v5584 = vmax.f32 %v5575, 1e-24
  %v5585 = vmax.f32 %v5577, 1e-24
  %v5586 = vrsqrt.pop %v5578
  %v5587 = vmul.f32 %v5586, %v5578
  %v5588 = vmul.f32 %v5587, %v5586
  %v5589 = vmul.f32 0.5, %v5588
  %v5590 = vsub.f32 1.5, %v5589
  %v5591 = vmul.f32 %v5586, %v5590
  %vm5592 = vweird.f32 %v5578
  %vm5593 = vweird.f32 %v5586
  %vm5594 = vmor %vm5592, %vm5593
  %v5595 = vsel %vm5594, %v5586, %v5591
  %v5596 = vrsqrt.pop %v5579
  %v5597 = vmul.f32 %v5596, %v5579
  %v5598 = vmul.f32 %v5597, %v5596
  %v5599 = vmul.f32 0.5, %v5598
  %v5600 = vsub.f32 1.5, %v5599
  %v5601 = vmul.f32 %v5596, %v5600
  %vm5602 = vweird.f32 %v5579
  %vm5603 = vweird.f32 %v5596
  %vm5604 = vmor %vm5602, %vm5603
  %v5605 = vsel %vm5604, %v5596, %v5601
  %v5606 = vrsqrt.pop %v5580
  %v5607 = vmul.f32 %v5606, %v5580
  %v5608 = vmul.f32 %v5607, %v5606
  %v5609 = vmul.f32 0.5, %v5608
  %v5610 = vsub.f32 1.5, %v5609
  %v5611 = vmul.f32 %v5606, %v5610
  %vm5612 = vweird.f32 %v5580
  %vm5613 = vweird.f32 %v5606
  %vm5614 = vmor %vm5612, %vm5613
  %v5615 = vsel %vm5614, %v5606, %v5611
  %v5616 = vrsqrt.pop %v5581
  %v5617 = vmul.f32 %v5616, %v5581
  %v5618 = vmul.f32 %v5617, %v5616
  %v5619 = vmul.f32 0.5, %v5618
  %v5620 = vsub.f32 1.5, %v5619
  %v5621 = vmul.f32 %v5616, %v5620
  %vm5622 = vweird.f32 %v5581
  %vm5623 = vweird.f32 %v5616
  %vm5624 = vmor %vm5622, %vm5623
  %v5625 = vsel %vm5624, %v5616, %v5621
  %v5626 = vrsqrt.pop %v5582
  %v5627 = vmul.f32 %v5626, %v5582
  %v5628 = vmul.f32 %v5627, %v5626
  %v5629 = vmul.f32 0.5, %v5628
  %v5630 = vsub.f32 1.5, %v5629
  %v5631 = vmul.f32 %v5626, %v5630
  %vm5632 = vweird.f32 %v5582
  %vm5633 = vweird.f32 %v5626
  %vm5634 = vmor %vm5632, %vm5633
  %v5635 = vsel %vm5634, %v5626, %v5631
  %v5636 = vrsqrt.pop %v5583
  %v5637 = vmul.f32 %v5636, %v5583
  %v5638 = vmul.f32 %v5637, %v5636
  %v5639 = vmul.f32 0.5, %v5638
  %v5640 = vsub.f32 1.5, %v5639
  %v5641 = vmul.f32 %v5636, %v5640
  %vm5642 = vweird.f32 %v5583
  %vm5643 = vweird.f32 %v5636
  %vm5644 = vmor %vm5642, %vm5643
  %v5645 = vsel %vm5644, %v5636, %v5641
  %v5646 = vrsqrt.pop %v5584
  %v5647 = vmul.f32 %v5646, %v5584
  %v5648 = vmul.f32 %v5647, %v5646
  %v5649 = vmul.f32 0.5, %v5648
  %v5650 = vsub.f32 1.5, %v5649
  %v5651 = vmul.f32 %v5646, %v5650
  %vm5652 = vweird.f32 %v5584
  %vm5653 = vweird.f32 %v5646
  %vm5654 = vmor %vm5652, %vm5653
  %v5655 = vsel %vm5654, %v5646, %v5651
  %v5656 = vrsqrt.pop %v5585
  %v5657 = vmul.f32 %v5656, %v5585
  %v5658 = vmul.f32 %v5657, %v5656
  %v5659 = vmul.f32 0.5, %v5658
  %v5660 = vsub.f32 1.5, %v5659
  %v5661 = vmul.f32 %v5656, %v5660
  %vm5662 = vweird.f32 %v5585
  %vm5663 = vweird.f32 %v5656
  %vm5664 = vmor %vm5662, %vm5663
  %v5665 = vsel %vm5664, %v5656, %v5661
  %v5666 = vmul.f32 %v4914, %v5595
  %v5667 = vmul.f32 %v4915, %v5605
  %v5668 = vmul.f32 %v4916, %v5615
  %v5669 = vmul.f32 %v4917, %v5625
  %v5670 = vmul.f32 %v4918, %v5635
  %v5671 = vmul.f32 %v4919, %v5645
  %v5672 = vmul.f32 %v4920, %v5655
  %v5673 = vmul.f32 %v4921, %v5665
  %v5674 = vmul.f32 %v73, %v73
  %v5675 = vmul.f32 %v74, %v74
  %v5676 = vmul.f32 %v75, %v75
  %v5677 = vmul.f32 %v76, %v76
  %v5678 = vmul.f32 %v77, %v77
  %v5679 = vmul.f32 %v78, %v78
  %v5680 = vmul.f32 %v79, %v79
  %v5681 = vmul.f32 %v80, %v80
  %5682 = vadd.xlane.f32.xlu0 %v5674
  %v5683 = vpop.xlane.xlu0 %5682
  %5684 = vadd.xlane.f32.xlu0 %v5675
  %v5685 = vpop.xlane.xlu0 %5684
  %5686 = vadd.xlane.f32.xlu0 %v5676
  %v5687 = vpop.xlane.xlu0 %5686
  %5688 = vadd.xlane.f32.xlu0 %v5677
  %v5689 = vpop.xlane.xlu0 %5688
  %5690 = vadd.xlane.f32.xlu0 %v5678
  %v5691 = vpop.xlane.xlu0 %5690
  %5692 = vadd.xlane.f32.xlu0 %v5679
  %v5693 = vpop.xlane.xlu0 %5692
  %5694 = vadd.xlane.f32.xlu0 %v5680
  %v5695 = vpop.xlane.xlu0 %5694
  %5696 = vadd.xlane.f32.xlu0 %v5681
  %v5697 = vpop.xlane.xlu0 %5696
  %v5698 = vmax.f32 %v5683, 1e-24
  %v5699 = vmax.f32 %v5685, 1e-24
  %v5700 = vmax.f32 %v5687, 1e-24
  %v5701 = vmax.f32 %v5689, 1e-24
  %v5702 = vmax.f32 %v5691, 1e-24
  %v5703 = vmax.f32 %v5693, 1e-24
  %v5704 = vmax.f32 %v5695, 1e-24
  %v5705 = vmax.f32 %v5697, 1e-24
  %v5706 = vrsqrt.pop %v5698
  %v5707 = vmul.f32 %v5706, %v5698
  %v5708 = vmul.f32 %v5707, %v5706
  %v5709 = vmul.f32 0.5, %v5708
  %v5710 = vsub.f32 1.5, %v5709
  %v5711 = vmul.f32 %v5706, %v5710
  %vm5712 = vweird.f32 %v5698
  %vm5713 = vweird.f32 %v5706
  %vm5714 = vmor %vm5712, %vm5713
  %v5715 = vsel %vm5714, %v5706, %v5711
  %v5716 = vrsqrt.pop %v5699
  %v5717 = vmul.f32 %v5716, %v5699
  %v5718 = vmul.f32 %v5717, %v5716
  %v5719 = vmul.f32 0.5, %v5718
  %v5720 = vsub.f32 1.5, %v5719
  %v5721 = vmul.f32 %v5716, %v5720
  %vm5722 = vweird.f32 %v5699
  %vm5723 = vweird.f32 %v5716
  %vm5724 = vmor %vm5722, %vm5723
  %v5725 = vsel %vm5724, %v5716, %v5721
  %v5726 = vrsqrt.pop %v5700
  %v5727 = vmul.f32 %v5726, %v5700
  %v5728 = vmul.f32 %v5727, %v5726
  %v5729 = vmul.f32 0.5, %v5728
  %v5730 = vsub.f32 1.5, %v5729
  %v5731 = vmul.f32 %v5726, %v5730
  %vm5732 = vweird.f32 %v5700
  %vm5733 = vweird.f32 %v5726
  %vm5734 = vmor %vm5732, %vm5733
  %v5735 = vsel %vm5734, %v5726, %v5731
  %v5736 = vrsqrt.pop %v5701
  %v5737 = vmul.f32 %v5736, %v5701
  %v5738 = vmul.f32 %v5737, %v5736
  %v5739 = vmul.f32 0.5, %v5738
  %v5740 = vsub.f32 1.5, %v5739
  %v5741 = vmul.f32 %v5736, %v5740
  %vm5742 = vweird.f32 %v5701
  %vm5743 = vweird.f32 %v5736
  %vm5744 = vmor %vm5742, %vm5743
  %v5745 = vsel %vm5744, %v5736, %v5741
  %v5746 = vrsqrt.pop %v5702
  %v5747 = vmul.f32 %v5746, %v5702
  %v5748 = vmul.f32 %v5747, %v5746
  %v5749 = vmul.f32 0.5, %v5748
  %v5750 = vsub.f32 1.5, %v5749
  %v5751 = vmul.f32 %v5746, %v5750
  %vm5752 = vweird.f32 %v5702
  %vm5753 = vweird.f32 %v5746
  %vm5754 = vmor %vm5752, %vm5753
  %v5755 = vsel %vm5754, %v5746, %v5751
  %v5756 = vrsqrt.pop %v5703
  %v5757 = vmul.f32 %v5756, %v5703
  %v5758 = vmul.f32 %v5757, %v5756
  %v5759 = vmul.f32 0.5, %v5758
  %v5760 = vsub.f32 1.5, %v5759
  %v5761 = vmul.f32 %v5756, %v5760
  %vm5762 = vweird.f32 %v5703
  %vm5763 = vweird.f32 %v5756
  %vm5764 = vmor %vm5762, %vm5763
  %v5765 = vsel %vm5764, %v5756, %v5761
  %v5766 = vrsqrt.pop %v5704
  %v5767 = vmul.f32 %v5766, %v5704
  %v5768 = vmul.f32 %v5767, %v5766
  %v5769 = vmul.f32 0.5, %v5768
  %v5770 = vsub.f32 1.5, %v5769
  %v5771 = vmul.f32 %v5766, %v5770
  %vm5772 = vweird.f32 %v5704
  %vm5773 = vweird.f32 %v5766
  %vm5774 = vmor %vm5772, %vm5773
  %v5775 = vsel %vm5774, %v5766, %v5771
  %v5776 = vrsqrt.pop %v5705
  %v5777 = vmul.f32 %v5776, %v5705
  %v5778 = vmul.f32 %v5777, %v5776
  %v5779 = vmul.f32 0.5, %v5778
  %v5780 = vsub.f32 1.5, %v5779
  %v5781 = vmul.f32 %v5776, %v5780
  %vm5782 = vweird.f32 %v5705
  %vm5783 = vweird.f32 %v5776
  %vm5784 = vmor %vm5782, %vm5783
  %v5785 = vsel %vm5784, %v5776, %v5781
  %v5786 = vmul.f32 %v2300, %v73
  %v5787 = vmul.f32 %v2301, %v74
  %v5788 = vmul.f32 %v2302, %v75
  %v5789 = vmul.f32 %v2303, %v76
  %v5790 = vmul.f32 %v2304, %v77
  %v5791 = vmul.f32 %v2305, %v78
  %v5792 = vmul.f32 %v2306, %v79
  %v5793 = vmul.f32 %v2307, %v80
  %v5794 = vmul.f32 %v5786, %v5715
  %v5795 = vmul.f32 %v5787, %v5725
  %v5796 = vmul.f32 %v5788, %v5735
  %v5797 = vmul.f32 %v5789, %v5745
  %v5798 = vmul.f32 %v5790, %v5755
  %v5799 = vmul.f32 %v5791, %v5765
  %v5800 = vmul.f32 %v5792, %v5775
  %v5801 = vmul.f32 %v5793, %v5785
  %v5802 = vmul.f32 %v4922, %v4922
  %v5803 = vmul.f32 %v4923, %v4923
  %v5804 = vmul.f32 %v4924, %v4924
  %v5805 = vmul.f32 %v4925, %v4925
  %v5806 = vmul.f32 %v4926, %v4926
  %v5807 = vmul.f32 %v4927, %v4927
  %v5808 = vmul.f32 %v4928, %v4928
  %v5809 = vmul.f32 %v4929, %v4929
  %5810 = vadd.xlane.f32.xlu0 %v5802
  %v5811 = vpop.xlane.xlu0 %5810
  %5812 = vadd.xlane.f32.xlu0 %v5803
  %v5813 = vpop.xlane.xlu0 %5812
  %5814 = vadd.xlane.f32.xlu0 %v5804
  %v5815 = vpop.xlane.xlu0 %5814
  %5816 = vadd.xlane.f32.xlu0 %v5805
  %v5817 = vpop.xlane.xlu0 %5816
  %5818 = vadd.xlane.f32.xlu0 %v5806
  %v5819 = vpop.xlane.xlu0 %5818
  %5820 = vadd.xlane.f32.xlu0 %v5807
  %v5821 = vpop.xlane.xlu0 %5820
  %5822 = vadd.xlane.f32.xlu0 %v5808
  %v5823 = vpop.xlane.xlu0 %5822
  %5824 = vadd.xlane.f32.xlu0 %v5809
  %v5825 = vpop.xlane.xlu0 %5824
  %v5826 = vmax.f32 %v5811, 1e-24
  %v5827 = vmax.f32 %v5813, 1e-24
  %v5828 = vmax.f32 %v5815, 1e-24
  %v5829 = vmax.f32 %v5817, 1e-24
  %v5830 = vmax.f32 %v5819, 1e-24
  %v5831 = vmax.f32 %v5821, 1e-24
  %v5832 = vmax.f32 %v5823, 1e-24
  %v5833 = vmax.f32 %v5825, 1e-24
  %v5834 = vrsqrt.pop %v5826
  %v5835 = vmul.f32 %v5834, %v5826
  %v5836 = vmul.f32 %v5835, %v5834
  %v5837 = vmul.f32 0.5, %v5836
  %v5838 = vsub.f32 1.5, %v5837
  %v5839 = vmul.f32 %v5834, %v5838
  %vm5840 = vweird.f32 %v5826
  %vm5841 = vweird.f32 %v5834
  %vm5842 = vmor %vm5840, %vm5841
  %v5843 = vsel %vm5842, %v5834, %v5839
  %v5844 = vrsqrt.pop %v5827
  %v5845 = vmul.f32 %v5844, %v5827
  %v5846 = vmul.f32 %v5845, %v5844
  %v5847 = vmul.f32 0.5, %v5846
  %v5848 = vsub.f32 1.5, %v5847
  %v5849 = vmul.f32 %v5844, %v5848
  %vm5850 = vweird.f32 %v5827
  %vm5851 = vweird.f32 %v5844
  %vm5852 = vmor %vm5850, %vm5851
  %v5853 = vsel %vm5852, %v5844, %v5849
  %v5854 = vrsqrt.pop %v5828
  %v5855 = vmul.f32 %v5854, %v5828
  %v5856 = vmul.f32 %v5855, %v5854
  %v5857 = vmul.f32 0.5, %v5856
  %v5858 = vsub.f32 1.5, %v5857
  %v5859 = vmul.f32 %v5854, %v5858
  %vm5860 = vweird.f32 %v5828
  %vm5861 = vweird.f32 %v5854
  %vm5862 = vmor %vm5860, %vm5861
  %v5863 = vsel %vm5862, %v5854, %v5859
  %v5864 = vrsqrt.pop %v5829
  %v5865 = vmul.f32 %v5864, %v5829
  %v5866 = vmul.f32 %v5865, %v5864
  %v5867 = vmul.f32 0.5, %v5866
  %v5868 = vsub.f32 1.5, %v5867
  %v5869 = vmul.f32 %v5864, %v5868
  %vm5870 = vweird.f32 %v5829
  %vm5871 = vweird.f32 %v5864
  %vm5872 = vmor %vm5870, %vm5871
  %v5873 = vsel %vm5872, %v5864, %v5869
  %v5874 = vrsqrt.pop %v5830
  %v5875 = vmul.f32 %v5874, %v5830
  %v5876 = vmul.f32 %v5875, %v5874
  %v5877 = vmul.f32 0.5, %v5876
  %v5878 = vsub.f32 1.5, %v5877
  %v5879 = vmul.f32 %v5874, %v5878
  %vm5880 = vweird.f32 %v5830
  %vm5881 = vweird.f32 %v5874
  %vm5882 = vmor %vm5880, %vm5881
  %v5883 = vsel %vm5882, %v5874, %v5879
  %v5884 = vrsqrt.pop %v5831
  %v5885 = vmul.f32 %v5884, %v5831
  %v5886 = vmul.f32 %v5885, %v5884
  %v5887 = vmul.f32 0.5, %v5886
  %v5888 = vsub.f32 1.5, %v5887
  %v5889 = vmul.f32 %v5884, %v5888
  %vm5890 = vweird.f32 %v5831
  %vm5891 = vweird.f32 %v5884
  %vm5892 = vmor %vm5890, %vm5891
  %v5893 = vsel %vm5892, %v5884, %v5889
  %v5894 = vrsqrt.pop %v5832
  %v5895 = vmul.f32 %v5894, %v5832
  %v5896 = vmul.f32 %v5895, %v5894
  %v5897 = vmul.f32 0.5, %v5896
  %v5898 = vsub.f32 1.5, %v5897
  %v5899 = vmul.f32 %v5894, %v5898
  %vm5900 = vweird.f32 %v5832
  %vm5901 = vweird.f32 %v5894
  %vm5902 = vmor %vm5900, %vm5901
  %v5903 = vsel %vm5902, %v5894, %v5899
  %v5904 = vrsqrt.pop %v5833
  %v5905 = vmul.f32 %v5904, %v5833
  %v5906 = vmul.f32 %v5905, %v5904
  %v5907 = vmul.f32 0.5, %v5906
  %v5908 = vsub.f32 1.5, %v5907
  %v5909 = vmul.f32 %v5904, %v5908
  %vm5910 = vweird.f32 %v5833
  %vm5911 = vweird.f32 %v5904
  %vm5912 = vmor %vm5910, %vm5911
  %v5913 = vsel %vm5912, %v5904, %v5909
  %v5914 = vmul.f32 %v4922, %v5843
  %v5915 = vmul.f32 %v4923, %v5853
  %v5916 = vmul.f32 %v4924, %v5863
  %v5917 = vmul.f32 %v4925, %v5873
  %v5918 = vmul.f32 %v4926, %v5883
  %v5919 = vmul.f32 %v4927, %v5893
  %v5920 = vmul.f32 %v4928, %v5903
  %v5921 = vmul.f32 %v4929, %v5913
  %5922 = vst [vmem:[%s14] sm:$0xff] %v5050
  %5923 = vst [vmem:[%s14 + $0x8] sm:$0xff] %v5298
  %5924 = vst [vmem:[%s14 + $0x10] sm:$0xff] %v5546
  %5925 = vst [vmem:[%s14 + $0x18] sm:$0xff] %v5794
  %5926 = vst [vmem:[%s14 + $0x20] sm:$0xff] %v5051
  %5927 = vst [vmem:[%s14 + $0x28] sm:$0xff] %v5299
  %5928 = vst [vmem:[%s14 + $0x30] sm:$0xff] %v5547
  %5929 = vst [vmem:[%s14 + $0x38] sm:$0xff] %v5795
  %5930 = vst [vmem:[%s14 + $0x40] sm:$0xff] %v5052
  %5931 = vst [vmem:[%s14 + $0x48] sm:$0xff] %v5300
  %5932 = vst [vmem:[%s14 + $0x50] sm:$0xff] %v5548
  %5933 = vst [vmem:[%s14 + $0x58] sm:$0xff] %v5796
  %5934 = vst [vmem:[%s14 + $0x60] sm:$0xff] %v5053
  %5935 = vst [vmem:[%s14 + $0x68] sm:$0xff] %v5301
  %5936 = vst [vmem:[%s14 + $0x70] sm:$0xff] %v5549
  %5937 = vst [vmem:[%s14 + $0x78] sm:$0xff] %v5797
  %5938 = vst [vmem:[%s14 + $0x80] sm:$0xff] %v5054
  %5939 = vst [vmem:[%s14 + $0x88] sm:$0xff] %v5302
  %5940 = vst [vmem:[%s14 + $0x90] sm:$0xff] %v5550
  %5941 = vst [vmem:[%s14 + $0x98] sm:$0xff] %v5798
  %5942 = vst [vmem:[%s14 + $0xa0] sm:$0xff] %v5055
  %5943 = vst [vmem:[%s14 + $0xa8] sm:$0xff] %v5303
  %5944 = vst [vmem:[%s14 + $0xb0] sm:$0xff] %v5551
  %5945 = vst [vmem:[%s14 + $0xb8] sm:$0xff] %v5799
  %5946 = vst [vmem:[%s14 + $0xc0] sm:$0xff] %v5056
  %5947 = vst [vmem:[%s14 + $0xc8] sm:$0xff] %v5304
  %5948 = vst [vmem:[%s14 + $0xd0] sm:$0xff] %v5552
  %5949 = vst [vmem:[%s14 + $0xd8] sm:$0xff] %v5800
  %5950 = vst [vmem:[%s14 + $0xe0] sm:$0xff] %v5057
  %5951 = vst [vmem:[%s14 + $0xe8] sm:$0xff] %v5305
  %5952 = vst [vmem:[%s14 + $0xf0] sm:$0xff] %v5553
  %5953 = vst [vmem:[%s14 + $0xf8] sm:$0xff] %v5801
  %5954 = vst [vmem:[%s15] sm:$0xff] %v5170
  %5955 = vst [vmem:[%s15 + $0x8] sm:$0xff] %v5418
  %5956 = vst [vmem:[%s15 + $0x10] sm:$0xff] %v5666
  %5957 = vst [vmem:[%s15 + $0x18] sm:$0xff] %v5914
  %5958 = vst [vmem:[%s15 + $0x20] sm:$0xff] %v5171
  %5959 = vst [vmem:[%s15 + $0x28] sm:$0xff] %v5419
  %5960 = vst [vmem:[%s15 + $0x30] sm:$0xff] %v5667
  %5961 = vst [vmem:[%s15 + $0x38] sm:$0xff] %v5915
  %5962 = vst [vmem:[%s15 + $0x40] sm:$0xff] %v5172
  %5963 = vst [vmem:[%s15 + $0x48] sm:$0xff] %v5420
  %5964 = vst [vmem:[%s15 + $0x50] sm:$0xff] %v5668
  %5965 = vst [vmem:[%s15 + $0x58] sm:$0xff] %v5916
  %5966 = vst [vmem:[%s15 + $0x60] sm:$0xff] %v5173
  %5967 = vst [vmem:[%s15 + $0x68] sm:$0xff] %v5421
  %5968 = vst [vmem:[%s15 + $0x70] sm:$0xff] %v5669
  %5969 = vst [vmem:[%s15 + $0x78] sm:$0xff] %v5917
  %5970 = vst [vmem:[%s15 + $0x80] sm:$0xff] %v5174
  %5971 = vst [vmem:[%s15 + $0x88] sm:$0xff] %v5422
  %5972 = vst [vmem:[%s15 + $0x90] sm:$0xff] %v5670
  %5973 = vst [vmem:[%s15 + $0x98] sm:$0xff] %v5918
  %5974 = vst [vmem:[%s15 + $0xa0] sm:$0xff] %v5175
  %5975 = vst [vmem:[%s15 + $0xa8] sm:$0xff] %v5423
  %5976 = vst [vmem:[%s15 + $0xb0] sm:$0xff] %v5671
  %5977 = vst [vmem:[%s15 + $0xb8] sm:$0xff] %v5919
  %5978 = vst [vmem:[%s15 + $0xc0] sm:$0xff] %v5176
  %5979 = vst [vmem:[%s15 + $0xc8] sm:$0xff] %v5424
  %5980 = vst [vmem:[%s15 + $0xd0] sm:$0xff] %v5672
  %5981 = vst [vmem:[%s15 + $0xd8] sm:$0xff] %v5920
  %5982 = vst [vmem:[%s15 + $0xe0] sm:$0xff] %v5177
  %5983 = vst [vmem:[%s15 + $0xe8] sm:$0xff] %v5425
  %5984 = vst [vmem:[%s15 + $0xf0] sm:$0xff] %v5673
  %5985 = vst [vmem:[%s15 + $0xf8] sm:$0xff] %v5921
  // Predicated region
  $region58: #{meaformer_forward.24} parent=0 // pred_check
    _
  $region59: #{meaformer_forward.24} parent=0 // pred_check_branch
    %5987 = sbr.rel (0) target = $region61
  $region60: #{meaformer_forward.24} parent=0 // pred_region
    _
  $region61: #{meaformer_forward.24} parent=0 // pred_fallthru
    _
  // Predicated region
  $region62: #{meaformer_forward.24} parent=0 // pred_check
    _
  $region63: #{meaformer_forward.24} parent=0 // pred_check_branch
    %5989 = sbr.rel (0) target = $region65
  $region64: #{meaformer_forward.24} parent=0 // pred_region
    _
  $region65: #{meaformer_forward.24} parent=0 // pred_fallthru
    _
  // Predicated region
  $region66: #{meaformer_forward.24} parent=0 // pred_check
    _
  $region67: #{meaformer_forward.24} parent=0 // pred_check_branch
    %5991 = sbr.rel (0) target = $region69
  $region68: #{meaformer_forward.24} parent=0 // pred_region
    _
  $region69: #{meaformer_forward.24} parent=0 // pred_fallthru
    _
  // Predicated region
  $region70: #{meaformer_forward.24} parent=0 // pred_check
    _
  $region71: #{meaformer_forward.24} parent=0 // pred_check_branch
    %5993 = sbr.rel (0) target = $region73
  $region72: #{meaformer_forward.24} parent=0 // pred_region
    _
  $region73: #{meaformer_forward.24} parent=0 // pred_fallthru
    _

</llo_original>
